<compile_context>
chip_gen: v7x
topology: tpu7x:2x2x1
jax: 0.10.0
libtpu: 0.0.40
codegen_flags: <defaults>
</compile_context>

<pallas_src>
import math

import jax
import jax.numpy as jnp
import numpy as np
from jax import lax
from jax.experimental import pallas as pl
from jax.experimental.pallas import tpu as pltpu

INPUT_SIZE = 14
HIDDEN = 32            # H
NUM_LAYERS = 2
NUM_CLASSES = 2
DIR_BLOCK = 128        # per-direction gate block padded to one lane tile (>= 3*H)


# --------------------------------------------------------------------------
# Kernel
# --------------------------------------------------------------------------
def _run_layer(gi_scr, seq_scr, seqr_scr, mask2_ref, whh, bhhn, is_fwd,
               T, B, unroll):
    """One fused (fwd + bwd) bidirectional GRU layer over the paired layout.

    Row convention (B2 = 2*B rows):
      rows [0:B)   = forward direction, step i <-> time i
      rows [B:2B)  = backward direction, step i <-> time T-1-i
    gi_scr  : (T, 2B, DIR_BLOCK) precomputed x @ W_ih (+ all gi biases)
    seq_scr : (T, 2B, H) layer output in paired layout
    seqr_scr: (T, 2B, H) same outputs stored time-reversed (seqr[T-1-i] = out_i)
    mask2   : (T, 2B, 1) paired length mask
    whh     : (H, 2*DIR_BLOCK) [W_hh_fwd | W_hh_bwd] value (loop invariant)
    bhhn    : (2B, H) paired hidden bias of the n gate
    """
    H = HIDDEN
    DG = DIR_BLOCK
    B2 = 2 * B

    def step(i, h):                       # h: (2B, H)
        gi = gi_scr[i]                    # (2B, DG)   aligned load
        m = mask2_ref[i]                  # (2B, 1)    aligned load
        ghf = jnp.dot(h, whh, preferred_element_type=jnp.float32)   # (2B, 2DG)
        # per-row-block direction select (vselect; lane-tile aligned slices)
        gh = jnp.where(is_fwd, ghf[:, 0:DG], ghf[:, DG:2 * DG])     # (2B, DG)

        rz = jax.nn.sigmoid(gi[:, 0:2 * H] + gh[:, 0:2 * H])
        r = rz[:, 0:H]
        z = rz[:, H:2 * H]
        n = jnp.tanh(gi[:, 2 * H:3 * H] + r * (gh[:, 2 * H:3 * H] + bhhn))
        # packed-sequence semantics: state frozen / output zeroed past lengths[b]
        h_new = h + m * ((1.0 - z) * (n - h))
        out = m * h_new
        seq_scr[i] = out                  # aligned, full-width store
        seqr_scr[T - 1 - i] = out         # reversed copy (off the dep chain)
        return h_new

    lax.fori_loop(0, T, step, jnp.zeros((B2, H), jnp.float32), unroll=unroll)


def _gru_attn_kernel(x_ref, mask2_ref, tval_ref, a0_ref, a1_ref, rr_ref,
                     nb_ref, hd_ref, out_ref, gi_scr, seq_scr, seqr_scr):
    T, B2, _ = x_ref.shape
    B = B2 // 2
    H = HIDDEN
    DG = DIR_BLOCK
    unroll = True if T <= 64 else 8

    # rows [0:B) are the forward direction
    is_fwd = lax.broadcasted_iota(jnp.int32, (B2, 1), 0) < B

    # ---------------- layer 0 ----------------
    # Hoisted input projection for all timesteps at once.  The ones-indicator
    # columns of x_paired pick up the per-direction folded gate biases.
    gi0 = jnp.dot(x_ref[...].reshape(T * B2, x_ref.shape[2]), a0_ref[...],
                  preferred_element_type=jnp.float32)
    gi_scr[...] = gi0.reshape(T, B2, DG)
    _run_layer(gi_scr, seq_scr, seqr_scr, mask2_ref,
               rr_ref[0:H, :], nb_ref[0], is_fwd, T, B, unroll)

    # ---------------- layer 1 ----------------
    # Logical layer-0 output U[t] = [fwd_out[t] | bwd_out[t]] and its time
    # reverse L, rebuilt in bulk (once) from the two per-step stores.
    U = jnp.concatenate([seq_scr[:, 0:B, :], seqr_scr[:, B:B2, :]], axis=-1)   # (T,B,2H)
    L = jnp.concatenate([seqr_scr[:, 0:B, :], seq_scr[:, B:B2, :]], axis=-1)   # (T,B,2H)
    w1f = a1_ref[0:2 * H, 0:DG]
    b1f = a1_ref[2 * H:2 * H + 1, 0:DG]
    w1b = a1_ref[0:2 * H, DG:2 * DG]
    b1b = a1_ref[2 * H:2 * H + 1, DG:2 * DG]
    giu = jnp.dot(U.reshape(T * B, 2 * H), w1f,
                  preferred_element_type=jnp.float32) + b1f
    gil = jnp.dot(L.reshape(T * B, 2 * H), w1b,
                  preferred_element_type=jnp.float32) + b1b
    gi_scr[:, 0:B, :] = giu.reshape(T, B, DG)
    gi_scr[:, B:B2, :] = gil.reshape(T, B, DG)
    _run_layer(gi_scr, seq_scr, seqr_scr, mask2_ref,
               rr_ref[H:2 * H, :], nb_ref[1], is_fwd, T, B, unroll)

    # ---------------- attention pooling over time ----------------
    seq = jnp.concatenate([seq_scr[:, 0:B, :], seqr_scr[:, B:B2, :]], axis=-1)  # (T,B,2H)
    wa = hd_ref[2 * H + 1:2 * H + 2, 0:2 * H]                 # (1, 2H)
    ba = hd_ref[2 * H:2 * H + 1, 32 + NUM_CLASSES:33 + NUM_CLASSES]   # (1, 1)
    # VPU multiply + lane reduce instead of an N=1 MXU matmul; no trailing 1-dim
    scores = jnp.sum(seq * wa.reshape(1, 1, 2 * H), axis=-1) + ba     # (T, B)
    # timesteps beyond max(lengths) do not exist after pad_packed_sequence;
    # use -1e30 (finite) so an all-padded tile never yields 0/0 -> NaN.
    scores = jnp.where(tval_ref[...] > 0.0, scores, -1e30)
    m = jnp.max(scores, axis=0, keepdims=True)
    e = jnp.exp(scores - m)
    attn = e / jnp.sum(e, axis=0, keepdims=True)                       # (T, B)
    pooled = jnp.sum(attn[:, :, None] * seq, axis=0)                   # (B, 2H)

    # ---------------- classification head ----------------
    w1 = hd_ref[0:2 * H, 0:32]
    b1 = hd_ref[2 * H:2 * H + 1, 0:32]
    w2 = hd_ref[0:32, 32:32 + NUM_CLASSES]
    b2 = hd_ref[2 * H:2 * H + 1, 32:32 + NUM_CLASSES]
    hid = jnp.maximum(
        jnp.dot(pooled, w1, preferred_element_type=jnp.float32) + b1, 0.0)
    out_ref[...] = jnp.dot(hid, w2, preferred_element_type=jnp.float32) + b2


# --------------------------------------------------------------------------
# Host-side parameter packing into a few lane-dense slabs
# --------------------------------------------------------------------------
def _gate_bias(bi, bh):
    """Fold bias_ih fully + the r,z part of bias_hh; n-gate hidden bias stays
    separate (it is applied inside r * (gh_n + b_hn))."""
    H = HIDDEN
    gb = jnp.zeros((3 * H,), jnp.float32)
    gb = gb.at[0:2 * H].set(bi[0, 0:2 * H] + bh[0, 0:2 * H])
    return gb.at[2 * H:3 * H].set(bi[0, 2 * H:3 * H])


def _pack_params(p):
    H = HIDDEN
    DG = DIR_BLOCK
    F = INPUT_SIZE
    assert 2 * H >= 33 + NUM_CLASSES

    # layer-0 input slab (2F+2, DG): rows [wih0_f ; fwd-bias ; wih0_b ; bwd-bias]
    a0 = jnp.zeros((2 * F + 2, DG), jnp.float32)
    a0 = a0.at[0:F, 0:3 * H].set(p["wih0f"])
    a0 = a0.at[F, 0:3 * H].set(_gate_bias(p["bih0f"], p["bhh0f"]))
    a0 = a0.at[F + 1:2 * F + 1, 0:3 * H].set(p["wih0b"])
    a0 = a0.at[2 * F + 1, 0:3 * H].set(_gate_bias(p["bih0b"], p["bhh0b"]))

    # layer-1 input slab (2H+1, 2DG): fwd in lanes [0:DG), bwd in [DG:2DG)
    a1 = jnp.zeros((2 * H + 1, 2 * DG), jnp.float32)
    a1 = a1.at[0:2 * H, 0:3 * H].set(p["wih1f"])
    a1 = a1.at[2 * H, 0:3 * H].set(_gate_bias(p["bih1f"], p["bhh1f"]))
    a1 = a1.at[0:2 * H, DG:DG + 3 * H].set(p["wih1b"])
    a1 = a1.at[2 * H, DG:DG + 3 * H].set(_gate_bias(p["bih1b"], p["bhh1b"]))

    # recurrent slab (2H, 2DG): rows [0:H)=layer0, [H:2H)=layer1; fwd/bwd blocks
    # NOTE(v5e): the 256-lane RHS spans two 128-wide MXU tiles there.
    rr = jnp.zeros((2 * H, 2 * DG), jnp.float32)
    rr = rr.at[0:H, 0:3 * H].set(p["whh0f"])
    rr = rr.at[0:H, DG:DG + 3 * H].set(p["whh0b"])
    rr = rr.at[H:2 * H, 0:3 * H].set(p["whh1f"])
    rr = rr.at[H:2 * H, DG:DG + 3 * H].set(p["whh1b"])

    # head slab (2H+2, 2H): w1, b1, w2, b2, wa (as a row), ba
    hd = jnp.zeros((2 * H + 2, 2 * H), jnp.float32)
    hd = hd.at[0:2 * H, 0:32].set(p["w1"])
    hd = hd.at[2 * H, 0:32].set(p["b1"][0])
    hd = hd.at[0:32, 32:32 + NUM_CLASSES].set(p["w2"])
    hd = hd.at[2 * H, 32:32 + NUM_CLASSES].set(p["b2"][0])
    hd = hd.at[2 * H + 1, 0:2 * H].set(p["wa"][:, 0])
    hd = hd.at[2 * H, 32 + NUM_CLASSES].set(p["ba"][0, 0])
    return {"a0": a0, "a1": a1, "rr": rr, "hd": hd}


def _make_bhhn_slab(p, bt):
    """n-gate hidden biases, pre-broadcast to the paired (2*bt, H) row layout."""
    H = HIDDEN
    nb = jnp.zeros((2, 2 * bt, H), jnp.float32)
    for layer in range(NUM_LAYERS):
        bf = p[f"bhh{layer}f"][0, 2 * H:3 * H]
        bb = p[f"bhh{layer}b"][0, 2 * H:3 * H]
        nb = nb.at[layer, 0:bt, :].set(jnp.broadcast_to(bf, (bt, H)))
        nb = nb.at[layer, bt:, :].set(jnp.broadcast_to(bb, (bt, H)))
    return nb


def init_params(key):
    """Deterministic parameter init (PyTorch-style U(-1/sqrt(H), 1/sqrt(H)))."""
    bound = 1.0 / math.sqrt(HIDDEN)
    shapes = {}
    for layer in range(NUM_LAYERS):
        d_in = INPUT_SIZE if layer == 0 else 2 * HIDDEN
        for d in ("f", "b"):
            shapes[f"wih{layer}{d}"] = (d_in, 3 * HIDDEN)
            shapes[f"whh{layer}{d}"] = (HIDDEN, 3 * HIDDEN)
            shapes[f"bih{layer}{d}"] = (1, 3 * HIDDEN)
            shapes[f"bhh{layer}{d}"] = (1, 3 * HIDDEN)
    shapes["wa"] = (2 * HIDDEN, 1)
    shapes["ba"] = (1, 1)
    shapes["w1"] = (2 * HIDDEN, 32)
    shapes["b1"] = (1, 32)
    shapes["w2"] = (32, NUM_CLASSES)
    shapes["b2"] = (1, NUM_CLASSES)
    keys = jax.random.split(key, len(shapes))
    return {name: jax.random.uniform(k, shape, jnp.float32, -bound, bound)
            for (name, shape), k in zip(shapes.items(), keys)}


# --------------------------------------------------------------------------
# Tile sizing / VMEM budgeting
# --------------------------------------------------------------------------
def _round_up(v, m):
    return ((v + m - 1) // m) * m


def _vmem_estimate_bytes(T, bt):
    rows = 2 * bt
    per_slab = T * rows * 128 * 4            # every T*2B slab pads to 128 lanes
    scratch = 3 * per_slab                    # gi + seq + seq_rev
    inputs = 2 * 2 * per_slab                 # x_paired + mask2, double buffered
    values = 3 * per_slab                     # in-kernel temporaries (gi0/U/L/...)
    weights = 2 * (1 << 20)
    return scratch + inputs + values + weights


def _choose_bt(B, T):
    bt = min(_round_up(max(B, 1), 8), 64)     # >= 16..128 paired MXU rows
    while bt > 8 and _vmem_estimate_bytes(T, bt) > 40 * (1 << 20):
        bt -= 8
    return bt


# --------------------------------------------------------------------------
# Wrapper
# --------------------------------------------------------------------------
def gru_with_attention(params, x, lengths):
    B, T, F = x.shape
    assert F == INPUT_SIZE
    H = HIDDEN
    lengths = jnp.asarray(lengths, jnp.int32)

    bt = _choose_bt(B, T)
    ntiles = -(-B // bt)
    B_pad = ntiles * bt
    C = 2 * F + 2

    x_tm = jnp.transpose(x.astype(jnp.float32), (1, 0, 2))        # (T, B, F)
    x_tm = jnp.pad(x_tm, ((0, 0), (0, B_pad - B), (0, 0)))        # (T, B_pad, F)
    x_rev = x_tm[::-1]                                            # time reversed
    len_p = jnp.pad(lengths, (0, B_pad - B))
    mask = (jnp.arange(T, dtype=jnp.int32)[:, None]
            < len_p[None, :]).astype(jnp.float32)                 # (T, B_pad)
    mask_rev = mask[::-1]

    # paired input rows: fwd = [x | 1 | 0 | 0], bwd = [0 | 0 | x_rev | 1]
    ones = jnp.ones((T, B_pad, 1), jnp.float32)
    zeros_f = jnp.zeros((T, B_pad, F), jnp.float32)
    zcol = jnp.zeros((T, B_pad, 1), jnp.float32)
    fwd_rows = jnp.concatenate([x_tm, ones, zeros_f, zcol], axis=-1)
    bwd_rows = jnp.concatenate([zeros_f, zcol, x_rev, ones], axis=-1)

    fr = fwd_rows.reshape(T, ntiles, bt, C).transpose(1, 0, 2, 3)
    br = bwd_rows.reshape(T, ntiles, bt, C).transpose(1, 0, 2, 3)
    x_paired = jnp.concatenate([fr, br], axis=2).reshape(ntiles * T, 2 * bt, C)

    m_f = mask.reshape(T, ntiles, bt).transpose(1, 0, 2)
    m_b = mask_rev.reshape(T, ntiles, bt).transpose(1, 0, 2)
    mask2 = jnp.concatenate([m_f, m_b], axis=2).reshape(ntiles * T, 2 * bt)[..., None]

    # global (whole-batch) valid-timestep mask: t < max(lengths)  (no host sync)
    tval = (jnp.arange(T, dtype=jnp.int32)
            < jnp.max(lengths)).astype(jnp.float32).reshape(T, 1)

    pk = _pack_params(params)
    nslab = _make_bhhn_slab(params, bt)
    args = [x_paired, mask2, tval, pk["a0"], pk["a1"], pk["rr"], nslab, pk["hd"]]

    est = _vmem_estimate_bytes(T, bt)
    vmem_limit = min(max(est + (4 << 20), 20 << 20), 48 << 20)   # never v7x's full 64 MiB

    out = pl.pallas_call(
        _gru_attn_kernel,
        out_shape=jax.ShapeDtypeStruct((B_pad, NUM_CLASSES), jnp.float32),
        grid=(ntiles,),
        in_specs=[
            pl.BlockSpec((T, 2 * bt, C), lambda b: (b, 0, 0)),       # x_paired (tiled)
            pl.BlockSpec((T, 2 * bt, 1), lambda b: (b, 0, 0)),       # mask2    (tiled)
            pl.BlockSpec((T, 1), lambda b: (0, 0)),                  # tval
            pl.BlockSpec(pk["a0"].shape, lambda b: (0, 0)),          # layer-0 slab
            pl.BlockSpec(pk["a1"].shape, lambda b: (0, 0)),          # layer-1 slab
            pl.BlockSpec(pk["rr"].shape, lambda b: (0, 0)),          # recurrent slab
            pl.BlockSpec(nslab.shape, lambda b: (0, 0, 0)),          # n-gate hidden bias
            pl.BlockSpec(pk["hd"].shape, lambda b: (0, 0)),          # head slab
        ],
        out_specs=pl.BlockSpec((bt, NUM_CLASSES), lambda b: (b, 0)),
        scratch_shapes=[
            pltpu.VMEM((T, 2 * bt, DIR_BLOCK), jnp.float32),   # gi (both layers)
            pltpu.VMEM((T, 2 * bt, HIDDEN), jnp.float32),      # layer outputs (paired)
            pltpu.VMEM((T, 2 * bt, HIDDEN), jnp.float32),      # same, time reversed
        ],
        compiler_params=pltpu.CompilerParams(
            dimension_semantics=("parallel",),
            vmem_limit_bytes=vmem_limit,
        ),
    )(*args)
    return out[:B]


# --------------------------------------------------------------------------
# Pure-JAX reference mirroring PyTorch packed bidirectional GRU + attention
# --------------------------------------------------------------------------
def reference(params, x, lengths):
    B, _, _ = x.shape
    H = HIDDEN
    lengths = jnp.asarray(lengths, jnp.int32)
    T = int(jax.device_get(jnp.max(lengths)))     # pad_packed_sequence trims to max length
    x = x[:, :T, :].astype(jnp.float32)
    mask = (jnp.arange(T)[None, :] < lengths[:, None]).astype(jnp.float32)   # (B, T)

    def gru_dir(xs, wih, whh, bih, bhh, reverse):
        h = jnp.zeros((B, H), jnp.float32)
        outs = [None] * T
        order = range(T - 1, -1, -1) if reverse else range(T)
        for t in order:
            gi = xs[:, t] @ wih + bih
            gh = h @ whh + bhh
            r = jax.nn.sigmoid(gi[:, :H] + gh[:, :H])
            z = jax.nn.sigmoid(gi[:, H:2 * H] + gh[:, H:2 * H])
            n = jnp.tanh(gi[:, 2 * H:] + r * gh[:, 2 * H:])
            hc = (1.0 - z) * n + z * h
            m = mask[:, t:t + 1]
            h = m * hc + (1.0 - m) * h
            outs[t] = m * h
        return jnp.stack(outs, axis=1)            # (B, T, H)

    seq = x
    for layer in range(NUM_LAYERS):
        of = gru_dir(seq, params[f"wih{layer}f"], params[f"whh{layer}f"],
                     params[f"bih{layer}f"], params[f"bhh{layer}f"], False)
        ob = gru_dir(seq, params[f"wih{layer}b"], params[f"whh{layer}b"],
                     params[f"bih{layer}b"], params[f"bhh{layer}b"], True)
        seq = jnp.concatenate([of, ob], axis=-1)  # (B, T, 2H)

    scores = jnp.einsum("bth,h->bt", seq, params["wa"][:, 0]) + params["ba"][0, 0]
    attn = jax.nn.softmax(scores, axis=1)
    pooled = jnp.einsum("bt,bth->bh", attn, seq)
    hid = jax.nn.relu(pooled @ params["w1"] + params["b1"])
    return hid @ params["w2"] + params["b2"]


if __name__ == "__main__":
    key = jax.random.PRNGKey(0)
    pkey, xkey = jax.random.split(key)
    params = init_params(pkey)

    B, T = 2, 10
    x = jax.random.normal(xkey, (B, T, INPUT_SIZE), jnp.float32)
    lengths = jnp.array([8, 5], jnp.int32)   # variable-length (padded past max length too)

    out = jax.block_until_ready(gru_with_attention(params, x, lengths))
    ref = reference(params, x, lengths)
    assert out.shape == (B, NUM_CLASSES)
    np.testing.assert_allclose(np.asarray(out), np.asarray(ref), atol=2e-3, rtol=2e-3)
    print("KERNEL_OK")
</pallas_src>

<mosaic_0001>
module attributes {stable_mosaic.version = 11 : i64} {
  func.func @_gru_attn_kernel(%arg0: i32, %arg1: memref<10x16x30xf32, #tpu.memory_space<vmem>>, %arg2: memref<10x16x1xf32, #tpu.memory_space<vmem>>, %arg3: memref<10x1xf32, #tpu.memory_space<vmem>>, %arg4: memref<30x128xf32, #tpu.memory_space<vmem>>, %arg5: memref<65x256xf32, #tpu.memory_space<vmem>>, %arg6: memref<64x256xf32, #tpu.memory_space<vmem>>, %arg7: memref<2x16x32xf32, #tpu.memory_space<vmem>>, %arg8: memref<66x64xf32, #tpu.memory_space<vmem>>, %arg9: memref<8x2xf32, #tpu.memory_space<vmem>>, %arg10: memref<10x16x128xf32, #tpu.memory_space<vmem>>, %arg11: memref<10x16x32xf32, #tpu.memory_space<vmem>>, %arg12: memref<10x16x32xf32, #tpu.memory_space<vmem>>) attributes {dimension_semantics = [#tpu.dimension_semantics<parallel>], iteration_bounds = array<i64: 1>, scalar_prefetch = 0 : i64, scratch_operands = 3 : i64, tpu.core_type = #tpu.core_type<tc>, window_params = [{transform_indices = @transform_0, window_bounds = array<i64: 10, 16, 30>}, {transform_indices = @transform_1, window_bounds = array<i64: 10, 16, 1>}, {pipeline_mode = #tpu.pipeline_mode<synchronous>, transform_indices = @transform_2, window_bounds = array<i64: 10, 1>}, {pipeline_mode = #tpu.pipeline_mode<synchronous>, transform_indices = @transform_3, window_bounds = array<i64: 30, 128>}, {pipeline_mode = #tpu.pipeline_mode<synchronous>, transform_indices = @transform_4, window_bounds = array<i64: 65, 256>}, {pipeline_mode = #tpu.pipeline_mode<synchronous>, transform_indices = @transform_5, window_bounds = array<i64: 64, 256>}, {pipeline_mode = #tpu.pipeline_mode<synchronous>, transform_indices = @transform_6, window_bounds = array<i64: 2, 16, 32>}, {pipeline_mode = #tpu.pipeline_mode<synchronous>, transform_indices = @transform_7, window_bounds = array<i64: 66, 64>}, {transform_indices = @transform_8, window_bounds = array<i64: 8, 2>}]} {
    %0 = tpu.iota {dimensions = array<i32: 0>} : vector<16x1xi32>
    %c8_i32 = arith.constant 8 : i32
    %1 = vector.broadcast %c8_i32 : i32 to vector<16x1xi32>
    %2 = arith.cmpi slt, %0, %1 : vector<16x1xi32>
    %c0 = arith.constant 0 : index
    %c0_0 = arith.constant 0 : index
    %c0_1 = arith.constant 0 : index
    %3 = vector.load %arg1[%c0, %c0_0, %c0_1] : memref<10x16x30xf32, #tpu.memory_space<vmem>>, vector<10x16x30xf32>
    %4 = vector.shape_cast %3 : vector<10x16x30xf32> to vector<160x30xf32>
    %c0_2 = arith.constant 0 : index
    %c0_3 = arith.constant 0 : index
    %5 = vector.load %arg4[%c0_2, %c0_3] : memref<30x128xf32, #tpu.memory_space<vmem>>, vector<30x128xf32>
    %cst = arith.constant dense<0.000000e+00> : vector<160x128xf32>
    %6 = tpu.matmul %4, %5, %cst {dimension_numbers = #tpu.dot_dimension_numbers<[1], [0], [0], [1], [0, 0, 1, 1], [], []>} : vector<160x30xf32>, vector<30x128xf32>, vector<160x128xf32> -> vector<160x128xf32>
    %7 = vector.shape_cast %6 : vector<160x128xf32> to vector<10x16x128xf32>
    %c0_4 = arith.constant 0 : index
    %c0_5 = arith.constant 0 : index
    %c0_6 = arith.constant 0 : index
    %8 = vector.load %arg10[%c0_4, %c0_5, %c0_6] : memref<10x16x128xf32, #tpu.memory_space<vmem>>, vector<10x16x128xf32>
    tpu.vector_store %arg10[%c0_4, %c0_5, %c0_6], %7 {strides = array<i32>} : memref<10x16x128xf32, #tpu.memory_space<vmem>>, vector<10x16x128xf32>,
    %c0_7 = arith.constant 0 : index
    %c0_8 = arith.constant 0 : index
    %9 = vector.load %arg6[%c0_7, %c0_8] : memref<64x256xf32, #tpu.memory_space<vmem>>, vector<32x256xf32>
    %c0_9 = arith.constant 0 : index
    %c0_10 = arith.constant 0 : index
    %c0_11 = arith.constant 0 : index
    %10 = vector.load %arg7[%c0_9, %c0_10, %c0_11] : memref<2x16x32xf32, #tpu.memory_space<vmem>>, vector<1x16x32xf32>
    %11 = vector.shape_cast %10 : vector<1x16x32xf32> to vector<16x32xf32>
    %cst_12 = arith.constant 0.000000e+00 : f32
    %12 = vector.broadcast %cst_12 : f32 to vector<16x32xf32>
    %c0_i32 = arith.constant 0 : i32
    %13 = arith.index_cast %c0_i32 : i32 to index
    %c0_13 = arith.constant 0 : index
    %c0_14 = arith.constant 0 : index
    %14 = vector.load %arg10[%13, %c0_13, %c0_14] : memref<10x16x128xf32, #tpu.memory_space<vmem>>, vector<1x16x128xf32>
    %15 = vector.shape_cast %14 : vector<1x16x128xf32> to vector<16x128xf32>
    %16 = arith.index_cast %c0_i32 : i32 to index
    %c0_15 = arith.constant 0 : index
    %c0_16 = arith.constant 0 : index
    %17 = vector.load %arg2[%16, %c0_15, %c0_16] : memref<10x16x1xf32, #tpu.memory_space<vmem>>, vector<1x16x1xf32>
    %18 = vector.shape_cast %17 : vector<1x16x1xf32> to vector<16x1xf32>
    %cst_17 = arith.constant dense<0.000000e+00> : vector<16x256xf32>
    %19 = tpu.matmul %12, %9, %cst_17 {dimension_numbers = #tpu.dot_dimension_numbers<[1], [0], [0], [1], [0, 0, 1, 1], [], []>} : vector<16x32xf32>, vector<32x256xf32>, vector<16x256xf32> -> vector<16x256xf32>
    %20 = vector.extract_strided_slice %19 {offsets = [0, 0], sizes = [16, 128], strides = [1, 1]} : vector<16x256xf32> to vector<16x128xf32>
    %21 = vector.extract_strided_slice %19 {offsets = [0, 128], sizes = [16, 128], strides = [1, 1]} : vector<16x256xf32> to vector<16x128xf32>
    %22 = vector.shape_cast %2 : vector<16x1xi1> to vector<16x1xi1>
    %23 = vector.broadcast %22 : vector<16x1xi1> to vector<16x128xi1>
    %24 = arith.select %23, %20, %21 : vector<16x128xi1>, vector<16x128xf32>
    %25 = vector.extract_strided_slice %15 {offsets = [0, 0], sizes = [16, 64], strides = [1, 1]} : vector<16x128xf32> to vector<16x64xf32>
    %26 = vector.extract_strided_slice %24 {offsets = [0, 0], sizes = [16, 64], strides = [1, 1]} : vector<16x128xf32> to vector<16x64xf32>
    %27 = arith.addf %25, %26 : vector<16x64xf32>
    %28 = arith.negf %27 : vector<16x64xf32>
    %29 = math.exp %28 : vector<16x64xf32>
    %cst_18 = arith.constant 1.000000e+00 : f32
    %30 = vector.broadcast %cst_18 : f32 to vector<16x64xf32>
    %31 = arith.addf %30, %29 : vector<16x64xf32>
    %32 = arith.divf %30, %31 : vector<16x64xf32>
    %33 = vector.extract_strided_slice %32 {offsets = [0, 0], sizes = [16, 32], strides = [1, 1]} : vector<16x64xf32> to vector<16x32xf32>
    %34 = vector.extract_strided_slice %32 {offsets = [0, 32], sizes = [16, 32], strides = [1, 1]} : vector<16x64xf32> to vector<16x32xf32>
    %35 = vector.extract_strided_slice %15 {offsets = [0, 64], sizes = [16, 32], strides = [1, 1]} : vector<16x128xf32> to vector<16x32xf32>
    %36 = vector.extract_strided_slice %24 {offsets = [0, 64], sizes = [16, 32], strides = [1, 1]} : vector<16x128xf32> to vector<16x32xf32>
    %37 = arith.addf %36, %11 : vector<16x32xf32>
    %38 = arith.mulf %33, %37 : vector<16x32xf32>
    %39 = arith.addf %35, %38 : vector<16x32xf32>
    %40 = math.tanh %39 : vector<16x32xf32>
    %cst_19 = arith.constant 1.000000e+00 : f32
    %41 = vector.broadcast %cst_19 : f32 to vector<16x32xf32>
    %42 = arith.subf %41, %34 : vector<16x32xf32>
    %43 = arith.subf %40, %12 : vector<16x32xf32>
    %44 = arith.mulf %42, %43 : vector<16x32xf32>
    %45 = vector.broadcast %18 : vector<16x1xf32> to vector<16x32xf32>
    %46 = arith.mulf %45, %44 : vector<16x32xf32>
    %47 = arith.addf %12, %46 : vector<16x32xf32>
    %48 = vector.broadcast %18 : vector<16x1xf32> to vector<16x32xf32>
    %49 = arith.mulf %48, %47 : vector<16x32xf32>
    %50 = arith.index_cast %c0_i32 : i32 to index
    %c0_20 = arith.constant 0 : index
    %c0_21 = arith.constant 0 : index
    %51 = vector.load %arg11[%50, %c0_20, %c0_21] : memref<10x16x32xf32, #tpu.memory_space<vmem>>, vector<1x16x32xf32>
    %52 = vector.shape_cast %51 : vector<1x16x32xf32> to vector<16x32xf32>
    %53 = vector.shape_cast %49 : vector<16x32xf32> to vector<1x16x32xf32>
    tpu.vector_store %arg11[%50, %c0_20, %c0_21], %53 {strides = array<i32>} : memref<10x16x32xf32, #tpu.memory_space<vmem>>, vector<1x16x32xf32>,
    %c9_i32 = arith.constant 9 : i32
    %54 = arith.subi %c9_i32, %c0_i32 : i32
    %55 = arith.index_cast %54 : i32 to index
    %c0_22 = arith.constant 0 : index
    %c0_23 = arith.constant 0 : index
    %56 = vector.load %arg12[%55, %c0_22, %c0_23] : memref<10x16x32xf32, #tpu.memory_space<vmem>>, vector<1x16x32xf32>
    %57 = vector.shape_cast %56 : vector<1x16x32xf32> to vector<16x32xf32>
    %58 = vector.shape_cast %49 : vector<16x32xf32> to vector<1x16x32xf32>
    tpu.vector_store %arg12[%55, %c0_22, %c0_23], %58 {strides = array<i32>} : memref<10x16x32xf32, #tpu.memory_space<vmem>>, vector<1x16x32xf32>,
    %c1_i32 = arith.constant 1 : i32
    %59 = arith.index_cast %c1_i32 : i32 to index
    %c0_24 = arith.constant 0 : index
    %c0_25 = arith.constant 0 : index
    %60 = vector.load %arg10[%59, %c0_24, %c0_25] : memref<10x16x128xf32, #tpu.memory_space<vmem>>, vector<1x16x128xf32>
    %61 = vector.shape_cast %60 : vector<1x16x128xf32> to vector<16x128xf32>
    %62 = arith.index_cast %c1_i32 : i32 to index
    %c0_26 = arith.constant 0 : index
    %c0_27 = arith.constant 0 : index
    %63 = vector.load %arg2[%62, %c0_26, %c0_27] : memref<10x16x1xf32, #tpu.memory_space<vmem>>, vector<1x16x1xf32>
    %64 = vector.shape_cast %63 : vector<1x16x1xf32> to vector<16x1xf32>
    %cst_28 = arith.constant dense<0.000000e+00> : vector<16x256xf32>
    %65 = tpu.matmul %47, %9, %cst_28 {dimension_numbers = #tpu.dot_dimension_numbers<[1], [0], [0], [1], [0, 0, 1, 1], [], []>} : vector<16x32xf32>, vector<32x256xf32>, vector<16x256xf32> -> vector<16x256xf32>
    %66 = vector.extract_strided_slice %65 {offsets = [0, 0], sizes = [16, 128], strides = [1, 1]} : vector<16x256xf32> to vector<16x128xf32>
    %67 = vector.extract_strided_slice %65 {offsets = [0, 128], sizes = [16, 128], strides = [1, 1]} : vector<16x256xf32> to vector<16x128xf32>
    %68 = vector.shape_cast %2 : vector<16x1xi1> to vector<16x1xi1>
    %69 = vector.broadcast %68 : vector<16x1xi1> to vector<16x128xi1>
    %70 = arith.select %69, %66, %67 : vector<16x128xi1>, vector<16x128xf32>
    %71 = vector.extract_strided_slice %61 {offsets = [0, 0], sizes = [16, 64], strides = [1, 1]} : vector<16x128xf32> to vector<16x64xf32>
    %72 = vector.extract_strided_slice %70 {offsets = [0, 0], sizes = [16, 64], strides = [1, 1]} : vector<16x128xf32> to vector<16x64xf32>
    %73 = arith.addf %71, %72 : vector<16x64xf32>
    %74 = arith.negf %73 : vector<16x64xf32>
    %75 = math.exp %74 : vector<16x64xf32>
    %cst_29 = arith.constant 1.000000e+00 : f32
    %76 = vector.broadcast %cst_29 : f32 to vector<16x64xf32>
    %77 = arith.addf %76, %75 : vector<16x64xf32>
    %78 = arith.divf %76, %77 : vector<16x64xf32>
    %79 = vector.extract_strided_slice %78 {offsets = [0, 0], sizes = [16, 32], strides = [1, 1]} : vector<16x64xf32> to vector<16x32xf32>
    %80 = vector.extract_strided_slice %78 {offsets = [0, 32], sizes = [16, 32], strides = [1, 1]} : vector<16x64xf32> to vector<16x32xf32>
    %81 = vector.extract_strided_slice %61 {offsets = [0, 64], sizes = [16, 32], strides = [1, 1]} : vector<16x128xf32> to vector<16x32xf32>
    %82 = vector.extract_strided_slice %70 {offsets = [0, 64], sizes = [16, 32], strides = [1, 1]} : vector<16x128xf32> to vector<16x32xf32>
    %83 = arith.addf %82, %11 : vector<16x32xf32>
    %84 = arith.mulf %79, %83 : vector<16x32xf32>
    %85 = arith.addf %81, %84 : vector<16x32xf32>
    %86 = math.tanh %85 : vector<16x32xf32>
    %cst_30 = arith.constant 1.000000e+00 : f32
    %87 = vector.broadcast %cst_30 : f32 to vector<16x32xf32>
    %88 = arith.subf %87, %80 : vector<16x32xf32>
    %89 = arith.subf %86, %47 : vector<16x32xf32>
    %90 = arith.mulf %88, %89 : vector<16x32xf32>
    %91 = vector.broadcast %64 : vector<16x1xf32> to vector<16x32xf32>
    %92 = arith.mulf %91, %90 : vector<16x32xf32>
    %93 = arith.addf %47, %92 : vector<16x32xf32>
    %94 = vector.broadcast %64 : vector<16x1xf32> to vector<16x32xf32>
    %95 = arith.mulf %94, %93 : vector<16x32xf32>
    %96 = arith.index_cast %c1_i32 : i32 to index
    %c0_31 = arith.constant 0 : index
    %c0_32 = arith.constant 0 : index
    %97 = vector.load %arg11[%96, %c0_31, %c0_32] : memref<10x16x32xf32, #tpu.memory_space<vmem>>, vector<1x16x32xf32>
    %98 = vector.shape_cast %97 : vector<1x16x32xf32> to vector<16x32xf32>
    %99 = vector.shape_cast %95 : vector<16x32xf32> to vector<1x16x32xf32>
    tpu.vector_store %arg11[%96, %c0_31, %c0_32], %99 {strides = array<i32>} : memref<10x16x32xf32, #tpu.memory_space<vmem>>, vector<1x16x32xf32>,
    %c9_i32_33 = arith.constant 9 : i32
    %100 = arith.subi %c9_i32_33, %c1_i32 : i32
    %101 = arith.index_cast %100 : i32 to index
    %c0_34 = arith.constant 0 : index
    %c0_35 = arith.constant 0 : index
    %102 = vector.load %arg12[%101, %c0_34, %c0_35] : memref<10x16x32xf32, #tpu.memory_space<vmem>>, vector<1x16x32xf32>
    %103 = vector.shape_cast %102 : vector<1x16x32xf32> to vector<16x32xf32>
    %104 = vector.shape_cast %95 : vector<16x32xf32> to vector<1x16x32xf32>
    tpu.vector_store %arg12[%101, %c0_34, %c0_35], %104 {strides = array<i32>} : memref<10x16x32xf32, #tpu.memory_space<vmem>>, vector<1x16x32xf32>,
    %c2_i32 = arith.constant 2 : i32
    %105 = arith.index_cast %c2_i32 : i32 to index
    %c0_36 = arith.constant 0 : index
    %c0_37 = arith.constant 0 : index
    %106 = vector.load %arg10[%105, %c0_36, %c0_37] : memref<10x16x128xf32, #tpu.memory_space<vmem>>, vector<1x16x128xf32>
    %107 = vector.shape_cast %106 : vector<1x16x128xf32> to vector<16x128xf32>
    %108 = arith.index_cast %c2_i32 : i32 to index
    %c0_38 = arith.constant 0 : index
    %c0_39 = arith.constant 0 : index
    %109 = vector.load %arg2[%108, %c0_38, %c0_39] : memref<10x16x1xf32, #tpu.memory_space<vmem>>, vector<1x16x1xf32>
    %110 = vector.shape_cast %109 : vector<1x16x1xf32> to vector<16x1xf32>
    %cst_40 = arith.constant dense<0.000000e+00> : vector<16x256xf32>
    %111 = tpu.matmul %93, %9, %cst_40 {dimension_numbers = #tpu.dot_dimension_numbers<[1], [0], [0], [1], [0, 0, 1, 1], [], []>} : vector<16x32xf32>, vector<32x256xf32>, vector<16x256xf32> -> vector<16x256xf32>
    %112 = vector.extract_strided_slice %111 {offsets = [0, 0], sizes = [16, 128], strides = [1, 1]} : vector<16x256xf32> to vector<16x128xf32>
    %113 = vector.extract_strided_slice %111 {offsets = [0, 128], sizes = [16, 128], strides = [1, 1]} : vector<16x256xf32> to vector<16x128xf32>
    %114 = vector.shape_cast %2 : vector<16x1xi1> to vector<16x1xi1>
    %115 = vector.broadcast %114 : vector<16x1xi1> to vector<16x128xi1>
    %116 = arith.select %115, %112, %113 : vector<16x128xi1>, vector<16x128xf32>
    %117 = vector.extract_strided_slice %107 {offsets = [0, 0], sizes = [16, 64], strides = [1, 1]} : vector<16x128xf32> to vector<16x64xf32>
    %118 = vector.extract_strided_slice %116 {offsets = [0, 0], sizes = [16, 64], strides = [1, 1]} : vector<16x128xf32> to vector<16x64xf32>
    %119 = arith.addf %117, %118 : vector<16x64xf32>
    %120 = arith.negf %119 : vector<16x64xf32>
    %121 = math.exp %120 : vector<16x64xf32>
    %cst_41 = arith.constant 1.000000e+00 : f32
    %122 = vector.broadcast %cst_41 : f32 to vector<16x64xf32>
    %123 = arith.addf %122, %121 : vector<16x64xf32>
    %124 = arith.divf %122, %123 : vector<16x64xf32>
    %125 = vector.extract_strided_slice %124 {offsets = [0, 0], sizes = [16, 32], strides = [1, 1]} : vector<16x64xf32> to vector<16x32xf32>
    %126 = vector.extract_strided_slice %124 {offsets = [0, 32], sizes = [16, 32], strides = [1, 1]} : vector<16x64xf32> to vector<16x32xf32>
    %127 = vector.extract_strided_slice %107 {offsets = [0, 64], sizes = [16, 32], strides = [1, 1]} : vector<16x128xf32> to vector<16x32xf32>
    %128 = vector.extract_strided_slice %116 {offsets = [0, 64], sizes = [16, 32], strides = [1, 1]} : vector<16x128xf32> to vector<16x32xf32>
    %129 = arith.addf %128, %11 : vector<16x32xf32>
    %130 = arith.mulf %125, %129 : vector<16x32xf32>
    %131 = arith.addf %127, %130 : vector<16x32xf32>
    %132 = math.tanh %131 : vector<16x32xf32>
    %cst_42 = arith.constant 1.000000e+00 : f32
    %133 = vector.broadcast %cst_42 : f32 to vector<16x32xf32>
    %134 = arith.subf %133, %126 : vector<16x32xf32>
    %135 = arith.subf %132, %93 : vector<16x32xf32>
    %136 = arith.mulf %134, %135 : vector<16x32xf32>
    %137 = vector.broadcast %110 : vector<16x1xf32> to vector<16x32xf32>
    %138 = arith.mulf %137, %136 : vector<16x32xf32>
    %139 = arith.addf %93, %138 : vector<16x32xf32>
    %140 = vector.broadcast %110 : vector<16x1xf32> to vector<16x32xf32>
    %141 = arith.mulf %140, %139 : vector<16x32xf32>
    %142 = arith.index_cast %c2_i32 : i32 to index
    %c0_43 = arith.constant 0 : index
    %c0_44 = arith.constant 0 : index
    %143 = vector.load %arg11[%142, %c0_43, %c0_44] : memref<10x16x32xf32, #tpu.memory_space<vmem>>, vector<1x16x32xf32>
    %144 = vector.shape_cast %143 : vector<1x16x32xf32> to vector<16x32xf32>
    %145 = vector.shape_cast %141 : vector<16x32xf32> to vector<1x16x32xf32>
    tpu.vector_store %arg11[%142, %c0_43, %c0_44], %145 {strides = array<i32>} : memref<10x16x32xf32, #tpu.memory_space<vmem>>, vector<1x16x32xf32>,
    %c9_i32_45 = arith.constant 9 : i32
    %146 = arith.subi %c9_i32_45, %c2_i32 : i32
    %147 = arith.index_cast %146 : i32 to index
    %c0_46 = arith.constant 0 : index
    %c0_47 = arith.constant 0 : index
    %148 = vector.load %arg12[%147, %c0_46, %c0_47] : memref<10x16x32xf32, #tpu.memory_space<vmem>>, vector<1x16x32xf32>
    %149 = vector.shape_cast %148 : vector<1x16x32xf32> to vector<16x32xf32>
    %150 = vector.shape_cast %141 : vector<16x32xf32> to vector<1x16x32xf32>
    tpu.vector_store %arg12[%147, %c0_46, %c0_47], %150 {strides = array<i32>} : memref<10x16x32xf32, #tpu.memory_space<vmem>>, vector<1x16x32xf32>,
    %c3_i32 = arith.constant 3 : i32
    %151 = arith.index_cast %c3_i32 : i32 to index
    %c0_48 = arith.constant 0 : index
    %c0_49 = arith.constant 0 : index
    %152 = vector.load %arg10[%151, %c0_48, %c0_49] : memref<10x16x128xf32, #tpu.memory_space<vmem>>, vector<1x16x128xf32>
    %153 = vector.shape_cast %152 : vector<1x16x128xf32> to vector<16x128xf32>
    %154 = arith.index_cast %c3_i32 : i32 to index
    %c0_50 = arith.constant 0 : index
    %c0_51 = arith.constant 0 : index
    %155 = vector.load %arg2[%154, %c0_50, %c0_51] : memref<10x16x1xf32, #tpu.memory_space<vmem>>, vector<1x16x1xf32>
    %156 = vector.shape_cast %155 : vector<1x16x1xf32> to vector<16x1xf32>
    %cst_52 = arith.constant dense<0.000000e+00> : vector<16x256xf32>
    %157 = tpu.matmul %139, %9, %cst_52 {dimension_numbers = #tpu.dot_dimension_numbers<[1], [0], [0], [1], [0, 0, 1, 1], [], []>} : vector<16x32xf32>, vector<32x256xf32>, vector<16x256xf32> -> vector<16x256xf32>
    %158 = vector.extract_strided_slice %157 {offsets = [0, 0], sizes = [16, 128], strides = [1, 1]} : vector<16x256xf32> to vector<16x128xf32>
    %159 = vector.extract_strided_slice %157 {offsets = [0, 128], sizes = [16, 128], strides = [1, 1]} : vector<16x256xf32> to vector<16x128xf32>
    %160 = vector.shape_cast %2 : vector<16x1xi1> to vector<16x1xi1>
    %161 = vector.broadcast %160 : vector<16x1xi1> to vector<16x128xi1>
    %162 = arith.select %161, %158, %159 : vector<16x128xi1>, vector<16x128xf32>
    %163 = vector.extract_strided_slice %153 {offsets = [0, 0], sizes = [16, 64], strides = [1, 1]} : vector<16x128xf32> to vector<16x64xf32>
    %164 = vector.extract_strided_slice %162 {offsets = [0, 0], sizes = [16, 64], strides = [1, 1]} : vector<16x128xf32> to vector<16x64xf32>
    %165 = arith.addf %163, %164 : vector<16x64xf32>
    %166 = arith.negf %165 : vector<16x64xf32>
    %167 = math.exp %166 : vector<16x64xf32>
    %cst_53 = arith.constant 1.000000e+00 : f32
    %168 = vector.broadcast %cst_53 : f32 to vector<16x64xf32>
    %169 = arith.addf %168, %167 : vector<16x64xf32>
    %170 = arith.divf %168, %169 : vector<16x64xf32>
    %171 = vector.extract_strided_slice %170 {offsets = [0, 0], sizes = [16, 32], strides = [1, 1]} : vector<16x64xf32> to vector<16x32xf32>
    %172 = vector.extract_strided_slice %170 {offsets = [0, 32], sizes = [16, 32], strides = [1, 1]} : vector<16x64xf32> to vector<16x32xf32>
    %173 = vector.extract_strided_slice %153 {offsets = [0, 64], sizes = [16, 32], strides = [1, 1]} : vector<16x128xf32> to vector<16x32xf32>
    %174 = vector.extract_strided_slice %162 {offsets = [0, 64], sizes = [16, 32], strides = [1, 1]} : vector<16x128xf32> to vector<16x32xf32>
    %175 = arith.addf %174, %11 : vector<16x32xf32>
    %176 = arith.mulf %171, %175 : vector<16x32xf32>
    %177 = arith.addf %173, %176 : vector<16x32xf32>
    %178 = math.tanh %177 : vector<16x32xf32>
    %cst_54 = arith.constant 1.000000e+00 : f32
    %179 = vector.broadcast %cst_54 : f32 to vector<16x32xf32>
    %180 = arith.subf %179, %172 : vector<16x32xf32>
    %181 = arith.subf %178, %139 : vector<16x32xf32>
    %182 = arith.mulf %180, %181 : vector<16x32xf32>
    %183 = vector.broadcast %156 : vector<16x1xf32> to vector<16x32xf32>
    %184 = arith.mulf %183, %182 : vector<16x32xf32>
    %185 = arith.addf %139, %184 : vector<16x32xf32>
    %186 = vector.broadcast %156 : vector<16x1xf32> to vector<16x32xf32>
    %187 = arith.mulf %186, %185 : vector<16x32xf32>
    %188 = arith.index_cast %c3_i32 : i32 to index
    %c0_55 = arith.constant 0 : index
    %c0_56 = arith.constant 0 : index
    %189 = vector.load %arg11[%188, %c0_55, %c0_56] : memref<10x16x32xf32, #tpu.memory_space<vmem>>, vector<1x16x32xf32>
    %190 = vector.shape_cast %189 : vector<1x16x32xf32> to vector<16x32xf32>
    %191 = vector.shape_cast %187 : vector<16x32xf32> to vector<1x16x32xf32>
    tpu.vector_store %arg11[%188, %c0_55, %c0_56], %191 {strides = array<i32>} : memref<10x16x32xf32, #tpu.memory_space<vmem>>, vector<1x16x32xf32>,
    %c9_i32_57 = arith.constant 9 : i32
    %192 = arith.subi %c9_i32_57, %c3_i32 : i32
    %193 = arith.index_cast %192 : i32 to index
    %c0_58 = arith.constant 0 : index
    %c0_59 = arith.constant 0 : index
    %194 = vector.load %arg12[%193, %c0_58, %c0_59] : memref<10x16x32xf32, #tpu.memory_space<vmem>>, vector<1x16x32xf32>
    %195 = vector.shape_cast %194 : vector<1x16x32xf32> to vector<16x32xf32>
    %196 = vector.shape_cast %187 : vector<16x32xf32> to vector<1x16x32xf32>
    tpu.vector_store %arg12[%193, %c0_58, %c0_59], %196 {strides = array<i32>} : memref<10x16x32xf32, #tpu.memory_space<vmem>>, vector<1x16x32xf32>,
    %c4_i32 = arith.constant 4 : i32
    %197 = arith.index_cast %c4_i32 : i32 to index
    %c0_60 = arith.constant 0 : index
    %c0_61 = arith.constant 0 : index
    %198 = vector.load %arg10[%197, %c0_60, %c0_61] : memref<10x16x128xf32, #tpu.memory_space<vmem>>, vector<1x16x128xf32>
    %199 = vector.shape_cast %198 : vector<1x16x128xf32> to vector<16x128xf32>
    %200 = arith.index_cast %c4_i32 : i32 to index
    %c0_62 = arith.constant 0 : index
    %c0_63 = arith.constant 0 : index
    %201 = vector.load %arg2[%200, %c0_62, %c0_63] : memref<10x16x1xf32, #tpu.memory_space<vmem>>, vector<1x16x1xf32>
    %202 = vector.shape_cast %201 : vector<1x16x1xf32> to vector<16x1xf32>
    %cst_64 = arith.constant dense<0.000000e+00> : vector<16x256xf32>
    %203 = tpu.matmul %185, %9, %cst_64 {dimension_numbers = #tpu.dot_dimension_numbers<[1], [0], [0], [1], [0, 0, 1, 1], [], []>} : vector<16x32xf32>, vector<32x256xf32>, vector<16x256xf32> -> vector<16x256xf32>
    %204 = vector.extract_strided_slice %203 {offsets = [0, 0], sizes = [16, 128], strides = [1, 1]} : vector<16x256xf32> to vector<16x128xf32>
    %205 = vector.extract_strided_slice %203 {offsets = [0, 128], sizes = [16, 128], strides = [1, 1]} : vector<16x256xf32> to vector<16x128xf32>
    %206 = vector.shape_cast %2 : vector<16x1xi1> to vector<16x1xi1>
    %207 = vector.broadcast %206 : vector<16x1xi1> to vector<16x128xi1>
    %208 = arith.select %207, %204, %205 : vector<16x128xi1>, vector<16x128xf32>
    %209 = vector.extract_strided_slice %199 {offsets = [0, 0], sizes = [16, 64], strides = [1, 1]} : vector<16x128xf32> to vector<16x64xf32>
    %210 = vector.extract_strided_slice %208 {offsets = [0, 0], sizes = [16, 64], strides = [1, 1]} : vector<16x128xf32> to vector<16x64xf32>
    %211 = arith.addf %209, %210 : vector<16x64xf32>
    %212 = arith.negf %211 : vector<16x64xf32>
    %213 = math.exp %212 : vector<16x64xf32>
    %cst_65 = arith.constant 1.000000e+00 : f32
    %214 = vector.broadcast %cst_65 : f32 to vector<16x64xf32>
    %215 = arith.addf %214, %213 : vector<16x64xf32>
    %216 = arith.divf %214, %215 : vector<16x64xf32>
    %217 = vector.extract_strided_slice %216 {offsets = [0, 0], sizes = [16, 32], strides = [1, 1]} : vector<16x64xf32> to vector<16x32xf32>
    %218 = vector.extract_strided_slice %216 {offsets = [0, 32], sizes = [16, 32], strides = [1, 1]} : vector<16x64xf32> to vector<16x32xf32>
    %219 = vector.extract_strided_slice %199 {offsets = [0, 64], sizes = [16, 32], strides = [1, 1]} : vector<16x128xf32> to vector<16x32xf32>
    %220 = vector.extract_strided_slice %208 {offsets = [0, 64], sizes = [16, 32], strides = [1, 1]} : vector<16x128xf32> to vector<16x32xf32>
    %221 = arith.addf %220, %11 : vector<16x32xf32>
    %222 = arith.mulf %217, %221 : vector<16x32xf32>
    %223 = arith.addf %219, %222 : vector<16x32xf32>
    %224 = math.tanh %223 : vector<16x32xf32>
    %cst_66 = arith.constant 1.000000e+00 : f32
    %225 = vector.broadcast %cst_66 : f32 to vector<16x32xf32>
    %226 = arith.subf %225, %218 : vector<16x32xf32>
    %227 = arith.subf %224, %185 : vector<16x32xf32>
    %228 = arith.mulf %226, %227 : vector<16x32xf32>
    %229 = vector.broadcast %202 : vector<16x1xf32> to vector<16x32xf32>
    %230 = arith.mulf %229, %228 : vector<16x32xf32>
    %231 = arith.addf %185, %230 : vector<16x32xf32>
    %232 = vector.broadcast %202 : vector<16x1xf32> to vector<16x32xf32>
    %233 = arith.mulf %232, %231 : vector<16x32xf32>
    %234 = arith.index_cast %c4_i32 : i32 to index
    %c0_67 = arith.constant 0 : index
    %c0_68 = arith.constant 0 : index
    %235 = vector.load %arg11[%234, %c0_67, %c0_68] : memref<10x16x32xf32, #tpu.memory_space<vmem>>, vector<1x16x32xf32>
    %236 = vector.shape_cast %235 : vector<1x16x32xf32> to vector<16x32xf32>
    %237 = vector.shape_cast %233 : vector<16x32xf32> to vector<1x16x32xf32>
    tpu.vector_store %arg11[%234, %c0_67, %c0_68], %237 {strides = array<i32>} : memref<10x16x32xf32, #tpu.memory_space<vmem>>, vector<1x16x32xf32>,
    %c9_i32_69 = arith.constant 9 : i32
    %238 = arith.subi %c9_i32_69, %c4_i32 : i32
    %239 = arith.index_cast %238 : i32 to index
    %c0_70 = arith.constant 0 : index
    %c0_71 = arith.constant 0 : index
    %240 = vector.load %arg12[%239, %c0_70, %c0_71] : memref<10x16x32xf32, #tpu.memory_space<vmem>>, vector<1x16x32xf32>
    %241 = vector.shape_cast %240 : vector<1x16x32xf32> to vector<16x32xf32>
    %242 = vector.shape_cast %233 : vector<16x32xf32> to vector<1x16x32xf32>
    tpu.vector_store %arg12[%239, %c0_70, %c0_71], %242 {strides = array<i32>} : memref<10x16x32xf32, #tpu.memory_space<vmem>>, vector<1x16x32xf32>,
    %c5_i32 = arith.constant 5 : i32
    %243 = arith.index_cast %c5_i32 : i32 to index
    %c0_72 = arith.constant 0 : index
    %c0_73 = arith.constant 0 : index
    %244 = vector.load %arg10[%243, %c0_72, %c0_73] : memref<10x16x128xf32, #tpu.memory_space<vmem>>, vector<1x16x128xf32>
    %245 = vector.shape_cast %244 : vector<1x16x128xf32> to vector<16x128xf32>
    %246 = arith.index_cast %c5_i32 : i32 to index
    %c0_74 = arith.constant 0 : index
    %c0_75 = arith.constant 0 : index
    %247 = vector.load %arg2[%246, %c0_74, %c0_75] : memref<10x16x1xf32, #tpu.memory_space<vmem>>, vector<1x16x1xf32>
    %248 = vector.shape_cast %247 : vector<1x16x1xf32> to vector<16x1xf32>
    %cst_76 = arith.constant dense<0.000000e+00> : vector<16x256xf32>
    %249 = tpu.matmul %231, %9, %cst_76 {dimension_numbers = #tpu.dot_dimension_numbers<[1], [0], [0], [1], [0, 0, 1, 1], [], []>} : vector<16x32xf32>, vector<32x256xf32>, vector<16x256xf32> -> vector<16x256xf32>
    %250 = vector.extract_strided_slice %249 {offsets = [0, 0], sizes = [16, 128], strides = [1, 1]} : vector<16x256xf32> to vector<16x128xf32>
    %251 = vector.extract_strided_slice %249 {offsets = [0, 128], sizes = [16, 128], strides = [1, 1]} : vector<16x256xf32> to vector<16x128xf32>
    %252 = vector.shape_cast %2 : vector<16x1xi1> to vector<16x1xi1>
    %253 = vector.broadcast %252 : vector<16x1xi1> to vector<16x128xi1>
    %254 = arith.select %253, %250, %251 : vector<16x128xi1>, vector<16x128xf32>
    %255 = vector.extract_strided_slice %245 {offsets = [0, 0], sizes = [16, 64], strides = [1, 1]} : vector<16x128xf32> to vector<16x64xf32>
    %256 = vector.extract_strided_slice %254 {offsets = [0, 0], sizes = [16, 64], strides = [1, 1]} : vector<16x128xf32> to vector<16x64xf32>
    %257 = arith.addf %255, %256 : vector<16x64xf32>
    %258 = arith.negf %257 : vector<16x64xf32>
    %259 = math.exp %258 : vector<16x64xf32>
    %cst_77 = arith.constant 1.000000e+00 : f32
    %260 = vector.broadcast %cst_77 : f32 to vector<16x64xf32>
    %261 = arith.addf %260, %259 : vector<16x64xf32>
    %262 = arith.divf %260, %261 : vector<16x64xf32>
    %263 = vector.extract_strided_slice %262 {offsets = [0, 0], sizes = [16, 32], strides = [1, 1]} : vector<16x64xf32> to vector<16x32xf32>
    %264 = vector.extract_strided_slice %262 {offsets = [0, 32], sizes = [16, 32], strides = [1, 1]} : vector<16x64xf32> to vector<16x32xf32>
    %265 = vector.extract_strided_slice %245 {offsets = [0, 64], sizes = [16, 32], strides = [1, 1]} : vector<16x128xf32> to vector<16x32xf32>
    %266 = vector.extract_strided_slice %254 {offsets = [0, 64], sizes = [16, 32], strides = [1, 1]} : vector<16x128xf32> to vector<16x32xf32>
    %267 = arith.addf %266, %11 : vector<16x32xf32>
    %268 = arith.mulf %263, %267 : vector<16x32xf32>
    %269 = arith.addf %265, %268 : vector<16x32xf32>
    %270 = math.tanh %269 : vector<16x32xf32>
    %cst_78 = arith.constant 1.000000e+00 : f32
    %271 = vector.broadcast %cst_78 : f32 to vector<16x32xf32>
    %272 = arith.subf %271, %264 : vector<16x32xf32>
    %273 = arith.subf %270, %231 : vector<16x32xf32>
    %274 = arith.mulf %272, %273 : vector<16x32xf32>
    %275 = vector.broadcast %248 : vector<16x1xf32> to vector<16x32xf32>
    %276 = arith.mulf %275, %274 : vector<16x32xf32>
    %277 = arith.addf %231, %276 : vector<16x32xf32>
    %278 = vector.broadcast %248 : vector<16x1xf32> to vector<16x32xf32>
    %279 = arith.mulf %278, %277 : vector<16x32xf32>
    %280 = arith.index_cast %c5_i32 : i32 to index
    %c0_79 = arith.constant 0 : index
    %c0_80 = arith.constant 0 : index
    %281 = vector.load %arg11[%280, %c0_79, %c0_80] : memref<10x16x32xf32, #tpu.memory_space<vmem>>, vector<1x16x32xf32>
    %282 = vector.shape_cast %281 : vector<1x16x32xf32> to vector<16x32xf32>
    %283 = vector.shape_cast %279 : vector<16x32xf32> to vector<1x16x32xf32>
    tpu.vector_store %arg11[%280, %c0_79, %c0_80], %283 {strides = array<i32>} : memref<10x16x32xf32, #tpu.memory_space<vmem>>, vector<1x16x32xf32>,
    %c9_i32_81 = arith.constant 9 : i32
    %284 = arith.subi %c9_i32_81, %c5_i32 : i32
    %285 = arith.index_cast %284 : i32 to index
    %c0_82 = arith.constant 0 : index
    %c0_83 = arith.constant 0 : index
    %286 = vector.load %arg12[%285, %c0_82, %c0_83] : memref<10x16x32xf32, #tpu.memory_space<vmem>>, vector<1x16x32xf32>
    %287 = vector.shape_cast %286 : vector<1x16x32xf32> to vector<16x32xf32>
    %288 = vector.shape_cast %279 : vector<16x32xf32> to vector<1x16x32xf32>
    tpu.vector_store %arg12[%285, %c0_82, %c0_83], %288 {strides = array<i32>} : memref<10x16x32xf32, #tpu.memory_space<vmem>>, vector<1x16x32xf32>,
    %c6_i32 = arith.constant 6 : i32
    %289 = arith.index_cast %c6_i32 : i32 to index
    %c0_84 = arith.constant 0 : index
    %c0_85 = arith.constant 0 : index
    %290 = vector.load %arg10[%289, %c0_84, %c0_85] : memref<10x16x128xf32, #tpu.memory_space<vmem>>, vector<1x16x128xf32>
    %291 = vector.shape_cast %290 : vector<1x16x128xf32> to vector<16x128xf32>
    %292 = arith.index_cast %c6_i32 : i32 to index
    %c0_86 = arith.constant 0 : index
    %c0_87 = arith.constant 0 : index
    %293 = vector.load %arg2[%292, %c0_86, %c0_87] : memref<10x16x1xf32, #tpu.memory_space<vmem>>, vector<1x16x1xf32>
    %294 = vector.shape_cast %293 : vector<1x16x1xf32> to vector<16x1xf32>
    %cst_88 = arith.constant dense<0.000000e+00> : vector<16x256xf32>
    %295 = tpu.matmul %277, %9, %cst_88 {dimension_numbers = #tpu.dot_dimension_numbers<[1], [0], [0], [1], [0, 0, 1, 1], [], []>} : vector<16x32xf32>, vector<32x256xf32>, vector<16x256xf32> -> vector<16x256xf32>
    %296 = vector.extract_strided_slice %295 {offsets = [0, 0], sizes = [16, 128], strides = [1, 1]} : vector<16x256xf32> to vector<16x128xf32>
    %297 = vector.extract_strided_slice %295 {offsets = [0, 128], sizes = [16, 128], strides = [1, 1]} : vector<16x256xf32> to vector<16x128xf32>
    %298 = vector.shape_cast %2 : vector<16x1xi1> to vector<16x1xi1>
    %299 = vector.broadcast %298 : vector<16x1xi1> to vector<16x128xi1>
    %300 = arith.select %299, %296, %297 : vector<16x128xi1>, vector<16x128xf32>
    %301 = vector.extract_strided_slice %291 {offsets = [0, 0], sizes = [16, 64], strides = [1, 1]} : vector<16x128xf32> to vector<16x64xf32>
    %302 = vector.extract_strided_slice %300 {offsets = [0, 0], sizes = [16, 64], strides = [1, 1]} : vector<16x128xf32> to vector<16x64xf32>
    %303 = arith.addf %301, %302 : vector<16x64xf32>
    %304 = arith.negf %303 : vector<16x64xf32>
    %305 = math.exp %304 : vector<16x64xf32>
    %cst_89 = arith.constant 1.000000e+00 : f32
    %306 = vector.broadcast %cst_89 : f32 to vector<16x64xf32>
    %307 = arith.addf %306, %305 : vector<16x64xf32>
    %308 = arith.divf %306, %307 : vector<16x64xf32>
    %309 = vector.extract_strided_slice %308 {offsets = [0, 0], sizes = [16, 32], strides = [1, 1]} : vector<16x64xf32> to vector<16x32xf32>
    %310 = vector.extract_strided_slice %308 {offsets = [0, 32], sizes = [16, 32], strides = [1, 1]} : vector<16x64xf32> to vector<16x32xf32>
    %311 = vector.extract_strided_slice %291 {offsets = [0, 64], sizes = [16, 32], strides = [1, 1]} : vector<16x128xf32> to vector<16x32xf32>
    %312 = vector.extract_strided_slice %300 {offsets = [0, 64], sizes = [16, 32], strides = [1, 1]} : vector<16x128xf32> to vector<16x32xf32>
    %313 = arith.addf %312, %11 : vector<16x32xf32>
    %314 = arith.mulf %309, %313 : vector<16x32xf32>
    %315 = arith.addf %311, %314 : vector<16x32xf32>
    %316 = math.tanh %315 : vector<16x32xf32>
    %cst_90 = arith.constant 1.000000e+00 : f32
    %317 = vector.broadcast %cst_90 : f32 to vector<16x32xf32>
    %318 = arith.subf %317, %310 : vector<16x32xf32>
    %319 = arith.subf %316, %277 : vector<16x32xf32>
    %320 = arith.mulf %318, %319 : vector<16x32xf32>
    %321 = vector.broadcast %294 : vector<16x1xf32> to vector<16x32xf32>
    %322 = arith.mulf %321, %320 : vector<16x32xf32>
    %323 = arith.addf %277, %322 : vector<16x32xf32>
    %324 = vector.broadcast %294 : vector<16x1xf32> to vector<16x32xf32>
    %325 = arith.mulf %324, %323 : vector<16x32xf32>
    %326 = arith.index_cast %c6_i32 : i32 to index
    %c0_91 = arith.constant 0 : index
    %c0_92 = arith.constant 0 : index
    %327 = vector.load %arg11[%326, %c0_91, %c0_92] : memref<10x16x32xf32, #tpu.memory_space<vmem>>, vector<1x16x32xf32>
    %328 = vector.shape_cast %327 : vector<1x16x32xf32> to vector<16x32xf32>
    %329 = vector.shape_cast %325 : vector<16x32xf32> to vector<1x16x32xf32>
    tpu.vector_store %arg11[%326, %c0_91, %c0_92], %329 {strides = array<i32>} : memref<10x16x32xf32, #tpu.memory_space<vmem>>, vector<1x16x32xf32>,
    %c9_i32_93 = arith.constant 9 : i32
    %330 = arith.subi %c9_i32_93, %c6_i32 : i32
    %331 = arith.index_cast %330 : i32 to index
    %c0_94 = arith.constant 0 : index
    %c0_95 = arith.constant 0 : index
    %332 = vector.load %arg12[%331, %c0_94, %c0_95] : memref<10x16x32xf32, #tpu.memory_space<vmem>>, vector<1x16x32xf32>
    %333 = vector.shape_cast %332 : vector<1x16x32xf32> to vector<16x32xf32>
    %334 = vector.shape_cast %325 : vector<16x32xf32> to vector<1x16x32xf32>
    tpu.vector_store %arg12[%331, %c0_94, %c0_95], %334 {strides = array<i32>} : memref<10x16x32xf32, #tpu.memory_space<vmem>>, vector<1x16x32xf32>,
    %c7_i32 = arith.constant 7 : i32
    %335 = arith.index_cast %c7_i32 : i32 to index
    %c0_96 = arith.constant 0 : index
    %c0_97 = arith.constant 0 : index
    %336 = vector.load %arg10[%335, %c0_96, %c0_97] : memref<10x16x128xf32, #tpu.memory_space<vmem>>, vector<1x16x128xf32>
    %337 = vector.shape_cast %336 : vector<1x16x128xf32> to vector<16x128xf32>
    %338 = arith.index_cast %c7_i32 : i32 to index
    %c0_98 = arith.constant 0 : index
    %c0_99 = arith.constant 0 : index
    %339 = vector.load %arg2[%338, %c0_98, %c0_99] : memref<10x16x1xf32, #tpu.memory_space<vmem>>, vector<1x16x1xf32>
    %340 = vector.shape_cast %339 : vector<1x16x1xf32> to vector<16x1xf32>
    %cst_100 = arith.constant dense<0.000000e+00> : vector<16x256xf32>
    %341 = tpu.matmul %323, %9, %cst_100 {dimension_numbers = #tpu.dot_dimension_numbers<[1], [0], [0], [1], [0, 0, 1, 1], [], []>} : vector<16x32xf32>, vector<32x256xf32>, vector<16x256xf32> -> vector<16x256xf32>
    %342 = vector.extract_strided_slice %341 {offsets = [0, 0], sizes = [16, 128], strides = [1, 1]} : vector<16x256xf32> to vector<16x128xf32>
    %343 = vector.extract_strided_slice %341 {offsets = [0, 128], sizes = [16, 128], strides = [1, 1]} : vector<16x256xf32> to vector<16x128xf32>
    %344 = vector.shape_cast %2 : vector<16x1xi1> to vector<16x1xi1>
    %345 = vector.broadcast %344 : vector<16x1xi1> to vector<16x128xi1>
    %346 = arith.select %345, %342, %343 : vector<16x128xi1>, vector<16x128xf32>
    %347 = vector.extract_strided_slice %337 {offsets = [0, 0], sizes = [16, 64], strides = [1, 1]} : vector<16x128xf32> to vector<16x64xf32>
    %348 = vector.extract_strided_slice %346 {offsets = [0, 0], sizes = [16, 64], strides = [1, 1]} : vector<16x128xf32> to vector<16x64xf32>
    %349 = arith.addf %347, %348 : vector<16x64xf32>
    %350 = arith.negf %349 : vector<16x64xf32>
    %351 = math.exp %350 : vector<16x64xf32>
    %cst_101 = arith.constant 1.000000e+00 : f32
    %352 = vector.broadcast %cst_101 : f32 to vector<16x64xf32>
    %353 = arith.addf %352, %351 : vector<16x64xf32>
    %354 = arith.divf %352, %353 : vector<16x64xf32>
    %355 = vector.extract_strided_slice %354 {offsets = [0, 0], sizes = [16, 32], strides = [1, 1]} : vector<16x64xf32> to vector<16x32xf32>
    %356 = vector.extract_strided_slice %354 {offsets = [0, 32], sizes = [16, 32], strides = [1, 1]} : vector<16x64xf32> to vector<16x32xf32>
    %357 = vector.extract_strided_slice %337 {offsets = [0, 64], sizes = [16, 32], strides = [1, 1]} : vector<16x128xf32> to vector<16x32xf32>
    %358 = vector.extract_strided_slice %346 {offsets = [0, 64], sizes = [16, 32], strides = [1, 1]} : vector<16x128xf32> to vector<16x32xf32>
    %359 = arith.addf %358, %11 : vector<16x32xf32>
    %360 = arith.mulf %355, %359 : vector<16x32xf32>
    %361 = arith.addf %357, %360 : vector<16x32xf32>
    %362 = math.tanh %361 : vector<16x32xf32>
    %cst_102 = arith.constant 1.000000e+00 : f32
    %363 = vector.broadcast %cst_102 : f32 to vector<16x32xf32>
    %364 = arith.subf %363, %356 : vector<16x32xf32>
    %365 = arith.subf %362, %323 : vector<16x32xf32>
    %366 = arith.mulf %364, %365 : vector<16x32xf32>
    %367 = vector.broadcast %340 : vector<16x1xf32> to vector<16x32xf32>
    %368 = arith.mulf %367, %366 : vector<16x32xf32>
    %369 = arith.addf %323, %368 : vector<16x32xf32>
    %370 = vector.broadcast %340 : vector<16x1xf32> to vector<16x32xf32>
    %371 = arith.mulf %370, %369 : vector<16x32xf32>
    %372 = arith.index_cast %c7_i32 : i32 to index
    %c0_103 = arith.constant 0 : index
    %c0_104 = arith.constant 0 : index
    %373 = vector.load %arg11[%372, %c0_103, %c0_104] : memref<10x16x32xf32, #tpu.memory_space<vmem>>, vector<1x16x32xf32>
    %374 = vector.shape_cast %373 : vector<1x16x32xf32> to vector<16x32xf32>
    %375 = vector.shape_cast %371 : vector<16x32xf32> to vector<1x16x32xf32>
    tpu.vector_store %arg11[%372, %c0_103, %c0_104], %375 {strides = array<i32>} : memref<10x16x32xf32, #tpu.memory_space<vmem>>, vector<1x16x32xf32>,
    %c9_i32_105 = arith.constant 9 : i32
    %376 = arith.subi %c9_i32_105, %c7_i32 : i32
    %377 = arith.index_cast %376 : i32 to index
    %c0_106 = arith.constant 0 : index
    %c0_107 = arith.constant 0 : index
    %378 = vector.load %arg12[%377, %c0_106, %c0_107] : memref<10x16x32xf32, #tpu.memory_space<vmem>>, vector<1x16x32xf32>
    %379 = vector.shape_cast %378 : vector<1x16x32xf32> to vector<16x32xf32>
    %380 = vector.shape_cast %371 : vector<16x32xf32> to vector<1x16x32xf32>
    tpu.vector_store %arg12[%377, %c0_106, %c0_107], %380 {strides = array<i32>} : memref<10x16x32xf32, #tpu.memory_space<vmem>>, vector<1x16x32xf32>,
    %c8_i32_108 = arith.constant 8 : i32
    %381 = arith.index_cast %c8_i32_108 : i32 to index
    %c0_109 = arith.constant 0 : index
    %c0_110 = arith.constant 0 : index
    %382 = vector.load %arg10[%381, %c0_109, %c0_110] : memref<10x16x128xf32, #tpu.memory_space<vmem>>, vector<1x16x128xf32>
    %383 = vector.shape_cast %382 : vector<1x16x128xf32> to vector<16x128xf32>
    %384 = arith.index_cast %c8_i32_108 : i32 to index
    %c0_111 = arith.constant 0 : index
    %c0_112 = arith.constant 0 : index
    %385 = vector.load %arg2[%384, %c0_111, %c0_112] : memref<10x16x1xf32, #tpu.memory_space<vmem>>, vector<1x16x1xf32>
    %386 = vector.shape_cast %385 : vector<1x16x1xf32> to vector<16x1xf32>
    %cst_113 = arith.constant dense<0.000000e+00> : vector<16x256xf32>
    %387 = tpu.matmul %369, %9, %cst_113 {dimension_numbers = #tpu.dot_dimension_numbers<[1], [0], [0], [1], [0, 0, 1, 1], [], []>} : vector<16x32xf32>, vector<32x256xf32>, vector<16x256xf32> -> vector<16x256xf32>
    %388 = vector.extract_strided_slice %387 {offsets = [0, 0], sizes = [16, 128], strides = [1, 1]} : vector<16x256xf32> to vector<16x128xf32>
    %389 = vector.extract_strided_slice %387 {offsets = [0, 128], sizes = [16, 128], strides = [1, 1]} : vector<16x256xf32> to vector<16x128xf32>
    %390 = vector.shape_cast %2 : vector<16x1xi1> to vector<16x1xi1>
    %391 = vector.broadcast %390 : vector<16x1xi1> to vector<16x128xi1>
    %392 = arith.select %391, %388, %389 : vector<16x128xi1>, vector<16x128xf32>
    %393 = vector.extract_strided_slice %383 {offsets = [0, 0], sizes = [16, 64], strides = [1, 1]} : vector<16x128xf32> to vector<16x64xf32>
    %394 = vector.extract_strided_slice %392 {offsets = [0, 0], sizes = [16, 64], strides = [1, 1]} : vector<16x128xf32> to vector<16x64xf32>
    %395 = arith.addf %393, %394 : vector<16x64xf32>
    %396 = arith.negf %395 : vector<16x64xf32>
    %397 = math.exp %396 : vector<16x64xf32>
    %cst_114 = arith.constant 1.000000e+00 : f32
    %398 = vector.broadcast %cst_114 : f32 to vector<16x64xf32>
    %399 = arith.addf %398, %397 : vector<16x64xf32>
    %400 = arith.divf %398, %399 : vector<16x64xf32>
    %401 = vector.extract_strided_slice %400 {offsets = [0, 0], sizes = [16, 32], strides = [1, 1]} : vector<16x64xf32> to vector<16x32xf32>
    %402 = vector.extract_strided_slice %400 {offsets = [0, 32], sizes = [16, 32], strides = [1, 1]} : vector<16x64xf32> to vector<16x32xf32>
    %403 = vector.extract_strided_slice %383 {offsets = [0, 64], sizes = [16, 32], strides = [1, 1]} : vector<16x128xf32> to vector<16x32xf32>
    %404 = vector.extract_strided_slice %392 {offsets = [0, 64], sizes = [16, 32], strides = [1, 1]} : vector<16x128xf32> to vector<16x32xf32>
    %405 = arith.addf %404, %11 : vector<16x32xf32>
    %406 = arith.mulf %401, %405 : vector<16x32xf32>
    %407 = arith.addf %403, %406 : vector<16x32xf32>
    %408 = math.tanh %407 : vector<16x32xf32>
    %cst_115 = arith.constant 1.000000e+00 : f32
    %409 = vector.broadcast %cst_115 : f32 to vector<16x32xf32>
    %410 = arith.subf %409, %402 : vector<16x32xf32>
    %411 = arith.subf %408, %369 : vector<16x32xf32>
    %412 = arith.mulf %410, %411 : vector<16x32xf32>
    %413 = vector.broadcast %386 : vector<16x1xf32> to vector<16x32xf32>
    %414 = arith.mulf %413, %412 : vector<16x32xf32>
    %415 = arith.addf %369, %414 : vector<16x32xf32>
    %416 = vector.broadcast %386 : vector<16x1xf32> to vector<16x32xf32>
    %417 = arith.mulf %416, %415 : vector<16x32xf32>
    %418 = arith.index_cast %c8_i32_108 : i32 to index
    %c0_116 = arith.constant 0 : index
    %c0_117 = arith.constant 0 : index
    %419 = vector.load %arg11[%418, %c0_116, %c0_117] : memref<10x16x32xf32, #tpu.memory_space<vmem>>, vector<1x16x32xf32>
    %420 = vector.shape_cast %419 : vector<1x16x32xf32> to vector<16x32xf32>
    %421 = vector.shape_cast %417 : vector<16x32xf32> to vector<1x16x32xf32>
    tpu.vector_store %arg11[%418, %c0_116, %c0_117], %421 {strides = array<i32>} : memref<10x16x32xf32, #tpu.memory_space<vmem>>, vector<1x16x32xf32>,
    %c9_i32_118 = arith.constant 9 : i32
    %422 = arith.subi %c9_i32_118, %c8_i32_108 : i32
    %423 = arith.index_cast %422 : i32 to index
    %c0_119 = arith.constant 0 : index
    %c0_120 = arith.constant 0 : index
    %424 = vector.load %arg12[%423, %c0_119, %c0_120] : memref<10x16x32xf32, #tpu.memory_space<vmem>>, vector<1x16x32xf32>
    %425 = vector.shape_cast %424 : vector<1x16x32xf32> to vector<16x32xf32>
    %426 = vector.shape_cast %417 : vector<16x32xf32> to vector<1x16x32xf32>
    tpu.vector_store %arg12[%423, %c0_119, %c0_120], %426 {strides = array<i32>} : memref<10x16x32xf32, #tpu.memory_space<vmem>>, vector<1x16x32xf32>,
    %c9_i32_121 = arith.constant 9 : i32
    %427 = arith.index_cast %c9_i32_121 : i32 to index
    %c0_122 = arith.constant 0 : index
    %c0_123 = arith.constant 0 : index
    %428 = vector.load %arg10[%427, %c0_122, %c0_123] : memref<10x16x128xf32, #tpu.memory_space<vmem>>, vector<1x16x128xf32>
    %429 = vector.shape_cast %428 : vector<1x16x128xf32> to vector<16x128xf32>
    %430 = arith.index_cast %c9_i32_121 : i32 to index
    %c0_124 = arith.constant 0 : index
    %c0_125 = arith.constant 0 : index
    %431 = vector.load %arg2[%430, %c0_124, %c0_125] : memref<10x16x1xf32, #tpu.memory_space<vmem>>, vector<1x16x1xf32>
    %432 = vector.shape_cast %431 : vector<1x16x1xf32> to vector<16x1xf32>
    %cst_126 = arith.constant dense<0.000000e+00> : vector<16x256xf32>
    %433 = tpu.matmul %415, %9, %cst_126 {dimension_numbers = #tpu.dot_dimension_numbers<[1], [0], [0], [1], [0, 0, 1, 1], [], []>} : vector<16x32xf32>, vector<32x256xf32>, vector<16x256xf32> -> vector<16x256xf32>
    %434 = vector.extract_strided_slice %433 {offsets = [0, 0], sizes = [16, 128], strides = [1, 1]} : vector<16x256xf32> to vector<16x128xf32>
    %435 = vector.extract_strided_slice %433 {offsets = [0, 128], sizes = [16, 128], strides = [1, 1]} : vector<16x256xf32> to vector<16x128xf32>
    %436 = vector.shape_cast %2 : vector<16x1xi1> to vector<16x1xi1>
    %437 = vector.broadcast %436 : vector<16x1xi1> to vector<16x128xi1>
    %438 = arith.select %437, %434, %435 : vector<16x128xi1>, vector<16x128xf32>
    %439 = vector.extract_strided_slice %429 {offsets = [0, 0], sizes = [16, 64], strides = [1, 1]} : vector<16x128xf32> to vector<16x64xf32>
    %440 = vector.extract_strided_slice %438 {offsets = [0, 0], sizes = [16, 64], strides = [1, 1]} : vector<16x128xf32> to vector<16x64xf32>
    %441 = arith.addf %439, %440 : vector<16x64xf32>
    %442 = arith.negf %441 : vector<16x64xf32>
    %443 = math.exp %442 : vector<16x64xf32>
    %cst_127 = arith.constant 1.000000e+00 : f32
    %444 = vector.broadcast %cst_127 : f32 to vector<16x64xf32>
    %445 = arith.addf %444, %443 : vector<16x64xf32>
    %446 = arith.divf %444, %445 : vector<16x64xf32>
    %447 = vector.extract_strided_slice %446 {offsets = [0, 0], sizes = [16, 32], strides = [1, 1]} : vector<16x64xf32> to vector<16x32xf32>
    %448 = vector.extract_strided_slice %446 {offsets = [0, 32], sizes = [16, 32], strides = [1, 1]} : vector<16x64xf32> to vector<16x32xf32>
    %449 = vector.extract_strided_slice %429 {offsets = [0, 64], sizes = [16, 32], strides = [1, 1]} : vector<16x128xf32> to vector<16x32xf32>
    %450 = vector.extract_strided_slice %438 {offsets = [0, 64], sizes = [16, 32], strides = [1, 1]} : vector<16x128xf32> to vector<16x32xf32>
    %451 = arith.addf %450, %11 : vector<16x32xf32>
    %452 = arith.mulf %447, %451 : vector<16x32xf32>
    %453 = arith.addf %449, %452 : vector<16x32xf32>
    %454 = math.tanh %453 : vector<16x32xf32>
    %cst_128 = arith.constant 1.000000e+00 : f32
    %455 = vector.broadcast %cst_128 : f32 to vector<16x32xf32>
    %456 = arith.subf %455, %448 : vector<16x32xf32>
    %457 = arith.subf %454, %415 : vector<16x32xf32>
    %458 = arith.mulf %456, %457 : vector<16x32xf32>
    %459 = vector.broadcast %432 : vector<16x1xf32> to vector<16x32xf32>
    %460 = arith.mulf %459, %458 : vector<16x32xf32>
    %461 = arith.addf %415, %460 : vector<16x32xf32>
    %462 = vector.broadcast %432 : vector<16x1xf32> to vector<16x32xf32>
    %463 = arith.mulf %462, %461 : vector<16x32xf32>
    %464 = arith.index_cast %c9_i32_121 : i32 to index
    %c0_129 = arith.constant 0 : index
    %c0_130 = arith.constant 0 : index
    %465 = vector.load %arg11[%464, %c0_129, %c0_130] : memref<10x16x32xf32, #tpu.memory_space<vmem>>, vector<1x16x32xf32>
    %466 = vector.shape_cast %465 : vector<1x16x32xf32> to vector<16x32xf32>
    %467 = vector.shape_cast %463 : vector<16x32xf32> to vector<1x16x32xf32>
    tpu.vector_store %arg11[%464, %c0_129, %c0_130], %467 {strides = array<i32>} : memref<10x16x32xf32, #tpu.memory_space<vmem>>, vector<1x16x32xf32>,
    %c9_i32_131 = arith.constant 9 : i32
    %468 = arith.subi %c9_i32_131, %c9_i32_121 : i32
    %469 = arith.index_cast %468 : i32 to index
    %c0_132 = arith.constant 0 : index
    %c0_133 = arith.constant 0 : index
    %470 = vector.load %arg12[%469, %c0_132, %c0_133] : memref<10x16x32xf32, #tpu.memory_space<vmem>>, vector<1x16x32xf32>
    %471 = vector.shape_cast %470 : vector<1x16x32xf32> to vector<16x32xf32>
    %472 = vector.shape_cast %463 : vector<16x32xf32> to vector<1x16x32xf32>
    tpu.vector_store %arg12[%469, %c0_132, %c0_133], %472 {strides = array<i32>} : memref<10x16x32xf32, #tpu.memory_space<vmem>>, vector<1x16x32xf32>,
    %c10_i32 = arith.constant 10 : i32
    %c0_134 = arith.constant 0 : index
    %c0_135 = arith.constant 0 : index
    %c0_136 = arith.constant 0 : index
    %473 = vector.load %arg11[%c0_134, %c0_135, %c0_136] : memref<10x16x32xf32, #tpu.memory_space<vmem>>, vector<10x8x32xf32>
    %c0_137 = arith.constant 0 : index
    %c8 = arith.constant 8 : index
    %c0_138 = arith.constant 0 : index
    %474 = vector.load %arg12[%c0_137, %c8, %c0_138] : memref<10x16x32xf32, #tpu.memory_space<vmem>>, vector<10x8x32xf32>
    %475 = tpu.concatenate %473, %474 in 2 : vector<10x8x32xf32>, vector<10x8x32xf32> -> vector<10x8x64xf32>
    %c0_139 = arith.constant 0 : index
    %c0_140 = arith.constant 0 : index
    %c0_141 = arith.constant 0 : index
    %476 = vector.load %arg12[%c0_139, %c0_140, %c0_141] : memref<10x16x32xf32, #tpu.memory_space<vmem>>, vector<10x8x32xf32>
    %c0_142 = arith.constant 0 : index
    %c8_143 = arith.constant 8 : index
    %c0_144 = arith.constant 0 : index
    %477 = vector.load %arg11[%c0_142, %c8_143, %c0_144] : memref<10x16x32xf32, #tpu.memory_space<vmem>>, vector<10x8x32xf32>
    %478 = tpu.concatenate %476, %477 in 2 : vector<10x8x32xf32>, vector<10x8x32xf32> -> vector<10x8x64xf32>
    %c0_145 = arith.constant 0 : index
    %c0_146 = arith.constant 0 : index
    %479 = vector.load %arg5[%c0_145, %c0_146] : memref<65x256xf32, #tpu.memory_space<vmem>>, vector<64x128xf32>
    %c64 = arith.constant 64 : index
    %c0_147 = arith.constant 0 : index
    %480 = vector.load %arg5[%c64, %c0_147] : memref<65x256xf32, #tpu.memory_space<vmem>>, vector<1x128xf32>
    %c0_148 = arith.constant 0 : index
    %c128 = arith.constant 128 : index
    %481 = vector.load %arg5[%c0_148, %c128] : memref<65x256xf32, #tpu.memory_space<vmem>>, vector<64x128xf32>
    %c64_149 = arith.constant 64 : index
    %c128_150 = arith.constant 128 : index
    %482 = vector.load %arg5[%c64_149, %c128_150] : memref<65x256xf32, #tpu.memory_space<vmem>>, vector<1x128xf32>
    %483 = vector.shape_cast %475 : vector<10x8x64xf32> to vector<80x64xf32>
    %cst_151 = arith.constant dense<0.000000e+00> : vector<80x128xf32>
    %484 = tpu.matmul %483, %479, %cst_151 {dimension_numbers = #tpu.dot_dimension_numbers<[1], [0], [0], [1], [0, 0, 1, 1], [], []>} : vector<80x64xf32>, vector<64x128xf32>, vector<80x128xf32> -> vector<80x128xf32>
    %485 = vector.broadcast %480 : vector<1x128xf32> to vector<80x128xf32>
    %486 = arith.addf %484, %485 : vector<80x128xf32>
    %487 = vector.shape_cast %478 : vector<10x8x64xf32> to vector<80x64xf32>
    %cst_152 = arith.constant dense<0.000000e+00> : vector<80x128xf32>
    %488 = tpu.matmul %487, %481, %cst_152 {dimension_numbers = #tpu.dot_dimension_numbers<[1], [0], [0], [1], [0, 0, 1, 1], [], []>} : vector<80x64xf32>, vector<64x128xf32>, vector<80x128xf32> -> vector<80x128xf32>
    %489 = vector.broadcast %482 : vector<1x128xf32> to vector<80x128xf32>
    %490 = arith.addf %488, %489 : vector<80x128xf32>
    %491 = vector.shape_cast %486 : vector<80x128xf32> to vector<10x8x128xf32>
    %c0_153 = arith.constant 0 : index
    %c0_154 = arith.constant 0 : index
    %c0_155 = arith.constant 0 : index
    %492 = vector.load %arg10[%c0_153, %c0_154, %c0_155] : memref<10x16x128xf32, #tpu.memory_space<vmem>>, vector<10x8x128xf32>
    tpu.vector_store %arg10[%c0_153, %c0_154, %c0_155], %491 {strides = array<i32>} : memref<10x16x128xf32, #tpu.memory_space<vmem>>, vector<10x8x128xf32>,
    %493 = vector.shape_cast %490 : vector<80x128xf32> to vector<10x8x128xf32>
    %c0_156 = arith.constant 0 : index
    %c8_157 = arith.constant 8 : index
    %c0_158 = arith.constant 0 : index
    %494 = vector.load %arg10[%c0_156, %c8_157, %c0_158] : memref<10x16x128xf32, #tpu.memory_space<vmem>>, vector<10x8x128xf32>
    tpu.vector_store %arg10[%c0_156, %c8_157, %c0_158], %493 {strides = array<i32>} : memref<10x16x128xf32, #tpu.memory_space<vmem>>, vector<10x8x128xf32>,
    %c32 = arith.constant 32 : index
    %c0_159 = arith.constant 0 : index
    %495 = vector.load %arg6[%c32, %c0_159] : memref<64x256xf32, #tpu.memory_space<vmem>>, vector<32x256xf32>
    %c1 = arith.constant 1 : index
    %c0_160 = arith.constant 0 : index
    %c0_161 = arith.constant 0 : index
    %496 = vector.load %arg7[%c1, %c0_160, %c0_161] : memref<2x16x32xf32, #tpu.memory_space<vmem>>, vector<1x16x32xf32>
    %497 = vector.shape_cast %496 : vector<1x16x32xf32> to vector<16x32xf32>
    %cst_162 = arith.constant 0.000000e+00 : f32
    %498 = vector.broadcast %cst_162 : f32 to vector<16x32xf32>
    %c0_i32_163 = arith.constant 0 : i32
    %499 = arith.index_cast %c0_i32_163 : i32 to index
    %c0_164 = arith.constant 0 : index
    %c0_165 = arith.constant 0 : index
    %500 = vector.load %arg10[%499, %c0_164, %c0_165] : memref<10x16x128xf32, #tpu.memory_space<vmem>>, vector<1x16x128xf32>
    %501 = vector.shape_cast %500 : vector<1x16x128xf32> to vector<16x128xf32>
    %502 = arith.index_cast %c0_i32_163 : i32 to index
    %c0_166 = arith.constant 0 : index
    %c0_167 = arith.constant 0 : index
    %503 = vector.load %arg2[%502, %c0_166, %c0_167] : memref<10x16x1xf32, #tpu.memory_space<vmem>>, vector<1x16x1xf32>
    %504 = vector.shape_cast %503 : vector<1x16x1xf32> to vector<16x1xf32>
    %cst_168 = arith.constant dense<0.000000e+00> : vector<16x256xf32>
    %505 = tpu.matmul %498, %495, %cst_168 {dimension_numbers = #tpu.dot_dimension_numbers<[1], [0], [0], [1], [0, 0, 1, 1], [], []>} : vector<16x32xf32>, vector<32x256xf32>, vector<16x256xf32> -> vector<16x256xf32>
    %506 = vector.extract_strided_slice %505 {offsets = [0, 0], sizes = [16, 128], strides = [1, 1]} : vector<16x256xf32> to vector<16x128xf32>
    %507 = vector.extract_strided_slice %505 {offsets = [0, 128], sizes = [16, 128], strides = [1, 1]} : vector<16x256xf32> to vector<16x128xf32>
    %508 = vector.shape_cast %2 : vector<16x1xi1> to vector<16x1xi1>
    %509 = vector.broadcast %508 : vector<16x1xi1> to vector<16x128xi1>
    %510 = arith.select %509, %506, %507 : vector<16x128xi1>, vector<16x128xf32>
    %511 = vector.extract_strided_slice %501 {offsets = [0, 0], sizes = [16, 64], strides = [1, 1]} : vector<16x128xf32> to vector<16x64xf32>
    %512 = vector.extract_strided_slice %510 {offsets = [0, 0], sizes = [16, 64], strides = [1, 1]} : vector<16x128xf32> to vector<16x64xf32>
    %513 = arith.addf %511, %512 : vector<16x64xf32>
    %514 = arith.negf %513 : vector<16x64xf32>
    %515 = math.exp %514 : vector<16x64xf32>
    %cst_169 = arith.constant 1.000000e+00 : f32
    %516 = vector.broadcast %cst_169 : f32 to vector<16x64xf32>
    %517 = arith.addf %516, %515 : vector<16x64xf32>
    %518 = arith.divf %516, %517 : vector<16x64xf32>
    %519 = vector.extract_strided_slice %518 {offsets = [0, 0], sizes = [16, 32], strides = [1, 1]} : vector<16x64xf32> to vector<16x32xf32>
    %520 = vector.extract_strided_slice %518 {offsets = [0, 32], sizes = [16, 32], strides = [1, 1]} : vector<16x64xf32> to vector<16x32xf32>
    %521 = vector.extract_strided_slice %501 {offsets = [0, 64], sizes = [16, 32], strides = [1, 1]} : vector<16x128xf32> to vector<16x32xf32>
    %522 = vector.extract_strided_slice %510 {offsets = [0, 64], sizes = [16, 32], strides = [1, 1]} : vector<16x128xf32> to vector<16x32xf32>
    %523 = arith.addf %522, %497 : vector<16x32xf32>
    %524 = arith.mulf %519, %523 : vector<16x32xf32>
    %525 = arith.addf %521, %524 : vector<16x32xf32>
    %526 = math.tanh %525 : vector<16x32xf32>
    %cst_170 = arith.constant 1.000000e+00 : f32
    %527 = vector.broadcast %cst_170 : f32 to vector<16x32xf32>
    %528 = arith.subf %527, %520 : vector<16x32xf32>
    %529 = arith.subf %526, %498 : vector<16x32xf32>
    %530 = arith.mulf %528, %529 : vector<16x32xf32>
    %531 = vector.broadcast %504 : vector<16x1xf32> to vector<16x32xf32>
    %532 = arith.mulf %531, %530 : vector<16x32xf32>
    %533 = arith.addf %498, %532 : vector<16x32xf32>
    %534 = vector.broadcast %504 : vector<16x1xf32> to vector<16x32xf32>
    %535 = arith.mulf %534, %533 : vector<16x32xf32>
    %536 = arith.index_cast %c0_i32_163 : i32 to index
    %c0_171 = arith.constant 0 : index
    %c0_172 = arith.constant 0 : index
    %537 = vector.load %arg11[%536, %c0_171, %c0_172] : memref<10x16x32xf32, #tpu.memory_space<vmem>>, vector<1x16x32xf32>
    %538 = vector.shape_cast %537 : vector<1x16x32xf32> to vector<16x32xf32>
    %539 = vector.shape_cast %535 : vector<16x32xf32> to vector<1x16x32xf32>
    tpu.vector_store %arg11[%536, %c0_171, %c0_172], %539 {strides = array<i32>} : memref<10x16x32xf32, #tpu.memory_space<vmem>>, vector<1x16x32xf32>,
    %c9_i32_173 = arith.constant 9 : i32
    %540 = arith.subi %c9_i32_173, %c0_i32_163 : i32
    %541 = arith.index_cast %540 : i32 to index
    %c0_174 = arith.constant 0 : index
    %c0_175 = arith.constant 0 : index
    %542 = vector.load %arg12[%541, %c0_174, %c0_175] : memref<10x16x32xf32, #tpu.memory_space<vmem>>, vector<1x16x32xf32>
    %543 = vector.shape_cast %542 : vector<1x16x32xf32> to vector<16x32xf32>
    %544 = vector.shape_cast %535 : vector<16x32xf32> to vector<1x16x32xf32>
    tpu.vector_store %arg12[%541, %c0_174, %c0_175], %544 {strides = array<i32>} : memref<10x16x32xf32, #tpu.memory_space<vmem>>, vector<1x16x32xf32>,
    %c1_i32_176 = arith.constant 1 : i32
    %545 = arith.index_cast %c1_i32_176 : i32 to index
    %c0_177 = arith.constant 0 : index
    %c0_178 = arith.constant 0 : index
    %546 = vector.load %arg10[%545, %c0_177, %c0_178] : memref<10x16x128xf32, #tpu.memory_space<vmem>>, vector<1x16x128xf32>
    %547 = vector.shape_cast %546 : vector<1x16x128xf32> to vector<16x128xf32>
    %548 = arith.index_cast %c1_i32_176 : i32 to index
    %c0_179 = arith.constant 0 : index
    %c0_180 = arith.constant 0 : index
    %549 = vector.load %arg2[%548, %c0_179, %c0_180] : memref<10x16x1xf32, #tpu.memory_space<vmem>>, vector<1x16x1xf32>
    %550 = vector.shape_cast %549 : vector<1x16x1xf32> to vector<16x1xf32>
    %cst_181 = arith.constant dense<0.000000e+00> : vector<16x256xf32>
    %551 = tpu.matmul %533, %495, %cst_181 {dimension_numbers = #tpu.dot_dimension_numbers<[1], [0], [0], [1], [0, 0, 1, 1], [], []>} : vector<16x32xf32>, vector<32x256xf32>, vector<16x256xf32> -> vector<16x256xf32>
    %552 = vector.extract_strided_slice %551 {offsets = [0, 0], sizes = [16, 128], strides = [1, 1]} : vector<16x256xf32> to vector<16x128xf32>
    %553 = vector.extract_strided_slice %551 {offsets = [0, 128], sizes = [16, 128], strides = [1, 1]} : vector<16x256xf32> to vector<16x128xf32>
    %554 = vector.shape_cast %2 : vector<16x1xi1> to vector<16x1xi1>
    %555 = vector.broadcast %554 : vector<16x1xi1> to vector<16x128xi1>
    %556 = arith.select %555, %552, %553 : vector<16x128xi1>, vector<16x128xf32>
    %557 = vector.extract_strided_slice %547 {offsets = [0, 0], sizes = [16, 64], strides = [1, 1]} : vector<16x128xf32> to vector<16x64xf32>
    %558 = vector.extract_strided_slice %556 {offsets = [0, 0], sizes = [16, 64], strides = [1, 1]} : vector<16x128xf32> to vector<16x64xf32>
    %559 = arith.addf %557, %558 : vector<16x64xf32>
    %560 = arith.negf %559 : vector<16x64xf32>
    %561 = math.exp %560 : vector<16x64xf32>
    %cst_182 = arith.constant 1.000000e+00 : f32
    %562 = vector.broadcast %cst_182 : f32 to vector<16x64xf32>
    %563 = arith.addf %562, %561 : vector<16x64xf32>
    %564 = arith.divf %562, %563 : vector<16x64xf32>
    %565 = vector.extract_strided_slice %564 {offsets = [0, 0], sizes = [16, 32], strides = [1, 1]} : vector<16x64xf32> to vector<16x32xf32>
    %566 = vector.extract_strided_slice %564 {offsets = [0, 32], sizes = [16, 32], strides = [1, 1]} : vector<16x64xf32> to vector<16x32xf32>
    %567 = vector.extract_strided_slice %547 {offsets = [0, 64], sizes = [16, 32], strides = [1, 1]} : vector<16x128xf32> to vector<16x32xf32>
    %568 = vector.extract_strided_slice %556 {offsets = [0, 64], sizes = [16, 32], strides = [1, 1]} : vector<16x128xf32> to vector<16x32xf32>
    %569 = arith.addf %568, %497 : vector<16x32xf32>
    %570 = arith.mulf %565, %569 : vector<16x32xf32>
    %571 = arith.addf %567, %570 : vector<16x32xf32>
    %572 = math.tanh %571 : vector<16x32xf32>
    %cst_183 = arith.constant 1.000000e+00 : f32
    %573 = vector.broadcast %cst_183 : f32 to vector<16x32xf32>
    %574 = arith.subf %573, %566 : vector<16x32xf32>
    %575 = arith.subf %572, %533 : vector<16x32xf32>
    %576 = arith.mulf %574, %575 : vector<16x32xf32>
    %577 = vector.broadcast %550 : vector<16x1xf32> to vector<16x32xf32>
    %578 = arith.mulf %577, %576 : vector<16x32xf32>
    %579 = arith.addf %533, %578 : vector<16x32xf32>
    %580 = vector.broadcast %550 : vector<16x1xf32> to vector<16x32xf32>
    %581 = arith.mulf %580, %579 : vector<16x32xf32>
    %582 = arith.index_cast %c1_i32_176 : i32 to index
    %c0_184 = arith.constant 0 : index
    %c0_185 = arith.constant 0 : index
    %583 = vector.load %arg11[%582, %c0_184, %c0_185] : memref<10x16x32xf32, #tpu.memory_space<vmem>>, vector<1x16x32xf32>
    %584 = vector.shape_cast %583 : vector<1x16x32xf32> to vector<16x32xf32>
    %585 = vector.shape_cast %581 : vector<16x32xf32> to vector<1x16x32xf32>
    tpu.vector_store %arg11[%582, %c0_184, %c0_185], %585 {strides = array<i32>} : memref<10x16x32xf32, #tpu.memory_space<vmem>>, vector<1x16x32xf32>,
    %c9_i32_186 = arith.constant 9 : i32
    %586 = arith.subi %c9_i32_186, %c1_i32_176 : i32
    %587 = arith.index_cast %586 : i32 to index
    %c0_187 = arith.constant 0 : index
    %c0_188 = arith.constant 0 : index
    %588 = vector.load %arg12[%587, %c0_187, %c0_188] : memref<10x16x32xf32, #tpu.memory_space<vmem>>, vector<1x16x32xf32>
    %589 = vector.shape_cast %588 : vector<1x16x32xf32> to vector<16x32xf32>
    %590 = vector.shape_cast %581 : vector<16x32xf32> to vector<1x16x32xf32>
    tpu.vector_store %arg12[%587, %c0_187, %c0_188], %590 {strides = array<i32>} : memref<10x16x32xf32, #tpu.memory_space<vmem>>, vector<1x16x32xf32>,
    %c2_i32_189 = arith.constant 2 : i32
    %591 = arith.index_cast %c2_i32_189 : i32 to index
    %c0_190 = arith.constant 0 : index
    %c0_191 = arith.constant 0 : index
    %592 = vector.load %arg10[%591, %c0_190, %c0_191] : memref<10x16x128xf32, #tpu.memory_space<vmem>>, vector<1x16x128xf32>
    %593 = vector.shape_cast %592 : vector<1x16x128xf32> to vector<16x128xf32>
    %594 = arith.index_cast %c2_i32_189 : i32 to index
    %c0_192 = arith.constant 0 : index
    %c0_193 = arith.constant 0 : index
    %595 = vector.load %arg2[%594, %c0_192, %c0_193] : memref<10x16x1xf32, #tpu.memory_space<vmem>>, vector<1x16x1xf32>
    %596 = vector.shape_cast %595 : vector<1x16x1xf32> to vector<16x1xf32>
    %cst_194 = arith.constant dense<0.000000e+00> : vector<16x256xf32>
    %597 = tpu.matmul %579, %495, %cst_194 {dimension_numbers = #tpu.dot_dimension_numbers<[1], [0], [0], [1], [0, 0, 1, 1], [], []>} : vector<16x32xf32>, vector<32x256xf32>, vector<16x256xf32> -> vector<16x256xf32>
    %598 = vector.extract_strided_slice %597 {offsets = [0, 0], sizes = [16, 128], strides = [1, 1]} : vector<16x256xf32> to vector<16x128xf32>
    %599 = vector.extract_strided_slice %597 {offsets = [0, 128], sizes = [16, 128], strides = [1, 1]} : vector<16x256xf32> to vector<16x128xf32>
    %600 = vector.shape_cast %2 : vector<16x1xi1> to vector<16x1xi1>
    %601 = vector.broadcast %600 : vector<16x1xi1> to vector<16x128xi1>
    %602 = arith.select %601, %598, %599 : vector<16x128xi1>, vector<16x128xf32>
    %603 = vector.extract_strided_slice %593 {offsets = [0, 0], sizes = [16, 64], strides = [1, 1]} : vector<16x128xf32> to vector<16x64xf32>
    %604 = vector.extract_strided_slice %602 {offsets = [0, 0], sizes = [16, 64], strides = [1, 1]} : vector<16x128xf32> to vector<16x64xf32>
    %605 = arith.addf %603, %604 : vector<16x64xf32>
    %606 = arith.negf %605 : vector<16x64xf32>
    %607 = math.exp %606 : vector<16x64xf32>
    %cst_195 = arith.constant 1.000000e+00 : f32
    %608 = vector.broadcast %cst_195 : f32 to vector<16x64xf32>
    %609 = arith.addf %608, %607 : vector<16x64xf32>
    %610 = arith.divf %608, %609 : vector<16x64xf32>
    %611 = vector.extract_strided_slice %610 {offsets = [0, 0], sizes = [16, 32], strides = [1, 1]} : vector<16x64xf32> to vector<16x32xf32>
    %612 = vector.extract_strided_slice %610 {offsets = [0, 32], sizes = [16, 32], strides = [1, 1]} : vector<16x64xf32> to vector<16x32xf32>
    %613 = vector.extract_strided_slice %593 {offsets = [0, 64], sizes = [16, 32], strides = [1, 1]} : vector<16x128xf32> to vector<16x32xf32>
    %614 = vector.extract_strided_slice %602 {offsets = [0, 64], sizes = [16, 32], strides = [1, 1]} : vector<16x128xf32> to vector<16x32xf32>
    %615 = arith.addf %614, %497 : vector<16x32xf32>
    %616 = arith.mulf %611, %615 : vector<16x32xf32>
    %617 = arith.addf %613, %616 : vector<16x32xf32>
    %618 = math.tanh %617 : vector<16x32xf32>
    %cst_196 = arith.constant 1.000000e+00 : f32
    %619 = vector.broadcast %cst_196 : f32 to vector<16x32xf32>
    %620 = arith.subf %619, %612 : vector<16x32xf32>
    %621 = arith.subf %618, %579 : vector<16x32xf32>
    %622 = arith.mulf %620, %621 : vector<16x32xf32>
    %623 = vector.broadcast %596 : vector<16x1xf32> to vector<16x32xf32>
    %624 = arith.mulf %623, %622 : vector<16x32xf32>
    %625 = arith.addf %579, %624 : vector<16x32xf32>
    %626 = vector.broadcast %596 : vector<16x1xf32> to vector<16x32xf32>
    %627 = arith.mulf %626, %625 : vector<16x32xf32>
    %628 = arith.index_cast %c2_i32_189 : i32 to index
    %c0_197 = arith.constant 0 : index
    %c0_198 = arith.constant 0 : index
    %629 = vector.load %arg11[%628, %c0_197, %c0_198] : memref<10x16x32xf32, #tpu.memory_space<vmem>>, vector<1x16x32xf32>
    %630 = vector.shape_cast %629 : vector<1x16x32xf32> to vector<16x32xf32>
    %631 = vector.shape_cast %627 : vector<16x32xf32> to vector<1x16x32xf32>
    tpu.vector_store %arg11[%628, %c0_197, %c0_198], %631 {strides = array<i32>} : memref<10x16x32xf32, #tpu.memory_space<vmem>>, vector<1x16x32xf32>,
    %c9_i32_199 = arith.constant 9 : i32
    %632 = arith.subi %c9_i32_199, %c2_i32_189 : i32
    %633 = arith.index_cast %632 : i32 to index
    %c0_200 = arith.constant 0 : index
    %c0_201 = arith.constant 0 : index
    %634 = vector.load %arg12[%633, %c0_200, %c0_201] : memref<10x16x32xf32, #tpu.memory_space<vmem>>, vector<1x16x32xf32>
    %635 = vector.shape_cast %634 : vector<1x16x32xf32> to vector<16x32xf32>
    %636 = vector.shape_cast %627 : vector<16x32xf32> to vector<1x16x32xf32>
    tpu.vector_store %arg12[%633, %c0_200, %c0_201], %636 {strides = array<i32>} : memref<10x16x32xf32, #tpu.memory_space<vmem>>, vector<1x16x32xf32>,
    %c3_i32_202 = arith.constant 3 : i32
    %637 = arith.index_cast %c3_i32_202 : i32 to index
    %c0_203 = arith.constant 0 : index
    %c0_204 = arith.constant 0 : index
    %638 = vector.load %arg10[%637, %c0_203, %c0_204] : memref<10x16x128xf32, #tpu.memory_space<vmem>>, vector<1x16x128xf32>
    %639 = vector.shape_cast %638 : vector<1x16x128xf32> to vector<16x128xf32>
    %640 = arith.index_cast %c3_i32_202 : i32 to index
    %c0_205 = arith.constant 0 : index
    %c0_206 = arith.constant 0 : index
    %641 = vector.load %arg2[%640, %c0_205, %c0_206] : memref<10x16x1xf32, #tpu.memory_space<vmem>>, vector<1x16x1xf32>
    %642 = vector.shape_cast %641 : vector<1x16x1xf32> to vector<16x1xf32>
    %cst_207 = arith.constant dense<0.000000e+00> : vector<16x256xf32>
    %643 = tpu.matmul %625, %495, %cst_207 {dimension_numbers = #tpu.dot_dimension_numbers<[1], [0], [0], [1], [0, 0, 1, 1], [], []>} : vector<16x32xf32>, vector<32x256xf32>, vector<16x256xf32> -> vector<16x256xf32>
    %644 = vector.extract_strided_slice %643 {offsets = [0, 0], sizes = [16, 128], strides = [1, 1]} : vector<16x256xf32> to vector<16x128xf32>
    %645 = vector.extract_strided_slice %643 {offsets = [0, 128], sizes = [16, 128], strides = [1, 1]} : vector<16x256xf32> to vector<16x128xf32>
    %646 = vector.shape_cast %2 : vector<16x1xi1> to vector<16x1xi1>
    %647 = vector.broadcast %646 : vector<16x1xi1> to vector<16x128xi1>
    %648 = arith.select %647, %644, %645 : vector<16x128xi1>, vector<16x128xf32>
    %649 = vector.extract_strided_slice %639 {offsets = [0, 0], sizes = [16, 64], strides = [1, 1]} : vector<16x128xf32> to vector<16x64xf32>
    %650 = vector.extract_strided_slice %648 {offsets = [0, 0], sizes = [16, 64], strides = [1, 1]} : vector<16x128xf32> to vector<16x64xf32>
    %651 = arith.addf %649, %650 : vector<16x64xf32>
    %652 = arith.negf %651 : vector<16x64xf32>
    %653 = math.exp %652 : vector<16x64xf32>
    %cst_208 = arith.constant 1.000000e+00 : f32
    %654 = vector.broadcast %cst_208 : f32 to vector<16x64xf32>
    %655 = arith.addf %654, %653 : vector<16x64xf32>
    %656 = arith.divf %654, %655 : vector<16x64xf32>
    %657 = vector.extract_strided_slice %656 {offsets = [0, 0], sizes = [16, 32], strides = [1, 1]} : vector<16x64xf32> to vector<16x32xf32>
    %658 = vector.extract_strided_slice %656 {offsets = [0, 32], sizes = [16, 32], strides = [1, 1]} : vector<16x64xf32> to vector<16x32xf32>
    %659 = vector.extract_strided_slice %639 {offsets = [0, 64], sizes = [16, 32], strides = [1, 1]} : vector<16x128xf32> to vector<16x32xf32>
    %660 = vector.extract_strided_slice %648 {offsets = [0, 64], sizes = [16, 32], strides = [1, 1]} : vector<16x128xf32> to vector<16x32xf32>
    %661 = arith.addf %660, %497 : vector<16x32xf32>
    %662 = arith.mulf %657, %661 : vector<16x32xf32>
    %663 = arith.addf %659, %662 : vector<16x32xf32>
    %664 = math.tanh %663 : vector<16x32xf32>
    %cst_209 = arith.constant 1.000000e+00 : f32
    %665 = vector.broadcast %cst_209 : f32 to vector<16x32xf32>
    %666 = arith.subf %665, %658 : vector<16x32xf32>
    %667 = arith.subf %664, %625 : vector<16x32xf32>
    %668 = arith.mulf %666, %667 : vector<16x32xf32>
    %669 = vector.broadcast %642 : vector<16x1xf32> to vector<16x32xf32>
    %670 = arith.mulf %669, %668 : vector<16x32xf32>
    %671 = arith.addf %625, %670 : vector<16x32xf32>
    %672 = vector.broadcast %642 : vector<16x1xf32> to vector<16x32xf32>
    %673 = arith.mulf %672, %671 : vector<16x32xf32>
    %674 = arith.index_cast %c3_i32_202 : i32 to index
    %c0_210 = arith.constant 0 : index
    %c0_211 = arith.constant 0 : index
    %675 = vector.load %arg11[%674, %c0_210, %c0_211] : memref<10x16x32xf32, #tpu.memory_space<vmem>>, vector<1x16x32xf32>
    %676 = vector.shape_cast %675 : vector<1x16x32xf32> to vector<16x32xf32>
    %677 = vector.shape_cast %673 : vector<16x32xf32> to vector<1x16x32xf32>
    tpu.vector_store %arg11[%674, %c0_210, %c0_211], %677 {strides = array<i32>} : memref<10x16x32xf32, #tpu.memory_space<vmem>>, vector<1x16x32xf32>,
    %c9_i32_212 = arith.constant 9 : i32
    %678 = arith.subi %c9_i32_212, %c3_i32_202 : i32
    %679 = arith.index_cast %678 : i32 to index
    %c0_213 = arith.constant 0 : index
    %c0_214 = arith.constant 0 : index
    %680 = vector.load %arg12[%679, %c0_213, %c0_214] : memref<10x16x32xf32, #tpu.memory_space<vmem>>, vector<1x16x32xf32>
    %681 = vector.shape_cast %680 : vector<1x16x32xf32> to vector<16x32xf32>
    %682 = vector.shape_cast %673 : vector<16x32xf32> to vector<1x16x32xf32>
    tpu.vector_store %arg12[%679, %c0_213, %c0_214], %682 {strides = array<i32>} : memref<10x16x32xf32, #tpu.memory_space<vmem>>, vector<1x16x32xf32>,
    %c4_i32_215 = arith.constant 4 : i32
    %683 = arith.index_cast %c4_i32_215 : i32 to index
    %c0_216 = arith.constant 0 : index
    %c0_217 = arith.constant 0 : index
    %684 = vector.load %arg10[%683, %c0_216, %c0_217] : memref<10x16x128xf32, #tpu.memory_space<vmem>>, vector<1x16x128xf32>
    %685 = vector.shape_cast %684 : vector<1x16x128xf32> to vector<16x128xf32>
    %686 = arith.index_cast %c4_i32_215 : i32 to index
    %c0_218 = arith.constant 0 : index
    %c0_219 = arith.constant 0 : index
    %687 = vector.load %arg2[%686, %c0_218, %c0_219] : memref<10x16x1xf32, #tpu.memory_space<vmem>>, vector<1x16x1xf32>
    %688 = vector.shape_cast %687 : vector<1x16x1xf32> to vector<16x1xf32>
    %cst_220 = arith.constant dense<0.000000e+00> : vector<16x256xf32>
    %689 = tpu.matmul %671, %495, %cst_220 {dimension_numbers = #tpu.dot_dimension_numbers<[1], [0], [0], [1], [0, 0, 1, 1], [], []>} : vector<16x32xf32>, vector<32x256xf32>, vector<16x256xf32> -> vector<16x256xf32>
    %690 = vector.extract_strided_slice %689 {offsets = [0, 0], sizes = [16, 128], strides = [1, 1]} : vector<16x256xf32> to vector<16x128xf32>
    %691 = vector.extract_strided_slice %689 {offsets = [0, 128], sizes = [16, 128], strides = [1, 1]} : vector<16x256xf32> to vector<16x128xf32>
    %692 = vector.shape_cast %2 : vector<16x1xi1> to vector<16x1xi1>
    %693 = vector.broadcast %692 : vector<16x1xi1> to vector<16x128xi1>
    %694 = arith.select %693, %690, %691 : vector<16x128xi1>, vector<16x128xf32>
    %695 = vector.extract_strided_slice %685 {offsets = [0, 0], sizes = [16, 64], strides = [1, 1]} : vector<16x128xf32> to vector<16x64xf32>
    %696 = vector.extract_strided_slice %694 {offsets = [0, 0], sizes = [16, 64], strides = [1, 1]} : vector<16x128xf32> to vector<16x64xf32>
    %697 = arith.addf %695, %696 : vector<16x64xf32>
    %698 = arith.negf %697 : vector<16x64xf32>
    %699 = math.exp %698 : vector<16x64xf32>
    %cst_221 = arith.constant 1.000000e+00 : f32
    %700 = vector.broadcast %cst_221 : f32 to vector<16x64xf32>
    %701 = arith.addf %700, %699 : vector<16x64xf32>
    %702 = arith.divf %700, %701 : vector<16x64xf32>
    %703 = vector.extract_strided_slice %702 {offsets = [0, 0], sizes = [16, 32], strides = [1, 1]} : vector<16x64xf32> to vector<16x32xf32>
    %704 = vector.extract_strided_slice %702 {offsets = [0, 32], sizes = [16, 32], strides = [1, 1]} : vector<16x64xf32> to vector<16x32xf32>
    %705 = vector.extract_strided_slice %685 {offsets = [0, 64], sizes = [16, 32], strides = [1, 1]} : vector<16x128xf32> to vector<16x32xf32>
    %706 = vector.extract_strided_slice %694 {offsets = [0, 64], sizes = [16, 32], strides = [1, 1]} : vector<16x128xf32> to vector<16x32xf32>
    %707 = arith.addf %706, %497 : vector<16x32xf32>
    %708 = arith.mulf %703, %707 : vector<16x32xf32>
    %709 = arith.addf %705, %708 : vector<16x32xf32>
    %710 = math.tanh %709 : vector<16x32xf32>
    %cst_222 = arith.constant 1.000000e+00 : f32
    %711 = vector.broadcast %cst_222 : f32 to vector<16x32xf32>
    %712 = arith.subf %711, %704 : vector<16x32xf32>
    %713 = arith.subf %710, %671 : vector<16x32xf32>
    %714 = arith.mulf %712, %713 : vector<16x32xf32>
    %715 = vector.broadcast %688 : vector<16x1xf32> to vector<16x32xf32>
    %716 = arith.mulf %715, %714 : vector<16x32xf32>
    %717 = arith.addf %671, %716 : vector<16x32xf32>
    %718 = vector.broadcast %688 : vector<16x1xf32> to vector<16x32xf32>
    %719 = arith.mulf %718, %717 : vector<16x32xf32>
    %720 = arith.index_cast %c4_i32_215 : i32 to index
    %c0_223 = arith.constant 0 : index
    %c0_224 = arith.constant 0 : index
    %721 = vector.load %arg11[%720, %c0_223, %c0_224] : memref<10x16x32xf32, #tpu.memory_space<vmem>>, vector<1x16x32xf32>
    %722 = vector.shape_cast %721 : vector<1x16x32xf32> to vector<16x32xf32>
    %723 = vector.shape_cast %719 : vector<16x32xf32> to vector<1x16x32xf32>
    tpu.vector_store %arg11[%720, %c0_223, %c0_224], %723 {strides = array<i32>} : memref<10x16x32xf32, #tpu.memory_space<vmem>>, vector<1x16x32xf32>,
    %c9_i32_225 = arith.constant 9 : i32
    %724 = arith.subi %c9_i32_225, %c4_i32_215 : i32
    %725 = arith.index_cast %724 : i32 to index
    %c0_226 = arith.constant 0 : index
    %c0_227 = arith.constant 0 : index
    %726 = vector.load %arg12[%725, %c0_226, %c0_227] : memref<10x16x32xf32, #tpu.memory_space<vmem>>, vector<1x16x32xf32>
    %727 = vector.shape_cast %726 : vector<1x16x32xf32> to vector<16x32xf32>
    %728 = vector.shape_cast %719 : vector<16x32xf32> to vector<1x16x32xf32>
    tpu.vector_store %arg12[%725, %c0_226, %c0_227], %728 {strides = array<i32>} : memref<10x16x32xf32, #tpu.memory_space<vmem>>, vector<1x16x32xf32>,
    %c5_i32_228 = arith.constant 5 : i32
    %729 = arith.index_cast %c5_i32_228 : i32 to index
    %c0_229 = arith.constant 0 : index
    %c0_230 = arith.constant 0 : index
    %730 = vector.load %arg10[%729, %c0_229, %c0_230] : memref<10x16x128xf32, #tpu.memory_space<vmem>>, vector<1x16x128xf32>
    %731 = vector.shape_cast %730 : vector<1x16x128xf32> to vector<16x128xf32>
    %732 = arith.index_cast %c5_i32_228 : i32 to index
    %c0_231 = arith.constant 0 : index
    %c0_232 = arith.constant 0 : index
    %733 = vector.load %arg2[%732, %c0_231, %c0_232] : memref<10x16x1xf32, #tpu.memory_space<vmem>>, vector<1x16x1xf32>
    %734 = vector.shape_cast %733 : vector<1x16x1xf32> to vector<16x1xf32>
    %cst_233 = arith.constant dense<0.000000e+00> : vector<16x256xf32>
    %735 = tpu.matmul %717, %495, %cst_233 {dimension_numbers = #tpu.dot_dimension_numbers<[1], [0], [0], [1], [0, 0, 1, 1], [], []>} : vector<16x32xf32>, vector<32x256xf32>, vector<16x256xf32> -> vector<16x256xf32>
    %736 = vector.extract_strided_slice %735 {offsets = [0, 0], sizes = [16, 128], strides = [1, 1]} : vector<16x256xf32> to vector<16x128xf32>
    %737 = vector.extract_strided_slice %735 {offsets = [0, 128], sizes = [16, 128], strides = [1, 1]} : vector<16x256xf32> to vector<16x128xf32>
    %738 = vector.shape_cast %2 : vector<16x1xi1> to vector<16x1xi1>
    %739 = vector.broadcast %738 : vector<16x1xi1> to vector<16x128xi1>
    %740 = arith.select %739, %736, %737 : vector<16x128xi1>, vector<16x128xf32>
    %741 = vector.extract_strided_slice %731 {offsets = [0, 0], sizes = [16, 64], strides = [1, 1]} : vector<16x128xf32> to vector<16x64xf32>
    %742 = vector.extract_strided_slice %740 {offsets = [0, 0], sizes = [16, 64], strides = [1, 1]} : vector<16x128xf32> to vector<16x64xf32>
    %743 = arith.addf %741, %742 : vector<16x64xf32>
    %744 = arith.negf %743 : vector<16x64xf32>
    %745 = math.exp %744 : vector<16x64xf32>
    %cst_234 = arith.constant 1.000000e+00 : f32
    %746 = vector.broadcast %cst_234 : f32 to vector<16x64xf32>
    %747 = arith.addf %746, %745 : vector<16x64xf32>
    %748 = arith.divf %746, %747 : vector<16x64xf32>
    %749 = vector.extract_strided_slice %748 {offsets = [0, 0], sizes = [16, 32], strides = [1, 1]} : vector<16x64xf32> to vector<16x32xf32>
    %750 = vector.extract_strided_slice %748 {offsets = [0, 32], sizes = [16, 32], strides = [1, 1]} : vector<16x64xf32> to vector<16x32xf32>
    %751 = vector.extract_strided_slice %731 {offsets = [0, 64], sizes = [16, 32], strides = [1, 1]} : vector<16x128xf32> to vector<16x32xf32>
    %752 = vector.extract_strided_slice %740 {offsets = [0, 64], sizes = [16, 32], strides = [1, 1]} : vector<16x128xf32> to vector<16x32xf32>
    %753 = arith.addf %752, %497 : vector<16x32xf32>
    %754 = arith.mulf %749, %753 : vector<16x32xf32>
    %755 = arith.addf %751, %754 : vector<16x32xf32>
    %756 = math.tanh %755 : vector<16x32xf32>
    %cst_235 = arith.constant 1.000000e+00 : f32
    %757 = vector.broadcast %cst_235 : f32 to vector<16x32xf32>
    %758 = arith.subf %757, %750 : vector<16x32xf32>
    %759 = arith.subf %756, %717 : vector<16x32xf32>
    %760 = arith.mulf %758, %759 : vector<16x32xf32>
    %761 = vector.broadcast %734 : vector<16x1xf32> to vector<16x32xf32>
    %762 = arith.mulf %761, %760 : vector<16x32xf32>
    %763 = arith.addf %717, %762 : vector<16x32xf32>
    %764 = vector.broadcast %734 : vector<16x1xf32> to vector<16x32xf32>
    %765 = arith.mulf %764, %763 : vector<16x32xf32>
    %766 = arith.index_cast %c5_i32_228 : i32 to index
    %c0_236 = arith.constant 0 : index
    %c0_237 = arith.constant 0 : index
    %767 = vector.load %arg11[%766, %c0_236, %c0_237] : memref<10x16x32xf32, #tpu.memory_space<vmem>>, vector<1x16x32xf32>
    %768 = vector.shape_cast %767 : vector<1x16x32xf32> to vector<16x32xf32>
    %769 = vector.shape_cast %765 : vector<16x32xf32> to vector<1x16x32xf32>
    tpu.vector_store %arg11[%766, %c0_236, %c0_237], %769 {strides = array<i32>} : memref<10x16x32xf32, #tpu.memory_space<vmem>>, vector<1x16x32xf32>,
    %c9_i32_238 = arith.constant 9 : i32
    %770 = arith.subi %c9_i32_238, %c5_i32_228 : i32
    %771 = arith.index_cast %770 : i32 to index
    %c0_239 = arith.constant 0 : index
    %c0_240 = arith.constant 0 : index
    %772 = vector.load %arg12[%771, %c0_239, %c0_240] : memref<10x16x32xf32, #tpu.memory_space<vmem>>, vector<1x16x32xf32>
    %773 = vector.shape_cast %772 : vector<1x16x32xf32> to vector<16x32xf32>
    %774 = vector.shape_cast %765 : vector<16x32xf32> to vector<1x16x32xf32>
    tpu.vector_store %arg12[%771, %c0_239, %c0_240], %774 {strides = array<i32>} : memref<10x16x32xf32, #tpu.memory_space<vmem>>, vector<1x16x32xf32>,
    %c6_i32_241 = arith.constant 6 : i32
    %775 = arith.index_cast %c6_i32_241 : i32 to index
    %c0_242 = arith.constant 0 : index
    %c0_243 = arith.constant 0 : index
    %776 = vector.load %arg10[%775, %c0_242, %c0_243] : memref<10x16x128xf32, #tpu.memory_space<vmem>>, vector<1x16x128xf32>
    %777 = vector.shape_cast %776 : vector<1x16x128xf32> to vector<16x128xf32>
    %778 = arith.index_cast %c6_i32_241 : i32 to index
    %c0_244 = arith.constant 0 : index
    %c0_245 = arith.constant 0 : index
    %779 = vector.load %arg2[%778, %c0_244, %c0_245] : memref<10x16x1xf32, #tpu.memory_space<vmem>>, vector<1x16x1xf32>
    %780 = vector.shape_cast %779 : vector<1x16x1xf32> to vector<16x1xf32>
    %cst_246 = arith.constant dense<0.000000e+00> : vector<16x256xf32>
    %781 = tpu.matmul %763, %495, %cst_246 {dimension_numbers = #tpu.dot_dimension_numbers<[1], [0], [0], [1], [0, 0, 1, 1], [], []>} : vector<16x32xf32>, vector<32x256xf32>, vector<16x256xf32> -> vector<16x256xf32>
    %782 = vector.extract_strided_slice %781 {offsets = [0, 0], sizes = [16, 128], strides = [1, 1]} : vector<16x256xf32> to vector<16x128xf32>
    %783 = vector.extract_strided_slice %781 {offsets = [0, 128], sizes = [16, 128], strides = [1, 1]} : vector<16x256xf32> to vector<16x128xf32>
    %784 = vector.shape_cast %2 : vector<16x1xi1> to vector<16x1xi1>
    %785 = vector.broadcast %784 : vector<16x1xi1> to vector<16x128xi1>
    %786 = arith.select %785, %782, %783 : vector<16x128xi1>, vector<16x128xf32>
    %787 = vector.extract_strided_slice %777 {offsets = [0, 0], sizes = [16, 64], strides = [1, 1]} : vector<16x128xf32> to vector<16x64xf32>
    %788 = vector.extract_strided_slice %786 {offsets = [0, 0], sizes = [16, 64], strides = [1, 1]} : vector<16x128xf32> to vector<16x64xf32>
    %789 = arith.addf %787, %788 : vector<16x64xf32>
    %790 = arith.negf %789 : vector<16x64xf32>
    %791 = math.exp %790 : vector<16x64xf32>
    %cst_247 = arith.constant 1.000000e+00 : f32
    %792 = vector.broadcast %cst_247 : f32 to vector<16x64xf32>
    %793 = arith.addf %792, %791 : vector<16x64xf32>
    %794 = arith.divf %792, %793 : vector<16x64xf32>
    %795 = vector.extract_strided_slice %794 {offsets = [0, 0], sizes = [16, 32], strides = [1, 1]} : vector<16x64xf32> to vector<16x32xf32>
    %796 = vector.extract_strided_slice %794 {offsets = [0, 32], sizes = [16, 32], strides = [1, 1]} : vector<16x64xf32> to vector<16x32xf32>
    %797 = vector.extract_strided_slice %777 {offsets = [0, 64], sizes = [16, 32], strides = [1, 1]} : vector<16x128xf32> to vector<16x32xf32>
    %798 = vector.extract_strided_slice %786 {offsets = [0, 64], sizes = [16, 32], strides = [1, 1]} : vector<16x128xf32> to vector<16x32xf32>
    %799 = arith.addf %798, %497 : vector<16x32xf32>
    %800 = arith.mulf %795, %799 : vector<16x32xf32>
    %801 = arith.addf %797, %800 : vector<16x32xf32>
    %802 = math.tanh %801 : vector<16x32xf32>
    %cst_248 = arith.constant 1.000000e+00 : f32
    %803 = vector.broadcast %cst_248 : f32 to vector<16x32xf32>
    %804 = arith.subf %803, %796 : vector<16x32xf32>
    %805 = arith.subf %802, %763 : vector<16x32xf32>
    %806 = arith.mulf %804, %805 : vector<16x32xf32>
    %807 = vector.broadcast %780 : vector<16x1xf32> to vector<16x32xf32>
    %808 = arith.mulf %807, %806 : vector<16x32xf32>
    %809 = arith.addf %763, %808 : vector<16x32xf32>
    %810 = vector.broadcast %780 : vector<16x1xf32> to vector<16x32xf32>
    %811 = arith.mulf %810, %809 : vector<16x32xf32>
    %812 = arith.index_cast %c6_i32_241 : i32 to index
    %c0_249 = arith.constant 0 : index
    %c0_250 = arith.constant 0 : index
    %813 = vector.load %arg11[%812, %c0_249, %c0_250] : memref<10x16x32xf32, #tpu.memory_space<vmem>>, vector<1x16x32xf32>
    %814 = vector.shape_cast %813 : vector<1x16x32xf32> to vector<16x32xf32>
    %815 = vector.shape_cast %811 : vector<16x32xf32> to vector<1x16x32xf32>
    tpu.vector_store %arg11[%812, %c0_249, %c0_250], %815 {strides = array<i32>} : memref<10x16x32xf32, #tpu.memory_space<vmem>>, vector<1x16x32xf32>,
    %c9_i32_251 = arith.constant 9 : i32
    %816 = arith.subi %c9_i32_251, %c6_i32_241 : i32
    %817 = arith.index_cast %816 : i32 to index
    %c0_252 = arith.constant 0 : index
    %c0_253 = arith.constant 0 : index
    %818 = vector.load %arg12[%817, %c0_252, %c0_253] : memref<10x16x32xf32, #tpu.memory_space<vmem>>, vector<1x16x32xf32>
    %819 = vector.shape_cast %818 : vector<1x16x32xf32> to vector<16x32xf32>
    %820 = vector.shape_cast %811 : vector<16x32xf32> to vector<1x16x32xf32>
    tpu.vector_store %arg12[%817, %c0_252, %c0_253], %820 {strides = array<i32>} : memref<10x16x32xf32, #tpu.memory_space<vmem>>, vector<1x16x32xf32>,
    %c7_i32_254 = arith.constant 7 : i32
    %821 = arith.index_cast %c7_i32_254 : i32 to index
    %c0_255 = arith.constant 0 : index
    %c0_256 = arith.constant 0 : index
    %822 = vector.load %arg10[%821, %c0_255, %c0_256] : memref<10x16x128xf32, #tpu.memory_space<vmem>>, vector<1x16x128xf32>
    %823 = vector.shape_cast %822 : vector<1x16x128xf32> to vector<16x128xf32>
    %824 = arith.index_cast %c7_i32_254 : i32 to index
    %c0_257 = arith.constant 0 : index
    %c0_258 = arith.constant 0 : index
    %825 = vector.load %arg2[%824, %c0_257, %c0_258] : memref<10x16x1xf32, #tpu.memory_space<vmem>>, vector<1x16x1xf32>
    %826 = vector.shape_cast %825 : vector<1x16x1xf32> to vector<16x1xf32>
    %cst_259 = arith.constant dense<0.000000e+00> : vector<16x256xf32>
    %827 = tpu.matmul %809, %495, %cst_259 {dimension_numbers = #tpu.dot_dimension_numbers<[1], [0], [0], [1], [0, 0, 1, 1], [], []>} : vector<16x32xf32>, vector<32x256xf32>, vector<16x256xf32> -> vector<16x256xf32>
    %828 = vector.extract_strided_slice %827 {offsets = [0, 0], sizes = [16, 128], strides = [1, 1]} : vector<16x256xf32> to vector<16x128xf32>
    %829 = vector.extract_strided_slice %827 {offsets = [0, 128], sizes = [16, 128], strides = [1, 1]} : vector<16x256xf32> to vector<16x128xf32>
    %830 = vector.shape_cast %2 : vector<16x1xi1> to vector<16x1xi1>
    %831 = vector.broadcast %830 : vector<16x1xi1> to vector<16x128xi1>
    %832 = arith.select %831, %828, %829 : vector<16x128xi1>, vector<16x128xf32>
    %833 = vector.extract_strided_slice %823 {offsets = [0, 0], sizes = [16, 64], strides = [1, 1]} : vector<16x128xf32> to vector<16x64xf32>
    %834 = vector.extract_strided_slice %832 {offsets = [0, 0], sizes = [16, 64], strides = [1, 1]} : vector<16x128xf32> to vector<16x64xf32>
    %835 = arith.addf %833, %834 : vector<16x64xf32>
    %836 = arith.negf %835 : vector<16x64xf32>
    %837 = math.exp %836 : vector<16x64xf32>
    %cst_260 = arith.constant 1.000000e+00 : f32
    %838 = vector.broadcast %cst_260 : f32 to vector<16x64xf32>
    %839 = arith.addf %838, %837 : vector<16x64xf32>
    %840 = arith.divf %838, %839 : vector<16x64xf32>
    %841 = vector.extract_strided_slice %840 {offsets = [0, 0], sizes = [16, 32], strides = [1, 1]} : vector<16x64xf32> to vector<16x32xf32>
    %842 = vector.extract_strided_slice %840 {offsets = [0, 32], sizes = [16, 32], strides = [1, 1]} : vector<16x64xf32> to vector<16x32xf32>
    %843 = vector.extract_strided_slice %823 {offsets = [0, 64], sizes = [16, 32], strides = [1, 1]} : vector<16x128xf32> to vector<16x32xf32>
    %844 = vector.extract_strided_slice %832 {offsets = [0, 64], sizes = [16, 32], strides = [1, 1]} : vector<16x128xf32> to vector<16x32xf32>
    %845 = arith.addf %844, %497 : vector<16x32xf32>
    %846 = arith.mulf %841, %845 : vector<16x32xf32>
    %847 = arith.addf %843, %846 : vector<16x32xf32>
    %848 = math.tanh %847 : vector<16x32xf32>
    %cst_261 = arith.constant 1.000000e+00 : f32
    %849 = vector.broadcast %cst_261 : f32 to vector<16x32xf32>
    %850 = arith.subf %849, %842 : vector<16x32xf32>
    %851 = arith.subf %848, %809 : vector<16x32xf32>
    %852 = arith.mulf %850, %851 : vector<16x32xf32>
    %853 = vector.broadcast %826 : vector<16x1xf32> to vector<16x32xf32>
    %854 = arith.mulf %853, %852 : vector<16x32xf32>
    %855 = arith.addf %809, %854 : vector<16x32xf32>
    %856 = vector.broadcast %826 : vector<16x1xf32> to vector<16x32xf32>
    %857 = arith.mulf %856, %855 : vector<16x32xf32>
    %858 = arith.index_cast %c7_i32_254 : i32 to index
    %c0_262 = arith.constant 0 : index
    %c0_263 = arith.constant 0 : index
    %859 = vector.load %arg11[%858, %c0_262, %c0_263] : memref<10x16x32xf32, #tpu.memory_space<vmem>>, vector<1x16x32xf32>
    %860 = vector.shape_cast %859 : vector<1x16x32xf32> to vector<16x32xf32>
    %861 = vector.shape_cast %857 : vector<16x32xf32> to vector<1x16x32xf32>
    tpu.vector_store %arg11[%858, %c0_262, %c0_263], %861 {strides = array<i32>} : memref<10x16x32xf32, #tpu.memory_space<vmem>>, vector<1x16x32xf32>,
    %c9_i32_264 = arith.constant 9 : i32
    %862 = arith.subi %c9_i32_264, %c7_i32_254 : i32
    %863 = arith.index_cast %862 : i32 to index
    %c0_265 = arith.constant 0 : index
    %c0_266 = arith.constant 0 : index
    %864 = vector.load %arg12[%863, %c0_265, %c0_266] : memref<10x16x32xf32, #tpu.memory_space<vmem>>, vector<1x16x32xf32>
    %865 = vector.shape_cast %864 : vector<1x16x32xf32> to vector<16x32xf32>
    %866 = vector.shape_cast %857 : vector<16x32xf32> to vector<1x16x32xf32>
    tpu.vector_store %arg12[%863, %c0_265, %c0_266], %866 {strides = array<i32>} : memref<10x16x32xf32, #tpu.memory_space<vmem>>, vector<1x16x32xf32>,
    %c8_i32_267 = arith.constant 8 : i32
    %867 = arith.index_cast %c8_i32_267 : i32 to index
    %c0_268 = arith.constant 0 : index
    %c0_269 = arith.constant 0 : index
    %868 = vector.load %arg10[%867, %c0_268, %c0_269] : memref<10x16x128xf32, #tpu.memory_space<vmem>>, vector<1x16x128xf32>
    %869 = vector.shape_cast %868 : vector<1x16x128xf32> to vector<16x128xf32>
    %870 = arith.index_cast %c8_i32_267 : i32 to index
    %c0_270 = arith.constant 0 : index
    %c0_271 = arith.constant 0 : index
    %871 = vector.load %arg2[%870, %c0_270, %c0_271] : memref<10x16x1xf32, #tpu.memory_space<vmem>>, vector<1x16x1xf32>
    %872 = vector.shape_cast %871 : vector<1x16x1xf32> to vector<16x1xf32>
    %cst_272 = arith.constant dense<0.000000e+00> : vector<16x256xf32>
    %873 = tpu.matmul %855, %495, %cst_272 {dimension_numbers = #tpu.dot_dimension_numbers<[1], [0], [0], [1], [0, 0, 1, 1], [], []>} : vector<16x32xf32>, vector<32x256xf32>, vector<16x256xf32> -> vector<16x256xf32>
    %874 = vector.extract_strided_slice %873 {offsets = [0, 0], sizes = [16, 128], strides = [1, 1]} : vector<16x256xf32> to vector<16x128xf32>
    %875 = vector.extract_strided_slice %873 {offsets = [0, 128], sizes = [16, 128], strides = [1, 1]} : vector<16x256xf32> to vector<16x128xf32>
    %876 = vector.shape_cast %2 : vector<16x1xi1> to vector<16x1xi1>
    %877 = vector.broadcast %876 : vector<16x1xi1> to vector<16x128xi1>
    %878 = arith.select %877, %874, %875 : vector<16x128xi1>, vector<16x128xf32>
    %879 = vector.extract_strided_slice %869 {offsets = [0, 0], sizes = [16, 64], strides = [1, 1]} : vector<16x128xf32> to vector<16x64xf32>
    %880 = vector.extract_strided_slice %878 {offsets = [0, 0], sizes = [16, 64], strides = [1, 1]} : vector<16x128xf32> to vector<16x64xf32>
    %881 = arith.addf %879, %880 : vector<16x64xf32>
    %882 = arith.negf %881 : vector<16x64xf32>
    %883 = math.exp %882 : vector<16x64xf32>
    %cst_273 = arith.constant 1.000000e+00 : f32
    %884 = vector.broadcast %cst_273 : f32 to vector<16x64xf32>
    %885 = arith.addf %884, %883 : vector<16x64xf32>
    %886 = arith.divf %884, %885 : vector<16x64xf32>
    %887 = vector.extract_strided_slice %886 {offsets = [0, 0], sizes = [16, 32], strides = [1, 1]} : vector<16x64xf32> to vector<16x32xf32>
    %888 = vector.extract_strided_slice %886 {offsets = [0, 32], sizes = [16, 32], strides = [1, 1]} : vector<16x64xf32> to vector<16x32xf32>
    %889 = vector.extract_strided_slice %869 {offsets = [0, 64], sizes = [16, 32], strides = [1, 1]} : vector<16x128xf32> to vector<16x32xf32>
    %890 = vector.extract_strided_slice %878 {offsets = [0, 64], sizes = [16, 32], strides = [1, 1]} : vector<16x128xf32> to vector<16x32xf32>
    %891 = arith.addf %890, %497 : vector<16x32xf32>
    %892 = arith.mulf %887, %891 : vector<16x32xf32>
    %893 = arith.addf %889, %892 : vector<16x32xf32>
    %894 = math.tanh %893 : vector<16x32xf32>
    %cst_274 = arith.constant 1.000000e+00 : f32
    %895 = vector.broadcast %cst_274 : f32 to vector<16x32xf32>
    %896 = arith.subf %895, %888 : vector<16x32xf32>
    %897 = arith.subf %894, %855 : vector<16x32xf32>
    %898 = arith.mulf %896, %897 : vector<16x32xf32>
    %899 = vector.broadcast %872 : vector<16x1xf32> to vector<16x32xf32>
    %900 = arith.mulf %899, %898 : vector<16x32xf32>
    %901 = arith.addf %855, %900 : vector<16x32xf32>
    %902 = vector.broadcast %872 : vector<16x1xf32> to vector<16x32xf32>
    %903 = arith.mulf %902, %901 : vector<16x32xf32>
    %904 = arith.index_cast %c8_i32_267 : i32 to index
    %c0_275 = arith.constant 0 : index
    %c0_276 = arith.constant 0 : index
    %905 = vector.load %arg11[%904, %c0_275, %c0_276] : memref<10x16x32xf32, #tpu.memory_space<vmem>>, vector<1x16x32xf32>
    %906 = vector.shape_cast %905 : vector<1x16x32xf32> to vector<16x32xf32>
    %907 = vector.shape_cast %903 : vector<16x32xf32> to vector<1x16x32xf32>
    tpu.vector_store %arg11[%904, %c0_275, %c0_276], %907 {strides = array<i32>} : memref<10x16x32xf32, #tpu.memory_space<vmem>>, vector<1x16x32xf32>,
    %c9_i32_277 = arith.constant 9 : i32
    %908 = arith.subi %c9_i32_277, %c8_i32_267 : i32
    %909 = arith.index_cast %908 : i32 to index
    %c0_278 = arith.constant 0 : index
    %c0_279 = arith.constant 0 : index
    %910 = vector.load %arg12[%909, %c0_278, %c0_279] : memref<10x16x32xf32, #tpu.memory_space<vmem>>, vector<1x16x32xf32>
    %911 = vector.shape_cast %910 : vector<1x16x32xf32> to vector<16x32xf32>
    %912 = vector.shape_cast %903 : vector<16x32xf32> to vector<1x16x32xf32>
    tpu.vector_store %arg12[%909, %c0_278, %c0_279], %912 {strides = array<i32>} : memref<10x16x32xf32, #tpu.memory_space<vmem>>, vector<1x16x32xf32>,
    %c9_i32_280 = arith.constant 9 : i32
    %913 = arith.index_cast %c9_i32_280 : i32 to index
    %c0_281 = arith.constant 0 : index
    %c0_282 = arith.constant 0 : index
    %914 = vector.load %arg10[%913, %c0_281, %c0_282] : memref<10x16x128xf32, #tpu.memory_space<vmem>>, vector<1x16x128xf32>
    %915 = vector.shape_cast %914 : vector<1x16x128xf32> to vector<16x128xf32>
    %916 = arith.index_cast %c9_i32_280 : i32 to index
    %c0_283 = arith.constant 0 : index
    %c0_284 = arith.constant 0 : index
    %917 = vector.load %arg2[%916, %c0_283, %c0_284] : memref<10x16x1xf32, #tpu.memory_space<vmem>>, vector<1x16x1xf32>
    %918 = vector.shape_cast %917 : vector<1x16x1xf32> to vector<16x1xf32>
    %cst_285 = arith.constant dense<0.000000e+00> : vector<16x256xf32>
    %919 = tpu.matmul %901, %495, %cst_285 {dimension_numbers = #tpu.dot_dimension_numbers<[1], [0], [0], [1], [0, 0, 1, 1], [], []>} : vector<16x32xf32>, vector<32x256xf32>, vector<16x256xf32> -> vector<16x256xf32>
    %920 = vector.extract_strided_slice %919 {offsets = [0, 0], sizes = [16, 128], strides = [1, 1]} : vector<16x256xf32> to vector<16x128xf32>
    %921 = vector.extract_strided_slice %919 {offsets = [0, 128], sizes = [16, 128], strides = [1, 1]} : vector<16x256xf32> to vector<16x128xf32>
    %922 = vector.shape_cast %2 : vector<16x1xi1> to vector<16x1xi1>
    %923 = vector.broadcast %922 : vector<16x1xi1> to vector<16x128xi1>
    %924 = arith.select %923, %920, %921 : vector<16x128xi1>, vector<16x128xf32>
    %925 = vector.extract_strided_slice %915 {offsets = [0, 0], sizes = [16, 64], strides = [1, 1]} : vector<16x128xf32> to vector<16x64xf32>
    %926 = vector.extract_strided_slice %924 {offsets = [0, 0], sizes = [16, 64], strides = [1, 1]} : vector<16x128xf32> to vector<16x64xf32>
    %927 = arith.addf %925, %926 : vector<16x64xf32>
    %928 = arith.negf %927 : vector<16x64xf32>
    %929 = math.exp %928 : vector<16x64xf32>
    %cst_286 = arith.constant 1.000000e+00 : f32
    %930 = vector.broadcast %cst_286 : f32 to vector<16x64xf32>
    %931 = arith.addf %930, %929 : vector<16x64xf32>
    %932 = arith.divf %930, %931 : vector<16x64xf32>
    %933 = vector.extract_strided_slice %932 {offsets = [0, 0], sizes = [16, 32], strides = [1, 1]} : vector<16x64xf32> to vector<16x32xf32>
    %934 = vector.extract_strided_slice %932 {offsets = [0, 32], sizes = [16, 32], strides = [1, 1]} : vector<16x64xf32> to vector<16x32xf32>
    %935 = vector.extract_strided_slice %915 {offsets = [0, 64], sizes = [16, 32], strides = [1, 1]} : vector<16x128xf32> to vector<16x32xf32>
    %936 = vector.extract_strided_slice %924 {offsets = [0, 64], sizes = [16, 32], strides = [1, 1]} : vector<16x128xf32> to vector<16x32xf32>
    %937 = arith.addf %936, %497 : vector<16x32xf32>
    %938 = arith.mulf %933, %937 : vector<16x32xf32>
    %939 = arith.addf %935, %938 : vector<16x32xf32>
    %940 = math.tanh %939 : vector<16x32xf32>
    %cst_287 = arith.constant 1.000000e+00 : f32
    %941 = vector.broadcast %cst_287 : f32 to vector<16x32xf32>
    %942 = arith.subf %941, %934 : vector<16x32xf32>
    %943 = arith.subf %940, %901 : vector<16x32xf32>
    %944 = arith.mulf %942, %943 : vector<16x32xf32>
    %945 = vector.broadcast %918 : vector<16x1xf32> to vector<16x32xf32>
    %946 = arith.mulf %945, %944 : vector<16x32xf32>
    %947 = arith.addf %901, %946 : vector<16x32xf32>
    %948 = vector.broadcast %918 : vector<16x1xf32> to vector<16x32xf32>
    %949 = arith.mulf %948, %947 : vector<16x32xf32>
    %950 = arith.index_cast %c9_i32_280 : i32 to index
    %c0_288 = arith.constant 0 : index
    %c0_289 = arith.constant 0 : index
    %951 = vector.load %arg11[%950, %c0_288, %c0_289] : memref<10x16x32xf32, #tpu.memory_space<vmem>>, vector<1x16x32xf32>
    %952 = vector.shape_cast %951 : vector<1x16x32xf32> to vector<16x32xf32>
    %953 = vector.shape_cast %949 : vector<16x32xf32> to vector<1x16x32xf32>
    tpu.vector_store %arg11[%950, %c0_288, %c0_289], %953 {strides = array<i32>} : memref<10x16x32xf32, #tpu.memory_space<vmem>>, vector<1x16x32xf32>,
    %c9_i32_290 = arith.constant 9 : i32
    %954 = arith.subi %c9_i32_290, %c9_i32_280 : i32
    %955 = arith.index_cast %954 : i32 to index
    %c0_291 = arith.constant 0 : index
    %c0_292 = arith.constant 0 : index
    %956 = vector.load %arg12[%955, %c0_291, %c0_292] : memref<10x16x32xf32, #tpu.memory_space<vmem>>, vector<1x16x32xf32>
    %957 = vector.shape_cast %956 : vector<1x16x32xf32> to vector<16x32xf32>
    %958 = vector.shape_cast %949 : vector<16x32xf32> to vector<1x16x32xf32>
    tpu.vector_store %arg12[%955, %c0_291, %c0_292], %958 {strides = array<i32>} : memref<10x16x32xf32, #tpu.memory_space<vmem>>, vector<1x16x32xf32>,
    %c10_i32_293 = arith.constant 10 : i32
    %c0_294 = arith.constant 0 : index
    %c0_295 = arith.constant 0 : index
    %c0_296 = arith.constant 0 : index
    %959 = vector.load %arg11[%c0_294, %c0_295, %c0_296] : memref<10x16x32xf32, #tpu.memory_space<vmem>>, vector<10x8x32xf32>
    %c0_297 = arith.constant 0 : index
    %c8_298 = arith.constant 8 : index
    %c0_299 = arith.constant 0 : index
    %960 = vector.load %arg12[%c0_297, %c8_298, %c0_299] : memref<10x16x32xf32, #tpu.memory_space<vmem>>, vector<10x8x32xf32>
    %961 = tpu.concatenate %959, %960 in 2 : vector<10x8x32xf32>, vector<10x8x32xf32> -> vector<10x8x64xf32>
    %c65 = arith.constant 65 : index
    %c0_300 = arith.constant 0 : index
    %962 = vector.load %arg8[%c65, %c0_300] : memref<66x64xf32, #tpu.memory_space<vmem>>, vector<1x64xf32>
    %c64_301 = arith.constant 64 : index
    %c34 = arith.constant 34 : index
    %963 = vector.load %arg8[%c64_301, %c34] : memref<66x64xf32, #tpu.memory_space<vmem>>, vector<1x1xf32>
    %964 = vector.shape_cast %962 : vector<1x64xf32> to vector<1x1x64xf32>
    %965 = vector.broadcast %964 : vector<1x1x64xf32> to vector<10x8x64xf32>
    %966 = arith.mulf %961, %965 : vector<10x8x64xf32>
    %cst_302 = arith.constant dense<0.000000e+00> : vector<10x8xf32>
    %967 = vector.multi_reduction <add>, %966, %cst_302 [2] : vector<10x8x64xf32> to vector<10x8xf32>
    %968 = vector.broadcast %963 : vector<1x1xf32> to vector<10x8xf32>
    %969 = arith.addf %967, %968 : vector<10x8xf32>
    %c0_303 = arith.constant 0 : index
    %c0_304 = arith.constant 0 : index
    %970 = vector.load %arg3[%c0_303, %c0_304] : memref<10x1xf32, #tpu.memory_space<vmem>>, vector<10x1xf32>
    %cst_305 = arith.constant 0.000000e+00 : f32
    %971 = vector.broadcast %cst_305 : f32 to vector<10x1xf32>
    %972 = arith.cmpf ogt, %970, %971 : vector<10x1xf32>
    %cst_306 = arith.constant -1.000000e+30 : f32
    %973 = vector.shape_cast %972 : vector<10x1xi1> to vector<10x1xi1>
    %974 = vector.broadcast %973 : vector<10x1xi1> to vector<10x8xi1>
    %975 = vector.broadcast %cst_306 : f32 to vector<10x8xf32>
    %976 = arith.select %974, %969, %975 : vector<10x8xi1>, vector<10x8xf32>
    %cst_307 = arith.constant dense<0xFF800000> : vector<8xf32>
    %977 = vector.multi_reduction <maximumf>, %976, %cst_307 [0] : vector<10x8xf32> to vector<8xf32>
    %978 = vector.shape_cast %977 : vector<8xf32> to vector<1x8xf32>
    %979 = vector.broadcast %978 : vector<1x8xf32> to vector<10x8xf32>
    %980 = arith.subf %976, %979 : vector<10x8xf32>
    %981 = math.exp %980 : vector<10x8xf32>
    %cst_308 = arith.constant dense<0.000000e+00> : vector<8xf32>
    %982 = vector.multi_reduction <add>, %981, %cst_308 [0] : vector<10x8xf32> to vector<8xf32>
    %983 = vector.shape_cast %982 : vector<8xf32> to vector<1x8xf32>
    %984 = vector.broadcast %983 : vector<1x8xf32> to vector<10x8xf32>
    %985 = arith.divf %981, %984 : vector<10x8xf32>
    %986 = vector.shape_cast %985 : vector<10x8xf32> to vector<10x8x1xf32>
    %987 = vector.broadcast %986 : vector<10x8x1xf32> to vector<10x8x64xf32>
    %988 = arith.mulf %987, %961 : vector<10x8x64xf32>
    %cst_309 = arith.constant dense<0.000000e+00> : vector<8x64xf32>
    %989 = vector.multi_reduction <add>, %988, %cst_309 [0] : vector<10x8x64xf32> to vector<8x64xf32>
    %c0_310 = arith.constant 0 : index
    %c0_311 = arith.constant 0 : index
    %990 = vector.load %arg8[%c0_310, %c0_311] : memref<66x64xf32, #tpu.memory_space<vmem>>, vector<64x32xf32>
    %c64_312 = arith.constant 64 : index
    %c0_313 = arith.constant 0 : index
    %991 = vector.load %arg8[%c64_312, %c0_313] : memref<66x64xf32, #tpu.memory_space<vmem>>, vector<1x32xf32>
    %c0_314 = arith.constant 0 : index
    %c32_315 = arith.constant 32 : index
    %992 = vector.load %arg8[%c0_314, %c32_315] : memref<66x64xf32, #tpu.memory_space<vmem>>, vector<32x2xf32>
    %c64_316 = arith.constant 64 : index
    %c32_317 = arith.constant 32 : index
    %993 = vector.load %arg8[%c64_316, %c32_317] : memref<66x64xf32, #tpu.memory_space<vmem>>, vector<1x2xf32>
    %cst_318 = arith.constant dense<0.000000e+00> : vector<8x32xf32>
    %994 = tpu.matmul %989, %990, %cst_318 {dimension_numbers = #tpu.dot_dimension_numbers<[1], [0], [0], [1], [0, 0, 1, 1], [], []>} : vector<8x64xf32>, vector<64x32xf32>, vector<8x32xf32> -> vector<8x32xf32>
    %995 = vector.broadcast %991 : vector<1x32xf32> to vector<8x32xf32>
    %996 = arith.addf %994, %995 : vector<8x32xf32>
    %cst_319 = arith.constant 0.000000e+00 : f32
    %997 = vector.broadcast %cst_319 : f32 to vector<8x32xf32>
    %998 = arith.maximumf %996, %997 : vector<8x32xf32>
    %cst_320 = arith.constant dense<0.000000e+00> : vector<8x2xf32>
    %999 = tpu.matmul %998, %992, %cst_320 {dimension_numbers = #tpu.dot_dimension_numbers<[1], [0], [0], [1], [0, 0, 1, 1], [], []>} : vector<8x32xf32>, vector<32x2xf32>, vector<8x2xf32> -> vector<8x2xf32>
    %1000 = vector.broadcast %993 : vector<1x2xf32> to vector<8x2xf32>
    %1001 = arith.addf %999, %1000 : vector<8x2xf32>
    %c0_321 = arith.constant 0 : index
    %c0_322 = arith.constant 0 : index
    %1002 = vector.load %arg9[%c0_321, %c0_322] : memref<8x2xf32, #tpu.memory_space<vmem>>, vector<8x2xf32>
    tpu.vector_store %arg9[%c0_321, %c0_322], %1001 {strides = array<i32>} : memref<8x2xf32, #tpu.memory_space<vmem>>, vector<8x2xf32>,
    return
  }
  func.func @transform_0(%arg0: i32) -> (i32, i32, i32) {
    %c0_i32 = arith.constant 0 : i32
    %c0_i32_0 = arith.constant 0 : i32
    %c0_i32_1 = arith.constant 0 : i32
    return %arg0, %c0_i32, %c0_i32_0 : i32, i32, i32
  }
  func.func @transform_1(%arg0: i32) -> (i32, i32, i32) {
    %c0_i32 = arith.constant 0 : i32
    %c0_i32_0 = arith.constant 0 : i32
    %c0_i32_1 = arith.constant 0 : i32
    return %arg0, %c0_i32, %c0_i32_0 : i32, i32, i32
  }
  func.func @transform_2(%arg0: i32) -> (i32, i32) {
    %c0_i32 = arith.constant 0 : i32
    %c0_i32_0 = arith.constant 0 : i32
    %c0_i32_1 = arith.constant 0 : i32
    return %c0_i32, %c0_i32_0 : i32, i32
  }
  func.func @transform_3(%arg0: i32) -> (i32, i32) {
    %c0_i32 = arith.constant 0 : i32
    %c0_i32_0 = arith.constant 0 : i32
    %c0_i32_1 = arith.constant 0 : i32
    return %c0_i32, %c0_i32_0 : i32, i32
  }
  func.func @transform_4(%arg0: i32) -> (i32, i32) {
    %c0_i32 = arith.constant 0 : i32
    %c0_i32_0 = arith.constant 0 : i32
    %c0_i32_1 = arith.constant 0 : i32
    return %c0_i32, %c0_i32_0 : i32, i32
  }
  func.func @transform_5(%arg0: i32) -> (i32, i32) {
    %c0_i32 = arith.constant 0 : i32
    %c0_i32_0 = arith.constant 0 : i32
    %c0_i32_1 = arith.constant 0 : i32
    return %c0_i32, %c0_i32_0 : i32, i32
  }
  func.func @transform_6(%arg0: i32) -> (i32, i32, i32) {
    %c0_i32 = arith.constant 0 : i32
    %c0_i32_0 = arith.constant 0 : i32
    %c0_i32_1 = arith.constant 0 : i32
    %c0_i32_2 = arith.constant 0 : i32
    return %c0_i32, %c0_i32_0, %c0_i32_1 : i32, i32, i32
  }
  func.func @transform_7(%arg0: i32) -> (i32, i32) {
    %c0_i32 = arith.constant 0 : i32
    %c0_i32_0 = arith.constant 0 : i32
    %c0_i32_1 = arith.constant 0 : i32
    return %c0_i32, %c0_i32_0 : i32, i32
  }
  func.func @transform_8(%arg0: i32) -> (i32, i32) {
    %c0_i32 = arith.constant 0 : i32
    %c0_i32_0 = arith.constant 0 : i32
    return %arg0, %c0_i32 : i32, i32
  }
}

</mosaic_0001>

<llo_original>
// kernel: tpu_custom_call.1
$region0: #{tpu_custom_call.1}
  #allocation0 [shape = 'u32[]', space=smem, size = 0x4, offset = 0x4, fixed_abs, tag = 'smem constant byte address 0x4 - core index']
  #allocation1 [shape = 'u32[144,128]{1,0:T(1,128)}', space=vmem, size = 0x12000, scoped, tag = 'internal scratch']
  #allocation2 [shape = 'f32[10,16,128]{2,1,0:T(8,128)}', space=vmem, size = 0x14000, scoped, tag = 'scratch operand']
  #allocation3 [shape = 'f32[10,16,32]{2,1,0:T(8,128)}', space=vmem, size = 0x14000, scoped, tag = 'scratch operand']
  #allocation4 [shape = 'f32[10,16,32]{2,1,0:T(8,128)}', space=vmem, size = 0x14000, scoped, tag = 'scratch operand']
  %s0 = inlined_call_operand.vmem [shape: f32[10,16,30], index: 0, kind: input, shape index: {}]
  %s1 = inlined_call_operand.vmem [shape: f32[10,16,1], index: 1, kind: input, shape index: {}]
  %s2 = inlined_call_operand.vmem [shape: f32[10,1], index: 2, kind: input, shape index: {}]
  %s3 = inlined_call_operand.hbm [shape: f32[30,128], index: 3, kind: input, shape index: {}]
  %s4 = inlined_call_operand.vmem [shape: f32[65,256], index: 4, kind: input, shape index: {}]
  %s5 = inlined_call_operand.hbm [shape: f32[64,256], index: 5, kind: input, shape index: {}]
  %s6 = inlined_call_operand.vmem [shape: f32[2,16,32], index: 6, kind: input, shape index: {}]
  %s7 = inlined_call_operand.vmem [shape: f32[66,64], index: 7, kind: input, shape index: {}]
  %s8 = inlined_call_operand.vmem [shape: f32[8,2], index: 8, kind: output, shape index: {}]
  %s9 = sld [smem:[#allocation0]]
  $region50: #{tpu_custom_call.1} parent=0
    _
  %s11 = ssub.s32 1, %s9
  %s12 = scalar_select 0, %s11, %s9
  $region1: #{tpu_custom_call.1} parent=0
    #allocation5 [shape = 'u8[16384]{0}', space=vmem, size = 0x4000, scoped, tag = 'input window, operand 3, single buffered']
    #allocation6 [shape = 's32[1]{0}', space=sflag, size = 0x4, scoped, tag = 'scoped memory for tpu_custom_call.1']
    #allocation7 [shape = 'u8[65536]{0}', space=vmem, size = 0x10000, scoped, tag = 'input window, operand 5, single buffered']
    #allocation8 [shape = 's32[1]{0}', space=sflag, size = 0x4, scoped, tag = 'scoped memory for tpu_custom_call.1']
    %13 = vsyncpa [#allocation6], 0
    %14 = vsyncpa [#allocation8], 0
    // Predicated region
    $region2: #{tpu_custom_call.1} parent=1 // pred_check
      _
    $region3: #{tpu_custom_call.1} parent=1 // pred_check_branch
      %16 = sbr.rel (0) target = $region5
    $region4: #{tpu_custom_call.1} parent=1 // pred_region
      _
    $region5: #{tpu_custom_call.1} parent=1 // pred_fallthru
      _
    // Predicated region
    $region6: #{tpu_custom_call.1} parent=1 // pred_check
      _
    $region7: #{tpu_custom_call.1} parent=1 // pred_check_branch
      %18 = sbr.rel (0) target = $region9
    $region8: #{tpu_custom_call.1} parent=1 // pred_region
      _
    $region9: #{tpu_custom_call.1} parent=1 // pred_fallthru
      _
    // Predicated region
    $region10: #{tpu_custom_call.1} parent=1 // pred_check
      _
    $region11: #{tpu_custom_call.1} parent=1 // pred_check_branch
      %20 = sbr.rel (0) target = $region13
    $region12: #{tpu_custom_call.1} parent=1 // pred_region
      _
    $region13: #{tpu_custom_call.1} parent=1 // pred_fallthru
      _
    // Predicated region
    $region14: #{tpu_custom_call.1} parent=1 // pred_check
      _
    $region15: #{tpu_custom_call.1} parent=1 // pred_check_branch
      %22 = sbr.rel (0) target = $region17
    $region16: #{tpu_custom_call.1} parent=1 // pred_region
      %s24 = ssub.s32 512, 512
      %25 = vsyncadd [#allocation6], %s24
      %s26 = sshll.u32 [#allocation5], 4
      %s27 = int_to_ptr.vmem [resolvable:$true] %s26
      %32 = dma.hbm_to_vmem [thread:$0]  %s3, 512, %s27, [#allocation6], 128, 128, 8
    $region17: #{tpu_custom_call.1} parent=1 // pred_fallthru
      _
    // Predicated region
    $region18: #{tpu_custom_call.1} parent=1 // pred_check
      _
    $region19: #{tpu_custom_call.1} parent=1 // pred_check_branch
      %34 = sbr.rel (0) target = $region21
    $region20: #{tpu_custom_call.1} parent=1 // pred_region
      _
    $region21: #{tpu_custom_call.1} parent=1 // pred_fallthru
      _
    // Predicated region
    $region22: #{tpu_custom_call.1} parent=1 // pred_check
      _
    $region23: #{tpu_custom_call.1} parent=1 // pred_check_branch
      %36 = sbr.rel (0) target = $region25
    $region24: #{tpu_custom_call.1} parent=1 // pred_region
      %s38 = ssub.s32 2048, 2048
      %39 = vsyncadd [#allocation8], %s38
      %s40 = sshll.u32 [#allocation7], 4
      %s41 = int_to_ptr.vmem [resolvable:$true] %s40
      %46 = dma.hbm_to_vmem [thread:$0]  %s5, 2048, %s41, [#allocation8], 256, 256, 16
    $region25: #{tpu_custom_call.1} parent=1 // pred_fallthru
      _
    // Predicated region
    $region26: #{tpu_custom_call.1} parent=1 // pred_check
      _
    $region27: #{tpu_custom_call.1} parent=1 // pred_check_branch
      %48 = sbr.rel (0) target = $region29
    $region28: #{tpu_custom_call.1} parent=1 // pred_region
      _
    $region29: #{tpu_custom_call.1} parent=1 // pred_fallthru
      _
    // Predicated region
    $region30: #{tpu_custom_call.1} parent=1 // pred_check
      _
    $region31: #{tpu_custom_call.1} parent=1 // pred_check_branch
      %50 = sbr.rel (0) target = $region33
    $region32: #{tpu_custom_call.1} parent=1 // pred_region
      _
    $region33: #{tpu_custom_call.1} parent=1 // pred_fallthru
      _
    // Predicated region
    $region34: #{tpu_custom_call.1} parent=1 // pred_check
      _
    $region35: #{tpu_custom_call.1} parent=1 // pred_check_branch
      %52 = sbr.rel (0) target = $region37
    $region36: #{tpu_custom_call.1} parent=1 // pred_region
      %53 = dma.done [#allocation6], 512
    $region37: #{tpu_custom_call.1} parent=1 // pred_fallthru
      _
    // Predicated region
    $region38: #{tpu_custom_call.1} parent=1 // pred_check
      _
    $region39: #{tpu_custom_call.1} parent=1 // pred_check_branch
      %55 = sbr.rel (0) target = $region41
    $region40: #{tpu_custom_call.1} parent=1 // pred_region
      %56 = dma.done [#allocation8], 2048
    $region41: #{tpu_custom_call.1} parent=1 // pred_fallthru
      _
    %v57 = vlaneseq
    %v58 = vshrl.u32 %v57, 7
    %v59 = vadd.s32 %v58, 8
    %vm60 = vcmp.lt.s32.totalorder %v58, 8
    %vm61 = vcmp.lt.s32.totalorder %v59, 8
    %v62 = vld [vmem:[%s0] sm:$0xff]
    %v63 = vld [vmem:[%s0 + $0x8] sm:$0xff]
    %v64 = vld [vmem:[%s0 + $0x10] sm:$0xff]
    %v65 = vld [vmem:[%s0 + $0x18] sm:$0xff]
    %v66 = vld [vmem:[%s0 + $0x20] sm:$0xff]
    %v67 = vld [vmem:[%s0 + $0x28] sm:$0xff]
    %v68 = vld [vmem:[%s0 + $0x30] sm:$0xff]
    %v69 = vld [vmem:[%s0 + $0x38] sm:$0xff]
    %v70 = vld [vmem:[%s0 + $0x40] sm:$0xff]
    %v71 = vld [vmem:[%s0 + $0x48] sm:$0xff]
    %v72 = vld [vmem:[%s0 + $0x50] sm:$0xff]
    %v73 = vld [vmem:[%s0 + $0x58] sm:$0xff]
    %v74 = vld [vmem:[%s0 + $0x60] sm:$0xff]
    %v75 = vld [vmem:[%s0 + $0x68] sm:$0xff]
    %v76 = vld [vmem:[%s0 + $0x70] sm:$0xff]
    %v77 = vld [vmem:[%s0 + $0x78] sm:$0xff]
    %v78 = vld [vmem:[%s0 + $0x80] sm:$0xff]
    %v79 = vld [vmem:[%s0 + $0x88] sm:$0xff]
    %v80 = vld [vmem:[%s0 + $0x90] sm:$0xff]
    %v81 = vld [vmem:[%s0 + $0x98] sm:$0xff]
    %v82 = vld [vmem:[#allocation5] sm:$0xff]
    %v83 = vld [vmem:[#allocation5 + $0x8] sm:$0xff]
    %v84 = vld [vmem:[#allocation5 + $0x10] sm:$0xff]
    %v85 = vld [vmem:[#allocation5 + $0x18] sm:$0x3f]
    %vm86 = vcmask 244736
    %v88 = vsel %vm86, %v62, 0
    %v91 = vsel %vm86, %v63, 0
    %v94 = vsel %vm86, %v64, 0
    %v97 = vsel %vm86, %v65, 0
    %v100 = vsel %vm86, %v66, 0
    %v103 = vsel %vm86, %v67, 0
    %v106 = vsel %vm86, %v68, 0
    %v109 = vsel %vm86, %v69, 0
    %v112 = vsel %vm86, %v70, 0
    %v115 = vsel %vm86, %v71, 0
    %v118 = vsel %vm86, %v72, 0
    %v121 = vsel %vm86, %v73, 0
    %v124 = vsel %vm86, %v74, 0
    %v127 = vsel %vm86, %v75, 0
    %v130 = vsel %vm86, %v76, 0
    %v133 = vsel %vm86, %v77, 0
    %v136 = vsel %vm86, %v78, 0
    %v139 = vsel %vm86, %v79, 0
    %v142 = vsel %vm86, %v80, 0
    %v145 = vsel %vm86, %v81, 0
    %vm147 = vcmask 1045504
    %v149 = vsel %vm147, %v85, 0
    %151 = vmatprep.subr.mxu0 0.0
    %152 = vmatpush1.msra.mxu0 %v82
    %153 = vmatprep.subr.mxu0 0.0
    %154 = vmatpush1.msra.mxu0 %v83
    %155 = vmatprep.subr.mxu0 0.0
    %156 = vmatpush1.msra.mxu0 %v84
    %157 = vmatprep.subr.mxu0 0.0
    %158 = vmatpush1.msra.mxu0 %v149
    %159 = vmatprep.subr.mxu0 0.0
    %160 = vmatpush1.msra.mxu0 0.0
    %161 = vmatprep.subr.mxu0 0.0
    %162 = vmatpush1.msra.mxu0 0.0
    %163 = vmatprep.subr.mxu0 0.0
    %164 = vmatpush1.msra.mxu0 0.0
    %165 = vmatprep.subr.mxu0 0.0
    %166 = vmatpush1.msra.mxu0 0.0
    %167 = vmatprep.subr.mxu0 0.0
    %168 = vmatpush1.msra.mxu0 0.0
    %169 = vmatprep.subr.mxu0 0.0
    %170 = vmatpush1.msra.mxu0 0.0
    %171 = vmatprep.subr.mxu0 0.0
    %172 = vmatpush1.msra.mxu0 0.0
    %173 = vmatprep.subr.mxu0 0.0
    %174 = vmatpush1.msra.mxu0 0.0
    %175 = vmatprep.subr.mxu0 0.0
    %176 = vmatpush1.msra.mxu0 0.0
    %177 = vmatprep.subr.mxu0 0.0
    %178 = vmatpush1.msra.mxu0 0.0
    %179 = vmatprep.subr.mxu0 0.0
    %180 = vmatpush1.msra.mxu0 0.0
    %181 = vmatprep.subr.mxu0 0.0
    %182 = vmatpush1.msra.mxu0 0.0
    %183 = vmatprep.subr.mxu0 0.0
    %184 = vmatpush1.msra.mxu0 0.0
    %185 = vmatprep.subr.mxu0 0.0
    %186 = vmatpush1.msra.mxu0 0.0
    %187 = vmatprep.subr.mxu0 0.0
    %188 = vmatpush1.msra.mxu0 0.0
    %189 = vmatprep.subr.mxu0 0.0
    %190 = vmatpush1.msra.mxu0 0.0
    %191 = vmatprep.subr.mxu0 0.0
    %192 = vmatpush1.msra.mxu0 0.0
    %193 = vmatprep.subr.mxu0 0.0
    %194 = vmatpush1.msra.mxu0 0.0
    %195 = vmatprep.subr.mxu0 0.0
    %196 = vmatpush1.msra.mxu0 0.0
    %197 = vmatprep.subr.mxu0 0.0
    %198 = vmatpush1.msra.mxu0 0.0
    %199 = vmatprep.subr.mxu0 0.0
    %200 = vmatpush1.msra.mxu0 0.0
    %201 = vmatprep.subr.mxu0 0.0
    %202 = vmatpush1.msra.mxu0 0.0
    %203 = vmatprep.subr.mxu0 0.0
    %204 = vmatpush1.msra.mxu0 0.0
    %205 = vmatprep.subr.mxu0 0.0
    %206 = vmatpush1.msra.mxu0 0.0
    %207 = vmatprep.subr.mxu0 0.0
    %208 = vmatpush1.msra.mxu0 0.0
    %209 = vmatprep.subr.mxu0 0.0
    %210 = vmatpush1.msra.mxu0 0.0
    %211 = vmatprep.subr.mxu0 0.0
    %212 = vmatpush1.msra.mxu0 0.0
    %213 = vmatprep.subr.mxu0 0.0
    %214 = vmatpush1.msra.mxu0 0.0
    %215 = vmatprep.mubr.f32.mxu0 0.0
    %216 = vmatmul.mubr.f32.gmra.mrb[0].mxu0 %v88
    %v217 = vpop.f32.mrb[0].mxu0
    %v218 = vadd.f32 0.0, %v217
    %v219 = vpop.f32.mrb[0].mxu0
    %220 = vmatprep.mubr.f32.mxu0 0.0
    %221 = vmatmul.mubr.f32.gmra.mrb[0].mxu0 %v91
    %v222 = vpop.f32.mrb[0].mxu0
    %v223 = vadd.f32 0.0, %v222
    %v224 = vpop.f32.mrb[0].mxu0
    %225 = vmatprep.mubr.f32.mxu0 0.0
    %226 = vmatmul.mubr.f32.gmra.mrb[0].mxu0 %v94
    %v227 = vpop.f32.mrb[0].mxu0
    %v228 = vadd.f32 0.0, %v227
    %v229 = vpop.f32.mrb[0].mxu0
    %230 = vmatprep.mubr.f32.mxu0 0.0
    %231 = vmatmul.mubr.f32.gmra.mrb[0].mxu0 %v97
    %v232 = vpop.f32.mrb[0].mxu0
    %v233 = vadd.f32 0.0, %v232
    %v234 = vpop.f32.mrb[0].mxu0
    %235 = vmatprep.mubr.f32.mxu0 0.0
    %236 = vmatmul.mubr.f32.gmra.mrb[0].mxu0 %v100
    %v237 = vpop.f32.mrb[0].mxu0
    %v238 = vadd.f32 0.0, %v237
    %v239 = vpop.f32.mrb[0].mxu0
    %240 = vmatprep.mubr.f32.mxu0 0.0
    %241 = vmatmul.mubr.f32.gmra.mrb[0].mxu0 %v103
    %v242 = vpop.f32.mrb[0].mxu0
    %v243 = vadd.f32 0.0, %v242
    %v244 = vpop.f32.mrb[0].mxu0
    %245 = vmatprep.mubr.f32.mxu0 0.0
    %246 = vmatmul.mubr.f32.gmra.mrb[0].mxu0 %v106
    %v247 = vpop.f32.mrb[0].mxu0
    %v248 = vadd.f32 0.0, %v247
    %v249 = vpop.f32.mrb[0].mxu0
    %250 = vmatprep.mubr.f32.mxu0 0.0
    %251 = vmatmul.mubr.f32.gmra.mrb[0].mxu0 %v109
    %v252 = vpop.f32.mrb[0].mxu0
    %v253 = vadd.f32 0.0, %v252
    %v254 = vpop.f32.mrb[0].mxu0
    %255 = vmatprep.mubr.f32.mxu0 0.0
    %256 = vmatmul.mubr.f32.gmra.mrb[0].mxu0 %v112
    %v257 = vpop.f32.mrb[0].mxu0
    %v258 = vadd.f32 0.0, %v257
    %v259 = vpop.f32.mrb[0].mxu0
    %260 = vmatprep.mubr.f32.mxu0 0.0
    %261 = vmatmul.mubr.f32.gmra.mrb[0].mxu0 %v115
    %v262 = vpop.f32.mrb[0].mxu0
    %v263 = vadd.f32 0.0, %v262
    %v264 = vpop.f32.mrb[0].mxu0
    %265 = vmatprep.mubr.f32.mxu0 0.0
    %266 = vmatmul.mubr.f32.gmra.mrb[0].mxu0 %v118
    %v267 = vpop.f32.mrb[0].mxu0
    %v268 = vadd.f32 0.0, %v267
    %v269 = vpop.f32.mrb[0].mxu0
    %270 = vmatprep.mubr.f32.mxu0 0.0
    %271 = vmatmul.mubr.f32.gmra.mrb[0].mxu0 %v121
    %v272 = vpop.f32.mrb[0].mxu0
    %v273 = vadd.f32 0.0, %v272
    %v274 = vpop.f32.mrb[0].mxu0
    %275 = vmatprep.mubr.f32.mxu0 0.0
    %276 = vmatmul.mubr.f32.gmra.mrb[0].mxu0 %v124
    %v277 = vpop.f32.mrb[0].mxu0
    %v278 = vadd.f32 0.0, %v277
    %v279 = vpop.f32.mrb[0].mxu0
    %280 = vmatprep.mubr.f32.mxu0 0.0
    %281 = vmatmul.mubr.f32.gmra.mrb[0].mxu0 %v127
    %v282 = vpop.f32.mrb[0].mxu0
    %v283 = vadd.f32 0.0, %v282
    %v284 = vpop.f32.mrb[0].mxu0
    %285 = vmatprep.mubr.f32.mxu0 0.0
    %286 = vmatmul.mubr.f32.gmra.mrb[0].mxu0 %v130
    %v287 = vpop.f32.mrb[0].mxu0
    %v288 = vadd.f32 0.0, %v287
    %v289 = vpop.f32.mrb[0].mxu0
    %290 = vmatprep.mubr.f32.mxu0 0.0
    %291 = vmatmul.mubr.f32.gmra.mrb[0].mxu0 %v133
    %v292 = vpop.f32.mrb[0].mxu0
    %v293 = vadd.f32 0.0, %v292
    %v294 = vpop.f32.mrb[0].mxu0
    %295 = vmatprep.mubr.f32.mxu0 0.0
    %296 = vmatmul.mubr.f32.gmra.mrb[0].mxu0 %v136
    %v297 = vpop.f32.mrb[0].mxu0
    %v298 = vadd.f32 0.0, %v297
    %v299 = vpop.f32.mrb[0].mxu0
    %300 = vmatprep.mubr.f32.mxu0 0.0
    %301 = vmatmul.mubr.f32.gmra.mrb[0].mxu0 %v139
    %v302 = vpop.f32.mrb[0].mxu0
    %v303 = vadd.f32 0.0, %v302
    %v304 = vpop.f32.mrb[0].mxu0
    %305 = vmatprep.mubr.f32.mxu0 0.0
    %306 = vmatmul.mubr.f32.gmra.mrb[0].mxu0 %v142
    %v307 = vpop.f32.mrb[0].mxu0
    %v308 = vadd.f32 0.0, %v307
    %v309 = vpop.f32.mrb[0].mxu0
    %310 = vmatprep.mubr.f32.mxu0 0.0
    %311 = vmatmul.mubr.f32.gmra.mrb[0].mxu0 %v145
    %v312 = vpop.f32.mrb[0].mxu0
    %v313 = vadd.f32 0.0, %v312
    %v314 = vpop.f32.mrb[0].mxu0
    %315 = vdwg.mxu0
    %316 = vst [vmem:[#allocation2] sm:$0xff] %v218
    %317 = vst [vmem:[#allocation2 + $0x8] sm:$0xff] %v223
    %318 = vst [vmem:[#allocation2 + $0x10] sm:$0xff] %v228
    %319 = vst [vmem:[#allocation2 + $0x18] sm:$0xff] %v233
    %320 = vst [vmem:[#allocation2 + $0x20] sm:$0xff] %v238
    %321 = vst [vmem:[#allocation2 + $0x28] sm:$0xff] %v243
    %322 = vst [vmem:[#allocation2 + $0x30] sm:$0xff] %v248
    %323 = vst [vmem:[#allocation2 + $0x38] sm:$0xff] %v253
    %324 = vst [vmem:[#allocation2 + $0x40] sm:$0xff] %v258
    %325 = vst [vmem:[#allocation2 + $0x48] sm:$0xff] %v263
    %326 = vst [vmem:[#allocation2 + $0x50] sm:$0xff] %v268
    %327 = vst [vmem:[#allocation2 + $0x58] sm:$0xff] %v273
    %328 = vst [vmem:[#allocation2 + $0x60] sm:$0xff] %v278
    %329 = vst [vmem:[#allocation2 + $0x68] sm:$0xff] %v283
    %330 = vst [vmem:[#allocation2 + $0x70] sm:$0xff] %v288
    %331 = vst [vmem:[#allocation2 + $0x78] sm:$0xff] %v293
    %332 = vst [vmem:[#allocation2 + $0x80] sm:$0xff] %v298
    %333 = vst [vmem:[#allocation2 + $0x88] sm:$0xff] %v303
    %334 = vst [vmem:[#allocation2 + $0x90] sm:$0xff] %v308
    %335 = vst [vmem:[#allocation2 + $0x98] sm:$0xff] %v313
    %v336 = vld [vmem:[#allocation7] sm:$0xff]
    %v337 = vld [vmem:[#allocation7 + $0x8] sm:$0xff]
    %v338 = vld [vmem:[#allocation7 + $0x10] sm:$0xff]
    %v339 = vld [vmem:[#allocation7 + $0x18] sm:$0xff]
    %v340 = vld [vmem:[#allocation7 + $0x20] sm:$0xff]
    %v341 = vld [vmem:[#allocation7 + $0x28] sm:$0xff]
    %v342 = vld [vmem:[#allocation7 + $0x30] sm:$0xff]
    %v343 = vld [vmem:[#allocation7 + $0x38] sm:$0xff]
    %v344 = vld [vmem:[%s6] sm:$0xff]
    %v345 = vld [vmem:[%s6 + $0x8] sm:$0xff]
    %v346 = vld [vmem:[#allocation2] sm:$0xff]
    %v347 = vld [vmem:[#allocation2 + $0x8] sm:$0xff]
    %v348 = vld [vmem:[%s1] sm:$0xff]
    %v349 = vld [vmem:[%s1 + $0x8] sm:$0xff]
    %vm350 = vcmask 261120
    %v352 = vsel %vm350, 0.0, 0
    %354 = vmatprep.subr.mxu0 %v337
    %355 = vmatpush1.msra.mxu0 %v336
    %356 = vmatprep.subr.mxu0 %v339
    %357 = vmatpush1.msra.mxu0 %v338
    %358 = vmatprep.subr.mxu0 %v341
    %359 = vmatpush1.msra.mxu0 %v340
    %360 = vmatprep.subr.mxu0 %v343
    %361 = vmatpush1.msra.mxu0 %v342
    %362 = vmatprep.subr.mxu0 0.0
    %363 = vmatpush1.msra.mxu0 0.0
    %364 = vmatprep.subr.mxu0 0.0
    %365 = vmatpush1.msra.mxu0 0.0
    %366 = vmatprep.subr.mxu0 0.0
    %367 = vmatpush1.msra.mxu0 0.0
    %368 = vmatprep.subr.mxu0 0.0
    %369 = vmatpush1.msra.mxu0 0.0
    %370 = vmatprep.subr.mxu0 0.0
    %371 = vmatpush1.msra.mxu0 0.0
    %372 = vmatprep.subr.mxu0 0.0
    %373 = vmatpush1.msra.mxu0 0.0
    %374 = vmatprep.subr.mxu0 0.0
    %375 = vmatpush1.msra.mxu0 0.0
    %376 = vmatprep.subr.mxu0 0.0
    %377 = vmatpush1.msra.mxu0 0.0
    %378 = vmatprep.subr.mxu0 0.0
    %379 = vmatpush1.msra.mxu0 0.0
    %380 = vmatprep.subr.mxu0 0.0
    %381 = vmatpush1.msra.mxu0 0.0
    %382 = vmatprep.subr.mxu0 0.0
    %383 = vmatpush1.msra.mxu0 0.0
    %384 = vmatprep.subr.mxu0 0.0
    %385 = vmatpush1.msra.mxu0 0.0
    %386 = vmatprep.subr.mxu0 0.0
    %387 = vmatpush1.msra.mxu0 0.0
    %388 = vmatprep.subr.mxu0 0.0
    %389 = vmatpush1.msra.mxu0 0.0
    %390 = vmatprep.subr.mxu0 0.0
    %391 = vmatpush1.msra.mxu0 0.0
    %392 = vmatprep.subr.mxu0 0.0
    %393 = vmatpush1.msra.mxu0 0.0
    %394 = vmatprep.subr.mxu0 0.0
    %395 = vmatpush1.msra.mxu0 0.0
    %396 = vmatprep.subr.mxu0 0.0
    %397 = vmatpush1.msra.mxu0 0.0
    %398 = vmatprep.subr.mxu0 0.0
    %399 = vmatpush1.msra.mxu0 0.0
    %400 = vmatprep.subr.mxu0 0.0
    %401 = vmatpush1.msra.mxu0 0.0
    %402 = vmatprep.subr.mxu0 0.0
    %403 = vmatpush1.msra.mxu0 0.0
    %404 = vmatprep.subr.mxu0 0.0
    %405 = vmatpush1.msra.mxu0 0.0
    %406 = vmatprep.subr.mxu0 0.0
    %407 = vmatpush1.msra.mxu0 0.0
    %408 = vmatprep.subr.mxu0 0.0
    %409 = vmatpush1.msra.mxu0 0.0
    %410 = vmatprep.subr.mxu0 0.0
    %411 = vmatpush1.msra.mxu0 0.0
    %412 = vmatprep.subr.mxu0 0.0
    %413 = vmatpush1.msra.mxu0 0.0
    %414 = vmatprep.subr.mxu0 0.0
    %415 = vmatpush1.msra.mxu0 0.0
    %416 = vmatprep.subr.mxu0 0.0
    %417 = vmatpush1.msra.mxu0 0.0
    %418 = vmatprep.mubr.f32.mxu0 0.0
    %419 = vmatmul.mubr.f32.gmra.mrb[0].mxu0 %v352
    %v420 = vpop.f32.mrb[0].mxu0
    %v421 = vadd.f32 0.0, %v420
    %v422 = vpop.f32.mrb[0].mxu0
    %v423 = vadd.f32 0.0, %v422
    %424 = vmatprep.mubr.f32.mxu0 0.0
    %425 = vmatmul.mubr.f32.gmra.mrb[0].mxu0 %v352
    %v426 = vpop.f32.mrb[0].mxu0
    %v427 = vadd.f32 0.0, %v426
    %v428 = vpop.f32.mrb[0].mxu0
    %v429 = vadd.f32 0.0, %v428
    %430 = vdwg.mxu0
    %v431 = vsel %vm60, 1, 0
    %v432 = vsel %vm61, 1, 0
    %vm433 = vcmp.eq.s32.totalorder %v431, 1
    %vm434 = vcmp.eq.s32.totalorder %v432, 1
    %v435 = vsel %vm433, %v421, %v423
    %v436 = vsel %vm434, %v427, %v429
    %v437 = vadd.f32 %v346, %v435
    %v438 = vadd.f32 %v347, %v436
    %v439 = vxor.u32 %v437, 2147483648
    %v440 = vxor.u32 %v438, 2147483648
    %v441 = vmul.f32 %v439, 1.442695
    %v442 = vpow.pop %v441
    %v443 = vmul.f32 %v440, 1.442695
    %v444 = vpow.pop %v443
    %v445 = vadd.f32 %v442, 1.0
    %v446 = vadd.f32 %v444, 1.0
    %v447 = vrcp.pop %v445
    %v448 = vmul.f32 1.0, %v447
    %v449 = vrcp.pop %v446
    %v450 = vmul.f32 1.0, %v449
    %453 = vrot.lane.b32.xlu0 %v344, 64
    %v454 = vpop.permute.xlu0 %453
    %455 = vrot.lane.b32.xlu0 %v345, 64
    %v456 = vpop.permute.xlu0 %455
    %v459 = vadd.f32 %v435, %v454
    %v460 = vadd.f32 %v436, %v456
    %463 = vrot.lane.b32.xlu0 %v459, 64
    %v464 = vpop.permute.xlu0 %463
    %465 = vrot.lane.b32.xlu0 %v460, 64
    %v466 = vpop.permute.xlu0 %465
    %v469 = vmul.f32 %v448, %v464
    %v470 = vmul.f32 %v450, %v466
    %473 = vrot.lane.b32.xlu0 %v469, 64
    %v474 = vpop.permute.xlu0 %473
    %475 = vrot.lane.b32.xlu0 %v470, 64
    %v476 = vpop.permute.xlu0 %475
    %v479 = vadd.f32 %v346, %v474
    %v480 = vadd.f32 %v347, %v476
    %v481 = vtanh.pop %v479
    %v482 = vtanh.pop %v480
    %v483 = vsub.f32 1.0, %v448
    %v484 = vsub.f32 1.0, %v450
    %487 = vrot.lane.b32.xlu0 %v481, 96
    %v488 = vpop.permute.xlu0 %487
    %489 = vrot.lane.b32.xlu0 %v482, 96
    %v490 = vpop.permute.xlu0 %489
    %v493 = vmul.f32 %v483, %v488
    %v494 = vmul.f32 %v484, %v490
    %496 = vset.pattern.permute.xlu0 0
    %497 = vperm.xlu0 %496, %v348
    %v498 = vpop.permute.xlu0 %497
    %501 = vset.pattern.permute.xlu0 0
    %502 = vperm.xlu0 %501, %v349
    %v503 = vpop.permute.xlu0 %502
    %v505 = vmul.f32 %v498, %v493
    %v506 = vmul.f32 %v503, %v494
    %v507 = vadd.f32 %v505, 0.0
    %v508 = vadd.f32 %v506, 0.0
    %v509 = vmul.f32 %v498, %v507
    %v510 = vmul.f32 %v503, %v508
    %513 = vrot.lane.b32.xlu0 %v509, 96
    %v514 = vpop.permute.xlu0 %513
    %515 = vrot.lane.b32.xlu0 %v510, 96
    %v516 = vpop.permute.xlu0 %515
    %519 = vst.msk [vmem:[#allocation3] sm:$0xff] %vm350, %v514
    %520 = vst.msk [vmem:[#allocation3 + $0x8] sm:$0xff] %vm350, %v516
    %s521 = scalar_lea.vmem [#allocation4], 144
    %522 = vst.msk [vmem:[%s521] sm:$0xff] %vm350, %v514
    %523 = vst.msk [vmem:[%s521 + $0x8] sm:$0xff] %vm350, %v516
    %s524 = scalar_lea.vmem [#allocation2], 16
    %v525 = vld [vmem:[%s524] sm:$0xff]
    %v526 = vld [vmem:[%s524 + $0x8] sm:$0xff]
    %s527 = scalar_lea.vmem %s1, 16
    %v528 = vld [vmem:[%s527] sm:$0xff]
    %v529 = vld [vmem:[%s527 + $0x8] sm:$0xff]
    %532 = vrot.lane.b32.xlu0 %v507, 96
    %v533 = vpop.permute.xlu0 %532
    %534 = vrot.lane.b32.xlu0 %v508, 96
    %v535 = vpop.permute.xlu0 %534
    %v536 = vsel %vm350, %v533, 0
    %v538 = vsel %vm350, %v535, 0
    %540 = vmatprep.subr.mxu0 %v337
    %541 = vmatpush1.msra.mxu0 %v336
    %542 = vmatprep.subr.mxu0 %v339
    %543 = vmatpush1.msra.mxu0 %v338
    %544 = vmatprep.subr.mxu0 %v341
    %545 = vmatpush1.msra.mxu0 %v340
    %546 = vmatprep.subr.mxu0 %v343
    %547 = vmatpush1.msra.mxu0 %v342
    %548 = vmatprep.subr.mxu0 0.0
    %549 = vmatpush1.msra.mxu0 0.0
    %550 = vmatprep.subr.mxu0 0.0
    %551 = vmatpush1.msra.mxu0 0.0
    %552 = vmatprep.subr.mxu0 0.0
    %553 = vmatpush1.msra.mxu0 0.0
    %554 = vmatprep.subr.mxu0 0.0
    %555 = vmatpush1.msra.mxu0 0.0
    %556 = vmatprep.subr.mxu0 0.0
    %557 = vmatpush1.msra.mxu0 0.0
    %558 = vmatprep.subr.mxu0 0.0
    %559 = vmatpush1.msra.mxu0 0.0
    %560 = vmatprep.subr.mxu0 0.0
    %561 = vmatpush1.msra.mxu0 0.0
    %562 = vmatprep.subr.mxu0 0.0
    %563 = vmatpush1.msra.mxu0 0.0
    %564 = vmatprep.subr.mxu0 0.0
    %565 = vmatpush1.msra.mxu0 0.0
    %566 = vmatprep.subr.mxu0 0.0
    %567 = vmatpush1.msra.mxu0 0.0
    %568 = vmatprep.subr.mxu0 0.0
    %569 = vmatpush1.msra.mxu0 0.0
    %570 = vmatprep.subr.mxu0 0.0
    %571 = vmatpush1.msra.mxu0 0.0
    %572 = vmatprep.subr.mxu0 0.0
    %573 = vmatpush1.msra.mxu0 0.0
    %574 = vmatprep.subr.mxu0 0.0
    %575 = vmatpush1.msra.mxu0 0.0
    %576 = vmatprep.subr.mxu0 0.0
    %577 = vmatpush1.msra.mxu0 0.0
    %578 = vmatprep.subr.mxu0 0.0
    %579 = vmatpush1.msra.mxu0 0.0
    %580 = vmatprep.subr.mxu0 0.0
    %581 = vmatpush1.msra.mxu0 0.0
    %582 = vmatprep.subr.mxu0 0.0
    %583 = vmatpush1.msra.mxu0 0.0
    %584 = vmatprep.subr.mxu0 0.0
    %585 = vmatpush1.msra.mxu0 0.0
    %586 = vmatprep.subr.mxu0 0.0
    %587 = vmatpush1.msra.mxu0 0.0
    %588 = vmatprep.subr.mxu0 0.0
    %589 = vmatpush1.msra.mxu0 0.0
    %590 = vmatprep.subr.mxu0 0.0
    %591 = vmatpush1.msra.mxu0 0.0
    %592 = vmatprep.subr.mxu0 0.0
    %593 = vmatpush1.msra.mxu0 0.0
    %594 = vmatprep.subr.mxu0 0.0
    %595 = vmatpush1.msra.mxu0 0.0
    %596 = vmatprep.subr.mxu0 0.0
    %597 = vmatpush1.msra.mxu0 0.0
    %598 = vmatprep.subr.mxu0 0.0
    %599 = vmatpush1.msra.mxu0 0.0
    %600 = vmatprep.subr.mxu0 0.0
    %601 = vmatpush1.msra.mxu0 0.0
    %602 = vmatprep.subr.mxu0 0.0
    %603 = vmatpush1.msra.mxu0 0.0
    %604 = vmatprep.mubr.f32.mxu0 0.0
    %605 = vmatmul.mubr.f32.gmra.mrb[0].mxu0 %v536
    %v606 = vpop.f32.mrb[0].mxu0
    %v607 = vadd.f32 0.0, %v606
    %v608 = vpop.f32.mrb[0].mxu0
    %v609 = vadd.f32 0.0, %v608
    %610 = vmatprep.mubr.f32.mxu0 0.0
    %611 = vmatmul.mubr.f32.gmra.mrb[0].mxu0 %v538
    %v612 = vpop.f32.mrb[0].mxu0
    %v613 = vadd.f32 0.0, %v612
    %v614 = vpop.f32.mrb[0].mxu0
    %v615 = vadd.f32 0.0, %v614
    %616 = vdwg.mxu0
    %v617 = vsel %vm433, %v607, %v609
    %v618 = vsel %vm434, %v613, %v615
    %v619 = vadd.f32 %v525, %v617
    %v620 = vadd.f32 %v526, %v618
    %v621 = vxor.u32 %v619, 2147483648
    %v622 = vxor.u32 %v620, 2147483648
    %v623 = vmul.f32 %v621, 1.442695
    %v624 = vpow.pop %v623
    %v625 = vmul.f32 %v622, 1.442695
    %v626 = vpow.pop %v625
    %v627 = vadd.f32 %v624, 1.0
    %v628 = vadd.f32 %v626, 1.0
    %v629 = vrcp.pop %v627
    %v630 = vmul.f32 1.0, %v629
    %v631 = vrcp.pop %v628
    %v632 = vmul.f32 1.0, %v631
    %v633 = vadd.f32 %v617, %v454
    %v634 = vadd.f32 %v618, %v456
    %637 = vrot.lane.b32.xlu0 %v633, 64
    %v638 = vpop.permute.xlu0 %637
    %639 = vrot.lane.b32.xlu0 %v634, 64
    %v640 = vpop.permute.xlu0 %639
    %v643 = vmul.f32 %v630, %v638
    %v644 = vmul.f32 %v632, %v640
    %647 = vrot.lane.b32.xlu0 %v643, 64
    %v648 = vpop.permute.xlu0 %647
    %649 = vrot.lane.b32.xlu0 %v644, 64
    %v650 = vpop.permute.xlu0 %649
    %v653 = vadd.f32 %v525, %v648
    %v654 = vadd.f32 %v526, %v650
    %v655 = vtanh.pop %v653
    %v656 = vtanh.pop %v654
    %v657 = vsub.f32 1.0, %v630
    %v658 = vsub.f32 1.0, %v632
    %659 = vrot.lane.b32.xlu0 %v507, 32
    %v660 = vpop.permute.xlu0 %659
    %661 = vrot.lane.b32.xlu0 %v508, 32
    %v662 = vpop.permute.xlu0 %661
    %v665 = vsub.f32 %v655, %v660
    %v666 = vsub.f32 %v656, %v662
    %669 = vrot.lane.b32.xlu0 %v665, 96
    %v670 = vpop.permute.xlu0 %669
    %671 = vrot.lane.b32.xlu0 %v666, 96
    %v672 = vpop.permute.xlu0 %671
    %v675 = vmul.f32 %v657, %v670
    %v676 = vmul.f32 %v658, %v672
    %678 = vset.pattern.permute.xlu0 0
    %679 = vperm.xlu0 %678, %v528
    %v680 = vpop.permute.xlu0 %679
    %683 = vset.pattern.permute.xlu0 0
    %684 = vperm.xlu0 %683, %v529
    %v685 = vpop.permute.xlu0 %684
    %v687 = vmul.f32 %v680, %v675
    %v688 = vmul.f32 %v685, %v676
    %v689 = vadd.f32 %v507, %v687
    %v690 = vadd.f32 %v508, %v688
    %v691 = vmul.f32 %v680, %v689
    %v692 = vmul.f32 %v685, %v690
    %695 = vrot.lane.b32.xlu0 %v691, 96
    %v696 = vpop.permute.xlu0 %695
    %697 = vrot.lane.b32.xlu0 %v692, 96
    %v698 = vpop.permute.xlu0 %697
    %s701 = scalar_lea.vmem [#allocation3], 16
    %702 = vst.msk [vmem:[%s701] sm:$0xff] %vm350, %v696
    %703 = vst.msk [vmem:[%s701 + $0x8] sm:$0xff] %vm350, %v698
    %s704 = scalar_lea.vmem [#allocation4], 128
    %705 = vst.msk [vmem:[%s704] sm:$0xff] %vm350, %v696
    %706 = vst.msk [vmem:[%s704 + $0x8] sm:$0xff] %vm350, %v698
    %s707 = scalar_lea.vmem [#allocation2], 32
    %v708 = vld [vmem:[%s707] sm:$0xff]
    %v709 = vld [vmem:[%s707 + $0x8] sm:$0xff]
    %s710 = scalar_lea.vmem %s1, 32
    %v711 = vld [vmem:[%s710] sm:$0xff]
    %v712 = vld [vmem:[%s710 + $0x8] sm:$0xff]
    %715 = vrot.lane.b32.xlu0 %v689, 96
    %v716 = vpop.permute.xlu0 %715
    %717 = vrot.lane.b32.xlu0 %v690, 96
    %v718 = vpop.permute.xlu0 %717
    %v719 = vsel %vm350, %v716, 0
    %v721 = vsel %vm350, %v718, 0
    %723 = vmatprep.subr.mxu0 %v337
    %724 = vmatpush1.msra.mxu0 %v336
    %725 = vmatprep.subr.mxu0 %v339
    %726 = vmatpush1.msra.mxu0 %v338
    %727 = vmatprep.subr.mxu0 %v341
    %728 = vmatpush1.msra.mxu0 %v340
    %729 = vmatprep.subr.mxu0 %v343
    %730 = vmatpush1.msra.mxu0 %v342
    %731 = vmatprep.subr.mxu0 0.0
    %732 = vmatpush1.msra.mxu0 0.0
    %733 = vmatprep.subr.mxu0 0.0
    %734 = vmatpush1.msra.mxu0 0.0
    %735 = vmatprep.subr.mxu0 0.0
    %736 = vmatpush1.msra.mxu0 0.0
    %737 = vmatprep.subr.mxu0 0.0
    %738 = vmatpush1.msra.mxu0 0.0
    %739 = vmatprep.subr.mxu0 0.0
    %740 = vmatpush1.msra.mxu0 0.0
    %741 = vmatprep.subr.mxu0 0.0
    %742 = vmatpush1.msra.mxu0 0.0
    %743 = vmatprep.subr.mxu0 0.0
    %744 = vmatpush1.msra.mxu0 0.0
    %745 = vmatprep.subr.mxu0 0.0
    %746 = vmatpush1.msra.mxu0 0.0
    %747 = vmatprep.subr.mxu0 0.0
    %748 = vmatpush1.msra.mxu0 0.0
    %749 = vmatprep.subr.mxu0 0.0
    %750 = vmatpush1.msra.mxu0 0.0
    %751 = vmatprep.subr.mxu0 0.0
    %752 = vmatpush1.msra.mxu0 0.0
    %753 = vmatprep.subr.mxu0 0.0
    %754 = vmatpush1.msra.mxu0 0.0
    %755 = vmatprep.subr.mxu0 0.0
    %756 = vmatpush1.msra.mxu0 0.0
    %757 = vmatprep.subr.mxu0 0.0
    %758 = vmatpush1.msra.mxu0 0.0
    %759 = vmatprep.subr.mxu0 0.0
    %760 = vmatpush1.msra.mxu0 0.0
    %761 = vmatprep.subr.mxu0 0.0
    %762 = vmatpush1.msra.mxu0 0.0
    %763 = vmatprep.subr.mxu0 0.0
    %764 = vmatpush1.msra.mxu0 0.0
    %765 = vmatprep.subr.mxu0 0.0
    %766 = vmatpush1.msra.mxu0 0.0
    %767 = vmatprep.subr.mxu0 0.0
    %768 = vmatpush1.msra.mxu0 0.0
    %769 = vmatprep.subr.mxu0 0.0
    %770 = vmatpush1.msra.mxu0 0.0
    %771 = vmatprep.subr.mxu0 0.0
    %772 = vmatpush1.msra.mxu0 0.0
    %773 = vmatprep.subr.mxu0 0.0
    %774 = vmatpush1.msra.mxu0 0.0
    %775 = vmatprep.subr.mxu0 0.0
    %776 = vmatpush1.msra.mxu0 0.0
    %777 = vmatprep.subr.mxu0 0.0
    %778 = vmatpush1.msra.mxu0 0.0
    %779 = vmatprep.subr.mxu0 0.0
    %780 = vmatpush1.msra.mxu0 0.0
    %781 = vmatprep.subr.mxu0 0.0
    %782 = vmatpush1.msra.mxu0 0.0
    %783 = vmatprep.subr.mxu0 0.0
    %784 = vmatpush1.msra.mxu0 0.0
    %785 = vmatprep.subr.mxu0 0.0
    %786 = vmatpush1.msra.mxu0 0.0
    %787 = vmatprep.mubr.f32.mxu0 0.0
    %788 = vmatmul.mubr.f32.gmra.mrb[0].mxu0 %v719
    %v789 = vpop.f32.mrb[0].mxu0
    %v790 = vadd.f32 0.0, %v789
    %v791 = vpop.f32.mrb[0].mxu0
    %v792 = vadd.f32 0.0, %v791
    %793 = vmatprep.mubr.f32.mxu0 0.0
    %794 = vmatmul.mubr.f32.gmra.mrb[0].mxu0 %v721
    %v795 = vpop.f32.mrb[0].mxu0
    %v796 = vadd.f32 0.0, %v795
    %v797 = vpop.f32.mrb[0].mxu0
    %v798 = vadd.f32 0.0, %v797
    %799 = vdwg.mxu0
    %v800 = vsel %vm433, %v790, %v792
    %v801 = vsel %vm434, %v796, %v798
    %v802 = vadd.f32 %v708, %v800
    %v803 = vadd.f32 %v709, %v801
    %v804 = vxor.u32 %v802, 2147483648
    %v805 = vxor.u32 %v803, 2147483648
    %v806 = vmul.f32 %v804, 1.442695
    %v807 = vpow.pop %v806
    %v808 = vmul.f32 %v805, 1.442695
    %v809 = vpow.pop %v808
    %v810 = vadd.f32 %v807, 1.0
    %v811 = vadd.f32 %v809, 1.0
    %v812 = vrcp.pop %v810
    %v813 = vmul.f32 1.0, %v812
    %v814 = vrcp.pop %v811
    %v815 = vmul.f32 1.0, %v814
    %v816 = vadd.f32 %v800, %v454
    %v817 = vadd.f32 %v801, %v456
    %820 = vrot.lane.b32.xlu0 %v816, 64
    %v821 = vpop.permute.xlu0 %820
    %822 = vrot.lane.b32.xlu0 %v817, 64
    %v823 = vpop.permute.xlu0 %822
    %v826 = vmul.f32 %v813, %v821
    %v827 = vmul.f32 %v815, %v823
    %830 = vrot.lane.b32.xlu0 %v826, 64
    %v831 = vpop.permute.xlu0 %830
    %832 = vrot.lane.b32.xlu0 %v827, 64
    %v833 = vpop.permute.xlu0 %832
    %v836 = vadd.f32 %v708, %v831
    %v837 = vadd.f32 %v709, %v833
    %v838 = vtanh.pop %v836
    %v839 = vtanh.pop %v837
    %v840 = vsub.f32 1.0, %v813
    %v841 = vsub.f32 1.0, %v815
    %842 = vrot.lane.b32.xlu0 %v689, 32
    %v843 = vpop.permute.xlu0 %842
    %844 = vrot.lane.b32.xlu0 %v690, 32
    %v845 = vpop.permute.xlu0 %844
    %v848 = vsub.f32 %v838, %v843
    %v849 = vsub.f32 %v839, %v845
    %852 = vrot.lane.b32.xlu0 %v848, 96
    %v853 = vpop.permute.xlu0 %852
    %854 = vrot.lane.b32.xlu0 %v849, 96
    %v855 = vpop.permute.xlu0 %854
    %v858 = vmul.f32 %v840, %v853
    %v859 = vmul.f32 %v841, %v855
    %861 = vset.pattern.permute.xlu0 0
    %862 = vperm.xlu0 %861, %v711
    %v863 = vpop.permute.xlu0 %862
    %866 = vset.pattern.permute.xlu0 0
    %867 = vperm.xlu0 %866, %v712
    %v868 = vpop.permute.xlu0 %867
    %v870 = vmul.f32 %v863, %v858
    %v871 = vmul.f32 %v868, %v859
    %v872 = vadd.f32 %v689, %v870
    %v873 = vadd.f32 %v690, %v871
    %v874 = vmul.f32 %v863, %v872
    %v875 = vmul.f32 %v868, %v873
    %878 = vrot.lane.b32.xlu0 %v874, 96
    %v879 = vpop.permute.xlu0 %878
    %880 = vrot.lane.b32.xlu0 %v875, 96
    %v881 = vpop.permute.xlu0 %880
    %s884 = scalar_lea.vmem [#allocation3], 32
    %885 = vst.msk [vmem:[%s884] sm:$0xff] %vm350, %v879
    %886 = vst.msk [vmem:[%s884 + $0x8] sm:$0xff] %vm350, %v881
    %s887 = scalar_lea.vmem [#allocation4], 112
    %888 = vst.msk [vmem:[%s887] sm:$0xff] %vm350, %v879
    %889 = vst.msk [vmem:[%s887 + $0x8] sm:$0xff] %vm350, %v881
    %s890 = scalar_lea.vmem [#allocation2], 48
    %v891 = vld [vmem:[%s890] sm:$0xff]
    %v892 = vld [vmem:[%s890 + $0x8] sm:$0xff]
    %s893 = scalar_lea.vmem %s1, 48
    %v894 = vld [vmem:[%s893] sm:$0xff]
    %v895 = vld [vmem:[%s893 + $0x8] sm:$0xff]
    %898 = vrot.lane.b32.xlu0 %v872, 96
    %v899 = vpop.permute.xlu0 %898
    %900 = vrot.lane.b32.xlu0 %v873, 96
    %v901 = vpop.permute.xlu0 %900
    %v902 = vsel %vm350, %v899, 0
    %v904 = vsel %vm350, %v901, 0
    %906 = vmatprep.subr.mxu0 %v337
    %907 = vmatpush1.msra.mxu0 %v336
    %908 = vmatprep.subr.mxu0 %v339
    %909 = vmatpush1.msra.mxu0 %v338
    %910 = vmatprep.subr.mxu0 %v341
    %911 = vmatpush1.msra.mxu0 %v340
    %912 = vmatprep.subr.mxu0 %v343
    %913 = vmatpush1.msra.mxu0 %v342
    %914 = vmatprep.subr.mxu0 0.0
    %915 = vmatpush1.msra.mxu0 0.0
    %916 = vmatprep.subr.mxu0 0.0
    %917 = vmatpush1.msra.mxu0 0.0
    %918 = vmatprep.subr.mxu0 0.0
    %919 = vmatpush1.msra.mxu0 0.0
    %920 = vmatprep.subr.mxu0 0.0
    %921 = vmatpush1.msra.mxu0 0.0
    %922 = vmatprep.subr.mxu0 0.0
    %923 = vmatpush1.msra.mxu0 0.0
    %924 = vmatprep.subr.mxu0 0.0
    %925 = vmatpush1.msra.mxu0 0.0
    %926 = vmatprep.subr.mxu0 0.0
    %927 = vmatpush1.msra.mxu0 0.0
    %928 = vmatprep.subr.mxu0 0.0
    %929 = vmatpush1.msra.mxu0 0.0
    %930 = vmatprep.subr.mxu0 0.0
    %931 = vmatpush1.msra.mxu0 0.0
    %932 = vmatprep.subr.mxu0 0.0
    %933 = vmatpush1.msra.mxu0 0.0
    %934 = vmatprep.subr.mxu0 0.0
    %935 = vmatpush1.msra.mxu0 0.0
    %936 = vmatprep.subr.mxu0 0.0
    %937 = vmatpush1.msra.mxu0 0.0
    %938 = vmatprep.subr.mxu0 0.0
    %939 = vmatpush1.msra.mxu0 0.0
    %940 = vmatprep.subr.mxu0 0.0
    %941 = vmatpush1.msra.mxu0 0.0
    %942 = vmatprep.subr.mxu0 0.0
    %943 = vmatpush1.msra.mxu0 0.0
    %944 = vmatprep.subr.mxu0 0.0
    %945 = vmatpush1.msra.mxu0 0.0
    %946 = vmatprep.subr.mxu0 0.0
    %947 = vmatpush1.msra.mxu0 0.0
    %948 = vmatprep.subr.mxu0 0.0
    %949 = vmatpush1.msra.mxu0 0.0
    %950 = vmatprep.subr.mxu0 0.0
    %951 = vmatpush1.msra.mxu0 0.0
    %952 = vmatprep.subr.mxu0 0.0
    %953 = vmatpush1.msra.mxu0 0.0
    %954 = vmatprep.subr.mxu0 0.0
    %955 = vmatpush1.msra.mxu0 0.0
    %956 = vmatprep.subr.mxu0 0.0
    %957 = vmatpush1.msra.mxu0 0.0
    %958 = vmatprep.subr.mxu0 0.0
    %959 = vmatpush1.msra.mxu0 0.0
    %960 = vmatprep.subr.mxu0 0.0
    %961 = vmatpush1.msra.mxu0 0.0
    %962 = vmatprep.subr.mxu0 0.0
    %963 = vmatpush1.msra.mxu0 0.0
    %964 = vmatprep.subr.mxu0 0.0
    %965 = vmatpush1.msra.mxu0 0.0
    %966 = vmatprep.subr.mxu0 0.0
    %967 = vmatpush1.msra.mxu0 0.0
    %968 = vmatprep.subr.mxu0 0.0
    %969 = vmatpush1.msra.mxu0 0.0
    %970 = vmatprep.mubr.f32.mxu0 0.0
    %971 = vmatmul.mubr.f32.gmra.mrb[0].mxu0 %v902
    %v972 = vpop.f32.mrb[0].mxu0
    %v973 = vadd.f32 0.0, %v972
    %v974 = vpop.f32.mrb[0].mxu0
    %v975 = vadd.f32 0.0, %v974
    %976 = vmatprep.mubr.f32.mxu0 0.0
    %977 = vmatmul.mubr.f32.gmra.mrb[0].mxu0 %v904
    %v978 = vpop.f32.mrb[0].mxu0
    %v979 = vadd.f32 0.0, %v978
    %v980 = vpop.f32.mrb[0].mxu0
    %v981 = vadd.f32 0.0, %v980
    %982 = vdwg.mxu0
    %v983 = vsel %vm433, %v973, %v975
    %v984 = vsel %vm434, %v979, %v981
    %v985 = vadd.f32 %v891, %v983
    %v986 = vadd.f32 %v892, %v984
    %v987 = vxor.u32 %v985, 2147483648
    %v988 = vxor.u32 %v986, 2147483648
    %v989 = vmul.f32 %v987, 1.442695
    %v990 = vpow.pop %v989
    %v991 = vmul.f32 %v988, 1.442695
    %v992 = vpow.pop %v991
    %v993 = vadd.f32 %v990, 1.0
    %v994 = vadd.f32 %v992, 1.0
    %v995 = vrcp.pop %v993
    %v996 = vmul.f32 1.0, %v995
    %v997 = vrcp.pop %v994
    %v998 = vmul.f32 1.0, %v997
    %v999 = vadd.f32 %v983, %v454
    %v1000 = vadd.f32 %v984, %v456
    %1003 = vrot.lane.b32.xlu0 %v999, 64
    %v1004 = vpop.permute.xlu0 %1003
    %1005 = vrot.lane.b32.xlu0 %v1000, 64
    %v1006 = vpop.permute.xlu0 %1005
    %v1009 = vmul.f32 %v996, %v1004
    %v1010 = vmul.f32 %v998, %v1006
    %1013 = vrot.lane.b32.xlu0 %v1009, 64
    %v1014 = vpop.permute.xlu0 %1013
    %1015 = vrot.lane.b32.xlu0 %v1010, 64
    %v1016 = vpop.permute.xlu0 %1015
    %v1019 = vadd.f32 %v891, %v1014
    %v1020 = vadd.f32 %v892, %v1016
    %v1021 = vtanh.pop %v1019
    %v1022 = vtanh.pop %v1020
    %v1023 = vsub.f32 1.0, %v996
    %v1024 = vsub.f32 1.0, %v998
    %1025 = vrot.lane.b32.xlu0 %v872, 32
    %v1026 = vpop.permute.xlu0 %1025
    %1027 = vrot.lane.b32.xlu0 %v873, 32
    %v1028 = vpop.permute.xlu0 %1027
    %v1031 = vsub.f32 %v1021, %v1026
    %v1032 = vsub.f32 %v1022, %v1028
    %1035 = vrot.lane.b32.xlu0 %v1031, 96
    %v1036 = vpop.permute.xlu0 %1035
    %1037 = vrot.lane.b32.xlu0 %v1032, 96
    %v1038 = vpop.permute.xlu0 %1037
    %v1041 = vmul.f32 %v1023, %v1036
    %v1042 = vmul.f32 %v1024, %v1038
    %1044 = vset.pattern.permute.xlu0 0
    %1045 = vperm.xlu0 %1044, %v894
    %v1046 = vpop.permute.xlu0 %1045
    %1049 = vset.pattern.permute.xlu0 0
    %1050 = vperm.xlu0 %1049, %v895
    %v1051 = vpop.permute.xlu0 %1050
    %v1053 = vmul.f32 %v1046, %v1041
    %v1054 = vmul.f32 %v1051, %v1042
    %v1055 = vadd.f32 %v872, %v1053
    %v1056 = vadd.f32 %v873, %v1054
    %v1057 = vmul.f32 %v1046, %v1055
    %v1058 = vmul.f32 %v1051, %v1056
    %1061 = vrot.lane.b32.xlu0 %v1057, 96
    %v1062 = vpop.permute.xlu0 %1061
    %1063 = vrot.lane.b32.xlu0 %v1058, 96
    %v1064 = vpop.permute.xlu0 %1063
    %s1067 = scalar_lea.vmem [#allocation3], 48
    %1068 = vst.msk [vmem:[%s1067] sm:$0xff] %vm350, %v1062
    %1069 = vst.msk [vmem:[%s1067 + $0x8] sm:$0xff] %vm350, %v1064
    %s1070 = scalar_lea.vmem [#allocation4], 96
    %1071 = vst.msk [vmem:[%s1070] sm:$0xff] %vm350, %v1062
    %1072 = vst.msk [vmem:[%s1070 + $0x8] sm:$0xff] %vm350, %v1064
    %s1073 = scalar_lea.vmem [#allocation2], 64
    %v1074 = vld [vmem:[%s1073] sm:$0xff]
    %v1075 = vld [vmem:[%s1073 + $0x8] sm:$0xff]
    %s1076 = scalar_lea.vmem %s1, 64
    %v1077 = vld [vmem:[%s1076] sm:$0xff]
    %v1078 = vld [vmem:[%s1076 + $0x8] sm:$0xff]
    %1081 = vrot.lane.b32.xlu0 %v1055, 96
    %v1082 = vpop.permute.xlu0 %1081
    %1083 = vrot.lane.b32.xlu0 %v1056, 96
    %v1084 = vpop.permute.xlu0 %1083
    %v1085 = vsel %vm350, %v1082, 0
    %v1087 = vsel %vm350, %v1084, 0
    %1089 = vmatprep.subr.mxu0 %v337
    %1090 = vmatpush1.msra.mxu0 %v336
    %1091 = vmatprep.subr.mxu0 %v339
    %1092 = vmatpush1.msra.mxu0 %v338
    %1093 = vmatprep.subr.mxu0 %v341
    %1094 = vmatpush1.msra.mxu0 %v340
    %1095 = vmatprep.subr.mxu0 %v343
    %1096 = vmatpush1.msra.mxu0 %v342
    %1097 = vmatprep.subr.mxu0 0.0
    %1098 = vmatpush1.msra.mxu0 0.0
    %1099 = vmatprep.subr.mxu0 0.0
    %1100 = vmatpush1.msra.mxu0 0.0
    %1101 = vmatprep.subr.mxu0 0.0
    %1102 = vmatpush1.msra.mxu0 0.0
    %1103 = vmatprep.subr.mxu0 0.0
    %1104 = vmatpush1.msra.mxu0 0.0
    %1105 = vmatprep.subr.mxu0 0.0
    %1106 = vmatpush1.msra.mxu0 0.0
    %1107 = vmatprep.subr.mxu0 0.0
    %1108 = vmatpush1.msra.mxu0 0.0
    %1109 = vmatprep.subr.mxu0 0.0
    %1110 = vmatpush1.msra.mxu0 0.0
    %1111 = vmatprep.subr.mxu0 0.0
    %1112 = vmatpush1.msra.mxu0 0.0
    %1113 = vmatprep.subr.mxu0 0.0
    %1114 = vmatpush1.msra.mxu0 0.0
    %1115 = vmatprep.subr.mxu0 0.0
    %1116 = vmatpush1.msra.mxu0 0.0
    %1117 = vmatprep.subr.mxu0 0.0
    %1118 = vmatpush1.msra.mxu0 0.0
    %1119 = vmatprep.subr.mxu0 0.0
    %1120 = vmatpush1.msra.mxu0 0.0
    %1121 = vmatprep.subr.mxu0 0.0
    %1122 = vmatpush1.msra.mxu0 0.0
    %1123 = vmatprep.subr.mxu0 0.0
    %1124 = vmatpush1.msra.mxu0 0.0
    %1125 = vmatprep.subr.mxu0 0.0
    %1126 = vmatpush1.msra.mxu0 0.0
    %1127 = vmatprep.subr.mxu0 0.0
    %1128 = vmatpush1.msra.mxu0 0.0
    %1129 = vmatprep.subr.mxu0 0.0
    %1130 = vmatpush1.msra.mxu0 0.0
    %1131 = vmatprep.subr.mxu0 0.0
    %1132 = vmatpush1.msra.mxu0 0.0
    %1133 = vmatprep.subr.mxu0 0.0
    %1134 = vmatpush1.msra.mxu0 0.0
    %1135 = vmatprep.subr.mxu0 0.0
    %1136 = vmatpush1.msra.mxu0 0.0
    %1137 = vmatprep.subr.mxu0 0.0
    %1138 = vmatpush1.msra.mxu0 0.0
    %1139 = vmatprep.subr.mxu0 0.0
    %1140 = vmatpush1.msra.mxu0 0.0
    %1141 = vmatprep.subr.mxu0 0.0
    %1142 = vmatpush1.msra.mxu0 0.0
    %1143 = vmatprep.subr.mxu0 0.0
    %1144 = vmatpush1.msra.mxu0 0.0
    %1145 = vmatprep.subr.mxu0 0.0
    %1146 = vmatpush1.msra.mxu0 0.0
    %1147 = vmatprep.subr.mxu0 0.0
    %1148 = vmatpush1.msra.mxu0 0.0
    %1149 = vmatprep.subr.mxu0 0.0
    %1150 = vmatpush1.msra.mxu0 0.0
    %1151 = vmatprep.subr.mxu0 0.0
    %1152 = vmatpush1.msra.mxu0 0.0
    %1153 = vmatprep.mubr.f32.mxu0 0.0
    %1154 = vmatmul.mubr.f32.gmra.mrb[0].mxu0 %v1085
    %v1155 = vpop.f32.mrb[0].mxu0
    %v1156 = vadd.f32 0.0, %v1155
    %v1157 = vpop.f32.mrb[0].mxu0
    %v1158 = vadd.f32 0.0, %v1157
    %1159 = vmatprep.mubr.f32.mxu0 0.0
    %1160 = vmatmul.mubr.f32.gmra.mrb[0].mxu0 %v1087
    %v1161 = vpop.f32.mrb[0].mxu0
    %v1162 = vadd.f32 0.0, %v1161
    %v1163 = vpop.f32.mrb[0].mxu0
    %v1164 = vadd.f32 0.0, %v1163
    %1165 = vdwg.mxu0
    %v1166 = vsel %vm433, %v1156, %v1158
    %v1167 = vsel %vm434, %v1162, %v1164
    %v1168 = vadd.f32 %v1074, %v1166
    %v1169 = vadd.f32 %v1075, %v1167
    %v1170 = vxor.u32 %v1168, 2147483648
    %v1171 = vxor.u32 %v1169, 2147483648
    %v1172 = vmul.f32 %v1170, 1.442695
    %v1173 = vpow.pop %v1172
    %v1174 = vmul.f32 %v1171, 1.442695
    %v1175 = vpow.pop %v1174
    %v1176 = vadd.f32 %v1173, 1.0
    %v1177 = vadd.f32 %v1175, 1.0
    %v1178 = vrcp.pop %v1176
    %v1179 = vmul.f32 1.0, %v1178
    %v1180 = vrcp.pop %v1177
    %v1181 = vmul.f32 1.0, %v1180
    %v1182 = vadd.f32 %v1166, %v454
    %v1183 = vadd.f32 %v1167, %v456
    %1186 = vrot.lane.b32.xlu0 %v1182, 64
    %v1187 = vpop.permute.xlu0 %1186
    %1188 = vrot.lane.b32.xlu0 %v1183, 64
    %v1189 = vpop.permute.xlu0 %1188
    %v1192 = vmul.f32 %v1179, %v1187
    %v1193 = vmul.f32 %v1181, %v1189
    %1196 = vrot.lane.b32.xlu0 %v1192, 64
    %v1197 = vpop.permute.xlu0 %1196
    %1198 = vrot.lane.b32.xlu0 %v1193, 64
    %v1199 = vpop.permute.xlu0 %1198
    %v1202 = vadd.f32 %v1074, %v1197
    %v1203 = vadd.f32 %v1075, %v1199
    %v1204 = vtanh.pop %v1202
    %v1205 = vtanh.pop %v1203
    %v1206 = vsub.f32 1.0, %v1179
    %v1207 = vsub.f32 1.0, %v1181
    %1208 = vrot.lane.b32.xlu0 %v1055, 32
    %v1209 = vpop.permute.xlu0 %1208
    %1210 = vrot.lane.b32.xlu0 %v1056, 32
    %v1211 = vpop.permute.xlu0 %1210
    %v1214 = vsub.f32 %v1204, %v1209
    %v1215 = vsub.f32 %v1205, %v1211
    %1218 = vrot.lane.b32.xlu0 %v1214, 96
    %v1219 = vpop.permute.xlu0 %1218
    %1220 = vrot.lane.b32.xlu0 %v1215, 96
    %v1221 = vpop.permute.xlu0 %1220
    %v1224 = vmul.f32 %v1206, %v1219
    %v1225 = vmul.f32 %v1207, %v1221
    %1227 = vset.pattern.permute.xlu0 0
    %1228 = vperm.xlu0 %1227, %v1077
    %v1229 = vpop.permute.xlu0 %1228
    %1232 = vset.pattern.permute.xlu0 0
    %1233 = vperm.xlu0 %1232, %v1078
    %v1234 = vpop.permute.xlu0 %1233
    %v1236 = vmul.f32 %v1229, %v1224
    %v1237 = vmul.f32 %v1234, %v1225
    %v1238 = vadd.f32 %v1055, %v1236
    %v1239 = vadd.f32 %v1056, %v1237
    %v1240 = vmul.f32 %v1229, %v1238
    %v1241 = vmul.f32 %v1234, %v1239
    %1244 = vrot.lane.b32.xlu0 %v1240, 96
    %v1245 = vpop.permute.xlu0 %1244
    %1246 = vrot.lane.b32.xlu0 %v1241, 96
    %v1247 = vpop.permute.xlu0 %1246
    %s1250 = scalar_lea.vmem [#allocation3], 64
    %1251 = vst.msk [vmem:[%s1250] sm:$0xff] %vm350, %v1245
    %1252 = vst.msk [vmem:[%s1250 + $0x8] sm:$0xff] %vm350, %v1247
    %s1253 = scalar_lea.vmem [#allocation4], 80
    %1254 = vst.msk [vmem:[%s1253] sm:$0xff] %vm350, %v1245
    %1255 = vst.msk [vmem:[%s1253 + $0x8] sm:$0xff] %vm350, %v1247
    %s1256 = scalar_lea.vmem [#allocation2], 80
    %v1257 = vld [vmem:[%s1256] sm:$0xff]
    %v1258 = vld [vmem:[%s1256 + $0x8] sm:$0xff]
    %s1259 = scalar_lea.vmem %s1, 80
    %v1260 = vld [vmem:[%s1259] sm:$0xff]
    %v1261 = vld [vmem:[%s1259 + $0x8] sm:$0xff]
    %1264 = vrot.lane.b32.xlu0 %v1238, 96
    %v1265 = vpop.permute.xlu0 %1264
    %1266 = vrot.lane.b32.xlu0 %v1239, 96
    %v1267 = vpop.permute.xlu0 %1266
    %v1268 = vsel %vm350, %v1265, 0
    %v1270 = vsel %vm350, %v1267, 0
    %1272 = vmatprep.subr.mxu0 %v337
    %1273 = vmatpush1.msra.mxu0 %v336
    %1274 = vmatprep.subr.mxu0 %v339
    %1275 = vmatpush1.msra.mxu0 %v338
    %1276 = vmatprep.subr.mxu0 %v341
    %1277 = vmatpush1.msra.mxu0 %v340
    %1278 = vmatprep.subr.mxu0 %v343
    %1279 = vmatpush1.msra.mxu0 %v342
    %1280 = vmatprep.subr.mxu0 0.0
    %1281 = vmatpush1.msra.mxu0 0.0
    %1282 = vmatprep.subr.mxu0 0.0
    %1283 = vmatpush1.msra.mxu0 0.0
    %1284 = vmatprep.subr.mxu0 0.0
    %1285 = vmatpush1.msra.mxu0 0.0
    %1286 = vmatprep.subr.mxu0 0.0
    %1287 = vmatpush1.msra.mxu0 0.0
    %1288 = vmatprep.subr.mxu0 0.0
    %1289 = vmatpush1.msra.mxu0 0.0
    %1290 = vmatprep.subr.mxu0 0.0
    %1291 = vmatpush1.msra.mxu0 0.0
    %1292 = vmatprep.subr.mxu0 0.0
    %1293 = vmatpush1.msra.mxu0 0.0
    %1294 = vmatprep.subr.mxu0 0.0
    %1295 = vmatpush1.msra.mxu0 0.0
    %1296 = vmatprep.subr.mxu0 0.0
    %1297 = vmatpush1.msra.mxu0 0.0
    %1298 = vmatprep.subr.mxu0 0.0
    %1299 = vmatpush1.msra.mxu0 0.0
    %1300 = vmatprep.subr.mxu0 0.0
    %1301 = vmatpush1.msra.mxu0 0.0
    %1302 = vmatprep.subr.mxu0 0.0
    %1303 = vmatpush1.msra.mxu0 0.0
    %1304 = vmatprep.subr.mxu0 0.0
    %1305 = vmatpush1.msra.mxu0 0.0
    %1306 = vmatprep.subr.mxu0 0.0
    %1307 = vmatpush1.msra.mxu0 0.0
    %1308 = vmatprep.subr.mxu0 0.0
    %1309 = vmatpush1.msra.mxu0 0.0
    %1310 = vmatprep.subr.mxu0 0.0
    %1311 = vmatpush1.msra.mxu0 0.0
    %1312 = vmatprep.subr.mxu0 0.0
    %1313 = vmatpush1.msra.mxu0 0.0
    %1314 = vmatprep.subr.mxu0 0.0
    %1315 = vmatpush1.msra.mxu0 0.0
    %1316 = vmatprep.subr.mxu0 0.0
    %1317 = vmatpush1.msra.mxu0 0.0
    %1318 = vmatprep.subr.mxu0 0.0
    %1319 = vmatpush1.msra.mxu0 0.0
    %1320 = vmatprep.subr.mxu0 0.0
    %1321 = vmatpush1.msra.mxu0 0.0
    %1322 = vmatprep.subr.mxu0 0.0
    %1323 = vmatpush1.msra.mxu0 0.0
    %1324 = vmatprep.subr.mxu0 0.0
    %1325 = vmatpush1.msra.mxu0 0.0
    %1326 = vmatprep.subr.mxu0 0.0
    %1327 = vmatpush1.msra.mxu0 0.0
    %1328 = vmatprep.subr.mxu0 0.0
    %1329 = vmatpush1.msra.mxu0 0.0
    %1330 = vmatprep.subr.mxu0 0.0
    %1331 = vmatpush1.msra.mxu0 0.0
    %1332 = vmatprep.subr.mxu0 0.0
    %1333 = vmatpush1.msra.mxu0 0.0
    %1334 = vmatprep.subr.mxu0 0.0
    %1335 = vmatpush1.msra.mxu0 0.0
    %1336 = vmatprep.mubr.f32.mxu0 0.0
    %1337 = vmatmul.mubr.f32.gmra.mrb[0].mxu0 %v1268
    %v1338 = vpop.f32.mrb[0].mxu0
    %v1339 = vadd.f32 0.0, %v1338
    %v1340 = vpop.f32.mrb[0].mxu0
    %v1341 = vadd.f32 0.0, %v1340
    %1342 = vmatprep.mubr.f32.mxu0 0.0
    %1343 = vmatmul.mubr.f32.gmra.mrb[0].mxu0 %v1270
    %v1344 = vpop.f32.mrb[0].mxu0
    %v1345 = vadd.f32 0.0, %v1344
    %v1346 = vpop.f32.mrb[0].mxu0
    %v1347 = vadd.f32 0.0, %v1346
    %1348 = vdwg.mxu0
    %v1349 = vsel %vm433, %v1339, %v1341
    %v1350 = vsel %vm434, %v1345, %v1347
    %v1351 = vadd.f32 %v1257, %v1349
    %v1352 = vadd.f32 %v1258, %v1350
    %v1353 = vxor.u32 %v1351, 2147483648
    %v1354 = vxor.u32 %v1352, 2147483648
    %v1355 = vmul.f32 %v1353, 1.442695
    %v1356 = vpow.pop %v1355
    %v1357 = vmul.f32 %v1354, 1.442695
    %v1358 = vpow.pop %v1357
    %v1359 = vadd.f32 %v1356, 1.0
    %v1360 = vadd.f32 %v1358, 1.0
    %v1361 = vrcp.pop %v1359
    %v1362 = vmul.f32 1.0, %v1361
    %v1363 = vrcp.pop %v1360
    %v1364 = vmul.f32 1.0, %v1363
    %v1365 = vadd.f32 %v1349, %v454
    %v1366 = vadd.f32 %v1350, %v456
    %1369 = vrot.lane.b32.xlu0 %v1365, 64
    %v1370 = vpop.permute.xlu0 %1369
    %1371 = vrot.lane.b32.xlu0 %v1366, 64
    %v1372 = vpop.permute.xlu0 %1371
    %v1375 = vmul.f32 %v1362, %v1370
    %v1376 = vmul.f32 %v1364, %v1372
    %1379 = vrot.lane.b32.xlu0 %v1375, 64
    %v1380 = vpop.permute.xlu0 %1379
    %1381 = vrot.lane.b32.xlu0 %v1376, 64
    %v1382 = vpop.permute.xlu0 %1381
    %v1385 = vadd.f32 %v1257, %v1380
    %v1386 = vadd.f32 %v1258, %v1382
    %v1387 = vtanh.pop %v1385
    %v1388 = vtanh.pop %v1386
    %v1389 = vsub.f32 1.0, %v1362
    %v1390 = vsub.f32 1.0, %v1364
    %1391 = vrot.lane.b32.xlu0 %v1238, 32
    %v1392 = vpop.permute.xlu0 %1391
    %1393 = vrot.lane.b32.xlu0 %v1239, 32
    %v1394 = vpop.permute.xlu0 %1393
    %v1397 = vsub.f32 %v1387, %v1392
    %v1398 = vsub.f32 %v1388, %v1394
    %1401 = vrot.lane.b32.xlu0 %v1397, 96
    %v1402 = vpop.permute.xlu0 %1401
    %1403 = vrot.lane.b32.xlu0 %v1398, 96
    %v1404 = vpop.permute.xlu0 %1403
    %v1407 = vmul.f32 %v1389, %v1402
    %v1408 = vmul.f32 %v1390, %v1404
    %1410 = vset.pattern.permute.xlu0 0
    %1411 = vperm.xlu0 %1410, %v1260
    %v1412 = vpop.permute.xlu0 %1411
    %1415 = vset.pattern.permute.xlu0 0
    %1416 = vperm.xlu0 %1415, %v1261
    %v1417 = vpop.permute.xlu0 %1416
    %v1419 = vmul.f32 %v1412, %v1407
    %v1420 = vmul.f32 %v1417, %v1408
    %v1421 = vadd.f32 %v1238, %v1419
    %v1422 = vadd.f32 %v1239, %v1420
    %v1423 = vmul.f32 %v1412, %v1421
    %v1424 = vmul.f32 %v1417, %v1422
    %1427 = vrot.lane.b32.xlu0 %v1423, 96
    %v1428 = vpop.permute.xlu0 %1427
    %1429 = vrot.lane.b32.xlu0 %v1424, 96
    %v1430 = vpop.permute.xlu0 %1429
    %s1433 = scalar_lea.vmem [#allocation3], 80
    %1434 = vst.msk [vmem:[%s1433] sm:$0xff] %vm350, %v1428
    %1435 = vst.msk [vmem:[%s1433 + $0x8] sm:$0xff] %vm350, %v1430
    %s1436 = scalar_lea.vmem [#allocation4], 64
    %1437 = vst.msk [vmem:[%s1436] sm:$0xff] %vm350, %v1428
    %1438 = vst.msk [vmem:[%s1436 + $0x8] sm:$0xff] %vm350, %v1430
    %s1439 = scalar_lea.vmem [#allocation2], 96
    %v1440 = vld [vmem:[%s1439] sm:$0xff]
    %v1441 = vld [vmem:[%s1439 + $0x8] sm:$0xff]
    %s1442 = scalar_lea.vmem %s1, 96
    %v1443 = vld [vmem:[%s1442] sm:$0xff]
    %v1444 = vld [vmem:[%s1442 + $0x8] sm:$0xff]
    %1447 = vrot.lane.b32.xlu0 %v1421, 96
    %v1448 = vpop.permute.xlu0 %1447
    %1449 = vrot.lane.b32.xlu0 %v1422, 96
    %v1450 = vpop.permute.xlu0 %1449
    %v1451 = vsel %vm350, %v1448, 0
    %v1453 = vsel %vm350, %v1450, 0
    %1455 = vmatprep.subr.mxu0 %v337
    %1456 = vmatpush1.msra.mxu0 %v336
    %1457 = vmatprep.subr.mxu0 %v339
    %1458 = vmatpush1.msra.mxu0 %v338
    %1459 = vmatprep.subr.mxu0 %v341
    %1460 = vmatpush1.msra.mxu0 %v340
    %1461 = vmatprep.subr.mxu0 %v343
    %1462 = vmatpush1.msra.mxu0 %v342
    %1463 = vmatprep.subr.mxu0 0.0
    %1464 = vmatpush1.msra.mxu0 0.0
    %1465 = vmatprep.subr.mxu0 0.0
    %1466 = vmatpush1.msra.mxu0 0.0
    %1467 = vmatprep.subr.mxu0 0.0
    %1468 = vmatpush1.msra.mxu0 0.0
    %1469 = vmatprep.subr.mxu0 0.0
    %1470 = vmatpush1.msra.mxu0 0.0
    %1471 = vmatprep.subr.mxu0 0.0
    %1472 = vmatpush1.msra.mxu0 0.0
    %1473 = vmatprep.subr.mxu0 0.0
    %1474 = vmatpush1.msra.mxu0 0.0
    %1475 = vmatprep.subr.mxu0 0.0
    %1476 = vmatpush1.msra.mxu0 0.0
    %1477 = vmatprep.subr.mxu0 0.0
    %1478 = vmatpush1.msra.mxu0 0.0
    %1479 = vmatprep.subr.mxu0 0.0
    %1480 = vmatpush1.msra.mxu0 0.0
    %1481 = vmatprep.subr.mxu0 0.0
    %1482 = vmatpush1.msra.mxu0 0.0
    %1483 = vmatprep.subr.mxu0 0.0
    %1484 = vmatpush1.msra.mxu0 0.0
    %1485 = vmatprep.subr.mxu0 0.0
    %1486 = vmatpush1.msra.mxu0 0.0
    %1487 = vmatprep.subr.mxu0 0.0
    %1488 = vmatpush1.msra.mxu0 0.0
    %1489 = vmatprep.subr.mxu0 0.0
    %1490 = vmatpush1.msra.mxu0 0.0
    %1491 = vmatprep.subr.mxu0 0.0
    %1492 = vmatpush1.msra.mxu0 0.0
    %1493 = vmatprep.subr.mxu0 0.0
    %1494 = vmatpush1.msra.mxu0 0.0
    %1495 = vmatprep.subr.mxu0 0.0
    %1496 = vmatpush1.msra.mxu0 0.0
    %1497 = vmatprep.subr.mxu0 0.0
    %1498 = vmatpush1.msra.mxu0 0.0
    %1499 = vmatprep.subr.mxu0 0.0
    %1500 = vmatpush1.msra.mxu0 0.0
    %1501 = vmatprep.subr.mxu0 0.0
    %1502 = vmatpush1.msra.mxu0 0.0
    %1503 = vmatprep.subr.mxu0 0.0
    %1504 = vmatpush1.msra.mxu0 0.0
    %1505 = vmatprep.subr.mxu0 0.0
    %1506 = vmatpush1.msra.mxu0 0.0
    %1507 = vmatprep.subr.mxu0 0.0
    %1508 = vmatpush1.msra.mxu0 0.0
    %1509 = vmatprep.subr.mxu0 0.0
    %1510 = vmatpush1.msra.mxu0 0.0
    %1511 = vmatprep.subr.mxu0 0.0
    %1512 = vmatpush1.msra.mxu0 0.0
    %1513 = vmatprep.subr.mxu0 0.0
    %1514 = vmatpush1.msra.mxu0 0.0
    %1515 = vmatprep.subr.mxu0 0.0
    %1516 = vmatpush1.msra.mxu0 0.0
    %1517 = vmatprep.subr.mxu0 0.0
    %1518 = vmatpush1.msra.mxu0 0.0
    %1519 = vmatprep.mubr.f32.mxu0 0.0
    %1520 = vmatmul.mubr.f32.gmra.mrb[0].mxu0 %v1451
    %v1521 = vpop.f32.mrb[0].mxu0
    %v1522 = vadd.f32 0.0, %v1521
    %v1523 = vpop.f32.mrb[0].mxu0
    %v1524 = vadd.f32 0.0, %v1523
    %1525 = vmatprep.mubr.f32.mxu0 0.0
    %1526 = vmatmul.mubr.f32.gmra.mrb[0].mxu0 %v1453
    %v1527 = vpop.f32.mrb[0].mxu0
    %v1528 = vadd.f32 0.0, %v1527
    %v1529 = vpop.f32.mrb[0].mxu0
    %v1530 = vadd.f32 0.0, %v1529
    %1531 = vdwg.mxu0
    %v1532 = vsel %vm433, %v1522, %v1524
    %v1533 = vsel %vm434, %v1528, %v1530
    %v1534 = vadd.f32 %v1440, %v1532
    %v1535 = vadd.f32 %v1441, %v1533
    %v1536 = vxor.u32 %v1534, 2147483648
    %v1537 = vxor.u32 %v1535, 2147483648
    %v1538 = vmul.f32 %v1536, 1.442695
    %v1539 = vpow.pop %v1538
    %v1540 = vmul.f32 %v1537, 1.442695
    %v1541 = vpow.pop %v1540
    %v1542 = vadd.f32 %v1539, 1.0
    %v1543 = vadd.f32 %v1541, 1.0
    %v1544 = vrcp.pop %v1542
    %v1545 = vmul.f32 1.0, %v1544
    %v1546 = vrcp.pop %v1543
    %v1547 = vmul.f32 1.0, %v1546
    %v1548 = vadd.f32 %v1532, %v454
    %v1549 = vadd.f32 %v1533, %v456
    %1552 = vrot.lane.b32.xlu0 %v1548, 64
    %v1553 = vpop.permute.xlu0 %1552
    %1554 = vrot.lane.b32.xlu0 %v1549, 64
    %v1555 = vpop.permute.xlu0 %1554
    %v1558 = vmul.f32 %v1545, %v1553
    %v1559 = vmul.f32 %v1547, %v1555
    %1562 = vrot.lane.b32.xlu0 %v1558, 64
    %v1563 = vpop.permute.xlu0 %1562
    %1564 = vrot.lane.b32.xlu0 %v1559, 64
    %v1565 = vpop.permute.xlu0 %1564
    %v1568 = vadd.f32 %v1440, %v1563
    %v1569 = vadd.f32 %v1441, %v1565
    %v1570 = vtanh.pop %v1568
    %v1571 = vtanh.pop %v1569
    %v1572 = vsub.f32 1.0, %v1545
    %v1573 = vsub.f32 1.0, %v1547
    %1574 = vrot.lane.b32.xlu0 %v1421, 32
    %v1575 = vpop.permute.xlu0 %1574
    %1576 = vrot.lane.b32.xlu0 %v1422, 32
    %v1577 = vpop.permute.xlu0 %1576
    %v1580 = vsub.f32 %v1570, %v1575
    %v1581 = vsub.f32 %v1571, %v1577
    %1584 = vrot.lane.b32.xlu0 %v1580, 96
    %v1585 = vpop.permute.xlu0 %1584
    %1586 = vrot.lane.b32.xlu0 %v1581, 96
    %v1587 = vpop.permute.xlu0 %1586
    %v1590 = vmul.f32 %v1572, %v1585
    %v1591 = vmul.f32 %v1573, %v1587
    %1593 = vset.pattern.permute.xlu0 0
    %1594 = vperm.xlu0 %1593, %v1443
    %v1595 = vpop.permute.xlu0 %1594
    %1598 = vset.pattern.permute.xlu0 0
    %1599 = vperm.xlu0 %1598, %v1444
    %v1600 = vpop.permute.xlu0 %1599
    %v1602 = vmul.f32 %v1595, %v1590
    %v1603 = vmul.f32 %v1600, %v1591
    %v1604 = vadd.f32 %v1421, %v1602
    %v1605 = vadd.f32 %v1422, %v1603
    %v1606 = vmul.f32 %v1595, %v1604
    %v1607 = vmul.f32 %v1600, %v1605
    %1610 = vrot.lane.b32.xlu0 %v1606, 96
    %v1611 = vpop.permute.xlu0 %1610
    %1612 = vrot.lane.b32.xlu0 %v1607, 96
    %v1613 = vpop.permute.xlu0 %1612
    %s1616 = scalar_lea.vmem [#allocation3], 96
    %1617 = vst.msk [vmem:[%s1616] sm:$0xff] %vm350, %v1611
    %1618 = vst.msk [vmem:[%s1616 + $0x8] sm:$0xff] %vm350, %v1613
    %s1619 = scalar_lea.vmem [#allocation4], 48
    %1620 = vst.msk [vmem:[%s1619] sm:$0xff] %vm350, %v1611
    %1621 = vst.msk [vmem:[%s1619 + $0x8] sm:$0xff] %vm350, %v1613
    %s1622 = scalar_lea.vmem [#allocation2], 112
    %v1623 = vld [vmem:[%s1622] sm:$0xff]
    %v1624 = vld [vmem:[%s1622 + $0x8] sm:$0xff]
    %s1625 = scalar_lea.vmem %s1, 112
    %v1626 = vld [vmem:[%s1625] sm:$0xff]
    %v1627 = vld [vmem:[%s1625 + $0x8] sm:$0xff]
    %1630 = vrot.lane.b32.xlu0 %v1604, 96
    %v1631 = vpop.permute.xlu0 %1630
    %1632 = vrot.lane.b32.xlu0 %v1605, 96
    %v1633 = vpop.permute.xlu0 %1632
    %v1634 = vsel %vm350, %v1631, 0
    %v1636 = vsel %vm350, %v1633, 0
    %1638 = vmatprep.subr.mxu0 %v337
    %1639 = vmatpush1.msra.mxu0 %v336
    %1640 = vmatprep.subr.mxu0 %v339
    %1641 = vmatpush1.msra.mxu0 %v338
    %1642 = vmatprep.subr.mxu0 %v341
    %1643 = vmatpush1.msra.mxu0 %v340
    %1644 = vmatprep.subr.mxu0 %v343
    %1645 = vmatpush1.msra.mxu0 %v342
    %1646 = vmatprep.subr.mxu0 0.0
    %1647 = vmatpush1.msra.mxu0 0.0
    %1648 = vmatprep.subr.mxu0 0.0
    %1649 = vmatpush1.msra.mxu0 0.0
    %1650 = vmatprep.subr.mxu0 0.0
    %1651 = vmatpush1.msra.mxu0 0.0
    %1652 = vmatprep.subr.mxu0 0.0
    %1653 = vmatpush1.msra.mxu0 0.0
    %1654 = vmatprep.subr.mxu0 0.0
    %1655 = vmatpush1.msra.mxu0 0.0
    %1656 = vmatprep.subr.mxu0 0.0
    %1657 = vmatpush1.msra.mxu0 0.0
    %1658 = vmatprep.subr.mxu0 0.0
    %1659 = vmatpush1.msra.mxu0 0.0
    %1660 = vmatprep.subr.mxu0 0.0
    %1661 = vmatpush1.msra.mxu0 0.0
    %1662 = vmatprep.subr.mxu0 0.0
    %1663 = vmatpush1.msra.mxu0 0.0
    %1664 = vmatprep.subr.mxu0 0.0
    %1665 = vmatpush1.msra.mxu0 0.0
    %1666 = vmatprep.subr.mxu0 0.0
    %1667 = vmatpush1.msra.mxu0 0.0
    %1668 = vmatprep.subr.mxu0 0.0
    %1669 = vmatpush1.msra.mxu0 0.0
    %1670 = vmatprep.subr.mxu0 0.0
    %1671 = vmatpush1.msra.mxu0 0.0
    %1672 = vmatprep.subr.mxu0 0.0
    %1673 = vmatpush1.msra.mxu0 0.0
    %1674 = vmatprep.subr.mxu0 0.0
    %1675 = vmatpush1.msra.mxu0 0.0
    %1676 = vmatprep.subr.mxu0 0.0
    %1677 = vmatpush1.msra.mxu0 0.0
    %1678 = vmatprep.subr.mxu0 0.0
    %1679 = vmatpush1.msra.mxu0 0.0
    %1680 = vmatprep.subr.mxu0 0.0
    %1681 = vmatpush1.msra.mxu0 0.0
    %1682 = vmatprep.subr.mxu0 0.0
    %1683 = vmatpush1.msra.mxu0 0.0
    %1684 = vmatprep.subr.mxu0 0.0
    %1685 = vmatpush1.msra.mxu0 0.0
    %1686 = vmatprep.subr.mxu0 0.0
    %1687 = vmatpush1.msra.mxu0 0.0
    %1688 = vmatprep.subr.mxu0 0.0
    %1689 = vmatpush1.msra.mxu0 0.0
    %1690 = vmatprep.subr.mxu0 0.0
    %1691 = vmatpush1.msra.mxu0 0.0
    %1692 = vmatprep.subr.mxu0 0.0
    %1693 = vmatpush1.msra.mxu0 0.0
    %1694 = vmatprep.subr.mxu0 0.0
    %1695 = vmatpush1.msra.mxu0 0.0
    %1696 = vmatprep.subr.mxu0 0.0
    %1697 = vmatpush1.msra.mxu0 0.0
    %1698 = vmatprep.subr.mxu0 0.0
    %1699 = vmatpush1.msra.mxu0 0.0
    %1700 = vmatprep.subr.mxu0 0.0
    %1701 = vmatpush1.msra.mxu0 0.0
    %1702 = vmatprep.mubr.f32.mxu0 0.0
    %1703 = vmatmul.mubr.f32.gmra.mrb[0].mxu0 %v1634
    %v1704 = vpop.f32.mrb[0].mxu0
    %v1705 = vadd.f32 0.0, %v1704
    %v1706 = vpop.f32.mrb[0].mxu0
    %v1707 = vadd.f32 0.0, %v1706
    %1708 = vmatprep.mubr.f32.mxu0 0.0
    %1709 = vmatmul.mubr.f32.gmra.mrb[0].mxu0 %v1636
    %v1710 = vpop.f32.mrb[0].mxu0
    %v1711 = vadd.f32 0.0, %v1710
    %v1712 = vpop.f32.mrb[0].mxu0
    %v1713 = vadd.f32 0.0, %v1712
    %1714 = vdwg.mxu0
    %v1715 = vsel %vm433, %v1705, %v1707
    %v1716 = vsel %vm434, %v1711, %v1713
    %v1717 = vadd.f32 %v1623, %v1715
    %v1718 = vadd.f32 %v1624, %v1716
    %v1719 = vxor.u32 %v1717, 2147483648
    %v1720 = vxor.u32 %v1718, 2147483648
    %v1721 = vmul.f32 %v1719, 1.442695
    %v1722 = vpow.pop %v1721
    %v1723 = vmul.f32 %v1720, 1.442695
    %v1724 = vpow.pop %v1723
    %v1725 = vadd.f32 %v1722, 1.0
    %v1726 = vadd.f32 %v1724, 1.0
    %v1727 = vrcp.pop %v1725
    %v1728 = vmul.f32 1.0, %v1727
    %v1729 = vrcp.pop %v1726
    %v1730 = vmul.f32 1.0, %v1729
    %v1731 = vadd.f32 %v1715, %v454
    %v1732 = vadd.f32 %v1716, %v456
    %1735 = vrot.lane.b32.xlu0 %v1731, 64
    %v1736 = vpop.permute.xlu0 %1735
    %1737 = vrot.lane.b32.xlu0 %v1732, 64
    %v1738 = vpop.permute.xlu0 %1737
    %v1741 = vmul.f32 %v1728, %v1736
    %v1742 = vmul.f32 %v1730, %v1738
    %1745 = vrot.lane.b32.xlu0 %v1741, 64
    %v1746 = vpop.permute.xlu0 %1745
    %1747 = vrot.lane.b32.xlu0 %v1742, 64
    %v1748 = vpop.permute.xlu0 %1747
    %v1751 = vadd.f32 %v1623, %v1746
    %v1752 = vadd.f32 %v1624, %v1748
    %v1753 = vtanh.pop %v1751
    %v1754 = vtanh.pop %v1752
    %v1755 = vsub.f32 1.0, %v1728
    %v1756 = vsub.f32 1.0, %v1730
    %1757 = vrot.lane.b32.xlu0 %v1604, 32
    %v1758 = vpop.permute.xlu0 %1757
    %1759 = vrot.lane.b32.xlu0 %v1605, 32
    %v1760 = vpop.permute.xlu0 %1759
    %v1763 = vsub.f32 %v1753, %v1758
    %v1764 = vsub.f32 %v1754, %v1760
    %1767 = vrot.lane.b32.xlu0 %v1763, 96
    %v1768 = vpop.permute.xlu0 %1767
    %1769 = vrot.lane.b32.xlu0 %v1764, 96
    %v1770 = vpop.permute.xlu0 %1769
    %v1773 = vmul.f32 %v1755, %v1768
    %v1774 = vmul.f32 %v1756, %v1770
    %1776 = vset.pattern.permute.xlu0 0
    %1777 = vperm.xlu0 %1776, %v1626
    %v1778 = vpop.permute.xlu0 %1777
    %1781 = vset.pattern.permute.xlu0 0
    %1782 = vperm.xlu0 %1781, %v1627
    %v1783 = vpop.permute.xlu0 %1782
    %v1785 = vmul.f32 %v1778, %v1773
    %v1786 = vmul.f32 %v1783, %v1774
    %v1787 = vadd.f32 %v1604, %v1785
    %v1788 = vadd.f32 %v1605, %v1786
    %v1789 = vmul.f32 %v1778, %v1787
    %v1790 = vmul.f32 %v1783, %v1788
    %1793 = vrot.lane.b32.xlu0 %v1789, 96
    %v1794 = vpop.permute.xlu0 %1793
    %1795 = vrot.lane.b32.xlu0 %v1790, 96
    %v1796 = vpop.permute.xlu0 %1795
    %s1799 = scalar_lea.vmem [#allocation3], 112
    %1800 = vst.msk [vmem:[%s1799] sm:$0xff] %vm350, %v1794
    %1801 = vst.msk [vmem:[%s1799 + $0x8] sm:$0xff] %vm350, %v1796
    %s1802 = scalar_lea.vmem [#allocation4], 32
    %1803 = vst.msk [vmem:[%s1802] sm:$0xff] %vm350, %v1794
    %1804 = vst.msk [vmem:[%s1802 + $0x8] sm:$0xff] %vm350, %v1796
    %s1805 = scalar_lea.vmem [#allocation2], 128
    %v1806 = vld [vmem:[%s1805] sm:$0xff]
    %v1807 = vld [vmem:[%s1805 + $0x8] sm:$0xff]
    %s1808 = scalar_lea.vmem %s1, 128
    %v1809 = vld [vmem:[%s1808] sm:$0xff]
    %v1810 = vld [vmem:[%s1808 + $0x8] sm:$0xff]
    %1813 = vrot.lane.b32.xlu0 %v1787, 96
    %v1814 = vpop.permute.xlu0 %1813
    %1815 = vrot.lane.b32.xlu0 %v1788, 96
    %v1816 = vpop.permute.xlu0 %1815
    %v1817 = vsel %vm350, %v1814, 0
    %v1819 = vsel %vm350, %v1816, 0
    %1821 = vmatprep.subr.mxu0 %v337
    %1822 = vmatpush1.msra.mxu0 %v336
    %1823 = vmatprep.subr.mxu0 %v339
    %1824 = vmatpush1.msra.mxu0 %v338
    %1825 = vmatprep.subr.mxu0 %v341
    %1826 = vmatpush1.msra.mxu0 %v340
    %1827 = vmatprep.subr.mxu0 %v343
    %1828 = vmatpush1.msra.mxu0 %v342
    %1829 = vmatprep.subr.mxu0 0.0
    %1830 = vmatpush1.msra.mxu0 0.0
    %1831 = vmatprep.subr.mxu0 0.0
    %1832 = vmatpush1.msra.mxu0 0.0
    %1833 = vmatprep.subr.mxu0 0.0
    %1834 = vmatpush1.msra.mxu0 0.0
    %1835 = vmatprep.subr.mxu0 0.0
    %1836 = vmatpush1.msra.mxu0 0.0
    %1837 = vmatprep.subr.mxu0 0.0
    %1838 = vmatpush1.msra.mxu0 0.0
    %1839 = vmatprep.subr.mxu0 0.0
    %1840 = vmatpush1.msra.mxu0 0.0
    %1841 = vmatprep.subr.mxu0 0.0
    %1842 = vmatpush1.msra.mxu0 0.0
    %1843 = vmatprep.subr.mxu0 0.0
    %1844 = vmatpush1.msra.mxu0 0.0
    %1845 = vmatprep.subr.mxu0 0.0
    %1846 = vmatpush1.msra.mxu0 0.0
    %1847 = vmatprep.subr.mxu0 0.0
    %1848 = vmatpush1.msra.mxu0 0.0
    %1849 = vmatprep.subr.mxu0 0.0
    %1850 = vmatpush1.msra.mxu0 0.0
    %1851 = vmatprep.subr.mxu0 0.0
    %1852 = vmatpush1.msra.mxu0 0.0
    %1853 = vmatprep.subr.mxu0 0.0
    %1854 = vmatpush1.msra.mxu0 0.0
    %1855 = vmatprep.subr.mxu0 0.0
    %1856 = vmatpush1.msra.mxu0 0.0
    %1857 = vmatprep.subr.mxu0 0.0
    %1858 = vmatpush1.msra.mxu0 0.0
    %1859 = vmatprep.subr.mxu0 0.0
    %1860 = vmatpush1.msra.mxu0 0.0
    %1861 = vmatprep.subr.mxu0 0.0
    %1862 = vmatpush1.msra.mxu0 0.0
    %1863 = vmatprep.subr.mxu0 0.0
    %1864 = vmatpush1.msra.mxu0 0.0
    %1865 = vmatprep.subr.mxu0 0.0
    %1866 = vmatpush1.msra.mxu0 0.0
    %1867 = vmatprep.subr.mxu0 0.0
    %1868 = vmatpush1.msra.mxu0 0.0
    %1869 = vmatprep.subr.mxu0 0.0
    %1870 = vmatpush1.msra.mxu0 0.0
    %1871 = vmatprep.subr.mxu0 0.0
    %1872 = vmatpush1.msra.mxu0 0.0
    %1873 = vmatprep.subr.mxu0 0.0
    %1874 = vmatpush1.msra.mxu0 0.0
    %1875 = vmatprep.subr.mxu0 0.0
    %1876 = vmatpush1.msra.mxu0 0.0
    %1877 = vmatprep.subr.mxu0 0.0
    %1878 = vmatpush1.msra.mxu0 0.0
    %1879 = vmatprep.subr.mxu0 0.0
    %1880 = vmatpush1.msra.mxu0 0.0
    %1881 = vmatprep.subr.mxu0 0.0
    %1882 = vmatpush1.msra.mxu0 0.0
    %1883 = vmatprep.subr.mxu0 0.0
    %1884 = vmatpush1.msra.mxu0 0.0
    %1885 = vmatprep.mubr.f32.mxu0 0.0
    %1886 = vmatmul.mubr.f32.gmra.mrb[0].mxu0 %v1817
    %v1887 = vpop.f32.mrb[0].mxu0
    %v1888 = vadd.f32 0.0, %v1887
    %v1889 = vpop.f32.mrb[0].mxu0
    %v1890 = vadd.f32 0.0, %v1889
    %1891 = vmatprep.mubr.f32.mxu0 0.0
    %1892 = vmatmul.mubr.f32.gmra.mrb[0].mxu0 %v1819
    %v1893 = vpop.f32.mrb[0].mxu0
    %v1894 = vadd.f32 0.0, %v1893
    %v1895 = vpop.f32.mrb[0].mxu0
    %v1896 = vadd.f32 0.0, %v1895
    %1897 = vdwg.mxu0
    %v1898 = vsel %vm433, %v1888, %v1890
    %v1899 = vsel %vm434, %v1894, %v1896
    %v1900 = vadd.f32 %v1806, %v1898
    %v1901 = vadd.f32 %v1807, %v1899
    %v1902 = vxor.u32 %v1900, 2147483648
    %v1903 = vxor.u32 %v1901, 2147483648
    %v1904 = vmul.f32 %v1902, 1.442695
    %v1905 = vpow.pop %v1904
    %v1906 = vmul.f32 %v1903, 1.442695
    %v1907 = vpow.pop %v1906
    %v1908 = vadd.f32 %v1905, 1.0
    %v1909 = vadd.f32 %v1907, 1.0
    %v1910 = vrcp.pop %v1908
    %v1911 = vmul.f32 1.0, %v1910
    %v1912 = vrcp.pop %v1909
    %v1913 = vmul.f32 1.0, %v1912
    %v1914 = vadd.f32 %v1898, %v454
    %v1915 = vadd.f32 %v1899, %v456
    %1918 = vrot.lane.b32.xlu0 %v1914, 64
    %v1919 = vpop.permute.xlu0 %1918
    %1920 = vrot.lane.b32.xlu0 %v1915, 64
    %v1921 = vpop.permute.xlu0 %1920
    %v1924 = vmul.f32 %v1911, %v1919
    %v1925 = vmul.f32 %v1913, %v1921
    %1928 = vrot.lane.b32.xlu0 %v1924, 64
    %v1929 = vpop.permute.xlu0 %1928
    %1930 = vrot.lane.b32.xlu0 %v1925, 64
    %v1931 = vpop.permute.xlu0 %1930
    %v1934 = vadd.f32 %v1806, %v1929
    %v1935 = vadd.f32 %v1807, %v1931
    %v1936 = vtanh.pop %v1934
    %v1937 = vtanh.pop %v1935
    %v1938 = vsub.f32 1.0, %v1911
    %v1939 = vsub.f32 1.0, %v1913
    %1940 = vrot.lane.b32.xlu0 %v1787, 32
    %v1941 = vpop.permute.xlu0 %1940
    %1942 = vrot.lane.b32.xlu0 %v1788, 32
    %v1943 = vpop.permute.xlu0 %1942
    %v1946 = vsub.f32 %v1936, %v1941
    %v1947 = vsub.f32 %v1937, %v1943
    %1950 = vrot.lane.b32.xlu0 %v1946, 96
    %v1951 = vpop.permute.xlu0 %1950
    %1952 = vrot.lane.b32.xlu0 %v1947, 96
    %v1953 = vpop.permute.xlu0 %1952
    %v1956 = vmul.f32 %v1938, %v1951
    %v1957 = vmul.f32 %v1939, %v1953
    %1959 = vset.pattern.permute.xlu0 0
    %1960 = vperm.xlu0 %1959, %v1809
    %v1961 = vpop.permute.xlu0 %1960
    %1964 = vset.pattern.permute.xlu0 0
    %1965 = vperm.xlu0 %1964, %v1810
    %v1966 = vpop.permute.xlu0 %1965
    %v1968 = vmul.f32 %v1961, %v1956
    %v1969 = vmul.f32 %v1966, %v1957
    %v1970 = vadd.f32 %v1787, %v1968
    %v1971 = vadd.f32 %v1788, %v1969
    %v1972 = vmul.f32 %v1961, %v1970
    %v1973 = vmul.f32 %v1966, %v1971
    %1976 = vrot.lane.b32.xlu0 %v1972, 96
    %v1977 = vpop.permute.xlu0 %1976
    %1978 = vrot.lane.b32.xlu0 %v1973, 96
    %v1979 = vpop.permute.xlu0 %1978
    %s1982 = scalar_lea.vmem [#allocation3], 128
    %1983 = vst.msk [vmem:[%s1982] sm:$0xff] %vm350, %v1977
    %1984 = vst.msk [vmem:[%s1982 + $0x8] sm:$0xff] %vm350, %v1979
    %s1985 = scalar_lea.vmem [#allocation4], 16
    %1986 = vst.msk [vmem:[%s1985] sm:$0xff] %vm350, %v1977
    %1987 = vst.msk [vmem:[%s1985 + $0x8] sm:$0xff] %vm350, %v1979
    %s1988 = scalar_lea.vmem [#allocation2], 144
    %v1989 = vld [vmem:[%s1988] sm:$0xff]
    %v1990 = vld [vmem:[%s1988 + $0x8] sm:$0xff]
    %s1991 = scalar_lea.vmem %s1, 144
    %v1992 = vld [vmem:[%s1991] sm:$0xff]
    %v1993 = vld [vmem:[%s1991 + $0x8] sm:$0xff]
    %1996 = vrot.lane.b32.xlu0 %v1970, 96
    %v1997 = vpop.permute.xlu0 %1996
    %1998 = vrot.lane.b32.xlu0 %v1971, 96
    %v1999 = vpop.permute.xlu0 %1998
    %v2000 = vsel %vm350, %v1997, 0
    %v2002 = vsel %vm350, %v1999, 0
    %2004 = vmatprep.subr.mxu0 %v337
    %2005 = vmatpush1.msra.mxu0 %v336
    %2006 = vmatprep.subr.mxu0 %v339
    %2007 = vmatpush1.msra.mxu0 %v338
    %2008 = vmatprep.subr.mxu0 %v341
    %2009 = vmatpush1.msra.mxu0 %v340
    %2010 = vmatprep.subr.mxu0 %v343
    %2011 = vmatpush1.msra.mxu0 %v342
    %2012 = vmatprep.subr.mxu0 0.0
    %2013 = vmatpush1.msra.mxu0 0.0
    %2014 = vmatprep.subr.mxu0 0.0
    %2015 = vmatpush1.msra.mxu0 0.0
    %2016 = vmatprep.subr.mxu0 0.0
    %2017 = vmatpush1.msra.mxu0 0.0
    %2018 = vmatprep.subr.mxu0 0.0
    %2019 = vmatpush1.msra.mxu0 0.0
    %2020 = vmatprep.subr.mxu0 0.0
    %2021 = vmatpush1.msra.mxu0 0.0
    %2022 = vmatprep.subr.mxu0 0.0
    %2023 = vmatpush1.msra.mxu0 0.0
    %2024 = vmatprep.subr.mxu0 0.0
    %2025 = vmatpush1.msra.mxu0 0.0
    %2026 = vmatprep.subr.mxu0 0.0
    %2027 = vmatpush1.msra.mxu0 0.0
    %2028 = vmatprep.subr.mxu0 0.0
    %2029 = vmatpush1.msra.mxu0 0.0
    %2030 = vmatprep.subr.mxu0 0.0
    %2031 = vmatpush1.msra.mxu0 0.0
    %2032 = vmatprep.subr.mxu0 0.0
    %2033 = vmatpush1.msra.mxu0 0.0
    %2034 = vmatprep.subr.mxu0 0.0
    %2035 = vmatpush1.msra.mxu0 0.0
    %2036 = vmatprep.subr.mxu0 0.0
    %2037 = vmatpush1.msra.mxu0 0.0
    %2038 = vmatprep.subr.mxu0 0.0
    %2039 = vmatpush1.msra.mxu0 0.0
    %2040 = vmatprep.subr.mxu0 0.0
    %2041 = vmatpush1.msra.mxu0 0.0
    %2042 = vmatprep.subr.mxu0 0.0
    %2043 = vmatpush1.msra.mxu0 0.0
    %2044 = vmatprep.subr.mxu0 0.0
    %2045 = vmatpush1.msra.mxu0 0.0
    %2046 = vmatprep.subr.mxu0 0.0
    %2047 = vmatpush1.msra.mxu0 0.0
    %2048 = vmatprep.subr.mxu0 0.0
    %2049 = vmatpush1.msra.mxu0 0.0
    %2050 = vmatprep.subr.mxu0 0.0
    %2051 = vmatpush1.msra.mxu0 0.0
    %2052 = vmatprep.subr.mxu0 0.0
    %2053 = vmatpush1.msra.mxu0 0.0
    %2054 = vmatprep.subr.mxu0 0.0
    %2055 = vmatpush1.msra.mxu0 0.0
    %2056 = vmatprep.subr.mxu0 0.0
    %2057 = vmatpush1.msra.mxu0 0.0
    %2058 = vmatprep.subr.mxu0 0.0
    %2059 = vmatpush1.msra.mxu0 0.0
    %2060 = vmatprep.subr.mxu0 0.0
    %2061 = vmatpush1.msra.mxu0 0.0
    %2062 = vmatprep.subr.mxu0 0.0
    %2063 = vmatpush1.msra.mxu0 0.0
    %2064 = vmatprep.subr.mxu0 0.0
    %2065 = vmatpush1.msra.mxu0 0.0
    %2066 = vmatprep.subr.mxu0 0.0
    %2067 = vmatpush1.msra.mxu0 0.0
    %2068 = vmatprep.mubr.f32.mxu0 0.0
    %2069 = vmatmul.mubr.f32.gmra.mrb[0].mxu0 %v2000
    %v2070 = vpop.f32.mrb[0].mxu0
    %v2071 = vadd.f32 0.0, %v2070
    %v2072 = vpop.f32.mrb[0].mxu0
    %v2073 = vadd.f32 0.0, %v2072
    %2074 = vmatprep.mubr.f32.mxu0 0.0
    %2075 = vmatmul.mubr.f32.gmra.mrb[0].mxu0 %v2002
    %v2076 = vpop.f32.mrb[0].mxu0
    %v2077 = vadd.f32 0.0, %v2076
    %v2078 = vpop.f32.mrb[0].mxu0
    %v2079 = vadd.f32 0.0, %v2078
    %2080 = vdwg.mxu0
    %v2081 = vsel %vm433, %v2071, %v2073
    %v2082 = vsel %vm434, %v2077, %v2079
    %v2083 = vadd.f32 %v1989, %v2081
    %v2084 = vadd.f32 %v1990, %v2082
    %v2085 = vxor.u32 %v2083, 2147483648
    %v2086 = vxor.u32 %v2084, 2147483648
    %v2087 = vmul.f32 %v2085, 1.442695
    %v2088 = vpow.pop %v2087
    %v2089 = vmul.f32 %v2086, 1.442695
    %v2090 = vpow.pop %v2089
    %v2091 = vadd.f32 %v2088, 1.0
    %v2092 = vadd.f32 %v2090, 1.0
    %v2093 = vrcp.pop %v2091
    %v2094 = vmul.f32 1.0, %v2093
    %v2095 = vrcp.pop %v2092
    %v2096 = vmul.f32 1.0, %v2095
    %v2097 = vadd.f32 %v2081, %v454
    %v2098 = vadd.f32 %v2082, %v456
    %2101 = vrot.lane.b32.xlu0 %v2097, 64
    %v2102 = vpop.permute.xlu0 %2101
    %2103 = vrot.lane.b32.xlu0 %v2098, 64
    %v2104 = vpop.permute.xlu0 %2103
    %v2107 = vmul.f32 %v2094, %v2102
    %v2108 = vmul.f32 %v2096, %v2104
    %2111 = vrot.lane.b32.xlu0 %v2107, 64
    %v2112 = vpop.permute.xlu0 %2111
    %2113 = vrot.lane.b32.xlu0 %v2108, 64
    %v2114 = vpop.permute.xlu0 %2113
    %v2117 = vadd.f32 %v1989, %v2112
    %v2118 = vadd.f32 %v1990, %v2114
    %v2119 = vtanh.pop %v2117
    %v2120 = vtanh.pop %v2118
    %v2121 = vsub.f32 1.0, %v2094
    %v2122 = vsub.f32 1.0, %v2096
    %2123 = vrot.lane.b32.xlu0 %v1970, 32
    %v2124 = vpop.permute.xlu0 %2123
    %2125 = vrot.lane.b32.xlu0 %v1971, 32
    %v2126 = vpop.permute.xlu0 %2125
    %v2129 = vsub.f32 %v2119, %v2124
    %v2130 = vsub.f32 %v2120, %v2126
    %2133 = vrot.lane.b32.xlu0 %v2129, 96
    %v2134 = vpop.permute.xlu0 %2133
    %2135 = vrot.lane.b32.xlu0 %v2130, 96
    %v2136 = vpop.permute.xlu0 %2135
    %v2139 = vmul.f32 %v2121, %v2134
    %v2140 = vmul.f32 %v2122, %v2136
    %2142 = vset.pattern.permute.xlu0 0
    %2143 = vperm.xlu0 %2142, %v1992
    %v2144 = vpop.permute.xlu0 %2143
    %2147 = vset.pattern.permute.xlu0 0
    %2148 = vperm.xlu0 %2147, %v1993
    %v2149 = vpop.permute.xlu0 %2148
    %v2151 = vmul.f32 %v2144, %v2139
    %v2152 = vmul.f32 %v2149, %v2140
    %v2153 = vadd.f32 %v1970, %v2151
    %v2154 = vadd.f32 %v1971, %v2152
    %v2155 = vmul.f32 %v2144, %v2153
    %v2156 = vmul.f32 %v2149, %v2154
    %2159 = vrot.lane.b32.xlu0 %v2155, 96
    %v2160 = vpop.permute.xlu0 %2159
    %2161 = vrot.lane.b32.xlu0 %v2156, 96
    %v2162 = vpop.permute.xlu0 %2161
    %s2165 = scalar_lea.vmem [#allocation3], 144
    %2166 = vst.msk [vmem:[%s2165] sm:$0xff] %vm350, %v2160
    %2167 = vst.msk [vmem:[%s2165 + $0x8] sm:$0xff] %vm350, %v2162
    %2168 = vst.msk [vmem:[#allocation4] sm:$0xff] %vm350, %v2160
    %2169 = vst.msk [vmem:[#allocation4 + $0x8] sm:$0xff] %vm350, %v2162
    %v2170 = vld [vmem:[#allocation3] sm:$0xff]
    %v2171 = vld [vmem:[#allocation3 + $0x10] sm:$0xff]
    %v2172 = vld [vmem:[#allocation3 + $0x20] sm:$0xff]
    %v2173 = vld [vmem:[#allocation3 + $0x30] sm:$0xff]
    %v2174 = vld [vmem:[#allocation3 + $0x40] sm:$0xff]
    %v2175 = vld [vmem:[#allocation3 + $0x50] sm:$0xff]
    %v2176 = vld [vmem:[#allocation3 + $0x60] sm:$0xff]
    %v2177 = vld [vmem:[#allocation3 + $0x70] sm:$0xff]
    %v2178 = vld [vmem:[#allocation3 + $0x80] sm:$0xff]
    %v2179 = vld [vmem:[#allocation3 + $0x90] sm:$0xff]
    %v2180 = vld [vmem:[#allocation4 + $0x8] sm:$0xff]
    %v2181 = vld [vmem:[#allocation4 + $0x18] sm:$0xff]
    %v2182 = vld [vmem:[#allocation4 + $0x28] sm:$0xff]
    %v2183 = vld [vmem:[#allocation4 + $0x38] sm:$0xff]
    %v2184 = vld [vmem:[#allocation4 + $0x48] sm:$0xff]
    %v2185 = vld [vmem:[#allocation4 + $0x58] sm:$0xff]
    %v2186 = vld [vmem:[#allocation4 + $0x68] sm:$0xff]
    %v2187 = vld [vmem:[#allocation4 + $0x78] sm:$0xff]
    %v2188 = vld [vmem:[#allocation4 + $0x88] sm:$0xff]
    %v2189 = vld [vmem:[#allocation4 + $0x98] sm:$0xff]
    %2200 = vrot.lane.b32.xlu0 %v2180, 32
    %v2201 = vpop.permute.xlu0 %2200
    %2202 = vrot.lane.b32.xlu0 %v2181, 32
    %v2203 = vpop.permute.xlu0 %2202
    %2204 = vrot.lane.b32.xlu0 %v2182, 32
    %v2205 = vpop.permute.xlu0 %2204
    %2206 = vrot.lane.b32.xlu0 %v2183, 32
    %v2207 = vpop.permute.xlu0 %2206
    %2208 = vrot.lane.b32.xlu0 %v2184, 32
    %v2209 = vpop.permute.xlu0 %2208
    %2210 = vrot.lane.b32.xlu0 %v2185, 32
    %v2211 = vpop.permute.xlu0 %2210
    %2212 = vrot.lane.b32.xlu0 %v2186, 32
    %v2213 = vpop.permute.xlu0 %2212
    %2214 = vrot.lane.b32.xlu0 %v2187, 32
    %v2215 = vpop.permute.xlu0 %2214
    %2216 = vrot.lane.b32.xlu0 %v2188, 32
    %v2217 = vpop.permute.xlu0 %2216
    %2218 = vrot.lane.b32.xlu0 %v2189, 32
    %v2219 = vpop.permute.xlu0 %2218
    %v2230 = vsel %vm350, %v2170, %v2201
    %v2231 = vsel %vm350, %v2171, %v2203
    %v2232 = vsel %vm350, %v2172, %v2205
    %v2233 = vsel %vm350, %v2173, %v2207
    %v2234 = vsel %vm350, %v2174, %v2209
    %v2235 = vsel %vm350, %v2175, %v2211
    %v2236 = vsel %vm350, %v2176, %v2213
    %v2237 = vsel %vm350, %v2177, %v2215
    %v2238 = vsel %vm350, %v2178, %v2217
    %v2239 = vsel %vm350, %v2179, %v2219
    %v2240 = vld [vmem:[#allocation4] sm:$0xff]
    %v2241 = vld [vmem:[#allocation4 + $0x10] sm:$0xff]
    %v2242 = vld [vmem:[#allocation4 + $0x20] sm:$0xff]
    %v2243 = vld [vmem:[#allocation4 + $0x30] sm:$0xff]
    %v2244 = vld [vmem:[#allocation4 + $0x40] sm:$0xff]
    %v2245 = vld [vmem:[#allocation4 + $0x50] sm:$0xff]
    %v2246 = vld [vmem:[#allocation4 + $0x60] sm:$0xff]
    %v2247 = vld [vmem:[#allocation4 + $0x70] sm:$0xff]
    %v2248 = vld [vmem:[#allocation4 + $0x80] sm:$0xff]
    %v2249 = vld [vmem:[#allocation4 + $0x90] sm:$0xff]
    %v2250 = vld [vmem:[#allocation3 + $0x8] sm:$0xff]
    %v2251 = vld [vmem:[#allocation3 + $0x18] sm:$0xff]
    %v2252 = vld [vmem:[#allocation3 + $0x28] sm:$0xff]
    %v2253 = vld [vmem:[#allocation3 + $0x38] sm:$0xff]
    %v2254 = vld [vmem:[#allocation3 + $0x48] sm:$0xff]
    %v2255 = vld [vmem:[#allocation3 + $0x58] sm:$0xff]
    %v2256 = vld [vmem:[#allocation3 + $0x68] sm:$0xff]
    %v2257 = vld [vmem:[#allocation3 + $0x78] sm:$0xff]
    %v2258 = vld [vmem:[#allocation3 + $0x88] sm:$0xff]
    %v2259 = vld [vmem:[#allocation3 + $0x98] sm:$0xff]
    %2270 = vrot.lane.b32.xlu0 %v2250, 32
    %v2271 = vpop.permute.xlu0 %2270
    %2272 = vrot.lane.b32.xlu0 %v2251, 32
    %v2273 = vpop.permute.xlu0 %2272
    %2274 = vrot.lane.b32.xlu0 %v2252, 32
    %v2275 = vpop.permute.xlu0 %2274
    %2276 = vrot.lane.b32.xlu0 %v2253, 32
    %v2277 = vpop.permute.xlu0 %2276
    %2278 = vrot.lane.b32.xlu0 %v2254, 32
    %v2279 = vpop.permute.xlu0 %2278
    %2280 = vrot.lane.b32.xlu0 %v2255, 32
    %v2281 = vpop.permute.xlu0 %2280
    %2282 = vrot.lane.b32.xlu0 %v2256, 32
    %v2283 = vpop.permute.xlu0 %2282
    %2284 = vrot.lane.b32.xlu0 %v2257, 32
    %v2285 = vpop.permute.xlu0 %2284
    %2286 = vrot.lane.b32.xlu0 %v2258, 32
    %v2287 = vpop.permute.xlu0 %2286
    %2288 = vrot.lane.b32.xlu0 %v2259, 32
    %v2289 = vpop.permute.xlu0 %2288
    %v2300 = vsel %vm350, %v2240, %v2271
    %v2301 = vsel %vm350, %v2241, %v2273
    %v2302 = vsel %vm350, %v2242, %v2275
    %v2303 = vsel %vm350, %v2243, %v2277
    %v2304 = vsel %vm350, %v2244, %v2279
    %v2305 = vsel %vm350, %v2245, %v2281
    %v2306 = vsel %vm350, %v2246, %v2283
    %v2307 = vsel %vm350, %v2247, %v2285
    %v2308 = vsel %vm350, %v2248, %v2287
    %v2309 = vsel %vm350, %v2249, %v2289
    %v2310 = vld [vmem:[%s4] sm:$0xff]
    %v2311 = vld [vmem:[%s4 + $0x10] sm:$0xff]
    %v2312 = vld [vmem:[%s4 + $0x20] sm:$0xff]
    %v2313 = vld [vmem:[%s4 + $0x30] sm:$0xff]
    %v2314 = vld [vmem:[%s4 + $0x40] sm:$0xff]
    %v2315 = vld [vmem:[%s4 + $0x50] sm:$0xff]
    %v2316 = vld [vmem:[%s4 + $0x60] sm:$0xff]
    %v2317 = vld [vmem:[%s4 + $0x70] sm:$0xff]
    %v2318 = vld [vmem:[%s4 + $0x80] ss:$0 sm:$0xff]
    %v2319 = vld [vmem:[%s4 + $0x8] sm:$0xff]
    %v2320 = vld [vmem:[%s4 + $0x18] sm:$0xff]
    %v2321 = vld [vmem:[%s4 + $0x28] sm:$0xff]
    %v2322 = vld [vmem:[%s4 + $0x38] sm:$0xff]
    %v2323 = vld [vmem:[%s4 + $0x48] sm:$0xff]
    %v2324 = vld [vmem:[%s4 + $0x58] sm:$0xff]
    %v2325 = vld [vmem:[%s4 + $0x68] sm:$0xff]
    %v2326 = vld [vmem:[%s4 + $0x78] sm:$0xff]
    %v2327 = vld [vmem:[%s4 + $0x88] ss:$0 sm:$0xff]
    %vm2328 = vcmask 523264
    %v2330 = vsel %vm2328, %v2230, 0
    %v2333 = vsel %vm2328, %v2231, 0
    %v2336 = vsel %vm2328, %v2232, 0
    %v2339 = vsel %vm2328, %v2233, 0
    %v2342 = vsel %vm2328, %v2234, 0
    %v2345 = vsel %vm2328, %v2235, 0
    %v2348 = vsel %vm2328, %v2236, 0
    %v2351 = vsel %vm2328, %v2237, 0
    %v2354 = vsel %vm2328, %v2238, 0
    %v2357 = vsel %vm2328, %v2239, 0
    %2359 = vmatprep.subr.mxu0 0.0
    %2360 = vmatpush1.msra.mxu0 %v2310
    %2361 = vmatprep.subr.mxu0 0.0
    %2362 = vmatpush1.msra.mxu0 %v2311
    %2363 = vmatprep.subr.mxu0 0.0
    %2364 = vmatpush1.msra.mxu0 %v2312
    %2365 = vmatprep.subr.mxu0 0.0
    %2366 = vmatpush1.msra.mxu0 %v2313
    %2367 = vmatprep.subr.mxu0 0.0
    %2368 = vmatpush1.msra.mxu0 %v2314
    %2369 = vmatprep.subr.mxu0 0.0
    %2370 = vmatpush1.msra.mxu0 %v2315
    %2371 = vmatprep.subr.mxu0 0.0
    %2372 = vmatpush1.msra.mxu0 %v2316
    %2373 = vmatprep.subr.mxu0 0.0
    %2374 = vmatpush1.msra.mxu0 %v2317
    %2375 = vmatprep.subr.mxu0 0.0
    %2376 = vmatpush1.msra.mxu0 0.0
    %2377 = vmatprep.subr.mxu0 0.0
    %2378 = vmatpush1.msra.mxu0 0.0
    %2379 = vmatprep.subr.mxu0 0.0
    %2380 = vmatpush1.msra.mxu0 0.0
    %2381 = vmatprep.subr.mxu0 0.0
    %2382 = vmatpush1.msra.mxu0 0.0
    %2383 = vmatprep.subr.mxu0 0.0
    %2384 = vmatpush1.msra.mxu0 0.0
    %2385 = vmatprep.subr.mxu0 0.0
    %2386 = vmatpush1.msra.mxu0 0.0
    %2387 = vmatprep.subr.mxu0 0.0
    %2388 = vmatpush1.msra.mxu0 0.0
    %2389 = vmatprep.subr.mxu0 0.0
    %2390 = vmatpush1.msra.mxu0 0.0
    %2391 = vmatprep.subr.mxu0 0.0
    %2392 = vmatpush1.msra.mxu0 0.0
    %2393 = vmatprep.subr.mxu0 0.0
    %2394 = vmatpush1.msra.mxu0 0.0
    %2395 = vmatprep.subr.mxu0 0.0
    %2396 = vmatpush1.msra.mxu0 0.0
    %2397 = vmatprep.subr.mxu0 0.0
    %2398 = vmatpush1.msra.mxu0 0.0
    %2399 = vmatprep.subr.mxu0 0.0
    %2400 = vmatpush1.msra.mxu0 0.0
    %2401 = vmatprep.subr.mxu0 0.0
    %2402 = vmatpush1.msra.mxu0 0.0
    %2403 = vmatprep.subr.mxu0 0.0
    %2404 = vmatpush1.msra.mxu0 0.0
    %2405 = vmatprep.subr.mxu0 0.0
    %2406 = vmatpush1.msra.mxu0 0.0
    %2407 = vmatprep.subr.mxu0 0.0
    %2408 = vmatpush1.msra.mxu0 0.0
    %2409 = vmatprep.subr.mxu0 0.0
    %2410 = vmatpush1.msra.mxu0 0.0
    %2411 = vmatprep.subr.mxu0 0.0
    %2412 = vmatpush1.msra.mxu0 0.0
    %2413 = vmatprep.subr.mxu0 0.0
    %2414 = vmatpush1.msra.mxu0 0.0
    %2415 = vmatprep.subr.mxu0 0.0
    %2416 = vmatpush1.msra.mxu0 0.0
    %2417 = vmatprep.subr.mxu0 0.0
    %2418 = vmatpush1.msra.mxu0 0.0
    %2419 = vmatprep.subr.mxu0 0.0
    %2420 = vmatpush1.msra.mxu0 0.0
    %2421 = vmatprep.subr.mxu0 0.0
    %2422 = vmatpush1.msra.mxu0 0.0
    %2423 = vmatprep.mubr.f32.mxu0 0.0
    %2424 = vmatmul.mubr.f32.gmra.mrb[0].mxu0 %v2330
    %v2425 = vpop.f32.mrb[0].mxu0
    %v2426 = vadd.f32 %v2318, %v2425
    %v2427 = vpop.f32.mrb[0].mxu0
    %2428 = vmatprep.mubr.f32.mxu0 0.0
    %2429 = vmatmul.mubr.f32.gmra.mrb[0].mxu0 %v2333
    %v2430 = vpop.f32.mrb[0].mxu0
    %v2431 = vadd.f32 %v2318, %v2430
    %v2432 = vpop.f32.mrb[0].mxu0
    %2433 = vmatprep.mubr.f32.mxu0 0.0
    %2434 = vmatmul.mubr.f32.gmra.mrb[0].mxu0 %v2336
    %v2435 = vpop.f32.mrb[0].mxu0
    %v2436 = vadd.f32 %v2318, %v2435
    %v2437 = vpop.f32.mrb[0].mxu0
    %2438 = vmatprep.mubr.f32.mxu0 0.0
    %2439 = vmatmul.mubr.f32.gmra.mrb[0].mxu0 %v2339
    %v2440 = vpop.f32.mrb[0].mxu0
    %v2441 = vadd.f32 %v2318, %v2440
    %v2442 = vpop.f32.mrb[0].mxu0
    %2443 = vmatprep.mubr.f32.mxu0 0.0
    %2444 = vmatmul.mubr.f32.gmra.mrb[0].mxu0 %v2342
    %v2445 = vpop.f32.mrb[0].mxu0
    %v2446 = vadd.f32 %v2318, %v2445
    %v2447 = vpop.f32.mrb[0].mxu0
    %2448 = vmatprep.mubr.f32.mxu0 0.0
    %2449 = vmatmul.mubr.f32.gmra.mrb[0].mxu0 %v2345
    %v2450 = vpop.f32.mrb[0].mxu0
    %v2451 = vadd.f32 %v2318, %v2450
    %v2452 = vpop.f32.mrb[0].mxu0
    %2453 = vmatprep.mubr.f32.mxu0 0.0
    %2454 = vmatmul.mubr.f32.gmra.mrb[0].mxu0 %v2348
    %v2455 = vpop.f32.mrb[0].mxu0
    %v2456 = vadd.f32 %v2318, %v2455
    %v2457 = vpop.f32.mrb[0].mxu0
    %2458 = vmatprep.mubr.f32.mxu0 0.0
    %2459 = vmatmul.mubr.f32.gmra.mrb[0].mxu0 %v2351
    %v2460 = vpop.f32.mrb[0].mxu0
    %v2461 = vadd.f32 %v2318, %v2460
    %v2462 = vpop.f32.mrb[0].mxu0
    %2463 = vmatprep.mubr.f32.mxu0 0.0
    %2464 = vmatmul.mubr.f32.gmra.mrb[0].mxu0 %v2354
    %v2465 = vpop.f32.mrb[0].mxu0
    %v2466 = vadd.f32 %v2318, %v2465
    %v2467 = vpop.f32.mrb[0].mxu0
    %2468 = vmatprep.mubr.f32.mxu0 0.0
    %2469 = vmatmul.mubr.f32.gmra.mrb[0].mxu0 %v2357
    %v2470 = vpop.f32.mrb[0].mxu0
    %v2471 = vadd.f32 %v2318, %v2470
    %v2472 = vpop.f32.mrb[0].mxu0
    %2473 = vdwg.mxu0
    %v2475 = vsel %vm2328, %v2300, 0
    %v2478 = vsel %vm2328, %v2301, 0
    %v2481 = vsel %vm2328, %v2302, 0
    %v2484 = vsel %vm2328, %v2303, 0
    %v2487 = vsel %vm2328, %v2304, 0
    %v2490 = vsel %vm2328, %v2305, 0
    %v2493 = vsel %vm2328, %v2306, 0
    %v2496 = vsel %vm2328, %v2307, 0
    %v2499 = vsel %vm2328, %v2308, 0
    %v2502 = vsel %vm2328, %v2309, 0
    %2504 = vmatprep.subr.mxu0 0.0
    %2505 = vmatpush1.msra.mxu0 %v2319
    %2506 = vmatprep.subr.mxu0 0.0
    %2507 = vmatpush1.msra.mxu0 %v2320
    %2508 = vmatprep.subr.mxu0 0.0
    %2509 = vmatpush1.msra.mxu0 %v2321
    %2510 = vmatprep.subr.mxu0 0.0
    %2511 = vmatpush1.msra.mxu0 %v2322
    %2512 = vmatprep.subr.mxu0 0.0
    %2513 = vmatpush1.msra.mxu0 %v2323
    %2514 = vmatprep.subr.mxu0 0.0
    %2515 = vmatpush1.msra.mxu0 %v2324
    %2516 = vmatprep.subr.mxu0 0.0
    %2517 = vmatpush1.msra.mxu0 %v2325
    %2518 = vmatprep.subr.mxu0 0.0
    %2519 = vmatpush1.msra.mxu0 %v2326
    %2520 = vmatprep.subr.mxu0 0.0
    %2521 = vmatpush1.msra.mxu0 0.0
    %2522 = vmatprep.subr.mxu0 0.0
    %2523 = vmatpush1.msra.mxu0 0.0
    %2524 = vmatprep.subr.mxu0 0.0
    %2525 = vmatpush1.msra.mxu0 0.0
    %2526 = vmatprep.subr.mxu0 0.0
    %2527 = vmatpush1.msra.mxu0 0.0
    %2528 = vmatprep.subr.mxu0 0.0
    %2529 = vmatpush1.msra.mxu0 0.0
    %2530 = vmatprep.subr.mxu0 0.0
    %2531 = vmatpush1.msra.mxu0 0.0
    %2532 = vmatprep.subr.mxu0 0.0
    %2533 = vmatpush1.msra.mxu0 0.0
    %2534 = vmatprep.subr.mxu0 0.0
    %2535 = vmatpush1.msra.mxu0 0.0
    %2536 = vmatprep.subr.mxu0 0.0
    %2537 = vmatpush1.msra.mxu0 0.0
    %2538 = vmatprep.subr.mxu0 0.0
    %2539 = vmatpush1.msra.mxu0 0.0
    %2540 = vmatprep.subr.mxu0 0.0
    %2541 = vmatpush1.msra.mxu0 0.0
    %2542 = vmatprep.subr.mxu0 0.0
    %2543 = vmatpush1.msra.mxu0 0.0
    %2544 = vmatprep.subr.mxu0 0.0
    %2545 = vmatpush1.msra.mxu0 0.0
    %2546 = vmatprep.subr.mxu0 0.0
    %2547 = vmatpush1.msra.mxu0 0.0
    %2548 = vmatprep.subr.mxu0 0.0
    %2549 = vmatpush1.msra.mxu0 0.0
    %2550 = vmatprep.subr.mxu0 0.0
    %2551 = vmatpush1.msra.mxu0 0.0
    %2552 = vmatprep.subr.mxu0 0.0
    %2553 = vmatpush1.msra.mxu0 0.0
    %2554 = vmatprep.subr.mxu0 0.0
    %2555 = vmatpush1.msra.mxu0 0.0
    %2556 = vmatprep.subr.mxu0 0.0
    %2557 = vmatpush1.msra.mxu0 0.0
    %2558 = vmatprep.subr.mxu0 0.0
    %2559 = vmatpush1.msra.mxu0 0.0
    %2560 = vmatprep.subr.mxu0 0.0
    %2561 = vmatpush1.msra.mxu0 0.0
    %2562 = vmatprep.subr.mxu0 0.0
    %2563 = vmatpush1.msra.mxu0 0.0
    %2564 = vmatprep.subr.mxu0 0.0
    %2565 = vmatpush1.msra.mxu0 0.0
    %2566 = vmatprep.subr.mxu0 0.0
    %2567 = vmatpush1.msra.mxu0 0.0
    %2568 = vmatprep.mubr.f32.mxu0 0.0
    %2569 = vmatmul.mubr.f32.gmra.mrb[0].mxu0 %v2475
    %v2570 = vpop.f32.mrb[0].mxu0
    %v2571 = vadd.f32 %v2327, %v2570
    %v2572 = vpop.f32.mrb[0].mxu0
    %2573 = vmatprep.mubr.f32.mxu0 0.0
    %2574 = vmatmul.mubr.f32.gmra.mrb[0].mxu0 %v2478
    %v2575 = vpop.f32.mrb[0].mxu0
    %v2576 = vadd.f32 %v2327, %v2575
    %v2577 = vpop.f32.mrb[0].mxu0
    %2578 = vmatprep.mubr.f32.mxu0 0.0
    %2579 = vmatmul.mubr.f32.gmra.mrb[0].mxu0 %v2481
    %v2580 = vpop.f32.mrb[0].mxu0
    %v2581 = vadd.f32 %v2327, %v2580
    %v2582 = vpop.f32.mrb[0].mxu0
    %2583 = vmatprep.mubr.f32.mxu0 0.0
    %2584 = vmatmul.mubr.f32.gmra.mrb[0].mxu0 %v2484
    %v2585 = vpop.f32.mrb[0].mxu0
    %v2586 = vadd.f32 %v2327, %v2585
    %v2587 = vpop.f32.mrb[0].mxu0
    %2588 = vmatprep.mubr.f32.mxu0 0.0
    %2589 = vmatmul.mubr.f32.gmra.mrb[0].mxu0 %v2487
    %v2590 = vpop.f32.mrb[0].mxu0
    %v2591 = vadd.f32 %v2327, %v2590
    %v2592 = vpop.f32.mrb[0].mxu0
    %2593 = vmatprep.mubr.f32.mxu0 0.0
    %2594 = vmatmul.mubr.f32.gmra.mrb[0].mxu0 %v2490
    %v2595 = vpop.f32.mrb[0].mxu0
    %v2596 = vadd.f32 %v2327, %v2595
    %v2597 = vpop.f32.mrb[0].mxu0
    %2598 = vmatprep.mubr.f32.mxu0 0.0
    %2599 = vmatmul.mubr.f32.gmra.mrb[0].mxu0 %v2493
    %v2600 = vpop.f32.mrb[0].mxu0
    %v2601 = vadd.f32 %v2327, %v2600
    %v2602 = vpop.f32.mrb[0].mxu0
    %2603 = vmatprep.mubr.f32.mxu0 0.0
    %2604 = vmatmul.mubr.f32.gmra.mrb[0].mxu0 %v2496
    %v2605 = vpop.f32.mrb[0].mxu0
    %v2606 = vadd.f32 %v2327, %v2605
    %v2607 = vpop.f32.mrb[0].mxu0
    %2608 = vmatprep.mubr.f32.mxu0 0.0
    %2609 = vmatmul.mubr.f32.gmra.mrb[0].mxu0 %v2499
    %v2610 = vpop.f32.mrb[0].mxu0
    %v2611 = vadd.f32 %v2327, %v2610
    %v2612 = vpop.f32.mrb[0].mxu0
    %2613 = vmatprep.mubr.f32.mxu0 0.0
    %2614 = vmatmul.mubr.f32.gmra.mrb[0].mxu0 %v2502
    %v2615 = vpop.f32.mrb[0].mxu0
    %v2616 = vadd.f32 %v2327, %v2615
    %v2617 = vpop.f32.mrb[0].mxu0
    %2618 = vdwg.mxu0
    %2619 = vst [vmem:[#allocation2] sm:$0xff] %v2426
    %2620 = vst [vmem:[#allocation2 + $0x10] sm:$0xff] %v2431
    %2621 = vst [vmem:[#allocation2 + $0x20] sm:$0xff] %v2436
    %2622 = vst [vmem:[#allocation2 + $0x30] sm:$0xff] %v2441
    %2623 = vst [vmem:[#allocation2 + $0x40] sm:$0xff] %v2446
    %2624 = vst [vmem:[#allocation2 + $0x50] sm:$0xff] %v2451
    %2625 = vst [vmem:[#allocation2 + $0x60] sm:$0xff] %v2456
    %2626 = vst [vmem:[#allocation2 + $0x70] sm:$0xff] %v2461
    %2627 = vst [vmem:[#allocation2 + $0x80] sm:$0xff] %v2466
    %2628 = vst [vmem:[#allocation2 + $0x90] sm:$0xff] %v2471
    %2629 = vst [vmem:[#allocation2 + $0x8] sm:$0xff] %v2571
    %2630 = vst [vmem:[#allocation2 + $0x18] sm:$0xff] %v2576
    %2631 = vst [vmem:[#allocation2 + $0x28] sm:$0xff] %v2581
    %2632 = vst [vmem:[#allocation2 + $0x38] sm:$0xff] %v2586
    %2633 = vst [vmem:[#allocation2 + $0x48] sm:$0xff] %v2591
    %2634 = vst [vmem:[#allocation2 + $0x58] sm:$0xff] %v2596
    %2635 = vst [vmem:[#allocation2 + $0x68] sm:$0xff] %v2601
    %2636 = vst [vmem:[#allocation2 + $0x78] sm:$0xff] %v2606
    %2637 = vst [vmem:[#allocation2 + $0x88] sm:$0xff] %v2611
    %2638 = vst [vmem:[#allocation2 + $0x98] sm:$0xff] %v2616
    %v2639 = vld [vmem:[#allocation7 + $0x40] sm:$0xff]
    %v2640 = vld [vmem:[#allocation7 + $0x48] sm:$0xff]
    %v2641 = vld [vmem:[#allocation7 + $0x50] sm:$0xff]
    %v2642 = vld [vmem:[#allocation7 + $0x58] sm:$0xff]
    %v2643 = vld [vmem:[#allocation7 + $0x60] sm:$0xff]
    %v2644 = vld [vmem:[#allocation7 + $0x68] sm:$0xff]
    %v2645 = vld [vmem:[#allocation7 + $0x70] sm:$0xff]
    %v2646 = vld [vmem:[#allocation7 + $0x78] sm:$0xff]
    %s2647 = scalar_lea.vmem %s6, 16
    %v2648 = vld [vmem:[%s2647] sm:$0xff]
    %v2649 = vld [vmem:[%s2647 + $0x8] sm:$0xff]
    %v2650 = vld [vmem:[#allocation2] sm:$0xff]
    %v2651 = vld [vmem:[#allocation2 + $0x8] sm:$0xff]
    %v2652 = vld [vmem:[%s1] sm:$0xff]
    %v2653 = vld [vmem:[%s1 + $0x8] sm:$0xff]
    %2654 = vmatprep.subr.mxu0 %v2640
    %2655 = vmatpush1.msra.mxu0 %v2639
    %2656 = vmatprep.subr.mxu0 %v2642
    %2657 = vmatpush1.msra.mxu0 %v2641
    %2658 = vmatprep.subr.mxu0 %v2644
    %2659 = vmatpush1.msra.mxu0 %v2643
    %2660 = vmatprep.subr.mxu0 %v2646
    %2661 = vmatpush1.msra.mxu0 %v2645
    %2662 = vmatprep.subr.mxu0 0.0
    %2663 = vmatpush1.msra.mxu0 0.0
    %2664 = vmatprep.subr.mxu0 0.0
    %2665 = vmatpush1.msra.mxu0 0.0
    %2666 = vmatprep.subr.mxu0 0.0
    %2667 = vmatpush1.msra.mxu0 0.0
    %2668 = vmatprep.subr.mxu0 0.0
    %2669 = vmatpush1.msra.mxu0 0.0
    %2670 = vmatprep.subr.mxu0 0.0
    %2671 = vmatpush1.msra.mxu0 0.0
    %2672 = vmatprep.subr.mxu0 0.0
    %2673 = vmatpush1.msra.mxu0 0.0
    %2674 = vmatprep.subr.mxu0 0.0
    %2675 = vmatpush1.msra.mxu0 0.0
    %2676 = vmatprep.subr.mxu0 0.0
    %2677 = vmatpush1.msra.mxu0 0.0
    %2678 = vmatprep.subr.mxu0 0.0
    %2679 = vmatpush1.msra.mxu0 0.0
    %2680 = vmatprep.subr.mxu0 0.0
    %2681 = vmatpush1.msra.mxu0 0.0
    %2682 = vmatprep.subr.mxu0 0.0
    %2683 = vmatpush1.msra.mxu0 0.0
    %2684 = vmatprep.subr.mxu0 0.0
    %2685 = vmatpush1.msra.mxu0 0.0
    %2686 = vmatprep.subr.mxu0 0.0
    %2687 = vmatpush1.msra.mxu0 0.0
    %2688 = vmatprep.subr.mxu0 0.0
    %2689 = vmatpush1.msra.mxu0 0.0
    %2690 = vmatprep.subr.mxu0 0.0
    %2691 = vmatpush1.msra.mxu0 0.0
    %2692 = vmatprep.subr.mxu0 0.0
    %2693 = vmatpush1.msra.mxu0 0.0
    %2694 = vmatprep.subr.mxu0 0.0
    %2695 = vmatpush1.msra.mxu0 0.0
    %2696 = vmatprep.subr.mxu0 0.0
    %2697 = vmatpush1.msra.mxu0 0.0
    %2698 = vmatprep.subr.mxu0 0.0
    %2699 = vmatpush1.msra.mxu0 0.0
    %2700 = vmatprep.subr.mxu0 0.0
    %2701 = vmatpush1.msra.mxu0 0.0
    %2702 = vmatprep.subr.mxu0 0.0
    %2703 = vmatpush1.msra.mxu0 0.0
    %2704 = vmatprep.subr.mxu0 0.0
    %2705 = vmatpush1.msra.mxu0 0.0
    %2706 = vmatprep.subr.mxu0 0.0
    %2707 = vmatpush1.msra.mxu0 0.0
    %2708 = vmatprep.subr.mxu0 0.0
    %2709 = vmatpush1.msra.mxu0 0.0
    %2710 = vmatprep.subr.mxu0 0.0
    %2711 = vmatpush1.msra.mxu0 0.0
    %2712 = vmatprep.subr.mxu0 0.0
    %2713 = vmatpush1.msra.mxu0 0.0
    %2714 = vmatprep.subr.mxu0 0.0
    %2715 = vmatpush1.msra.mxu0 0.0
    %2716 = vmatprep.subr.mxu0 0.0
    %2717 = vmatpush1.msra.mxu0 0.0
    %2718 = vmatprep.mubr.f32.mxu0 0.0
    %2719 = vmatmul.mubr.f32.gmra.mrb[0].mxu0 %v352
    %v2720 = vpop.f32.mrb[0].mxu0
    %v2721 = vadd.f32 0.0, %v2720
    %v2722 = vpop.f32.mrb[0].mxu0
    %v2723 = vadd.f32 0.0, %v2722
    %2724 = vmatprep.mubr.f32.mxu0 0.0
    %2725 = vmatmul.mubr.f32.gmra.mrb[0].mxu0 %v352
    %v2726 = vpop.f32.mrb[0].mxu0
    %v2727 = vadd.f32 0.0, %v2726
    %v2728 = vpop.f32.mrb[0].mxu0
    %v2729 = vadd.f32 0.0, %v2728
    %2730 = vdwg.mxu0
    %v2731 = vsel %vm433, %v2721, %v2723
    %v2732 = vsel %vm434, %v2727, %v2729
    %v2733 = vadd.f32 %v2650, %v2731
    %v2734 = vadd.f32 %v2651, %v2732
    %v2735 = vxor.u32 %v2733, 2147483648
    %v2736 = vxor.u32 %v2734, 2147483648
    %v2737 = vmul.f32 %v2735, 1.442695
    %v2738 = vpow.pop %v2737
    %v2739 = vmul.f32 %v2736, 1.442695
    %v2740 = vpow.pop %v2739
    %v2741 = vadd.f32 %v2738, 1.0
    %v2742 = vadd.f32 %v2740, 1.0
    %v2743 = vrcp.pop %v2741
    %v2744 = vmul.f32 1.0, %v2743
    %v2745 = vrcp.pop %v2742
    %v2746 = vmul.f32 1.0, %v2745
    %2749 = vrot.lane.b32.xlu0 %v2648, 64
    %v2750 = vpop.permute.xlu0 %2749
    %2751 = vrot.lane.b32.xlu0 %v2649, 64
    %v2752 = vpop.permute.xlu0 %2751
    %v2755 = vadd.f32 %v2731, %v2750
    %v2756 = vadd.f32 %v2732, %v2752
    %2759 = vrot.lane.b32.xlu0 %v2755, 64
    %v2760 = vpop.permute.xlu0 %2759
    %2761 = vrot.lane.b32.xlu0 %v2756, 64
    %v2762 = vpop.permute.xlu0 %2761
    %v2765 = vmul.f32 %v2744, %v2760
    %v2766 = vmul.f32 %v2746, %v2762
    %2769 = vrot.lane.b32.xlu0 %v2765, 64
    %v2770 = vpop.permute.xlu0 %2769
    %2771 = vrot.lane.b32.xlu0 %v2766, 64
    %v2772 = vpop.permute.xlu0 %2771
    %v2775 = vadd.f32 %v2650, %v2770
    %v2776 = vadd.f32 %v2651, %v2772
    %v2777 = vtanh.pop %v2775
    %v2778 = vtanh.pop %v2776
    %v2779 = vsub.f32 1.0, %v2744
    %v2780 = vsub.f32 1.0, %v2746
    %2783 = vrot.lane.b32.xlu0 %v2777, 96
    %v2784 = vpop.permute.xlu0 %2783
    %2785 = vrot.lane.b32.xlu0 %v2778, 96
    %v2786 = vpop.permute.xlu0 %2785
    %v2789 = vmul.f32 %v2779, %v2784
    %v2790 = vmul.f32 %v2780, %v2786
    %2792 = vset.pattern.permute.xlu0 0
    %2793 = vperm.xlu0 %2792, %v2652
    %v2794 = vpop.permute.xlu0 %2793
    %2797 = vset.pattern.permute.xlu0 0
    %2798 = vperm.xlu0 %2797, %v2653
    %v2799 = vpop.permute.xlu0 %2798
    %v2801 = vmul.f32 %v2794, %v2789
    %v2802 = vmul.f32 %v2799, %v2790
    %v2803 = vadd.f32 %v2801, 0.0
    %v2804 = vadd.f32 %v2802, 0.0
    %v2805 = vmul.f32 %v2794, %v2803
    %v2806 = vmul.f32 %v2799, %v2804
    %2809 = vrot.lane.b32.xlu0 %v2805, 96
    %v2810 = vpop.permute.xlu0 %2809
    %2811 = vrot.lane.b32.xlu0 %v2806, 96
    %v2812 = vpop.permute.xlu0 %2811
    %2815 = vst.msk [vmem:[#allocation3] sm:$0xff] %vm350, %v2810
    %2816 = vst.msk [vmem:[#allocation3 + $0x8] sm:$0xff] %vm350, %v2812
    %2817 = vst.msk [vmem:[%s521] sm:$0xff] %vm350, %v2810
    %2818 = vst.msk [vmem:[%s521 + $0x8] sm:$0xff] %vm350, %v2812
    %v2819 = vld [vmem:[%s524] sm:$0xff]
    %v2820 = vld [vmem:[%s524 + $0x8] sm:$0xff]
    %v2821 = vld [vmem:[%s527] sm:$0xff]
    %v2822 = vld [vmem:[%s527 + $0x8] sm:$0xff]
    %2825 = vrot.lane.b32.xlu0 %v2803, 96
    %v2826 = vpop.permute.xlu0 %2825
    %2827 = vrot.lane.b32.xlu0 %v2804, 96
    %v2828 = vpop.permute.xlu0 %2827
    %v2829 = vsel %vm350, %v2826, 0
    %v2831 = vsel %vm350, %v2828, 0
    %2833 = vmatprep.subr.mxu0 %v2640
    %2834 = vmatpush1.msra.mxu0 %v2639
    %2835 = vmatprep.subr.mxu0 %v2642
    %2836 = vmatpush1.msra.mxu0 %v2641
    %2837 = vmatprep.subr.mxu0 %v2644
    %2838 = vmatpush1.msra.mxu0 %v2643
    %2839 = vmatprep.subr.mxu0 %v2646
    %2840 = vmatpush1.msra.mxu0 %v2645
    %2841 = vmatprep.subr.mxu0 0.0
    %2842 = vmatpush1.msra.mxu0 0.0
    %2843 = vmatprep.subr.mxu0 0.0
    %2844 = vmatpush1.msra.mxu0 0.0
    %2845 = vmatprep.subr.mxu0 0.0
    %2846 = vmatpush1.msra.mxu0 0.0
    %2847 = vmatprep.subr.mxu0 0.0
    %2848 = vmatpush1.msra.mxu0 0.0
    %2849 = vmatprep.subr.mxu0 0.0
    %2850 = vmatpush1.msra.mxu0 0.0
    %2851 = vmatprep.subr.mxu0 0.0
    %2852 = vmatpush1.msra.mxu0 0.0
    %2853 = vmatprep.subr.mxu0 0.0
    %2854 = vmatpush1.msra.mxu0 0.0
    %2855 = vmatprep.subr.mxu0 0.0
    %2856 = vmatpush1.msra.mxu0 0.0
    %2857 = vmatprep.subr.mxu0 0.0
    %2858 = vmatpush1.msra.mxu0 0.0
    %2859 = vmatprep.subr.mxu0 0.0
    %2860 = vmatpush1.msra.mxu0 0.0
    %2861 = vmatprep.subr.mxu0 0.0
    %2862 = vmatpush1.msra.mxu0 0.0
    %2863 = vmatprep.subr.mxu0 0.0
    %2864 = vmatpush1.msra.mxu0 0.0
    %2865 = vmatprep.subr.mxu0 0.0
    %2866 = vmatpush1.msra.mxu0 0.0
    %2867 = vmatprep.subr.mxu0 0.0
    %2868 = vmatpush1.msra.mxu0 0.0
    %2869 = vmatprep.subr.mxu0 0.0
    %2870 = vmatpush1.msra.mxu0 0.0
    %2871 = vmatprep.subr.mxu0 0.0
    %2872 = vmatpush1.msra.mxu0 0.0
    %2873 = vmatprep.subr.mxu0 0.0
    %2874 = vmatpush1.msra.mxu0 0.0
    %2875 = vmatprep.subr.mxu0 0.0
    %2876 = vmatpush1.msra.mxu0 0.0
    %2877 = vmatprep.subr.mxu0 0.0
    %2878 = vmatpush1.msra.mxu0 0.0
    %2879 = vmatprep.subr.mxu0 0.0
    %2880 = vmatpush1.msra.mxu0 0.0
    %2881 = vmatprep.subr.mxu0 0.0
    %2882 = vmatpush1.msra.mxu0 0.0
    %2883 = vmatprep.subr.mxu0 0.0
    %2884 = vmatpush1.msra.mxu0 0.0
    %2885 = vmatprep.subr.mxu0 0.0
    %2886 = vmatpush1.msra.mxu0 0.0
    %2887 = vmatprep.subr.mxu0 0.0
    %2888 = vmatpush1.msra.mxu0 0.0
    %2889 = vmatprep.subr.mxu0 0.0
    %2890 = vmatpush1.msra.mxu0 0.0
    %2891 = vmatprep.subr.mxu0 0.0
    %2892 = vmatpush1.msra.mxu0 0.0
    %2893 = vmatprep.subr.mxu0 0.0
    %2894 = vmatpush1.msra.mxu0 0.0
    %2895 = vmatprep.subr.mxu0 0.0
    %2896 = vmatpush1.msra.mxu0 0.0
    %2897 = vmatprep.mubr.f32.mxu0 0.0
    %2898 = vmatmul.mubr.f32.gmra.mrb[0].mxu0 %v2829
    %v2899 = vpop.f32.mrb[0].mxu0
    %v2900 = vadd.f32 0.0, %v2899
    %v2901 = vpop.f32.mrb[0].mxu0
    %v2902 = vadd.f32 0.0, %v2901
    %2903 = vmatprep.mubr.f32.mxu0 0.0
    %2904 = vmatmul.mubr.f32.gmra.mrb[0].mxu0 %v2831
    %v2905 = vpop.f32.mrb[0].mxu0
    %v2906 = vadd.f32 0.0, %v2905
    %v2907 = vpop.f32.mrb[0].mxu0
    %v2908 = vadd.f32 0.0, %v2907
    %2909 = vdwg.mxu0
    %v2910 = vsel %vm433, %v2900, %v2902
    %v2911 = vsel %vm434, %v2906, %v2908
    %v2912 = vadd.f32 %v2819, %v2910
    %v2913 = vadd.f32 %v2820, %v2911
    %v2914 = vxor.u32 %v2912, 2147483648
    %v2915 = vxor.u32 %v2913, 2147483648
    %v2916 = vmul.f32 %v2914, 1.442695
    %v2917 = vpow.pop %v2916
    %v2918 = vmul.f32 %v2915, 1.442695
    %v2919 = vpow.pop %v2918
    %v2920 = vadd.f32 %v2917, 1.0
    %v2921 = vadd.f32 %v2919, 1.0
    %v2922 = vrcp.pop %v2920
    %v2923 = vmul.f32 1.0, %v2922
    %v2924 = vrcp.pop %v2921
    %v2925 = vmul.f32 1.0, %v2924
    %v2926 = vadd.f32 %v2910, %v2750
    %v2927 = vadd.f32 %v2911, %v2752
    %2930 = vrot.lane.b32.xlu0 %v2926, 64
    %v2931 = vpop.permute.xlu0 %2930
    %2932 = vrot.lane.b32.xlu0 %v2927, 64
    %v2933 = vpop.permute.xlu0 %2932
    %v2936 = vmul.f32 %v2923, %v2931
    %v2937 = vmul.f32 %v2925, %v2933
    %2940 = vrot.lane.b32.xlu0 %v2936, 64
    %v2941 = vpop.permute.xlu0 %2940
    %2942 = vrot.lane.b32.xlu0 %v2937, 64
    %v2943 = vpop.permute.xlu0 %2942
    %v2946 = vadd.f32 %v2819, %v2941
    %v2947 = vadd.f32 %v2820, %v2943
    %v2948 = vtanh.pop %v2946
    %v2949 = vtanh.pop %v2947
    %v2950 = vsub.f32 1.0, %v2923
    %v2951 = vsub.f32 1.0, %v2925
    %2952 = vrot.lane.b32.xlu0 %v2803, 32
    %v2953 = vpop.permute.xlu0 %2952
    %2954 = vrot.lane.b32.xlu0 %v2804, 32
    %v2955 = vpop.permute.xlu0 %2954
    %v2958 = vsub.f32 %v2948, %v2953
    %v2959 = vsub.f32 %v2949, %v2955
    %2962 = vrot.lane.b32.xlu0 %v2958, 96
    %v2963 = vpop.permute.xlu0 %2962
    %2964 = vrot.lane.b32.xlu0 %v2959, 96
    %v2965 = vpop.permute.xlu0 %2964
    %v2968 = vmul.f32 %v2950, %v2963
    %v2969 = vmul.f32 %v2951, %v2965
    %2971 = vset.pattern.permute.xlu0 0
    %2972 = vperm.xlu0 %2971, %v2821
    %v2973 = vpop.permute.xlu0 %2972
    %2976 = vset.pattern.permute.xlu0 0
    %2977 = vperm.xlu0 %2976, %v2822
    %v2978 = vpop.permute.xlu0 %2977
    %v2980 = vmul.f32 %v2973, %v2968
    %v2981 = vmul.f32 %v2978, %v2969
    %v2982 = vadd.f32 %v2803, %v2980
    %v2983 = vadd.f32 %v2804, %v2981
    %v2984 = vmul.f32 %v2973, %v2982
    %v2985 = vmul.f32 %v2978, %v2983
    %2988 = vrot.lane.b32.xlu0 %v2984, 96
    %v2989 = vpop.permute.xlu0 %2988
    %2990 = vrot.lane.b32.xlu0 %v2985, 96
    %v2991 = vpop.permute.xlu0 %2990
    %2994 = vst.msk [vmem:[%s701] sm:$0xff] %vm350, %v2989
    %2995 = vst.msk [vmem:[%s701 + $0x8] sm:$0xff] %vm350, %v2991
    %2996 = vst.msk [vmem:[%s704] sm:$0xff] %vm350, %v2989
    %2997 = vst.msk [vmem:[%s704 + $0x8] sm:$0xff] %vm350, %v2991
    %v2998 = vld [vmem:[%s707] sm:$0xff]
    %v2999 = vld [vmem:[%s707 + $0x8] sm:$0xff]
    %v3000 = vld [vmem:[%s710] sm:$0xff]
    %v3001 = vld [vmem:[%s710 + $0x8] sm:$0xff]
    %3004 = vrot.lane.b32.xlu0 %v2982, 96
    %v3005 = vpop.permute.xlu0 %3004
    %3006 = vrot.lane.b32.xlu0 %v2983, 96
    %v3007 = vpop.permute.xlu0 %3006
    %v3008 = vsel %vm350, %v3005, 0
    %v3010 = vsel %vm350, %v3007, 0
    %3012 = vmatprep.subr.mxu0 %v2640
    %3013 = vmatpush1.msra.mxu0 %v2639
    %3014 = vmatprep.subr.mxu0 %v2642
    %3015 = vmatpush1.msra.mxu0 %v2641
    %3016 = vmatprep.subr.mxu0 %v2644
    %3017 = vmatpush1.msra.mxu0 %v2643
    %3018 = vmatprep.subr.mxu0 %v2646
    %3019 = vmatpush1.msra.mxu0 %v2645
    %3020 = vmatprep.subr.mxu0 0.0
    %3021 = vmatpush1.msra.mxu0 0.0
    %3022 = vmatprep.subr.mxu0 0.0
    %3023 = vmatpush1.msra.mxu0 0.0
    %3024 = vmatprep.subr.mxu0 0.0
    %3025 = vmatpush1.msra.mxu0 0.0
    %3026 = vmatprep.subr.mxu0 0.0
    %3027 = vmatpush1.msra.mxu0 0.0
    %3028 = vmatprep.subr.mxu0 0.0
    %3029 = vmatpush1.msra.mxu0 0.0
    %3030 = vmatprep.subr.mxu0 0.0
    %3031 = vmatpush1.msra.mxu0 0.0
    %3032 = vmatprep.subr.mxu0 0.0
    %3033 = vmatpush1.msra.mxu0 0.0
    %3034 = vmatprep.subr.mxu0 0.0
    %3035 = vmatpush1.msra.mxu0 0.0
    %3036 = vmatprep.subr.mxu0 0.0
    %3037 = vmatpush1.msra.mxu0 0.0
    %3038 = vmatprep.subr.mxu0 0.0
    %3039 = vmatpush1.msra.mxu0 0.0
    %3040 = vmatprep.subr.mxu0 0.0
    %3041 = vmatpush1.msra.mxu0 0.0
    %3042 = vmatprep.subr.mxu0 0.0
    %3043 = vmatpush1.msra.mxu0 0.0
    %3044 = vmatprep.subr.mxu0 0.0
    %3045 = vmatpush1.msra.mxu0 0.0
    %3046 = vmatprep.subr.mxu0 0.0
    %3047 = vmatpush1.msra.mxu0 0.0
    %3048 = vmatprep.subr.mxu0 0.0
    %3049 = vmatpush1.msra.mxu0 0.0
    %3050 = vmatprep.subr.mxu0 0.0
    %3051 = vmatpush1.msra.mxu0 0.0
    %3052 = vmatprep.subr.mxu0 0.0
    %3053 = vmatpush1.msra.mxu0 0.0
    %3054 = vmatprep.subr.mxu0 0.0
    %3055 = vmatpush1.msra.mxu0 0.0
    %3056 = vmatprep.subr.mxu0 0.0
    %3057 = vmatpush1.msra.mxu0 0.0
    %3058 = vmatprep.subr.mxu0 0.0
    %3059 = vmatpush1.msra.mxu0 0.0
    %3060 = vmatprep.subr.mxu0 0.0
    %3061 = vmatpush1.msra.mxu0 0.0
    %3062 = vmatprep.subr.mxu0 0.0
    %3063 = vmatpush1.msra.mxu0 0.0
    %3064 = vmatprep.subr.mxu0 0.0
    %3065 = vmatpush1.msra.mxu0 0.0
    %3066 = vmatprep.subr.mxu0 0.0
    %3067 = vmatpush1.msra.mxu0 0.0
    %3068 = vmatprep.subr.mxu0 0.0
    %3069 = vmatpush1.msra.mxu0 0.0
    %3070 = vmatprep.subr.mxu0 0.0
    %3071 = vmatpush1.msra.mxu0 0.0
    %3072 = vmatprep.subr.mxu0 0.0
    %3073 = vmatpush1.msra.mxu0 0.0
    %3074 = vmatprep.subr.mxu0 0.0
    %3075 = vmatpush1.msra.mxu0 0.0
    %3076 = vmatprep.mubr.f32.mxu0 0.0
    %3077 = vmatmul.mubr.f32.gmra.mrb[0].mxu0 %v3008
    %v3078 = vpop.f32.mrb[0].mxu0
    %v3079 = vadd.f32 0.0, %v3078
    %v3080 = vpop.f32.mrb[0].mxu0
    %v3081 = vadd.f32 0.0, %v3080
    %3082 = vmatprep.mubr.f32.mxu0 0.0
    %3083 = vmatmul.mubr.f32.gmra.mrb[0].mxu0 %v3010
    %v3084 = vpop.f32.mrb[0].mxu0
    %v3085 = vadd.f32 0.0, %v3084
    %v3086 = vpop.f32.mrb[0].mxu0
    %v3087 = vadd.f32 0.0, %v3086
    %3088 = vdwg.mxu0
    %v3089 = vsel %vm433, %v3079, %v3081
    %v3090 = vsel %vm434, %v3085, %v3087
    %v3091 = vadd.f32 %v2998, %v3089
    %v3092 = vadd.f32 %v2999, %v3090
    %v3093 = vxor.u32 %v3091, 2147483648
    %v3094 = vxor.u32 %v3092, 2147483648
    %v3095 = vmul.f32 %v3093, 1.442695
    %v3096 = vpow.pop %v3095
    %v3097 = vmul.f32 %v3094, 1.442695
    %v3098 = vpow.pop %v3097
    %v3099 = vadd.f32 %v3096, 1.0
    %v3100 = vadd.f32 %v3098, 1.0
    %v3101 = vrcp.pop %v3099
    %v3102 = vmul.f32 1.0, %v3101
    %v3103 = vrcp.pop %v3100
    %v3104 = vmul.f32 1.0, %v3103
    %v3105 = vadd.f32 %v3089, %v2750
    %v3106 = vadd.f32 %v3090, %v2752
    %3109 = vrot.lane.b32.xlu0 %v3105, 64
    %v3110 = vpop.permute.xlu0 %3109
    %3111 = vrot.lane.b32.xlu0 %v3106, 64
    %v3112 = vpop.permute.xlu0 %3111
    %v3115 = vmul.f32 %v3102, %v3110
    %v3116 = vmul.f32 %v3104, %v3112
    %3119 = vrot.lane.b32.xlu0 %v3115, 64
    %v3120 = vpop.permute.xlu0 %3119
    %3121 = vrot.lane.b32.xlu0 %v3116, 64
    %v3122 = vpop.permute.xlu0 %3121
    %v3125 = vadd.f32 %v2998, %v3120
    %v3126 = vadd.f32 %v2999, %v3122
    %v3127 = vtanh.pop %v3125
    %v3128 = vtanh.pop %v3126
    %v3129 = vsub.f32 1.0, %v3102
    %v3130 = vsub.f32 1.0, %v3104
    %3131 = vrot.lane.b32.xlu0 %v2982, 32
    %v3132 = vpop.permute.xlu0 %3131
    %3133 = vrot.lane.b32.xlu0 %v2983, 32
    %v3134 = vpop.permute.xlu0 %3133
    %v3137 = vsub.f32 %v3127, %v3132
    %v3138 = vsub.f32 %v3128, %v3134
    %3141 = vrot.lane.b32.xlu0 %v3137, 96
    %v3142 = vpop.permute.xlu0 %3141
    %3143 = vrot.lane.b32.xlu0 %v3138, 96
    %v3144 = vpop.permute.xlu0 %3143
    %v3147 = vmul.f32 %v3129, %v3142
    %v3148 = vmul.f32 %v3130, %v3144
    %3150 = vset.pattern.permute.xlu0 0
    %3151 = vperm.xlu0 %3150, %v3000
    %v3152 = vpop.permute.xlu0 %3151
    %3155 = vset.pattern.permute.xlu0 0
    %3156 = vperm.xlu0 %3155, %v3001
    %v3157 = vpop.permute.xlu0 %3156
    %v3159 = vmul.f32 %v3152, %v3147
    %v3160 = vmul.f32 %v3157, %v3148
    %v3161 = vadd.f32 %v2982, %v3159
    %v3162 = vadd.f32 %v2983, %v3160
    %v3163 = vmul.f32 %v3152, %v3161
    %v3164 = vmul.f32 %v3157, %v3162
    %3167 = vrot.lane.b32.xlu0 %v3163, 96
    %v3168 = vpop.permute.xlu0 %3167
    %3169 = vrot.lane.b32.xlu0 %v3164, 96
    %v3170 = vpop.permute.xlu0 %3169
    %3173 = vst.msk [vmem:[%s884] sm:$0xff] %vm350, %v3168
    %3174 = vst.msk [vmem:[%s884 + $0x8] sm:$0xff] %vm350, %v3170
    %3175 = vst.msk [vmem:[%s887] sm:$0xff] %vm350, %v3168
    %3176 = vst.msk [vmem:[%s887 + $0x8] sm:$0xff] %vm350, %v3170
    %v3177 = vld [vmem:[%s890] sm:$0xff]
    %v3178 = vld [vmem:[%s890 + $0x8] sm:$0xff]
    %v3179 = vld [vmem:[%s893] sm:$0xff]
    %v3180 = vld [vmem:[%s893 + $0x8] sm:$0xff]
    %3183 = vrot.lane.b32.xlu0 %v3161, 96
    %v3184 = vpop.permute.xlu0 %3183
    %3185 = vrot.lane.b32.xlu0 %v3162, 96
    %v3186 = vpop.permute.xlu0 %3185
    %v3187 = vsel %vm350, %v3184, 0
    %v3189 = vsel %vm350, %v3186, 0
    %3191 = vmatprep.subr.mxu0 %v2640
    %3192 = vmatpush1.msra.mxu0 %v2639
    %3193 = vmatprep.subr.mxu0 %v2642
    %3194 = vmatpush1.msra.mxu0 %v2641
    %3195 = vmatprep.subr.mxu0 %v2644
    %3196 = vmatpush1.msra.mxu0 %v2643
    %3197 = vmatprep.subr.mxu0 %v2646
    %3198 = vmatpush1.msra.mxu0 %v2645
    %3199 = vmatprep.subr.mxu0 0.0
    %3200 = vmatpush1.msra.mxu0 0.0
    %3201 = vmatprep.subr.mxu0 0.0
    %3202 = vmatpush1.msra.mxu0 0.0
    %3203 = vmatprep.subr.mxu0 0.0
    %3204 = vmatpush1.msra.mxu0 0.0
    %3205 = vmatprep.subr.mxu0 0.0
    %3206 = vmatpush1.msra.mxu0 0.0
    %3207 = vmatprep.subr.mxu0 0.0
    %3208 = vmatpush1.msra.mxu0 0.0
    %3209 = vmatprep.subr.mxu0 0.0
    %3210 = vmatpush1.msra.mxu0 0.0
    %3211 = vmatprep.subr.mxu0 0.0
    %3212 = vmatpush1.msra.mxu0 0.0
    %3213 = vmatprep.subr.mxu0 0.0
    %3214 = vmatpush1.msra.mxu0 0.0
    %3215 = vmatprep.subr.mxu0 0.0
    %3216 = vmatpush1.msra.mxu0 0.0
    %3217 = vmatprep.subr.mxu0 0.0
    %3218 = vmatpush1.msra.mxu0 0.0
    %3219 = vmatprep.subr.mxu0 0.0
    %3220 = vmatpush1.msra.mxu0 0.0
    %3221 = vmatprep.subr.mxu0 0.0
    %3222 = vmatpush1.msra.mxu0 0.0
    %3223 = vmatprep.subr.mxu0 0.0
    %3224 = vmatpush1.msra.mxu0 0.0
    %3225 = vmatprep.subr.mxu0 0.0
    %3226 = vmatpush1.msra.mxu0 0.0
    %3227 = vmatprep.subr.mxu0 0.0
    %3228 = vmatpush1.msra.mxu0 0.0
    %3229 = vmatprep.subr.mxu0 0.0
    %3230 = vmatpush1.msra.mxu0 0.0
    %3231 = vmatprep.subr.mxu0 0.0
    %3232 = vmatpush1.msra.mxu0 0.0
    %3233 = vmatprep.subr.mxu0 0.0
    %3234 = vmatpush1.msra.mxu0 0.0
    %3235 = vmatprep.subr.mxu0 0.0
    %3236 = vmatpush1.msra.mxu0 0.0
    %3237 = vmatprep.subr.mxu0 0.0
    %3238 = vmatpush1.msra.mxu0 0.0
    %3239 = vmatprep.subr.mxu0 0.0
    %3240 = vmatpush1.msra.mxu0 0.0
    %3241 = vmatprep.subr.mxu0 0.0
    %3242 = vmatpush1.msra.mxu0 0.0
    %3243 = vmatprep.subr.mxu0 0.0
    %3244 = vmatpush1.msra.mxu0 0.0
    %3245 = vmatprep.subr.mxu0 0.0
    %3246 = vmatpush1.msra.mxu0 0.0
    %3247 = vmatprep.subr.mxu0 0.0
    %3248 = vmatpush1.msra.mxu0 0.0
    %3249 = vmatprep.subr.mxu0 0.0
    %3250 = vmatpush1.msra.mxu0 0.0
    %3251 = vmatprep.subr.mxu0 0.0
    %3252 = vmatpush1.msra.mxu0 0.0
    %3253 = vmatprep.subr.mxu0 0.0
    %3254 = vmatpush1.msra.mxu0 0.0
    %3255 = vmatprep.mubr.f32.mxu0 0.0
    %3256 = vmatmul.mubr.f32.gmra.mrb[0].mxu0 %v3187
    %v3257 = vpop.f32.mrb[0].mxu0
    %v3258 = vadd.f32 0.0, %v3257
    %v3259 = vpop.f32.mrb[0].mxu0
    %v3260 = vadd.f32 0.0, %v3259
    %3261 = vmatprep.mubr.f32.mxu0 0.0
    %3262 = vmatmul.mubr.f32.gmra.mrb[0].mxu0 %v3189
    %v3263 = vpop.f32.mrb[0].mxu0
    %v3264 = vadd.f32 0.0, %v3263
    %v3265 = vpop.f32.mrb[0].mxu0
    %v3266 = vadd.f32 0.0, %v3265
    %3267 = vdwg.mxu0
    %v3268 = vsel %vm433, %v3258, %v3260
    %v3269 = vsel %vm434, %v3264, %v3266
    %v3270 = vadd.f32 %v3177, %v3268
    %v3271 = vadd.f32 %v3178, %v3269
    %v3272 = vxor.u32 %v3270, 2147483648
    %v3273 = vxor.u32 %v3271, 2147483648
    %v3274 = vmul.f32 %v3272, 1.442695
    %v3275 = vpow.pop %v3274
    %v3276 = vmul.f32 %v3273, 1.442695
    %v3277 = vpow.pop %v3276
    %v3278 = vadd.f32 %v3275, 1.0
    %v3279 = vadd.f32 %v3277, 1.0
    %v3280 = vrcp.pop %v3278
    %v3281 = vmul.f32 1.0, %v3280
    %v3282 = vrcp.pop %v3279
    %v3283 = vmul.f32 1.0, %v3282
    %v3284 = vadd.f32 %v3268, %v2750
    %v3285 = vadd.f32 %v3269, %v2752
    %3288 = vrot.lane.b32.xlu0 %v3284, 64
    %v3289 = vpop.permute.xlu0 %3288
    %3290 = vrot.lane.b32.xlu0 %v3285, 64
    %v3291 = vpop.permute.xlu0 %3290
    %v3294 = vmul.f32 %v3281, %v3289
    %v3295 = vmul.f32 %v3283, %v3291
    %3298 = vrot.lane.b32.xlu0 %v3294, 64
    %v3299 = vpop.permute.xlu0 %3298
    %3300 = vrot.lane.b32.xlu0 %v3295, 64
    %v3301 = vpop.permute.xlu0 %3300
    %v3304 = vadd.f32 %v3177, %v3299
    %v3305 = vadd.f32 %v3178, %v3301
    %v3306 = vtanh.pop %v3304
    %v3307 = vtanh.pop %v3305
    %v3308 = vsub.f32 1.0, %v3281
    %v3309 = vsub.f32 1.0, %v3283
    %3310 = vrot.lane.b32.xlu0 %v3161, 32
    %v3311 = vpop.permute.xlu0 %3310
    %3312 = vrot.lane.b32.xlu0 %v3162, 32
    %v3313 = vpop.permute.xlu0 %3312
    %v3316 = vsub.f32 %v3306, %v3311
    %v3317 = vsub.f32 %v3307, %v3313
    %3320 = vrot.lane.b32.xlu0 %v3316, 96
    %v3321 = vpop.permute.xlu0 %3320
    %3322 = vrot.lane.b32.xlu0 %v3317, 96
    %v3323 = vpop.permute.xlu0 %3322
    %v3326 = vmul.f32 %v3308, %v3321
    %v3327 = vmul.f32 %v3309, %v3323
    %3329 = vset.pattern.permute.xlu0 0
    %3330 = vperm.xlu0 %3329, %v3179
    %v3331 = vpop.permute.xlu0 %3330
    %3334 = vset.pattern.permute.xlu0 0
    %3335 = vperm.xlu0 %3334, %v3180
    %v3336 = vpop.permute.xlu0 %3335
    %v3338 = vmul.f32 %v3331, %v3326
    %v3339 = vmul.f32 %v3336, %v3327
    %v3340 = vadd.f32 %v3161, %v3338
    %v3341 = vadd.f32 %v3162, %v3339
    %v3342 = vmul.f32 %v3331, %v3340
    %v3343 = vmul.f32 %v3336, %v3341
    %3346 = vrot.lane.b32.xlu0 %v3342, 96
    %v3347 = vpop.permute.xlu0 %3346
    %3348 = vrot.lane.b32.xlu0 %v3343, 96
    %v3349 = vpop.permute.xlu0 %3348
    %3352 = vst.msk [vmem:[%s1067] sm:$0xff] %vm350, %v3347
    %3353 = vst.msk [vmem:[%s1067 + $0x8] sm:$0xff] %vm350, %v3349
    %3354 = vst.msk [vmem:[%s1070] sm:$0xff] %vm350, %v3347
    %3355 = vst.msk [vmem:[%s1070 + $0x8] sm:$0xff] %vm350, %v3349
    %v3356 = vld [vmem:[%s1073] sm:$0xff]
    %v3357 = vld [vmem:[%s1073 + $0x8] sm:$0xff]
    %v3358 = vld [vmem:[%s1076] sm:$0xff]
    %v3359 = vld [vmem:[%s1076 + $0x8] sm:$0xff]
    %3362 = vrot.lane.b32.xlu0 %v3340, 96
    %v3363 = vpop.permute.xlu0 %3362
    %3364 = vrot.lane.b32.xlu0 %v3341, 96
    %v3365 = vpop.permute.xlu0 %3364
    %v3366 = vsel %vm350, %v3363, 0
    %v3368 = vsel %vm350, %v3365, 0
    %3370 = vmatprep.subr.mxu0 %v2640
    %3371 = vmatpush1.msra.mxu0 %v2639
    %3372 = vmatprep.subr.mxu0 %v2642
    %3373 = vmatpush1.msra.mxu0 %v2641
    %3374 = vmatprep.subr.mxu0 %v2644
    %3375 = vmatpush1.msra.mxu0 %v2643
    %3376 = vmatprep.subr.mxu0 %v2646
    %3377 = vmatpush1.msra.mxu0 %v2645
    %3378 = vmatprep.subr.mxu0 0.0
    %3379 = vmatpush1.msra.mxu0 0.0
    %3380 = vmatprep.subr.mxu0 0.0
    %3381 = vmatpush1.msra.mxu0 0.0
    %3382 = vmatprep.subr.mxu0 0.0
    %3383 = vmatpush1.msra.mxu0 0.0
    %3384 = vmatprep.subr.mxu0 0.0
    %3385 = vmatpush1.msra.mxu0 0.0
    %3386 = vmatprep.subr.mxu0 0.0
    %3387 = vmatpush1.msra.mxu0 0.0
    %3388 = vmatprep.subr.mxu0 0.0
    %3389 = vmatpush1.msra.mxu0 0.0
    %3390 = vmatprep.subr.mxu0 0.0
    %3391 = vmatpush1.msra.mxu0 0.0
    %3392 = vmatprep.subr.mxu0 0.0
    %3393 = vmatpush1.msra.mxu0 0.0
    %3394 = vmatprep.subr.mxu0 0.0
    %3395 = vmatpush1.msra.mxu0 0.0
    %3396 = vmatprep.subr.mxu0 0.0
    %3397 = vmatpush1.msra.mxu0 0.0
    %3398 = vmatprep.subr.mxu0 0.0
    %3399 = vmatpush1.msra.mxu0 0.0
    %3400 = vmatprep.subr.mxu0 0.0
    %3401 = vmatpush1.msra.mxu0 0.0
    %3402 = vmatprep.subr.mxu0 0.0
    %3403 = vmatpush1.msra.mxu0 0.0
    %3404 = vmatprep.subr.mxu0 0.0
    %3405 = vmatpush1.msra.mxu0 0.0
    %3406 = vmatprep.subr.mxu0 0.0
    %3407 = vmatpush1.msra.mxu0 0.0
    %3408 = vmatprep.subr.mxu0 0.0
    %3409 = vmatpush1.msra.mxu0 0.0
    %3410 = vmatprep.subr.mxu0 0.0
    %3411 = vmatpush1.msra.mxu0 0.0
    %3412 = vmatprep.subr.mxu0 0.0
    %3413 = vmatpush1.msra.mxu0 0.0
    %3414 = vmatprep.subr.mxu0 0.0
    %3415 = vmatpush1.msra.mxu0 0.0
    %3416 = vmatprep.subr.mxu0 0.0
    %3417 = vmatpush1.msra.mxu0 0.0
    %3418 = vmatprep.subr.mxu0 0.0
    %3419 = vmatpush1.msra.mxu0 0.0
    %3420 = vmatprep.subr.mxu0 0.0
    %3421 = vmatpush1.msra.mxu0 0.0
    %3422 = vmatprep.subr.mxu0 0.0
    %3423 = vmatpush1.msra.mxu0 0.0
    %3424 = vmatprep.subr.mxu0 0.0
    %3425 = vmatpush1.msra.mxu0 0.0
    %3426 = vmatprep.subr.mxu0 0.0
    %3427 = vmatpush1.msra.mxu0 0.0
    %3428 = vmatprep.subr.mxu0 0.0
    %3429 = vmatpush1.msra.mxu0 0.0
    %3430 = vmatprep.subr.mxu0 0.0
    %3431 = vmatpush1.msra.mxu0 0.0
    %3432 = vmatprep.subr.mxu0 0.0
    %3433 = vmatpush1.msra.mxu0 0.0
    %3434 = vmatprep.mubr.f32.mxu0 0.0
    %3435 = vmatmul.mubr.f32.gmra.mrb[0].mxu0 %v3366
    %v3436 = vpop.f32.mrb[0].mxu0
    %v3437 = vadd.f32 0.0, %v3436
    %v3438 = vpop.f32.mrb[0].mxu0
    %v3439 = vadd.f32 0.0, %v3438
    %3440 = vmatprep.mubr.f32.mxu0 0.0
    %3441 = vmatmul.mubr.f32.gmra.mrb[0].mxu0 %v3368
    %v3442 = vpop.f32.mrb[0].mxu0
    %v3443 = vadd.f32 0.0, %v3442
    %v3444 = vpop.f32.mrb[0].mxu0
    %v3445 = vadd.f32 0.0, %v3444
    %3446 = vdwg.mxu0
    %v3447 = vsel %vm433, %v3437, %v3439
    %v3448 = vsel %vm434, %v3443, %v3445
    %v3449 = vadd.f32 %v3356, %v3447
    %v3450 = vadd.f32 %v3357, %v3448
    %v3451 = vxor.u32 %v3449, 2147483648
    %v3452 = vxor.u32 %v3450, 2147483648
    %v3453 = vmul.f32 %v3451, 1.442695
    %v3454 = vpow.pop %v3453
    %v3455 = vmul.f32 %v3452, 1.442695
    %v3456 = vpow.pop %v3455
    %v3457 = vadd.f32 %v3454, 1.0
    %v3458 = vadd.f32 %v3456, 1.0
    %v3459 = vrcp.pop %v3457
    %v3460 = vmul.f32 1.0, %v3459
    %v3461 = vrcp.pop %v3458
    %v3462 = vmul.f32 1.0, %v3461
    %v3463 = vadd.f32 %v3447, %v2750
    %v3464 = vadd.f32 %v3448, %v2752
    %3467 = vrot.lane.b32.xlu0 %v3463, 64
    %v3468 = vpop.permute.xlu0 %3467
    %3469 = vrot.lane.b32.xlu0 %v3464, 64
    %v3470 = vpop.permute.xlu0 %3469
    %v3473 = vmul.f32 %v3460, %v3468
    %v3474 = vmul.f32 %v3462, %v3470
    %3477 = vrot.lane.b32.xlu0 %v3473, 64
    %v3478 = vpop.permute.xlu0 %3477
    %3479 = vrot.lane.b32.xlu0 %v3474, 64
    %v3480 = vpop.permute.xlu0 %3479
    %v3483 = vadd.f32 %v3356, %v3478
    %v3484 = vadd.f32 %v3357, %v3480
    %v3485 = vtanh.pop %v3483
    %v3486 = vtanh.pop %v3484
    %v3487 = vsub.f32 1.0, %v3460
    %v3488 = vsub.f32 1.0, %v3462
    %3489 = vrot.lane.b32.xlu0 %v3340, 32
    %v3490 = vpop.permute.xlu0 %3489
    %3491 = vrot.lane.b32.xlu0 %v3341, 32
    %v3492 = vpop.permute.xlu0 %3491
    %v3495 = vsub.f32 %v3485, %v3490
    %v3496 = vsub.f32 %v3486, %v3492
    %3499 = vrot.lane.b32.xlu0 %v3495, 96
    %v3500 = vpop.permute.xlu0 %3499
    %3501 = vrot.lane.b32.xlu0 %v3496, 96
    %v3502 = vpop.permute.xlu0 %3501
    %v3505 = vmul.f32 %v3487, %v3500
    %v3506 = vmul.f32 %v3488, %v3502
    %3508 = vset.pattern.permute.xlu0 0
    %3509 = vperm.xlu0 %3508, %v3358
    %v3510 = vpop.permute.xlu0 %3509
    %3513 = vset.pattern.permute.xlu0 0
    %3514 = vperm.xlu0 %3513, %v3359
    %v3515 = vpop.permute.xlu0 %3514
    %v3517 = vmul.f32 %v3510, %v3505
    %v3518 = vmul.f32 %v3515, %v3506
    %v3519 = vadd.f32 %v3340, %v3517
    %v3520 = vadd.f32 %v3341, %v3518
    %v3521 = vmul.f32 %v3510, %v3519
    %v3522 = vmul.f32 %v3515, %v3520
    %3525 = vrot.lane.b32.xlu0 %v3521, 96
    %v3526 = vpop.permute.xlu0 %3525
    %3527 = vrot.lane.b32.xlu0 %v3522, 96
    %v3528 = vpop.permute.xlu0 %3527
    %3531 = vst.msk [vmem:[%s1250] sm:$0xff] %vm350, %v3526
    %3532 = vst.msk [vmem:[%s1250 + $0x8] sm:$0xff] %vm350, %v3528
    %3533 = vst.msk [vmem:[%s1253] sm:$0xff] %vm350, %v3526
    %3534 = vst.msk [vmem:[%s1253 + $0x8] sm:$0xff] %vm350, %v3528
    %v3535 = vld [vmem:[%s1256] sm:$0xff]
    %v3536 = vld [vmem:[%s1256 + $0x8] sm:$0xff]
    %v3537 = vld [vmem:[%s1259] sm:$0xff]
    %v3538 = vld [vmem:[%s1259 + $0x8] sm:$0xff]
    %3541 = vrot.lane.b32.xlu0 %v3519, 96
    %v3542 = vpop.permute.xlu0 %3541
    %3543 = vrot.lane.b32.xlu0 %v3520, 96
    %v3544 = vpop.permute.xlu0 %3543
    %v3545 = vsel %vm350, %v3542, 0
    %v3547 = vsel %vm350, %v3544, 0
    %3549 = vmatprep.subr.mxu0 %v2640
    %3550 = vmatpush1.msra.mxu0 %v2639
    %3551 = vmatprep.subr.mxu0 %v2642
    %3552 = vmatpush1.msra.mxu0 %v2641
    %3553 = vmatprep.subr.mxu0 %v2644
    %3554 = vmatpush1.msra.mxu0 %v2643
    %3555 = vmatprep.subr.mxu0 %v2646
    %3556 = vmatpush1.msra.mxu0 %v2645
    %3557 = vmatprep.subr.mxu0 0.0
    %3558 = vmatpush1.msra.mxu0 0.0
    %3559 = vmatprep.subr.mxu0 0.0
    %3560 = vmatpush1.msra.mxu0 0.0
    %3561 = vmatprep.subr.mxu0 0.0
    %3562 = vmatpush1.msra.mxu0 0.0
    %3563 = vmatprep.subr.mxu0 0.0
    %3564 = vmatpush1.msra.mxu0 0.0
    %3565 = vmatprep.subr.mxu0 0.0
    %3566 = vmatpush1.msra.mxu0 0.0
    %3567 = vmatprep.subr.mxu0 0.0
    %3568 = vmatpush1.msra.mxu0 0.0
    %3569 = vmatprep.subr.mxu0 0.0
    %3570 = vmatpush1.msra.mxu0 0.0
    %3571 = vmatprep.subr.mxu0 0.0
    %3572 = vmatpush1.msra.mxu0 0.0
    %3573 = vmatprep.subr.mxu0 0.0
    %3574 = vmatpush1.msra.mxu0 0.0
    %3575 = vmatprep.subr.mxu0 0.0
    %3576 = vmatpush1.msra.mxu0 0.0
    %3577 = vmatprep.subr.mxu0 0.0
    %3578 = vmatpush1.msra.mxu0 0.0
    %3579 = vmatprep.subr.mxu0 0.0
    %3580 = vmatpush1.msra.mxu0 0.0
    %3581 = vmatprep.subr.mxu0 0.0
    %3582 = vmatpush1.msra.mxu0 0.0
    %3583 = vmatprep.subr.mxu0 0.0
    %3584 = vmatpush1.msra.mxu0 0.0
    %3585 = vmatprep.subr.mxu0 0.0
    %3586 = vmatpush1.msra.mxu0 0.0
    %3587 = vmatprep.subr.mxu0 0.0
    %3588 = vmatpush1.msra.mxu0 0.0
    %3589 = vmatprep.subr.mxu0 0.0
    %3590 = vmatpush1.msra.mxu0 0.0
    %3591 = vmatprep.subr.mxu0 0.0
    %3592 = vmatpush1.msra.mxu0 0.0
    %3593 = vmatprep.subr.mxu0 0.0
    %3594 = vmatpush1.msra.mxu0 0.0
    %3595 = vmatprep.subr.mxu0 0.0
    %3596 = vmatpush1.msra.mxu0 0.0
    %3597 = vmatprep.subr.mxu0 0.0
    %3598 = vmatpush1.msra.mxu0 0.0
    %3599 = vmatprep.subr.mxu0 0.0
    %3600 = vmatpush1.msra.mxu0 0.0
    %3601 = vmatprep.subr.mxu0 0.0
    %3602 = vmatpush1.msra.mxu0 0.0
    %3603 = vmatprep.subr.mxu0 0.0
    %3604 = vmatpush1.msra.mxu0 0.0
    %3605 = vmatprep.subr.mxu0 0.0
    %3606 = vmatpush1.msra.mxu0 0.0
    %3607 = vmatprep.subr.mxu0 0.0
    %3608 = vmatpush1.msra.mxu0 0.0
    %3609 = vmatprep.subr.mxu0 0.0
    %3610 = vmatpush1.msra.mxu0 0.0
    %3611 = vmatprep.subr.mxu0 0.0
    %3612 = vmatpush1.msra.mxu0 0.0
    %3613 = vmatprep.mubr.f32.mxu0 0.0
    %3614 = vmatmul.mubr.f32.gmra.mrb[0].mxu0 %v3545
    %v3615 = vpop.f32.mrb[0].mxu0
    %v3616 = vadd.f32 0.0, %v3615
    %v3617 = vpop.f32.mrb[0].mxu0
    %v3618 = vadd.f32 0.0, %v3617
    %3619 = vmatprep.mubr.f32.mxu0 0.0
    %3620 = vmatmul.mubr.f32.gmra.mrb[0].mxu0 %v3547
    %v3621 = vpop.f32.mrb[0].mxu0
    %v3622 = vadd.f32 0.0, %v3621
    %v3623 = vpop.f32.mrb[0].mxu0
    %v3624 = vadd.f32 0.0, %v3623
    %3625 = vdwg.mxu0
    %v3626 = vsel %vm433, %v3616, %v3618
    %v3627 = vsel %vm434, %v3622, %v3624
    %v3628 = vadd.f32 %v3535, %v3626
    %v3629 = vadd.f32 %v3536, %v3627
    %v3630 = vxor.u32 %v3628, 2147483648
    %v3631 = vxor.u32 %v3629, 2147483648
    %v3632 = vmul.f32 %v3630, 1.442695
    %v3633 = vpow.pop %v3632
    %v3634 = vmul.f32 %v3631, 1.442695
    %v3635 = vpow.pop %v3634
    %v3636 = vadd.f32 %v3633, 1.0
    %v3637 = vadd.f32 %v3635, 1.0
    %v3638 = vrcp.pop %v3636
    %v3639 = vmul.f32 1.0, %v3638
    %v3640 = vrcp.pop %v3637
    %v3641 = vmul.f32 1.0, %v3640
    %v3642 = vadd.f32 %v3626, %v2750
    %v3643 = vadd.f32 %v3627, %v2752
    %3646 = vrot.lane.b32.xlu0 %v3642, 64
    %v3647 = vpop.permute.xlu0 %3646
    %3648 = vrot.lane.b32.xlu0 %v3643, 64
    %v3649 = vpop.permute.xlu0 %3648
    %v3652 = vmul.f32 %v3639, %v3647
    %v3653 = vmul.f32 %v3641, %v3649
    %3656 = vrot.lane.b32.xlu0 %v3652, 64
    %v3657 = vpop.permute.xlu0 %3656
    %3658 = vrot.lane.b32.xlu0 %v3653, 64
    %v3659 = vpop.permute.xlu0 %3658
    %v3662 = vadd.f32 %v3535, %v3657
    %v3663 = vadd.f32 %v3536, %v3659
    %v3664 = vtanh.pop %v3662
    %v3665 = vtanh.pop %v3663
    %v3666 = vsub.f32 1.0, %v3639
    %v3667 = vsub.f32 1.0, %v3641
    %3668 = vrot.lane.b32.xlu0 %v3519, 32
    %v3669 = vpop.permute.xlu0 %3668
    %3670 = vrot.lane.b32.xlu0 %v3520, 32
    %v3671 = vpop.permute.xlu0 %3670
    %v3674 = vsub.f32 %v3664, %v3669
    %v3675 = vsub.f32 %v3665, %v3671
    %3678 = vrot.lane.b32.xlu0 %v3674, 96
    %v3679 = vpop.permute.xlu0 %3678
    %3680 = vrot.lane.b32.xlu0 %v3675, 96
    %v3681 = vpop.permute.xlu0 %3680
    %v3684 = vmul.f32 %v3666, %v3679
    %v3685 = vmul.f32 %v3667, %v3681
    %3687 = vset.pattern.permute.xlu0 0
    %3688 = vperm.xlu0 %3687, %v3537
    %v3689 = vpop.permute.xlu0 %3688
    %3692 = vset.pattern.permute.xlu0 0
    %3693 = vperm.xlu0 %3692, %v3538
    %v3694 = vpop.permute.xlu0 %3693
    %v3696 = vmul.f32 %v3689, %v3684
    %v3697 = vmul.f32 %v3694, %v3685
    %v3698 = vadd.f32 %v3519, %v3696
    %v3699 = vadd.f32 %v3520, %v3697
    %v3700 = vmul.f32 %v3689, %v3698
    %v3701 = vmul.f32 %v3694, %v3699
    %3704 = vrot.lane.b32.xlu0 %v3700, 96
    %v3705 = vpop.permute.xlu0 %3704
    %3706 = vrot.lane.b32.xlu0 %v3701, 96
    %v3707 = vpop.permute.xlu0 %3706
    %3710 = vst.msk [vmem:[%s1433] sm:$0xff] %vm350, %v3705
    %3711 = vst.msk [vmem:[%s1433 + $0x8] sm:$0xff] %vm350, %v3707
    %3712 = vst.msk [vmem:[%s1436] sm:$0xff] %vm350, %v3705
    %3713 = vst.msk [vmem:[%s1436 + $0x8] sm:$0xff] %vm350, %v3707
    %v3714 = vld [vmem:[%s1439] sm:$0xff]
    %v3715 = vld [vmem:[%s1439 + $0x8] sm:$0xff]
    %v3716 = vld [vmem:[%s1442] sm:$0xff]
    %v3717 = vld [vmem:[%s1442 + $0x8] sm:$0xff]
    %3720 = vrot.lane.b32.xlu0 %v3698, 96
    %v3721 = vpop.permute.xlu0 %3720
    %3722 = vrot.lane.b32.xlu0 %v3699, 96
    %v3723 = vpop.permute.xlu0 %3722
    %v3724 = vsel %vm350, %v3721, 0
    %v3726 = vsel %vm350, %v3723, 0
    %3728 = vmatprep.subr.mxu0 %v2640
    %3729 = vmatpush1.msra.mxu0 %v2639
    %3730 = vmatprep.subr.mxu0 %v2642
    %3731 = vmatpush1.msra.mxu0 %v2641
    %3732 = vmatprep.subr.mxu0 %v2644
    %3733 = vmatpush1.msra.mxu0 %v2643
    %3734 = vmatprep.subr.mxu0 %v2646
    %3735 = vmatpush1.msra.mxu0 %v2645
    %3736 = vmatprep.subr.mxu0 0.0
    %3737 = vmatpush1.msra.mxu0 0.0
    %3738 = vmatprep.subr.mxu0 0.0
    %3739 = vmatpush1.msra.mxu0 0.0
    %3740 = vmatprep.subr.mxu0 0.0
    %3741 = vmatpush1.msra.mxu0 0.0
    %3742 = vmatprep.subr.mxu0 0.0
    %3743 = vmatpush1.msra.mxu0 0.0
    %3744 = vmatprep.subr.mxu0 0.0
    %3745 = vmatpush1.msra.mxu0 0.0
    %3746 = vmatprep.subr.mxu0 0.0
    %3747 = vmatpush1.msra.mxu0 0.0
    %3748 = vmatprep.subr.mxu0 0.0
    %3749 = vmatpush1.msra.mxu0 0.0
    %3750 = vmatprep.subr.mxu0 0.0
    %3751 = vmatpush1.msra.mxu0 0.0
    %3752 = vmatprep.subr.mxu0 0.0
    %3753 = vmatpush1.msra.mxu0 0.0
    %3754 = vmatprep.subr.mxu0 0.0
    %3755 = vmatpush1.msra.mxu0 0.0
    %3756 = vmatprep.subr.mxu0 0.0
    %3757 = vmatpush1.msra.mxu0 0.0
    %3758 = vmatprep.subr.mxu0 0.0
    %3759 = vmatpush1.msra.mxu0 0.0
    %3760 = vmatprep.subr.mxu0 0.0
    %3761 = vmatpush1.msra.mxu0 0.0
    %3762 = vmatprep.subr.mxu0 0.0
    %3763 = vmatpush1.msra.mxu0 0.0
    %3764 = vmatprep.subr.mxu0 0.0
    %3765 = vmatpush1.msra.mxu0 0.0
    %3766 = vmatprep.subr.mxu0 0.0
    %3767 = vmatpush1.msra.mxu0 0.0
    %3768 = vmatprep.subr.mxu0 0.0
    %3769 = vmatpush1.msra.mxu0 0.0
    %3770 = vmatprep.subr.mxu0 0.0
    %3771 = vmatpush1.msra.mxu0 0.0
    %3772 = vmatprep.subr.mxu0 0.0
    %3773 = vmatpush1.msra.mxu0 0.0
    %3774 = vmatprep.subr.mxu0 0.0
    %3775 = vmatpush1.msra.mxu0 0.0
    %3776 = vmatprep.subr.mxu0 0.0
    %3777 = vmatpush1.msra.mxu0 0.0
    %3778 = vmatprep.subr.mxu0 0.0
    %3779 = vmatpush1.msra.mxu0 0.0
    %3780 = vmatprep.subr.mxu0 0.0
    %3781 = vmatpush1.msra.mxu0 0.0
    %3782 = vmatprep.subr.mxu0 0.0
    %3783 = vmatpush1.msra.mxu0 0.0
    %3784 = vmatprep.subr.mxu0 0.0
    %3785 = vmatpush1.msra.mxu0 0.0
    %3786 = vmatprep.subr.mxu0 0.0
    %3787 = vmatpush1.msra.mxu0 0.0
    %3788 = vmatprep.subr.mxu0 0.0
    %3789 = vmatpush1.msra.mxu0 0.0
    %3790 = vmatprep.subr.mxu0 0.0
    %3791 = vmatpush1.msra.mxu0 0.0
    %3792 = vmatprep.mubr.f32.mxu0 0.0
    %3793 = vmatmul.mubr.f32.gmra.mrb[0].mxu0 %v3724
    %v3794 = vpop.f32.mrb[0].mxu0
    %v3795 = vadd.f32 0.0, %v3794
    %v3796 = vpop.f32.mrb[0].mxu0
    %v3797 = vadd.f32 0.0, %v3796
    %3798 = vmatprep.mubr.f32.mxu0 0.0
    %3799 = vmatmul.mubr.f32.gmra.mrb[0].mxu0 %v3726
    %v3800 = vpop.f32.mrb[0].mxu0
    %v3801 = vadd.f32 0.0, %v3800
    %v3802 = vpop.f32.mrb[0].mxu0
    %v3803 = vadd.f32 0.0, %v3802
    %3804 = vdwg.mxu0
    %v3805 = vsel %vm433, %v3795, %v3797
    %v3806 = vsel %vm434, %v3801, %v3803
    %v3807 = vadd.f32 %v3714, %v3805
    %v3808 = vadd.f32 %v3715, %v3806
    %v3809 = vxor.u32 %v3807, 2147483648
    %v3810 = vxor.u32 %v3808, 2147483648
    %v3811 = vmul.f32 %v3809, 1.442695
    %v3812 = vpow.pop %v3811
    %v3813 = vmul.f32 %v3810, 1.442695
    %v3814 = vpow.pop %v3813
    %v3815 = vadd.f32 %v3812, 1.0
    %v3816 = vadd.f32 %v3814, 1.0
    %v3817 = vrcp.pop %v3815
    %v3818 = vmul.f32 1.0, %v3817
    %v3819 = vrcp.pop %v3816
    %v3820 = vmul.f32 1.0, %v3819
    %v3821 = vadd.f32 %v3805, %v2750
    %v3822 = vadd.f32 %v3806, %v2752
    %3825 = vrot.lane.b32.xlu0 %v3821, 64
    %v3826 = vpop.permute.xlu0 %3825
    %3827 = vrot.lane.b32.xlu0 %v3822, 64
    %v3828 = vpop.permute.xlu0 %3827
    %v3831 = vmul.f32 %v3818, %v3826
    %v3832 = vmul.f32 %v3820, %v3828
    %3835 = vrot.lane.b32.xlu0 %v3831, 64
    %v3836 = vpop.permute.xlu0 %3835
    %3837 = vrot.lane.b32.xlu0 %v3832, 64
    %v3838 = vpop.permute.xlu0 %3837
    %v3841 = vadd.f32 %v3714, %v3836
    %v3842 = vadd.f32 %v3715, %v3838
    %v3843 = vtanh.pop %v3841
    %v3844 = vtanh.pop %v3842
    %v3845 = vsub.f32 1.0, %v3818
    %v3846 = vsub.f32 1.0, %v3820
    %3847 = vrot.lane.b32.xlu0 %v3698, 32
    %v3848 = vpop.permute.xlu0 %3847
    %3849 = vrot.lane.b32.xlu0 %v3699, 32
    %v3850 = vpop.permute.xlu0 %3849
    %v3853 = vsub.f32 %v3843, %v3848
    %v3854 = vsub.f32 %v3844, %v3850
    %3857 = vrot.lane.b32.xlu0 %v3853, 96
    %v3858 = vpop.permute.xlu0 %3857
    %3859 = vrot.lane.b32.xlu0 %v3854, 96
    %v3860 = vpop.permute.xlu0 %3859
    %v3863 = vmul.f32 %v3845, %v3858
    %v3864 = vmul.f32 %v3846, %v3860
    %3866 = vset.pattern.permute.xlu0 0
    %3867 = vperm.xlu0 %3866, %v3716
    %v3868 = vpop.permute.xlu0 %3867
    %3871 = vset.pattern.permute.xlu0 0
    %3872 = vperm.xlu0 %3871, %v3717
    %v3873 = vpop.permute.xlu0 %3872
    %v3875 = vmul.f32 %v3868, %v3863
    %v3876 = vmul.f32 %v3873, %v3864
    %v3877 = vadd.f32 %v3698, %v3875
    %v3878 = vadd.f32 %v3699, %v3876
    %v3879 = vmul.f32 %v3868, %v3877
    %v3880 = vmul.f32 %v3873, %v3878
    %3883 = vrot.lane.b32.xlu0 %v3879, 96
    %v3884 = vpop.permute.xlu0 %3883
    %3885 = vrot.lane.b32.xlu0 %v3880, 96
    %v3886 = vpop.permute.xlu0 %3885
    %3889 = vst.msk [vmem:[%s1616] sm:$0xff] %vm350, %v3884
    %3890 = vst.msk [vmem:[%s1616 + $0x8] sm:$0xff] %vm350, %v3886
    %3891 = vst.msk [vmem:[%s1619] sm:$0xff] %vm350, %v3884
    %3892 = vst.msk [vmem:[%s1619 + $0x8] sm:$0xff] %vm350, %v3886
    %v3893 = vld [vmem:[%s1622] sm:$0xff]
    %v3894 = vld [vmem:[%s1622 + $0x8] sm:$0xff]
    %v3895 = vld [vmem:[%s1625] sm:$0xff]
    %v3896 = vld [vmem:[%s1625 + $0x8] sm:$0xff]
    %3899 = vrot.lane.b32.xlu0 %v3877, 96
    %v3900 = vpop.permute.xlu0 %3899
    %3901 = vrot.lane.b32.xlu0 %v3878, 96
    %v3902 = vpop.permute.xlu0 %3901
    %v3903 = vsel %vm350, %v3900, 0
    %v3905 = vsel %vm350, %v3902, 0
    %3907 = vmatprep.subr.mxu0 %v2640
    %3908 = vmatpush1.msra.mxu0 %v2639
    %3909 = vmatprep.subr.mxu0 %v2642
    %3910 = vmatpush1.msra.mxu0 %v2641
    %3911 = vmatprep.subr.mxu0 %v2644
    %3912 = vmatpush1.msra.mxu0 %v2643
    %3913 = vmatprep.subr.mxu0 %v2646
    %3914 = vmatpush1.msra.mxu0 %v2645
    %3915 = vmatprep.subr.mxu0 0.0
    %3916 = vmatpush1.msra.mxu0 0.0
    %3917 = vmatprep.subr.mxu0 0.0
    %3918 = vmatpush1.msra.mxu0 0.0
    %3919 = vmatprep.subr.mxu0 0.0
    %3920 = vmatpush1.msra.mxu0 0.0
    %3921 = vmatprep.subr.mxu0 0.0
    %3922 = vmatpush1.msra.mxu0 0.0
    %3923 = vmatprep.subr.mxu0 0.0
    %3924 = vmatpush1.msra.mxu0 0.0
    %3925 = vmatprep.subr.mxu0 0.0
    %3926 = vmatpush1.msra.mxu0 0.0
    %3927 = vmatprep.subr.mxu0 0.0
    %3928 = vmatpush1.msra.mxu0 0.0
    %3929 = vmatprep.subr.mxu0 0.0
    %3930 = vmatpush1.msra.mxu0 0.0
    %3931 = vmatprep.subr.mxu0 0.0
    %3932 = vmatpush1.msra.mxu0 0.0
    %3933 = vmatprep.subr.mxu0 0.0
    %3934 = vmatpush1.msra.mxu0 0.0
    %3935 = vmatprep.subr.mxu0 0.0
    %3936 = vmatpush1.msra.mxu0 0.0
    %3937 = vmatprep.subr.mxu0 0.0
    %3938 = vmatpush1.msra.mxu0 0.0
    %3939 = vmatprep.subr.mxu0 0.0
    %3940 = vmatpush1.msra.mxu0 0.0
    %3941 = vmatprep.subr.mxu0 0.0
    %3942 = vmatpush1.msra.mxu0 0.0
    %3943 = vmatprep.subr.mxu0 0.0
    %3944 = vmatpush1.msra.mxu0 0.0
    %3945 = vmatprep.subr.mxu0 0.0
    %3946 = vmatpush1.msra.mxu0 0.0
    %3947 = vmatprep.subr.mxu0 0.0
    %3948 = vmatpush1.msra.mxu0 0.0
    %3949 = vmatprep.subr.mxu0 0.0
    %3950 = vmatpush1.msra.mxu0 0.0
    %3951 = vmatprep.subr.mxu0 0.0
    %3952 = vmatpush1.msra.mxu0 0.0
    %3953 = vmatprep.subr.mxu0 0.0
    %3954 = vmatpush1.msra.mxu0 0.0
    %3955 = vmatprep.subr.mxu0 0.0
    %3956 = vmatpush1.msra.mxu0 0.0
    %3957 = vmatprep.subr.mxu0 0.0
    %3958 = vmatpush1.msra.mxu0 0.0
    %3959 = vmatprep.subr.mxu0 0.0
    %3960 = vmatpush1.msra.mxu0 0.0
    %3961 = vmatprep.subr.mxu0 0.0
    %3962 = vmatpush1.msra.mxu0 0.0
    %3963 = vmatprep.subr.mxu0 0.0
    %3964 = vmatpush1.msra.mxu0 0.0
    %3965 = vmatprep.subr.mxu0 0.0
    %3966 = vmatpush1.msra.mxu0 0.0
    %3967 = vmatprep.subr.mxu0 0.0
    %3968 = vmatpush1.msra.mxu0 0.0
    %3969 = vmatprep.subr.mxu0 0.0
    %3970 = vmatpush1.msra.mxu0 0.0
    %3971 = vmatprep.mubr.f32.mxu0 0.0
    %3972 = vmatmul.mubr.f32.gmra.mrb[0].mxu0 %v3903
    %v3973 = vpop.f32.mrb[0].mxu0
    %v3974 = vadd.f32 0.0, %v3973
    %v3975 = vpop.f32.mrb[0].mxu0
    %v3976 = vadd.f32 0.0, %v3975
    %3977 = vmatprep.mubr.f32.mxu0 0.0
    %3978 = vmatmul.mubr.f32.gmra.mrb[0].mxu0 %v3905
    %v3979 = vpop.f32.mrb[0].mxu0
    %v3980 = vadd.f32 0.0, %v3979
    %v3981 = vpop.f32.mrb[0].mxu0
    %v3982 = vadd.f32 0.0, %v3981
    %3983 = vdwg.mxu0
    %v3984 = vsel %vm433, %v3974, %v3976
    %v3985 = vsel %vm434, %v3980, %v3982
    %v3986 = vadd.f32 %v3893, %v3984
    %v3987 = vadd.f32 %v3894, %v3985
    %v3988 = vxor.u32 %v3986, 2147483648
    %v3989 = vxor.u32 %v3987, 2147483648
    %v3990 = vmul.f32 %v3988, 1.442695
    %v3991 = vpow.pop %v3990
    %v3992 = vmul.f32 %v3989, 1.442695
    %v3993 = vpow.pop %v3992
    %v3994 = vadd.f32 %v3991, 1.0
    %v3995 = vadd.f32 %v3993, 1.0
    %v3996 = vrcp.pop %v3994
    %v3997 = vmul.f32 1.0, %v3996
    %v3998 = vrcp.pop %v3995
    %v3999 = vmul.f32 1.0, %v3998
    %v4000 = vadd.f32 %v3984, %v2750
    %v4001 = vadd.f32 %v3985, %v2752
    %4004 = vrot.lane.b32.xlu0 %v4000, 64
    %v4005 = vpop.permute.xlu0 %4004
    %4006 = vrot.lane.b32.xlu0 %v4001, 64
    %v4007 = vpop.permute.xlu0 %4006
    %v4010 = vmul.f32 %v3997, %v4005
    %v4011 = vmul.f32 %v3999, %v4007
    %4014 = vrot.lane.b32.xlu0 %v4010, 64
    %v4015 = vpop.permute.xlu0 %4014
    %4016 = vrot.lane.b32.xlu0 %v4011, 64
    %v4017 = vpop.permute.xlu0 %4016
    %v4020 = vadd.f32 %v3893, %v4015
    %v4021 = vadd.f32 %v3894, %v4017
    %v4022 = vtanh.pop %v4020
    %v4023 = vtanh.pop %v4021
    %v4024 = vsub.f32 1.0, %v3997
    %v4025 = vsub.f32 1.0, %v3999
    %4026 = vrot.lane.b32.xlu0 %v3877, 32
    %v4027 = vpop.permute.xlu0 %4026
    %4028 = vrot.lane.b32.xlu0 %v3878, 32
    %v4029 = vpop.permute.xlu0 %4028
    %v4032 = vsub.f32 %v4022, %v4027
    %v4033 = vsub.f32 %v4023, %v4029
    %4036 = vrot.lane.b32.xlu0 %v4032, 96
    %v4037 = vpop.permute.xlu0 %4036
    %4038 = vrot.lane.b32.xlu0 %v4033, 96
    %v4039 = vpop.permute.xlu0 %4038
    %v4042 = vmul.f32 %v4024, %v4037
    %v4043 = vmul.f32 %v4025, %v4039
    %4045 = vset.pattern.permute.xlu0 0
    %4046 = vperm.xlu0 %4045, %v3895
    %v4047 = vpop.permute.xlu0 %4046
    %4050 = vset.pattern.permute.xlu0 0
    %4051 = vperm.xlu0 %4050, %v3896
    %v4052 = vpop.permute.xlu0 %4051
    %v4054 = vmul.f32 %v4047, %v4042
    %v4055 = vmul.f32 %v4052, %v4043
    %v4056 = vadd.f32 %v3877, %v4054
    %v4057 = vadd.f32 %v3878, %v4055
    %v4058 = vmul.f32 %v4047, %v4056
    %v4059 = vmul.f32 %v4052, %v4057
    %4062 = vrot.lane.b32.xlu0 %v4058, 96
    %v4063 = vpop.permute.xlu0 %4062
    %4064 = vrot.lane.b32.xlu0 %v4059, 96
    %v4065 = vpop.permute.xlu0 %4064
    %4068 = vst.msk [vmem:[%s1799] sm:$0xff] %vm350, %v4063
    %4069 = vst.msk [vmem:[%s1799 + $0x8] sm:$0xff] %vm350, %v4065
    %4070 = vst.msk [vmem:[%s1802] sm:$0xff] %vm350, %v4063
    %4071 = vst.msk [vmem:[%s1802 + $0x8] sm:$0xff] %vm350, %v4065
    %v4072 = vld [vmem:[%s1805] sm:$0xff]
    %v4073 = vld [vmem:[%s1805 + $0x8] sm:$0xff]
    %v4074 = vld [vmem:[%s1808] sm:$0xff]
    %v4075 = vld [vmem:[%s1808 + $0x8] sm:$0xff]
    %4078 = vrot.lane.b32.xlu0 %v4056, 96
    %v4079 = vpop.permute.xlu0 %4078
    %4080 = vrot.lane.b32.xlu0 %v4057, 96
    %v4081 = vpop.permute.xlu0 %4080
    %v4082 = vsel %vm350, %v4079, 0
    %v4084 = vsel %vm350, %v4081, 0
    %4086 = vmatprep.subr.mxu0 %v2640
    %4087 = vmatpush1.msra.mxu0 %v2639
    %4088 = vmatprep.subr.mxu0 %v2642
    %4089 = vmatpush1.msra.mxu0 %v2641
    %4090 = vmatprep.subr.mxu0 %v2644
    %4091 = vmatpush1.msra.mxu0 %v2643
    %4092 = vmatprep.subr.mxu0 %v2646
    %4093 = vmatpush1.msra.mxu0 %v2645
    %4094 = vmatprep.subr.mxu0 0.0
    %4095 = vmatpush1.msra.mxu0 0.0
    %4096 = vmatprep.subr.mxu0 0.0
    %4097 = vmatpush1.msra.mxu0 0.0
    %4098 = vmatprep.subr.mxu0 0.0
    %4099 = vmatpush1.msra.mxu0 0.0
    %4100 = vmatprep.subr.mxu0 0.0
    %4101 = vmatpush1.msra.mxu0 0.0
    %4102 = vmatprep.subr.mxu0 0.0
    %4103 = vmatpush1.msra.mxu0 0.0
    %4104 = vmatprep.subr.mxu0 0.0
    %4105 = vmatpush1.msra.mxu0 0.0
    %4106 = vmatprep.subr.mxu0 0.0
    %4107 = vmatpush1.msra.mxu0 0.0
    %4108 = vmatprep.subr.mxu0 0.0
    %4109 = vmatpush1.msra.mxu0 0.0
    %4110 = vmatprep.subr.mxu0 0.0
    %4111 = vmatpush1.msra.mxu0 0.0
    %4112 = vmatprep.subr.mxu0 0.0
    %4113 = vmatpush1.msra.mxu0 0.0
    %4114 = vmatprep.subr.mxu0 0.0
    %4115 = vmatpush1.msra.mxu0 0.0
    %4116 = vmatprep.subr.mxu0 0.0
    %4117 = vmatpush1.msra.mxu0 0.0
    %4118 = vmatprep.subr.mxu0 0.0
    %4119 = vmatpush1.msra.mxu0 0.0
    %4120 = vmatprep.subr.mxu0 0.0
    %4121 = vmatpush1.msra.mxu0 0.0
    %4122 = vmatprep.subr.mxu0 0.0
    %4123 = vmatpush1.msra.mxu0 0.0
    %4124 = vmatprep.subr.mxu0 0.0
    %4125 = vmatpush1.msra.mxu0 0.0
    %4126 = vmatprep.subr.mxu0 0.0
    %4127 = vmatpush1.msra.mxu0 0.0
    %4128 = vmatprep.subr.mxu0 0.0
    %4129 = vmatpush1.msra.mxu0 0.0
    %4130 = vmatprep.subr.mxu0 0.0
    %4131 = vmatpush1.msra.mxu0 0.0
    %4132 = vmatprep.subr.mxu0 0.0
    %4133 = vmatpush1.msra.mxu0 0.0
    %4134 = vmatprep.subr.mxu0 0.0
    %4135 = vmatpush1.msra.mxu0 0.0
    %4136 = vmatprep.subr.mxu0 0.0
    %4137 = vmatpush1.msra.mxu0 0.0
    %4138 = vmatprep.subr.mxu0 0.0
    %4139 = vmatpush1.msra.mxu0 0.0
    %4140 = vmatprep.subr.mxu0 0.0
    %4141 = vmatpush1.msra.mxu0 0.0
    %4142 = vmatprep.subr.mxu0 0.0
    %4143 = vmatpush1.msra.mxu0 0.0
    %4144 = vmatprep.subr.mxu0 0.0
    %4145 = vmatpush1.msra.mxu0 0.0
    %4146 = vmatprep.subr.mxu0 0.0
    %4147 = vmatpush1.msra.mxu0 0.0
    %4148 = vmatprep.subr.mxu0 0.0
    %4149 = vmatpush1.msra.mxu0 0.0
    %4150 = vmatprep.mubr.f32.mxu0 0.0
    %4151 = vmatmul.mubr.f32.gmra.mrb[0].mxu0 %v4082
    %v4152 = vpop.f32.mrb[0].mxu0
    %v4153 = vadd.f32 0.0, %v4152
    %v4154 = vpop.f32.mrb[0].mxu0
    %v4155 = vadd.f32 0.0, %v4154
    %4156 = vmatprep.mubr.f32.mxu0 0.0
    %4157 = vmatmul.mubr.f32.gmra.mrb[0].mxu0 %v4084
    %v4158 = vpop.f32.mrb[0].mxu0
    %v4159 = vadd.f32 0.0, %v4158
    %v4160 = vpop.f32.mrb[0].mxu0
    %v4161 = vadd.f32 0.0, %v4160
    %4162 = vdwg.mxu0
    %v4163 = vsel %vm433, %v4153, %v4155
    %v4164 = vsel %vm434, %v4159, %v4161
    %v4165 = vadd.f32 %v4072, %v4163
    %v4166 = vadd.f32 %v4073, %v4164
    %v4167 = vxor.u32 %v4165, 2147483648
    %v4168 = vxor.u32 %v4166, 2147483648
    %v4169 = vmul.f32 %v4167, 1.442695
    %v4170 = vpow.pop %v4169
    %v4171 = vmul.f32 %v4168, 1.442695
    %v4172 = vpow.pop %v4171
    %v4173 = vadd.f32 %v4170, 1.0
    %v4174 = vadd.f32 %v4172, 1.0
    %v4175 = vrcp.pop %v4173
    %v4176 = vmul.f32 1.0, %v4175
    %v4177 = vrcp.pop %v4174
    %v4178 = vmul.f32 1.0, %v4177
    %v4179 = vadd.f32 %v4163, %v2750
    %v4180 = vadd.f32 %v4164, %v2752
    %4183 = vrot.lane.b32.xlu0 %v4179, 64
    %v4184 = vpop.permute.xlu0 %4183
    %4185 = vrot.lane.b32.xlu0 %v4180, 64
    %v4186 = vpop.permute.xlu0 %4185
    %v4189 = vmul.f32 %v4176, %v4184
    %v4190 = vmul.f32 %v4178, %v4186
    %4193 = vrot.lane.b32.xlu0 %v4189, 64
    %v4194 = vpop.permute.xlu0 %4193
    %4195 = vrot.lane.b32.xlu0 %v4190, 64
    %v4196 = vpop.permute.xlu0 %4195
    %v4199 = vadd.f32 %v4072, %v4194
    %v4200 = vadd.f32 %v4073, %v4196
    %v4201 = vtanh.pop %v4199
    %v4202 = vtanh.pop %v4200
    %v4203 = vsub.f32 1.0, %v4176
    %v4204 = vsub.f32 1.0, %v4178
    %4205 = vrot.lane.b32.xlu0 %v4056, 32
    %v4206 = vpop.permute.xlu0 %4205
    %4207 = vrot.lane.b32.xlu0 %v4057, 32
    %v4208 = vpop.permute.xlu0 %4207
    %v4211 = vsub.f32 %v4201, %v4206
    %v4212 = vsub.f32 %v4202, %v4208
    %4215 = vrot.lane.b32.xlu0 %v4211, 96
    %v4216 = vpop.permute.xlu0 %4215
    %4217 = vrot.lane.b32.xlu0 %v4212, 96
    %v4218 = vpop.permute.xlu0 %4217
    %v4221 = vmul.f32 %v4203, %v4216
    %v4222 = vmul.f32 %v4204, %v4218
    %4224 = vset.pattern.permute.xlu0 0
    %4225 = vperm.xlu0 %4224, %v4074
    %v4226 = vpop.permute.xlu0 %4225
    %4229 = vset.pattern.permute.xlu0 0
    %4230 = vperm.xlu0 %4229, %v4075
    %v4231 = vpop.permute.xlu0 %4230
    %v4233 = vmul.f32 %v4226, %v4221
    %v4234 = vmul.f32 %v4231, %v4222
    %v4235 = vadd.f32 %v4056, %v4233
    %v4236 = vadd.f32 %v4057, %v4234
    %v4237 = vmul.f32 %v4226, %v4235
    %v4238 = vmul.f32 %v4231, %v4236
    %4241 = vrot.lane.b32.xlu0 %v4237, 96
    %v4242 = vpop.permute.xlu0 %4241
    %4243 = vrot.lane.b32.xlu0 %v4238, 96
    %v4244 = vpop.permute.xlu0 %4243
    %4247 = vst.msk [vmem:[%s1982] sm:$0xff] %vm350, %v4242
    %4248 = vst.msk [vmem:[%s1982 + $0x8] sm:$0xff] %vm350, %v4244
    %4249 = vst.msk [vmem:[%s1985] sm:$0xff] %vm350, %v4242
    %4250 = vst.msk [vmem:[%s1985 + $0x8] sm:$0xff] %vm350, %v4244
    %v4251 = vld [vmem:[%s1988] sm:$0xff]
    %v4252 = vld [vmem:[%s1988 + $0x8] sm:$0xff]
    %v4253 = vld [vmem:[%s1991] sm:$0xff]
    %v4254 = vld [vmem:[%s1991 + $0x8] sm:$0xff]
    %4257 = vrot.lane.b32.xlu0 %v4235, 96
    %v4258 = vpop.permute.xlu0 %4257
    %4259 = vrot.lane.b32.xlu0 %v4236, 96
    %v4260 = vpop.permute.xlu0 %4259
    %v4261 = vsel %vm350, %v4258, 0
    %v4263 = vsel %vm350, %v4260, 0
    %4265 = vmatprep.subr.mxu0 %v2640
    %4266 = vmatpush1.msra.mxu0 %v2639
    %4267 = vmatprep.subr.mxu0 %v2642
    %4268 = vmatpush1.msra.mxu0 %v2641
    %4269 = vmatprep.subr.mxu0 %v2644
    %4270 = vmatpush1.msra.mxu0 %v2643
    %4271 = vmatprep.subr.mxu0 %v2646
    %4272 = vmatpush1.msra.mxu0 %v2645
    %4273 = vmatprep.subr.mxu0 0.0
    %4274 = vmatpush1.msra.mxu0 0.0
    %4275 = vmatprep.subr.mxu0 0.0
    %4276 = vmatpush1.msra.mxu0 0.0
    %4277 = vmatprep.subr.mxu0 0.0
    %4278 = vmatpush1.msra.mxu0 0.0
    %4279 = vmatprep.subr.mxu0 0.0
    %4280 = vmatpush1.msra.mxu0 0.0
    %4281 = vmatprep.subr.mxu0 0.0
    %4282 = vmatpush1.msra.mxu0 0.0
    %4283 = vmatprep.subr.mxu0 0.0
    %4284 = vmatpush1.msra.mxu0 0.0
    %4285 = vmatprep.subr.mxu0 0.0
    %4286 = vmatpush1.msra.mxu0 0.0
    %4287 = vmatprep.subr.mxu0 0.0
    %4288 = vmatpush1.msra.mxu0 0.0
    %4289 = vmatprep.subr.mxu0 0.0
    %4290 = vmatpush1.msra.mxu0 0.0
    %4291 = vmatprep.subr.mxu0 0.0
    %4292 = vmatpush1.msra.mxu0 0.0
    %4293 = vmatprep.subr.mxu0 0.0
    %4294 = vmatpush1.msra.mxu0 0.0
    %4295 = vmatprep.subr.mxu0 0.0
    %4296 = vmatpush1.msra.mxu0 0.0
    %4297 = vmatprep.subr.mxu0 0.0
    %4298 = vmatpush1.msra.mxu0 0.0
    %4299 = vmatprep.subr.mxu0 0.0
    %4300 = vmatpush1.msra.mxu0 0.0
    %4301 = vmatprep.subr.mxu0 0.0
    %4302 = vmatpush1.msra.mxu0 0.0
    %4303 = vmatprep.subr.mxu0 0.0
    %4304 = vmatpush1.msra.mxu0 0.0
    %4305 = vmatprep.subr.mxu0 0.0
    %4306 = vmatpush1.msra.mxu0 0.0
    %4307 = vmatprep.subr.mxu0 0.0
    %4308 = vmatpush1.msra.mxu0 0.0
    %4309 = vmatprep.subr.mxu0 0.0
    %4310 = vmatpush1.msra.mxu0 0.0
    %4311 = vmatprep.subr.mxu0 0.0
    %4312 = vmatpush1.msra.mxu0 0.0
    %4313 = vmatprep.subr.mxu0 0.0
    %4314 = vmatpush1.msra.mxu0 0.0
    %4315 = vmatprep.subr.mxu0 0.0
    %4316 = vmatpush1.msra.mxu0 0.0
    %4317 = vmatprep.subr.mxu0 0.0
    %4318 = vmatpush1.msra.mxu0 0.0
    %4319 = vmatprep.subr.mxu0 0.0
    %4320 = vmatpush1.msra.mxu0 0.0
    %4321 = vmatprep.subr.mxu0 0.0
    %4322 = vmatpush1.msra.mxu0 0.0
    %4323 = vmatprep.subr.mxu0 0.0
    %4324 = vmatpush1.msra.mxu0 0.0
    %4325 = vmatprep.subr.mxu0 0.0
    %4326 = vmatpush1.msra.mxu0 0.0
    %4327 = vmatprep.subr.mxu0 0.0
    %4328 = vmatpush1.msra.mxu0 0.0
    %4329 = vmatprep.mubr.f32.mxu0 0.0
    %4330 = vmatmul.mubr.f32.gmra.mrb[0].mxu0 %v4261
    %v4331 = vpop.f32.mrb[0].mxu0
    %v4332 = vadd.f32 0.0, %v4331
    %v4333 = vpop.f32.mrb[0].mxu0
    %v4334 = vadd.f32 0.0, %v4333
    %4335 = vmatprep.mubr.f32.mxu0 0.0
    %4336 = vmatmul.mubr.f32.gmra.mrb[0].mxu0 %v4263
    %v4337 = vpop.f32.mrb[0].mxu0
    %v4338 = vadd.f32 0.0, %v4337
    %v4339 = vpop.f32.mrb[0].mxu0
    %v4340 = vadd.f32 0.0, %v4339
    %4341 = vdwg.mxu0
    %v4342 = vsel %vm433, %v4332, %v4334
    %v4343 = vsel %vm434, %v4338, %v4340
    %v4344 = vadd.f32 %v4251, %v4342
    %v4345 = vadd.f32 %v4252, %v4343
    %v4346 = vxor.u32 %v4344, 2147483648
    %v4347 = vxor.u32 %v4345, 2147483648
    %v4348 = vmul.f32 %v4346, 1.442695
    %v4349 = vpow.pop %v4348
    %v4350 = vmul.f32 %v4347, 1.442695
    %v4351 = vpow.pop %v4350
    %v4352 = vadd.f32 %v4349, 1.0
    %v4353 = vadd.f32 %v4351, 1.0
    %v4354 = vrcp.pop %v4352
    %v4355 = vmul.f32 1.0, %v4354
    %v4356 = vrcp.pop %v4353
    %v4357 = vmul.f32 1.0, %v4356
    %v4358 = vadd.f32 %v4342, %v2750
    %v4359 = vadd.f32 %v4343, %v2752
    %4362 = vrot.lane.b32.xlu0 %v4358, 64
    %v4363 = vpop.permute.xlu0 %4362
    %4364 = vrot.lane.b32.xlu0 %v4359, 64
    %v4365 = vpop.permute.xlu0 %4364
    %v4368 = vmul.f32 %v4355, %v4363
    %v4369 = vmul.f32 %v4357, %v4365
    %4372 = vrot.lane.b32.xlu0 %v4368, 64
    %v4373 = vpop.permute.xlu0 %4372
    %4374 = vrot.lane.b32.xlu0 %v4369, 64
    %v4375 = vpop.permute.xlu0 %4374
    %v4378 = vadd.f32 %v4251, %v4373
    %v4379 = vadd.f32 %v4252, %v4375
    %v4380 = vtanh.pop %v4378
    %v4381 = vtanh.pop %v4379
    %v4382 = vsub.f32 1.0, %v4355
    %v4383 = vsub.f32 1.0, %v4357
    %4384 = vrot.lane.b32.xlu0 %v4235, 32
    %v4385 = vpop.permute.xlu0 %4384
    %4386 = vrot.lane.b32.xlu0 %v4236, 32
    %v4387 = vpop.permute.xlu0 %4386
    %v4390 = vsub.f32 %v4380, %v4385
    %v4391 = vsub.f32 %v4381, %v4387
    %4394 = vrot.lane.b32.xlu0 %v4390, 96
    %v4395 = vpop.permute.xlu0 %4394
    %4396 = vrot.lane.b32.xlu0 %v4391, 96
    %v4397 = vpop.permute.xlu0 %4396
    %v4400 = vmul.f32 %v4382, %v4395
    %v4401 = vmul.f32 %v4383, %v4397
    %4403 = vset.pattern.permute.xlu0 0
    %4404 = vperm.xlu0 %4403, %v4253
    %v4405 = vpop.permute.xlu0 %4404
    %4408 = vset.pattern.permute.xlu0 0
    %4409 = vperm.xlu0 %4408, %v4254
    %v4410 = vpop.permute.xlu0 %4409
    %v4412 = vmul.f32 %v4405, %v4400
    %v4413 = vmul.f32 %v4410, %v4401
    %v4414 = vadd.f32 %v4235, %v4412
    %v4415 = vadd.f32 %v4236, %v4413
    %v4416 = vmul.f32 %v4405, %v4414
    %v4417 = vmul.f32 %v4410, %v4415
    %4420 = vrot.lane.b32.xlu0 %v4416, 96
    %v4421 = vpop.permute.xlu0 %4420
    %4422 = vrot.lane.b32.xlu0 %v4417, 96
    %v4423 = vpop.permute.xlu0 %4422
    %4426 = vst.msk [vmem:[%s2165] sm:$0xff] %vm350, %v4421
    %4427 = vst.msk [vmem:[%s2165 + $0x8] sm:$0xff] %vm350, %v4423
    %4428 = vst.msk [vmem:[#allocation4] sm:$0xff] %vm350, %v4421
    %4429 = vst.msk [vmem:[#allocation4 + $0x8] sm:$0xff] %vm350, %v4423
    %v4430 = vld [vmem:[#allocation3] sm:$0xff]
    %v4431 = vld [vmem:[#allocation3 + $0x10] sm:$0xff]
    %v4432 = vld [vmem:[#allocation3 + $0x20] sm:$0xff]
    %v4433 = vld [vmem:[#allocation3 + $0x30] sm:$0xff]
    %v4434 = vld [vmem:[#allocation3 + $0x40] sm:$0xff]
    %v4435 = vld [vmem:[#allocation3 + $0x50] sm:$0xff]
    %v4436 = vld [vmem:[#allocation3 + $0x60] sm:$0xff]
    %v4437 = vld [vmem:[#allocation3 + $0x70] sm:$0xff]
    %v4438 = vld [vmem:[#allocation3 + $0x80] sm:$0xff]
    %v4439 = vld [vmem:[#allocation3 + $0x90] sm:$0xff]
    %v4440 = vld [vmem:[#allocation4 + $0x8] sm:$0xff]
    %v4441 = vld [vmem:[#allocation4 + $0x18] sm:$0xff]
    %v4442 = vld [vmem:[#allocation4 + $0x28] sm:$0xff]
    %v4443 = vld [vmem:[#allocation4 + $0x38] sm:$0xff]
    %v4444 = vld [vmem:[#allocation4 + $0x48] sm:$0xff]
    %v4445 = vld [vmem:[#allocation4 + $0x58] sm:$0xff]
    %v4446 = vld [vmem:[#allocation4 + $0x68] sm:$0xff]
    %v4447 = vld [vmem:[#allocation4 + $0x78] sm:$0xff]
    %v4448 = vld [vmem:[#allocation4 + $0x88] sm:$0xff]
    %v4449 = vld [vmem:[#allocation4 + $0x98] sm:$0xff]
    %4460 = vrot.lane.b32.xlu0 %v4440, 32
    %v4461 = vpop.permute.xlu0 %4460
    %4462 = vrot.lane.b32.xlu0 %v4441, 32
    %v4463 = vpop.permute.xlu0 %4462
    %4464 = vrot.lane.b32.xlu0 %v4442, 32
    %v4465 = vpop.permute.xlu0 %4464
    %4466 = vrot.lane.b32.xlu0 %v4443, 32
    %v4467 = vpop.permute.xlu0 %4466
    %4468 = vrot.lane.b32.xlu0 %v4444, 32
    %v4469 = vpop.permute.xlu0 %4468
    %4470 = vrot.lane.b32.xlu0 %v4445, 32
    %v4471 = vpop.permute.xlu0 %4470
    %4472 = vrot.lane.b32.xlu0 %v4446, 32
    %v4473 = vpop.permute.xlu0 %4472
    %4474 = vrot.lane.b32.xlu0 %v4447, 32
    %v4475 = vpop.permute.xlu0 %4474
    %4476 = vrot.lane.b32.xlu0 %v4448, 32
    %v4477 = vpop.permute.xlu0 %4476
    %4478 = vrot.lane.b32.xlu0 %v4449, 32
    %v4479 = vpop.permute.xlu0 %4478
    %v4490 = vsel %vm350, %v4430, %v4461
    %v4491 = vsel %vm350, %v4431, %v4463
    %v4492 = vsel %vm350, %v4432, %v4465
    %v4493 = vsel %vm350, %v4433, %v4467
    %v4494 = vsel %vm350, %v4434, %v4469
    %v4495 = vsel %vm350, %v4435, %v4471
    %v4496 = vsel %vm350, %v4436, %v4473
    %v4497 = vsel %vm350, %v4437, %v4475
    %v4498 = vsel %vm350, %v4438, %v4477
    %v4499 = vsel %vm350, %v4439, %v4479
    %v4500 = vld [vmem:[%s7 + $0x41] sm:$0x1]
    %v4501 = vld [vmem:[%s7 + $0x40] sm:$0x1]
    %v4502 = vlaneseq
    %v4503 = vshrl.u32 %v4502, 7
    %v4504 = vsub.s32 0, %v4503
    %v4505 = vrot.slane %v4500, %v4504
    %v4506 = vmul.f32 %v4490, %v4505
    %v4507 = vmul.f32 %v4491, %v4505
    %v4508 = vmul.f32 %v4492, %v4505
    %v4509 = vmul.f32 %v4493, %v4505
    %v4510 = vmul.f32 %v4494, %v4505
    %v4511 = vmul.f32 %v4495, %v4505
    %v4512 = vmul.f32 %v4496, %v4505
    %v4513 = vmul.f32 %v4497, %v4505
    %v4514 = vmul.f32 %v4498, %v4505
    %v4515 = vmul.f32 %v4499, %v4505
    %v4516 = vsel %vm2328, %v4506, 0.0
    %4517 = vadd.xlane.f32.xlu0 %v4516
    %v4518 = vpop.xlane.xlu0 %4517
    %v4519 = vsel %vm2328, %v4507, 0.0
    %4520 = vadd.xlane.f32.xlu0 %v4519
    %v4521 = vpop.xlane.xlu0 %4520
    %v4522 = vsel %vm2328, %v4508, 0.0
    %4523 = vadd.xlane.f32.xlu0 %v4522
    %v4524 = vpop.xlane.xlu0 %4523
    %v4525 = vsel %vm2328, %v4509, 0.0
    %4526 = vadd.xlane.f32.xlu0 %v4525
    %v4527 = vpop.xlane.xlu0 %4526
    %v4528 = vsel %vm2328, %v4510, 0.0
    %4529 = vadd.xlane.f32.xlu0 %v4528
    %v4530 = vpop.xlane.xlu0 %4529
    %v4531 = vsel %vm2328, %v4511, 0.0
    %4532 = vadd.xlane.f32.xlu0 %v4531
    %v4533 = vpop.xlane.xlu0 %4532
    %v4534 = vsel %vm2328, %v4512, 0.0
    %4535 = vadd.xlane.f32.xlu0 %v4534
    %v4536 = vpop.xlane.xlu0 %4535
    %v4537 = vsel %vm2328, %v4513, 0.0
    %4538 = vadd.xlane.f32.xlu0 %v4537
    %v4539 = vpop.xlane.xlu0 %4538
    %v4540 = vsel %vm2328, %v4514, 0.0
    %4541 = vadd.xlane.f32.xlu0 %v4540
    %v4542 = vpop.xlane.xlu0 %4541
    %v4543 = vsel %vm2328, %v4515, 0.0
    %4544 = vadd.xlane.f32.xlu0 %v4543
    %v4545 = vpop.xlane.xlu0 %4544
    %4547 = vrot.lane.b32.xlu0 %v4501, 94
    %v4548 = vpop.permute.xlu0 %4547
    %s4549 = vtos %v4548
    %v4550 = vstv %s4549
    %v4552 = vadd.f32 %v4518, %v4550
    %v4553 = vadd.f32 %v4521, %v4550
    %v4554 = vadd.f32 %v4524, %v4550
    %v4555 = vadd.f32 %v4527, %v4550
    %v4556 = vadd.f32 %v4530, %v4550
    %v4557 = vadd.f32 %v4533, %v4550
    %v4558 = vadd.f32 %v4536, %v4550
    %v4559 = vadd.f32 %v4539, %v4550
    %v4560 = vadd.f32 %v4542, %v4550
    %v4561 = vadd.f32 %v4545, %v4550
    %v4562 = vld [vmem:[%s2] sm:$0xff]
    %v4563 = vld [vmem:[%s2 + $0x8] sm:$0x3]
    %vm4564 = vcmp.gt.f32.partialorder %v4562, 0.0
    %vm4565 = vcmp.gt.f32.partialorder %v4563, 0.0
    %v4566 = vsel %vm4564, 1, 0
    %v4567 = vsel %vm4565, 1, 0
    %4568 = vset.pattern.permute.xlu0 0
    %4569 = vperm.xlu0 %4568, %v4566
    %v4570 = vpop.permute.xlu0 %4569
    %4571 = vset.pattern.permute.xlu0 0
    %4572 = vperm.xlu0 %4571, %v4567
    %v4573 = vpop.permute.xlu0 %4572
    %vm4574 = vcmp.eq.s32.totalorder %v4570, 1
    %vm4575 = vcmp.eq.s32.totalorder %v4573, 1
    %v4586 = vlaneseq
    %v4587 = vand.u32 %v4586, 127
    %v4588 = vlaneseq
    %v4589 = vshrl.u32 %v4588, 7
    %v4590 = vsub.s32 %v4587, %v4589
    %v4591 = vrot.slane %v4552, %v4590
    %v4592 = vlaneseq
    %v4593 = vshrl.u32 %v4592, 7
    %v4594 = vsub.s32 %v4587, %v4593
    %v4595 = vrot.slane %v4553, %v4594
    %v4596 = vlaneseq
    %v4597 = vshrl.u32 %v4596, 7
    %v4598 = vsub.s32 %v4587, %v4597
    %v4599 = vrot.slane %v4554, %v4598
    %v4600 = vlaneseq
    %v4601 = vshrl.u32 %v4600, 7
    %v4602 = vsub.s32 %v4587, %v4601
    %v4603 = vrot.slane %v4555, %v4602
    %v4604 = vlaneseq
    %v4605 = vshrl.u32 %v4604, 7
    %v4606 = vsub.s32 %v4587, %v4605
    %v4607 = vrot.slane %v4556, %v4606
    %v4608 = vlaneseq
    %v4609 = vshrl.u32 %v4608, 7
    %v4610 = vsub.s32 %v4587, %v4609
    %v4611 = vrot.slane %v4557, %v4610
    %v4612 = vlaneseq
    %v4613 = vshrl.u32 %v4612, 7
    %v4614 = vsub.s32 %v4587, %v4613
    %v4615 = vrot.slane %v4558, %v4614
    %v4616 = vlaneseq
    %v4617 = vshrl.u32 %v4616, 7
    %v4618 = vsub.s32 %v4587, %v4617
    %v4619 = vrot.slane %v4559, %v4618
    %v4620 = vlaneseq
    %v4621 = vshrl.u32 %v4620, 7
    %v4622 = vsub.s32 %v4587, %v4621
    %v4623 = vrot.slane %v4560, %v4622
    %v4624 = vlaneseq
    %v4625 = vshrl.u32 %v4624, 7
    %v4626 = vsub.s32 %v4587, %v4625
    %v4627 = vrot.slane %v4561, %v4626
    %vm4628 = vcmask 1041409
    %v4629 = vsel %vm4628, %v4595, %v4591
    %vm4630 = vcmask 1042434
    %v4631 = vsel %vm4630, %v4599, %v4629
    %vm4632 = vcmask 1043459
    %v4633 = vsel %vm4632, %v4603, %v4631
    %vm4634 = vcmask 1044484
    %v4635 = vsel %vm4634, %v4607, %v4633
    %vm4636 = vcmask 1045509
    %v4637 = vsel %vm4636, %v4611, %v4635
    %vm4638 = vcmask 1046534
    %v4639 = vsel %vm4638, %v4615, %v4637
    %vm4640 = vcmask 1047559
    %v4641 = vsel %vm4640, %v4619, %v4639
    %v4642 = vsel %vm4628, %v4627, %v4623
    %v4645 = vsel %vm4574, %v4641, -1e+30
    %v4646 = vsel %vm4575, %v4642, -1e+30
    %vm4647 = vcmask 64512
    %v4648 = vsel %vm4647, %v4645, -inf
    %vm4649 = vcmask 58368
    %v4650 = vsel %vm4649, %v4646, -inf
    %v4651 = vmax.f32 %v4648, %v4650
    %v4652 = vrot.slane %v4651, 4
    %v4653 = vmax.f32 %v4651, %v4652
    %v4654 = vrot.slane %v4653, 2
    %v4655 = vmax.f32 %v4653, %v4654
    %v4656 = vrot.slane %v4655, 1
    %v4657 = vmax.f32 %v4655, %v4656
    %v4658 = vsub.f32 %v4645, %v4657
    %v4659 = vsub.f32 %v4646, %v4657
    %v4660 = vmul.f32 %v4658, 1.442695
    %v4661 = vpow.pop %v4660
    %v4662 = vmul.f32 %v4659, 1.442695
    %v4663 = vpow.pop %v4662
    %v4664 = vsel %vm4647, %v4661, 0.0
    %v4665 = vsel %vm4649, %v4663, 0.0
    %v4666 = vadd.f32 %v4664, %v4665
    %v4667 = vrot.slane %v4666, 4
    %v4668 = vadd.f32 %v4666, %v4667
    %v4669 = vrot.slane %v4668, 2
    %v4670 = vadd.f32 %v4668, %v4669
    %v4671 = vrot.slane %v4670, 1
    %v4672 = vadd.f32 %v4670, %v4671
    %v4673 = vrcp.pop %v4672
    %v4674 = vmul.f32 %v4661, %v4673
    %v4675 = vmul.f32 %v4663, %v4673
    %v4676 = vlaneseq
    %v4677 = vshrl.u32 %v4676, 7
    %v4678 = vsub.s32 0, %v4677
    %v4679 = vrot.slane %v4674, %v4678
    %4681 = vbcast.lane.b32.xlu0 %v4679, 256
    %v4682 = vpop.permute.xlu0 %4681
    %v4683 = vlaneseq
    %v4684 = vshrl.u32 %v4683, 7
    %v4685 = vsub.s32 1, %v4684
    %v4686 = vrot.slane %v4674, %v4685
    %4688 = vbcast.lane.b32.xlu0 %v4686, 256
    %v4689 = vpop.permute.xlu0 %4688
    %v4690 = vlaneseq
    %v4691 = vshrl.u32 %v4690, 7
    %v4692 = vsub.s32 2, %v4691
    %v4693 = vrot.slane %v4674, %v4692
    %4695 = vbcast.lane.b32.xlu0 %v4693, 256
    %v4696 = vpop.permute.xlu0 %4695
    %v4697 = vlaneseq
    %v4698 = vshrl.u32 %v4697, 7
    %v4699 = vsub.s32 3, %v4698
    %v4700 = vrot.slane %v4674, %v4699
    %4702 = vbcast.lane.b32.xlu0 %v4700, 256
    %v4703 = vpop.permute.xlu0 %4702
    %v4704 = vlaneseq
    %v4705 = vshrl.u32 %v4704, 7
    %v4706 = vsub.s32 4, %v4705
    %v4707 = vrot.slane %v4674, %v4706
    %4709 = vbcast.lane.b32.xlu0 %v4707, 256
    %v4710 = vpop.permute.xlu0 %4709
    %v4711 = vlaneseq
    %v4712 = vshrl.u32 %v4711, 7
    %v4713 = vsub.s32 5, %v4712
    %v4714 = vrot.slane %v4674, %v4713
    %4716 = vbcast.lane.b32.xlu0 %v4714, 256
    %v4717 = vpop.permute.xlu0 %4716
    %v4718 = vlaneseq
    %v4719 = vshrl.u32 %v4718, 7
    %v4720 = vsub.s32 6, %v4719
    %v4721 = vrot.slane %v4674, %v4720
    %4723 = vbcast.lane.b32.xlu0 %v4721, 256
    %v4724 = vpop.permute.xlu0 %4723
    %v4725 = vlaneseq
    %v4726 = vshrl.u32 %v4725, 7
    %v4727 = vsub.s32 7, %v4726
    %v4728 = vrot.slane %v4674, %v4727
    %4730 = vbcast.lane.b32.xlu0 %v4728, 256
    %v4731 = vpop.permute.xlu0 %4730
    %v4732 = vlaneseq
    %v4733 = vshrl.u32 %v4732, 7
    %v4734 = vsub.s32 0, %v4733
    %v4735 = vrot.slane %v4675, %v4734
    %4737 = vbcast.lane.b32.xlu0 %v4735, 256
    %v4738 = vpop.permute.xlu0 %4737
    %v4739 = vlaneseq
    %v4740 = vshrl.u32 %v4739, 7
    %v4741 = vsub.s32 1, %v4740
    %v4742 = vrot.slane %v4675, %v4741
    %4744 = vbcast.lane.b32.xlu0 %v4742, 256
    %v4745 = vpop.permute.xlu0 %4744
    %v4746 = vmul.f32 %v4682, %v4490
    %v4747 = vmul.f32 %v4689, %v4491
    %v4748 = vmul.f32 %v4696, %v4492
    %v4749 = vmul.f32 %v4703, %v4493
    %v4750 = vmul.f32 %v4710, %v4494
    %v4751 = vmul.f32 %v4717, %v4495
    %v4752 = vmul.f32 %v4724, %v4496
    %v4753 = vmul.f32 %v4731, %v4497
    %v4754 = vmul.f32 %v4738, %v4498
    %v4755 = vmul.f32 %v4745, %v4499
    %v4756 = vsel %vm2328, %v4746, 0.0
    %v4757 = vsel %vm2328, %v4747, 0.0
    %v4758 = vadd.f32 %v4756, %v4757
    %v4759 = vsel %vm2328, %v4748, 0.0
    %v4760 = vadd.f32 %v4758, %v4759
    %v4761 = vsel %vm2328, %v4749, 0.0
    %v4762 = vadd.f32 %v4760, %v4761
    %v4763 = vsel %vm2328, %v4750, 0.0
    %v4764 = vadd.f32 %v4762, %v4763
    %v4765 = vsel %vm2328, %v4751, 0.0
    %v4766 = vadd.f32 %v4764, %v4765
    %v4767 = vsel %vm2328, %v4752, 0.0
    %v4768 = vadd.f32 %v4766, %v4767
    %v4769 = vsel %vm2328, %v4753, 0.0
    %v4770 = vadd.f32 %v4768, %v4769
    %v4771 = vsel %vm2328, %v4754, 0.0
    %v4772 = vadd.f32 %v4770, %v4771
    %v4773 = vsel %vm2328, %v4755, 0.0
    %v4774 = vadd.f32 %v4772, %v4773
    %v4775 = vld [vmem:[%s7] sm:$0xff]
    %v4776 = vld [vmem:[%s7 + $0x8] sm:$0xff]
    %v4777 = vld [vmem:[%s7 + $0x10] sm:$0xff]
    %v4778 = vld [vmem:[%s7 + $0x18] sm:$0xff]
    %v4779 = vld [vmem:[%s7 + $0x20] sm:$0xff]
    %v4780 = vld [vmem:[%s7 + $0x28] sm:$0xff]
    %v4781 = vld [vmem:[%s7 + $0x30] sm:$0xff]
    %v4782 = vld [vmem:[%s7 + $0x38] sm:$0xff]
    %v4783 = vlaneseq
    %v4784 = vshrl.u32 %v4783, 7
    %v4785 = vsub.s32 0, %v4784
    %v4786 = vrot.slane %v4501, %v4785
    %v4788 = vsel %vm2328, %v4774, 0
    %4790 = vmatprep.subr.mxu0 0.0
    %4791 = vmatpush1.msra.mxu0 %v4775
    %4792 = vmatprep.subr.mxu0 0.0
    %4793 = vmatpush1.msra.mxu0 %v4776
    %4794 = vmatprep.subr.mxu0 0.0
    %4795 = vmatpush1.msra.mxu0 %v4777
    %4796 = vmatprep.subr.mxu0 0.0
    %4797 = vmatpush1.msra.mxu0 %v4778
    %4798 = vmatprep.subr.mxu0 0.0
    %4799 = vmatpush1.msra.mxu0 %v4779
    %4800 = vmatprep.subr.mxu0 0.0
    %4801 = vmatpush1.msra.mxu0 %v4780
    %4802 = vmatprep.subr.mxu0 0.0
    %4803 = vmatpush1.msra.mxu0 %v4781
    %4804 = vmatprep.subr.mxu0 0.0
    %4805 = vmatpush1.msra.mxu0 %v4782
    %4806 = vmatprep.subr.mxu0 0.0
    %4807 = vmatpush1.msra.mxu0 0.0
    %4808 = vmatprep.subr.mxu0 0.0
    %4809 = vmatpush1.msra.mxu0 0.0
    %4810 = vmatprep.subr.mxu0 0.0
    %4811 = vmatpush1.msra.mxu0 0.0
    %4812 = vmatprep.subr.mxu0 0.0
    %4813 = vmatpush1.msra.mxu0 0.0
    %4814 = vmatprep.subr.mxu0 0.0
    %4815 = vmatpush1.msra.mxu0 0.0
    %4816 = vmatprep.subr.mxu0 0.0
    %4817 = vmatpush1.msra.mxu0 0.0
    %4818 = vmatprep.subr.mxu0 0.0
    %4819 = vmatpush1.msra.mxu0 0.0
    %4820 = vmatprep.subr.mxu0 0.0
    %4821 = vmatpush1.msra.mxu0 0.0
    %4822 = vmatprep.subr.mxu0 0.0
    %4823 = vmatpush1.msra.mxu0 0.0
    %4824 = vmatprep.subr.mxu0 0.0
    %4825 = vmatpush1.msra.mxu0 0.0
    %4826 = vmatprep.subr.mxu0 0.0
    %4827 = vmatpush1.msra.mxu0 0.0
    %4828 = vmatprep.subr.mxu0 0.0
    %4829 = vmatpush1.msra.mxu0 0.0
    %4830 = vmatprep.subr.mxu0 0.0
    %4831 = vmatpush1.msra.mxu0 0.0
    %4832 = vmatprep.subr.mxu0 0.0
    %4833 = vmatpush1.msra.mxu0 0.0
    %4834 = vmatprep.subr.mxu0 0.0
    %4835 = vmatpush1.msra.mxu0 0.0
    %4836 = vmatprep.subr.mxu0 0.0
    %4837 = vmatpush1.msra.mxu0 0.0
    %4838 = vmatprep.subr.mxu0 0.0
    %4839 = vmatpush1.msra.mxu0 0.0
    %4840 = vmatprep.subr.mxu0 0.0
    %4841 = vmatpush1.msra.mxu0 0.0
    %4842 = vmatprep.subr.mxu0 0.0
    %4843 = vmatpush1.msra.mxu0 0.0
    %4844 = vmatprep.subr.mxu0 0.0
    %4845 = vmatpush1.msra.mxu0 0.0
    %4846 = vmatprep.subr.mxu0 0.0
    %4847 = vmatpush1.msra.mxu0 0.0
    %4848 = vmatprep.subr.mxu0 0.0
    %4849 = vmatpush1.msra.mxu0 0.0
    %4850 = vmatprep.subr.mxu0 0.0
    %4851 = vmatpush1.msra.mxu0 0.0
    %4852 = vmatprep.subr.mxu0 0.0
    %4853 = vmatpush1.msra.mxu0 0.0
    %4854 = vmatprep.mubr.f32.mxu0 0.0
    %4855 = vmatmul.mubr.f32.gmra.mrb[0].mxu0 %v4788
    %v4856 = vpop.f32.mrb[0].mxu0
    %v4857 = vadd.f32 %v4786, %v4856
    %v4858 = vpop.f32.mrb[0].mxu0
    %4859 = vdwg.mxu0
    %v4860 = vmax.f32 %v4857, 0.0
    %4865 = vrot.lane.b32.xlu0 %v4775, 96
    %v4866 = vpop.permute.xlu0 %4865
    %4867 = vrot.lane.b32.xlu0 %v4776, 96
    %v4868 = vpop.permute.xlu0 %4867
    %4869 = vrot.lane.b32.xlu0 %v4777, 96
    %v4870 = vpop.permute.xlu0 %4869
    %4871 = vrot.lane.b32.xlu0 %v4778, 96
    %v4872 = vpop.permute.xlu0 %4871
    %4878 = vrot.lane.b32.xlu0 %v4786, 96
    %v4879 = vpop.permute.xlu0 %4878
    %v4882 = vsel %vm350, %v4860, 0
    %4884 = vmatprep.subr.mxu0 0.0
    %4885 = vmatpush1.msra.mxu0 %v4866
    %4886 = vmatprep.subr.mxu0 0.0
    %4887 = vmatpush1.msra.mxu0 %v4868
    %4888 = vmatprep.subr.mxu0 0.0
    %4889 = vmatpush1.msra.mxu0 %v4870
    %4890 = vmatprep.subr.mxu0 0.0
    %4891 = vmatpush1.msra.mxu0 %v4872
    %4892 = vmatprep.subr.mxu0 0.0
    %4893 = vmatpush1.msra.mxu0 0.0
    %4894 = vmatprep.subr.mxu0 0.0
    %4895 = vmatpush1.msra.mxu0 0.0
    %4896 = vmatprep.subr.mxu0 0.0
    %4897 = vmatpush1.msra.mxu0 0.0
    %4898 = vmatprep.subr.mxu0 0.0
    %4899 = vmatpush1.msra.mxu0 0.0
    %4900 = vmatprep.subr.mxu0 0.0
    %4901 = vmatpush1.msra.mxu0 0.0
    %4902 = vmatprep.subr.mxu0 0.0
    %4903 = vmatpush1.msra.mxu0 0.0
    %4904 = vmatprep.subr.mxu0 0.0
    %4905 = vmatpush1.msra.mxu0 0.0
    %4906 = vmatprep.subr.mxu0 0.0
    %4907 = vmatpush1.msra.mxu0 0.0
    %4908 = vmatprep.subr.mxu0 0.0
    %4909 = vmatpush1.msra.mxu0 0.0
    %4910 = vmatprep.subr.mxu0 0.0
    %4911 = vmatpush1.msra.mxu0 0.0
    %4912 = vmatprep.subr.mxu0 0.0
    %4913 = vmatpush1.msra.mxu0 0.0
    %4914 = vmatprep.subr.mxu0 0.0
    %4915 = vmatpush1.msra.mxu0 0.0
    %4916 = vmatprep.subr.mxu0 0.0
    %4917 = vmatpush1.msra.mxu0 0.0
    %4918 = vmatprep.subr.mxu0 0.0
    %4919 = vmatpush1.msra.mxu0 0.0
    %4920 = vmatprep.subr.mxu0 0.0
    %4921 = vmatpush1.msra.mxu0 0.0
    %4922 = vmatprep.subr.mxu0 0.0
    %4923 = vmatpush1.msra.mxu0 0.0
    %4924 = vmatprep.subr.mxu0 0.0
    %4925 = vmatpush1.msra.mxu0 0.0
    %4926 = vmatprep.subr.mxu0 0.0
    %4927 = vmatpush1.msra.mxu0 0.0
    %4928 = vmatprep.subr.mxu0 0.0
    %4929 = vmatpush1.msra.mxu0 0.0
    %4930 = vmatprep.subr.mxu0 0.0
    %4931 = vmatpush1.msra.mxu0 0.0
    %4932 = vmatprep.subr.mxu0 0.0
    %4933 = vmatpush1.msra.mxu0 0.0
    %4934 = vmatprep.subr.mxu0 0.0
    %4935 = vmatpush1.msra.mxu0 0.0
    %4936 = vmatprep.subr.mxu0 0.0
    %4937 = vmatpush1.msra.mxu0 0.0
    %4938 = vmatprep.subr.mxu0 0.0
    %4939 = vmatpush1.msra.mxu0 0.0
    %4940 = vmatprep.subr.mxu0 0.0
    %4941 = vmatpush1.msra.mxu0 0.0
    %4942 = vmatprep.subr.mxu0 0.0
    %4943 = vmatpush1.msra.mxu0 0.0
    %4944 = vmatprep.subr.mxu0 0.0
    %4945 = vmatpush1.msra.mxu0 0.0
    %4946 = vmatprep.subr.mxu0 0.0
    %4947 = vmatpush1.msra.mxu0 0.0
    %4948 = vmatprep.mubr.f32.mxu0 0.0
    %4949 = vmatmul.mubr.f32.gmra.mrb[0].mxu0 %v4882
    %v4950 = vpop.f32.mrb[0].mxu0
    %v4951 = vadd.f32 %v4879, %v4950
    %v4952 = vpop.f32.mrb[0].mxu0
    %4953 = vdwg.mxu0
    %vm4954 = vcmask 15360
    %4955 = vst.msk [vmem:[%s8] sm:$0xff] %vm4954, %v4951
    // Predicated region
    $region42: #{tpu_custom_call.1} parent=1 // pred_check
      _
    $region43: #{tpu_custom_call.1} parent=1 // pred_check_branch
      %4957 = sbr.rel (0) target = $region45
    $region44: #{tpu_custom_call.1} parent=1 // pred_region
      _
    $region45: #{tpu_custom_call.1} parent=1 // pred_fallthru
      _
    // Predicated region
    $region46: #{tpu_custom_call.1} parent=1 // pred_check
      _
    $region47: #{tpu_custom_call.1} parent=1 // pred_check_branch
      %4959 = sbr.rel (0) target = $region49
    $region48: #{tpu_custom_call.1} parent=1 // pred_region
      _
    $region49: #{tpu_custom_call.1} parent=1 // pred_fallthru
      _
    %4960 = vsyncpa [#allocation6], 1
    %4961 = vsyncpa [#allocation8], 1

</llo_original>
